<compile_context>
chip_gen: v6e
topology: v6e:2x2x1
jax: 0.10.0
libtpu: 0.0.40
codegen_flags: <defaults>
</compile_context>

<pallas_src>
import functools

import numpy as np

import jax
import jax.numpy as jnp
from jax.experimental import pallas as pl
from jax.experimental.pallas import tpu as pltpu

COMPUTE_DTYPE = jnp.bfloat16   # matmul operand dtype (f32 accumulation)


# --------------------------- conv trunk kernel ------------------------------

def _pool_select_matrix(W, OH, OW):
    """Exact 0/1 matrix that compacts strided pooled lanes to a dense tile.

    After the two shifted maxes, v[:, 2*i*W + 2*j] holds the max over the
    2x2 window of pooled position (i, j).  sel has exactly one 1.0 per column
    so `v @ sel` is an exact gather of those lanes.
    """
    PH, PW = OH // 2, OW // 2
    L = (OH - 1) * W + OW
    VL = L - 1 - W
    sel = np.zeros((VL, PH * PW), np.float32)
    for i in range(PH):
        for j in range(PW):
            sel[2 * i * W + 2 * j, i * PW + j] = 1.0
    return sel


def _conv_relu_pool(x, w_ref, b_ref, sel_ref, *, H, W, KH, KW, out_dtype):
    """Valid conv (stride 1) + bias + ReLU + 2x2/2 max-pool for one image.

    x       : (C, H*W) value — channels on sublanes, flattened spatial on lanes.
    w_ref   : (KH*KW, OC, C) tap-major weights (bf16).
    b_ref   : (OC, 1) bias (f32).
    sel_ref : (VL, PH*PW) 0/1 pooling-selection matrix (bf16).
    returns : (OC, (OH//2)*(OW//2)) pooled activations in `out_dtype`.
    """
    C = x.shape[0]
    OC = w_ref.shape[1]
    OH, OW = H - KH + 1, W - KW + 1
    PH, PW = OH // 2, OW // 2
    # "Full-width" accumulation: acc[:, r*W + c] is the conv output at (r, c)
    # for c < OW; columns OW..W-1 hold row-wrapped garbage that is never read.
    L = (OH - 1) * W + OW
    VL = L - 1 - W
    assert sel_ref.shape == (VL, PH * PW)

    acc = jnp.zeros((OC, L), jnp.float32)
    x_in = x.astype(jnp.float32) if C == 1 else x
    for dy in range(KH):                      # in-kernel im2col: tap shifts
        for dx in range(KW):
            t = dy * KW + dx
            off = dy * W + dx
            xs = x_in[:, off:off + L]         # (C, L), pure lane shift in VMEM
            if C == 1:
                # K=1 contraction -> plain VPU broadcast-multiply, skip MXU.
                acc = acc + w_ref[t].astype(jnp.float32) * xs
            else:
                acc = acc + jnp.dot(w_ref[t], xs,
                                    preferred_element_type=jnp.float32)
    acc = jnp.maximum(acc + b_ref[...], 0.0)                  # bias + ReLU

    # Fused 2x2 stride-2 max pool.
    h = jnp.maximum(acc[:, :L - 1], acc[:, 1:])               # horiz. pairs
    v = jnp.maximum(h[:, :VL], h[:, W:])                      # vert. pairs
    # Compact the strided lane positions with the precomputed exact 0/1
    # selection matmul (bf16 operands, f32 accumulation — exact gather).
    pooled = jnp.dot(v.astype(sel_ref.dtype), sel_ref[...],
                     preferred_element_type=jnp.float32)
    return pooled.astype(out_dtype)                           # (OC, PH*PW)


def _conv_trunk_kernel(x_ref, w1_ref, b1_ref, sel1_ref,
                       w2_ref, b2_ref, sel2_ref, o_ref, *, H, W, KH, KW):
    x = x_ref[0]                                              # (C_in, H*W)
    p1 = _conv_relu_pool(x, w1_ref, b1_ref, sel1_ref, H=H, W=W, KH=KH, KW=KW,
                         out_dtype=x.dtype)                   # (OC1, H1*W1)
    H1, W1 = (H - KH + 1) // 2, (W - KW + 1) // 2
    p2 = _conv_relu_pool(p1, w2_ref, b2_ref, sel2_ref, H=H1, W=W1,
                         KH=KH, KW=KW, out_dtype=o_ref.dtype) # (OC2, H2*W2)
    o_ref[0] = p2


def conv_trunk(x, w1_taps, b1, w2_taps, b2, *, H, W, KH=5, KW=5):
    """x: (B, C_in, H*W) -> (B, OC2, H2*W2). Grid over batch, parallel."""
    B, C_in, HW = x.shape
    assert HW == H * W
    OC1 = w1_taps.shape[1]
    OC2 = w2_taps.shape[1]
    OH1, OW1 = H - KH + 1, W - KW + 1
    H1, W1 = OH1 // 2, OW1 // 2
    OH2, OW2 = H1 - KH + 1, W1 - KW + 1
    H2, W2 = OH2 // 2, OW2 // 2

    # Host-precomputed (compile-time constant) pooling-selection matrices.
    sel1 = jnp.asarray(_pool_select_matrix(W, OH1, OW1), COMPUTE_DTYPE)
    sel2 = jnp.asarray(_pool_select_matrix(W1, OH2, OW2), COMPUTE_DTYPE)

    kernel = functools.partial(_conv_trunk_kernel, H=H, W=W, KH=KH, KW=KW)
    return pl.pallas_call(
        kernel,
        out_shape=jax.ShapeDtypeStruct((B, OC2, H2 * W2), x.dtype),
        grid_spec=pltpu.PrefetchScalarGridSpec(
            num_scalar_prefetch=0,
            grid=(B,),
            in_specs=[
                pl.BlockSpec((1, C_in, HW), lambda b: (b, 0, 0)),
                pl.BlockSpec((KH * KW, OC1, C_in), lambda b: (0, 0, 0)),
                pl.BlockSpec((OC1, 1), lambda b: (0, 0)),
                pl.BlockSpec(sel1.shape, lambda b: (0, 0)),
                pl.BlockSpec((KH * KW, OC2, OC1), lambda b: (0, 0, 0)),
                pl.BlockSpec((OC2, 1), lambda b: (0, 0)),
                pl.BlockSpec(sel2.shape, lambda b: (0, 0)),
            ],
            out_specs=pl.BlockSpec((1, OC2, H2 * W2), lambda b: (b, 0, 0)),
        ),
        compiler_params=pltpu.CompilerParams(
            dimension_semantics=("parallel",)),
    )(x, w1_taps, b1, sel1, w2_taps, b2, sel2)


# ------------------------------ FC head kernel ------------------------------

def _fc_head_kernel(a_ref, w1_ref, b1_ref, w2_ref, b2_ref, o_ref):
    """o = log_softmax(relu(a @ w1 + b1) @ w2 + b2), one fused kernel."""
    h = jnp.dot(a_ref[...], w1_ref[...], preferred_element_type=jnp.float32)
    h = jnp.maximum(h + b1_ref[...], 0.0)
    z = jnp.dot(h.astype(w2_ref.dtype), w2_ref[...],
                preferred_element_type=jnp.float32)
    z = z + b2_ref[...]
    m = jnp.max(z, axis=1, keepdims=True)
    lse = m + jnp.log(jnp.sum(jnp.exp(z - m), axis=1, keepdims=True))
    o_ref[...] = (z - lse).astype(o_ref.dtype)


def fc_head(a, w1, b1, w2, b2, *, block_m=128):
    """a: (M, K) -> log-softmax logits (M, classes). Row-tiled grid."""
    M, K = a.shape
    K1, N1 = w1.shape
    N2 = w2.shape[1]
    assert K == K1 and w2.shape[0] == N1

    if M <= block_m:
        bm, m_pad = M, M                       # single block == full array
    else:
        bm = block_m
        m_pad = pl.cdiv(M, bm) * bm
        if m_pad != M:                         # padded rows are sliced off
            a = jnp.pad(a, ((0, m_pad - M), (0, 0)))

    out = pl.pallas_call(
        _fc_head_kernel,
        out_shape=jax.ShapeDtypeStruct((m_pad, N2), jnp.float32),
        grid_spec=pltpu.PrefetchScalarGridSpec(
            num_scalar_prefetch=0,
            grid=(m_pad // bm,),
            in_specs=[
                pl.BlockSpec((bm, K), lambda i: (i, 0)),
                pl.BlockSpec((K1, N1), lambda i: (0, 0)),
                pl.BlockSpec((1, N1), lambda i: (0, 0)),
                pl.BlockSpec((N1, N2), lambda i: (0, 0)),
                pl.BlockSpec((1, N2), lambda i: (0, 0)),
            ],
            out_specs=pl.BlockSpec((bm, N2), lambda i: (i, 0)),
        ),
        compiler_params=pltpu.CompilerParams(
            dimension_semantics=("parallel",)),
    )(a, w1, b1, w2, b2)
    return out[:M]


# ---------------------------- model definition ------------------------------

def init_params(key, num_channels, classes):
    """PyTorch-default init, PyTorch layouts (Conv OIHW, Linear (out, in))."""
    ks = jax.random.split(key, 8)

    def u(k, shape, fan_in):
        bound = 1.0 / jnp.sqrt(jnp.float32(fan_in))
        return jax.random.uniform(k, shape, jnp.float32, -bound, bound)

    return {
        "conv1_w": u(ks[0], (20, num_channels, 5, 5), num_channels * 25),
        "conv1_b": u(ks[1], (20,), num_channels * 25),
        "conv2_w": u(ks[2], (50, 20, 5, 5), 20 * 25),
        "conv2_b": u(ks[3], (50,), 20 * 25),
        "fc1_w":   u(ks[4], (500, 800), 800),
        "fc1_b":   u(ks[5], (500,), 800),
        "fc2_w":   u(ks[6], (classes, 500), 500),
        "fc2_b":   u(ks[7], (classes,), 500),
    }


def prepare_params(p):
    """One-time layout prep: tap-major conv weights, pre-transposed FC
    weights, bf16 matmul operands, f32 biases in broadcast-ready shapes."""
    def conv_taps(w):                       # (OC, C, KH, KW) -> (KH*KW, OC, C)
        OC, C, KH, KW = w.shape
        return (jnp.transpose(w, (2, 3, 0, 1))
                .reshape(KH * KW, OC, C).astype(COMPUTE_DTYPE))

    return {
        "conv1_w": conv_taps(p["conv1_w"]),
        "conv1_b": p["conv1_b"].reshape(-1, 1).astype(jnp.float32),
        "conv2_w": conv_taps(p["conv2_w"]),
        "conv2_b": p["conv2_b"].reshape(-1, 1).astype(jnp.float32),
        "fc1_w":   p["fc1_w"].T.astype(COMPUTE_DTYPE),        # (800, 500)
        "fc1_b":   p["fc1_b"].reshape(1, -1).astype(jnp.float32),
        "fc2_w":   p["fc2_w"].T.astype(COMPUTE_DTYPE),        # (500, classes)
        "fc2_b":   p["fc2_b"].reshape(1, -1).astype(jnp.float32),
    }


@jax.jit
def cnn_forward(params, x):
    # x: (B, numChannels, 28, 28) f32 NCHW (like PyTorch).
    B, C, H, W = x.shape
    xb = x.astype(COMPUTE_DTYPE).reshape(B, C, H * W)     # free reshape
    feats = conv_trunk(xb, params["conv1_w"], params["conv1_b"],
                       params["conv2_w"], params["conv2_b"],
                       H=H, W=W)                          # (B, 50, 16)
    a = feats.reshape(B, -1)          # (B, 800), == torch.flatten(x, 1) order
    assert a.shape[1] == params["fc1_w"].shape[0]
    return fc_head(a, params["fc1_w"], params["fc1_b"],
                   params["fc2_w"], params["fc2_b"])      # (B, classes) f32


# ------------------------- pure-JAX f32 reference ---------------------------

def reference_forward(tp, x):
    dn = ("NCHW", "OIHW", "NCHW")
    y = jax.lax.conv_general_dilated(x, tp["conv1_w"], (1, 1), "VALID",
                                     dimension_numbers=dn)
    y = jax.nn.relu(y + tp["conv1_b"][None, :, None, None])
    y = jax.lax.reduce_window(y, -jnp.inf, jax.lax.max,
                              (1, 1, 2, 2), (1, 1, 2, 2), "VALID")
    y = jax.lax.conv_general_dilated(y, tp["conv2_w"], (1, 1), "VALID",
                                     dimension_numbers=dn)
    y = jax.nn.relu(y + tp["conv2_b"][None, :, None, None])
    y = jax.lax.reduce_window(y, -jnp.inf, jax.lax.max,
                              (1, 1, 2, 2), (1, 1, 2, 2), "VALID")
    y = y.reshape(y.shape[0], -1)
    y = jax.nn.relu(y @ tp["fc1_w"].T + tp["fc1_b"])
    y = y @ tp["fc2_w"].T + tp["fc2_b"]
    return jax.nn.log_softmax(y, axis=1)


if __name__ == "__main__":
    key = jax.random.PRNGKey(0)
    k_param, k_input = jax.random.split(key)

    num_channels = 1
    classes = 10
    batch = 2
    # Spatial size 28 is implied by fc1 in_features=800 (50 * 4 * 4).
    x = jax.random.normal(k_input, (batch, num_channels, 28, 28), jnp.float32)

    torch_params = init_params(k_param, num_channels, classes)
    params = prepare_params(torch_params)

    out = cnn_forward(params, x)
    out = jax.block_until_ready(out)

    assert out.shape == (batch, classes), out.shape
    assert bool(jnp.all(jnp.isfinite(out)))
    # log_softmax rows must exp-sum to 1
    assert bool(jnp.allclose(jnp.sum(jnp.exp(out), axis=1), 1.0, atol=1e-3))
    # match the f32 reference (bf16 operands / f32 accumulation -> small diff)
    ref = reference_forward(torch_params, x)
    max_err = float(jnp.max(jnp.abs(out - ref)))
    assert max_err < 7.5e-2, f"max abs error vs reference: {max_err}"

    print("KERNEL_OK")
</pallas_src>

<mosaic_0001>
module attributes {stable_mosaic.version = 11 : i64} {
  func.func @_conv_trunk_kernel(%arg0: i32, %arg1: memref<1x1x784xbf16, #tpu.memory_space<vmem>>, %arg2: memref<25x20x1xbf16, #tpu.memory_space<vmem>>, %arg3: memref<20x1xf32, #tpu.memory_space<vmem>>, %arg4: memref<639x144xbf16, #tpu.memory_space<vmem>>, %arg5: memref<25x50x20xbf16, #tpu.memory_space<vmem>>, %arg6: memref<50x1xf32, #tpu.memory_space<vmem>>, %arg7: memref<79x16xbf16, #tpu.memory_space<vmem>>, %arg8: memref<1x50x16xbf16, #tpu.memory_space<vmem>>) attributes {dimension_semantics = [#tpu.dimension_semantics<parallel>], iteration_bounds = array<i64: 2>, scalar_prefetch = 0 : i64, scratch_operands = 0 : i64, tpu.core_type = #tpu.core_type<tc>, window_params = [{transform_indices = @transform_0, window_bounds = array<i64: 1, 1, 784>}, {pipeline_mode = #tpu.pipeline_mode<synchronous>, transform_indices = @transform_1, window_bounds = array<i64: 25, 20, 1>}, {pipeline_mode = #tpu.pipeline_mode<synchronous>, transform_indices = @transform_2, window_bounds = array<i64: 20, 1>}, {pipeline_mode = #tpu.pipeline_mode<synchronous>, transform_indices = @transform_3, window_bounds = array<i64: 639, 144>}, {pipeline_mode = #tpu.pipeline_mode<synchronous>, transform_indices = @transform_4, window_bounds = array<i64: 25, 50, 20>}, {pipeline_mode = #tpu.pipeline_mode<synchronous>, transform_indices = @transform_5, window_bounds = array<i64: 50, 1>}, {pipeline_mode = #tpu.pipeline_mode<synchronous>, transform_indices = @transform_6, window_bounds = array<i64: 79, 16>}, {transform_indices = @transform_7, window_bounds = array<i64: 1, 50, 16>}]} {
    %c0 = arith.constant 0 : index
    %c0_0 = arith.constant 0 : index
    %c0_1 = arith.constant 0 : index
    %0 = vector.load %arg1[%c0, %c0_0, %c0_1] : memref<1x1x784xbf16, #tpu.memory_space<vmem>>, vector<1x1x784xbf16>
    %1 = vector.shape_cast %0 : vector<1x1x784xbf16> to vector<1x784xbf16>
    %cst = arith.constant 0.000000e+00 : f32
    %2 = vector.broadcast %cst : f32 to vector<20x668xf32>
    %3 = arith.extf %1 : vector<1x784xbf16> to vector<1x784xf32>
    %4 = vector.extract_strided_slice %3 {offsets = [0, 0], sizes = [1, 668], strides = [1, 1]} : vector<1x784xf32> to vector<1x668xf32>
    %c0_2 = arith.constant 0 : index
    %c0_3 = arith.constant 0 : index
    %c0_4 = arith.constant 0 : index
    %5 = vector.load %arg2[%c0_2, %c0_3, %c0_4] : memref<25x20x1xbf16, #tpu.memory_space<vmem>>, vector<1x20x1xbf16>
    %6 = vector.shape_cast %5 : vector<1x20x1xbf16> to vector<20x1xbf16>
    %7 = arith.extf %6 : vector<20x1xbf16> to vector<20x1xf32>
    %8 = vector.broadcast %7 : vector<20x1xf32> to vector<20x668xf32>
    %9 = vector.broadcast %4 : vector<1x668xf32> to vector<20x668xf32>
    %10 = arith.mulf %8, %9 : vector<20x668xf32>
    %11 = arith.addf %2, %10 : vector<20x668xf32>
    %12 = vector.extract_strided_slice %3 {offsets = [0, 1], sizes = [1, 668], strides = [1, 1]} : vector<1x784xf32> to vector<1x668xf32>
    %c1 = arith.constant 1 : index
    %c0_5 = arith.constant 0 : index
    %c0_6 = arith.constant 0 : index
    %13 = vector.load %arg2[%c1, %c0_5, %c0_6] : memref<25x20x1xbf16, #tpu.memory_space<vmem>>, vector<1x20x1xbf16>
    %14 = vector.shape_cast %13 : vector<1x20x1xbf16> to vector<20x1xbf16>
    %15 = arith.extf %14 : vector<20x1xbf16> to vector<20x1xf32>
    %16 = vector.broadcast %15 : vector<20x1xf32> to vector<20x668xf32>
    %17 = vector.broadcast %12 : vector<1x668xf32> to vector<20x668xf32>
    %18 = arith.mulf %16, %17 : vector<20x668xf32>
    %19 = arith.addf %11, %18 : vector<20x668xf32>
    %20 = vector.extract_strided_slice %3 {offsets = [0, 2], sizes = [1, 668], strides = [1, 1]} : vector<1x784xf32> to vector<1x668xf32>
    %c2 = arith.constant 2 : index
    %c0_7 = arith.constant 0 : index
    %c0_8 = arith.constant 0 : index
    %21 = vector.load %arg2[%c2, %c0_7, %c0_8] : memref<25x20x1xbf16, #tpu.memory_space<vmem>>, vector<1x20x1xbf16>
    %22 = vector.shape_cast %21 : vector<1x20x1xbf16> to vector<20x1xbf16>
    %23 = arith.extf %22 : vector<20x1xbf16> to vector<20x1xf32>
    %24 = vector.broadcast %23 : vector<20x1xf32> to vector<20x668xf32>
    %25 = vector.broadcast %20 : vector<1x668xf32> to vector<20x668xf32>
    %26 = arith.mulf %24, %25 : vector<20x668xf32>
    %27 = arith.addf %19, %26 : vector<20x668xf32>
    %28 = vector.extract_strided_slice %3 {offsets = [0, 3], sizes = [1, 668], strides = [1, 1]} : vector<1x784xf32> to vector<1x668xf32>
    %c3 = arith.constant 3 : index
    %c0_9 = arith.constant 0 : index
    %c0_10 = arith.constant 0 : index
    %29 = vector.load %arg2[%c3, %c0_9, %c0_10] : memref<25x20x1xbf16, #tpu.memory_space<vmem>>, vector<1x20x1xbf16>
    %30 = vector.shape_cast %29 : vector<1x20x1xbf16> to vector<20x1xbf16>
    %31 = arith.extf %30 : vector<20x1xbf16> to vector<20x1xf32>
    %32 = vector.broadcast %31 : vector<20x1xf32> to vector<20x668xf32>
    %33 = vector.broadcast %28 : vector<1x668xf32> to vector<20x668xf32>
    %34 = arith.mulf %32, %33 : vector<20x668xf32>
    %35 = arith.addf %27, %34 : vector<20x668xf32>
    %36 = vector.extract_strided_slice %3 {offsets = [0, 4], sizes = [1, 668], strides = [1, 1]} : vector<1x784xf32> to vector<1x668xf32>
    %c4 = arith.constant 4 : index
    %c0_11 = arith.constant 0 : index
    %c0_12 = arith.constant 0 : index
    %37 = vector.load %arg2[%c4, %c0_11, %c0_12] : memref<25x20x1xbf16, #tpu.memory_space<vmem>>, vector<1x20x1xbf16>
    %38 = vector.shape_cast %37 : vector<1x20x1xbf16> to vector<20x1xbf16>
    %39 = arith.extf %38 : vector<20x1xbf16> to vector<20x1xf32>
    %40 = vector.broadcast %39 : vector<20x1xf32> to vector<20x668xf32>
    %41 = vector.broadcast %36 : vector<1x668xf32> to vector<20x668xf32>
    %42 = arith.mulf %40, %41 : vector<20x668xf32>
    %43 = arith.addf %35, %42 : vector<20x668xf32>
    %44 = vector.extract_strided_slice %3 {offsets = [0, 28], sizes = [1, 668], strides = [1, 1]} : vector<1x784xf32> to vector<1x668xf32>
    %c5 = arith.constant 5 : index
    %c0_13 = arith.constant 0 : index
    %c0_14 = arith.constant 0 : index
    %45 = vector.load %arg2[%c5, %c0_13, %c0_14] : memref<25x20x1xbf16, #tpu.memory_space<vmem>>, vector<1x20x1xbf16>
    %46 = vector.shape_cast %45 : vector<1x20x1xbf16> to vector<20x1xbf16>
    %47 = arith.extf %46 : vector<20x1xbf16> to vector<20x1xf32>
    %48 = vector.broadcast %47 : vector<20x1xf32> to vector<20x668xf32>
    %49 = vector.broadcast %44 : vector<1x668xf32> to vector<20x668xf32>
    %50 = arith.mulf %48, %49 : vector<20x668xf32>
    %51 = arith.addf %43, %50 : vector<20x668xf32>
    %52 = vector.extract_strided_slice %3 {offsets = [0, 29], sizes = [1, 668], strides = [1, 1]} : vector<1x784xf32> to vector<1x668xf32>
    %c6 = arith.constant 6 : index
    %c0_15 = arith.constant 0 : index
    %c0_16 = arith.constant 0 : index
    %53 = vector.load %arg2[%c6, %c0_15, %c0_16] : memref<25x20x1xbf16, #tpu.memory_space<vmem>>, vector<1x20x1xbf16>
    %54 = vector.shape_cast %53 : vector<1x20x1xbf16> to vector<20x1xbf16>
    %55 = arith.extf %54 : vector<20x1xbf16> to vector<20x1xf32>
    %56 = vector.broadcast %55 : vector<20x1xf32> to vector<20x668xf32>
    %57 = vector.broadcast %52 : vector<1x668xf32> to vector<20x668xf32>
    %58 = arith.mulf %56, %57 : vector<20x668xf32>
    %59 = arith.addf %51, %58 : vector<20x668xf32>
    %60 = vector.extract_strided_slice %3 {offsets = [0, 30], sizes = [1, 668], strides = [1, 1]} : vector<1x784xf32> to vector<1x668xf32>
    %c7 = arith.constant 7 : index
    %c0_17 = arith.constant 0 : index
    %c0_18 = arith.constant 0 : index
    %61 = vector.load %arg2[%c7, %c0_17, %c0_18] : memref<25x20x1xbf16, #tpu.memory_space<vmem>>, vector<1x20x1xbf16>
    %62 = vector.shape_cast %61 : vector<1x20x1xbf16> to vector<20x1xbf16>
    %63 = arith.extf %62 : vector<20x1xbf16> to vector<20x1xf32>
    %64 = vector.broadcast %63 : vector<20x1xf32> to vector<20x668xf32>
    %65 = vector.broadcast %60 : vector<1x668xf32> to vector<20x668xf32>
    %66 = arith.mulf %64, %65 : vector<20x668xf32>
    %67 = arith.addf %59, %66 : vector<20x668xf32>
    %68 = vector.extract_strided_slice %3 {offsets = [0, 31], sizes = [1, 668], strides = [1, 1]} : vector<1x784xf32> to vector<1x668xf32>
    %c8 = arith.constant 8 : index
    %c0_19 = arith.constant 0 : index
    %c0_20 = arith.constant 0 : index
    %69 = vector.load %arg2[%c8, %c0_19, %c0_20] : memref<25x20x1xbf16, #tpu.memory_space<vmem>>, vector<1x20x1xbf16>
    %70 = vector.shape_cast %69 : vector<1x20x1xbf16> to vector<20x1xbf16>
    %71 = arith.extf %70 : vector<20x1xbf16> to vector<20x1xf32>
    %72 = vector.broadcast %71 : vector<20x1xf32> to vector<20x668xf32>
    %73 = vector.broadcast %68 : vector<1x668xf32> to vector<20x668xf32>
    %74 = arith.mulf %72, %73 : vector<20x668xf32>
    %75 = arith.addf %67, %74 : vector<20x668xf32>
    %76 = vector.extract_strided_slice %3 {offsets = [0, 32], sizes = [1, 668], strides = [1, 1]} : vector<1x784xf32> to vector<1x668xf32>
    %c9 = arith.constant 9 : index
    %c0_21 = arith.constant 0 : index
    %c0_22 = arith.constant 0 : index
    %77 = vector.load %arg2[%c9, %c0_21, %c0_22] : memref<25x20x1xbf16, #tpu.memory_space<vmem>>, vector<1x20x1xbf16>
    %78 = vector.shape_cast %77 : vector<1x20x1xbf16> to vector<20x1xbf16>
    %79 = arith.extf %78 : vector<20x1xbf16> to vector<20x1xf32>
    %80 = vector.broadcast %79 : vector<20x1xf32> to vector<20x668xf32>
    %81 = vector.broadcast %76 : vector<1x668xf32> to vector<20x668xf32>
    %82 = arith.mulf %80, %81 : vector<20x668xf32>
    %83 = arith.addf %75, %82 : vector<20x668xf32>
    %84 = vector.extract_strided_slice %3 {offsets = [0, 56], sizes = [1, 668], strides = [1, 1]} : vector<1x784xf32> to vector<1x668xf32>
    %c10 = arith.constant 10 : index
    %c0_23 = arith.constant 0 : index
    %c0_24 = arith.constant 0 : index
    %85 = vector.load %arg2[%c10, %c0_23, %c0_24] : memref<25x20x1xbf16, #tpu.memory_space<vmem>>, vector<1x20x1xbf16>
    %86 = vector.shape_cast %85 : vector<1x20x1xbf16> to vector<20x1xbf16>
    %87 = arith.extf %86 : vector<20x1xbf16> to vector<20x1xf32>
    %88 = vector.broadcast %87 : vector<20x1xf32> to vector<20x668xf32>
    %89 = vector.broadcast %84 : vector<1x668xf32> to vector<20x668xf32>
    %90 = arith.mulf %88, %89 : vector<20x668xf32>
    %91 = arith.addf %83, %90 : vector<20x668xf32>
    %92 = vector.extract_strided_slice %3 {offsets = [0, 57], sizes = [1, 668], strides = [1, 1]} : vector<1x784xf32> to vector<1x668xf32>
    %c11 = arith.constant 11 : index
    %c0_25 = arith.constant 0 : index
    %c0_26 = arith.constant 0 : index
    %93 = vector.load %arg2[%c11, %c0_25, %c0_26] : memref<25x20x1xbf16, #tpu.memory_space<vmem>>, vector<1x20x1xbf16>
    %94 = vector.shape_cast %93 : vector<1x20x1xbf16> to vector<20x1xbf16>
    %95 = arith.extf %94 : vector<20x1xbf16> to vector<20x1xf32>
    %96 = vector.broadcast %95 : vector<20x1xf32> to vector<20x668xf32>
    %97 = vector.broadcast %92 : vector<1x668xf32> to vector<20x668xf32>
    %98 = arith.mulf %96, %97 : vector<20x668xf32>
    %99 = arith.addf %91, %98 : vector<20x668xf32>
    %100 = vector.extract_strided_slice %3 {offsets = [0, 58], sizes = [1, 668], strides = [1, 1]} : vector<1x784xf32> to vector<1x668xf32>
    %c12 = arith.constant 12 : index
    %c0_27 = arith.constant 0 : index
    %c0_28 = arith.constant 0 : index
    %101 = vector.load %arg2[%c12, %c0_27, %c0_28] : memref<25x20x1xbf16, #tpu.memory_space<vmem>>, vector<1x20x1xbf16>
    %102 = vector.shape_cast %101 : vector<1x20x1xbf16> to vector<20x1xbf16>
    %103 = arith.extf %102 : vector<20x1xbf16> to vector<20x1xf32>
    %104 = vector.broadcast %103 : vector<20x1xf32> to vector<20x668xf32>
    %105 = vector.broadcast %100 : vector<1x668xf32> to vector<20x668xf32>
    %106 = arith.mulf %104, %105 : vector<20x668xf32>
    %107 = arith.addf %99, %106 : vector<20x668xf32>
    %108 = vector.extract_strided_slice %3 {offsets = [0, 59], sizes = [1, 668], strides = [1, 1]} : vector<1x784xf32> to vector<1x668xf32>
    %c13 = arith.constant 13 : index
    %c0_29 = arith.constant 0 : index
    %c0_30 = arith.constant 0 : index
    %109 = vector.load %arg2[%c13, %c0_29, %c0_30] : memref<25x20x1xbf16, #tpu.memory_space<vmem>>, vector<1x20x1xbf16>
    %110 = vector.shape_cast %109 : vector<1x20x1xbf16> to vector<20x1xbf16>
    %111 = arith.extf %110 : vector<20x1xbf16> to vector<20x1xf32>
    %112 = vector.broadcast %111 : vector<20x1xf32> to vector<20x668xf32>
    %113 = vector.broadcast %108 : vector<1x668xf32> to vector<20x668xf32>
    %114 = arith.mulf %112, %113 : vector<20x668xf32>
    %115 = arith.addf %107, %114 : vector<20x668xf32>
    %116 = vector.extract_strided_slice %3 {offsets = [0, 60], sizes = [1, 668], strides = [1, 1]} : vector<1x784xf32> to vector<1x668xf32>
    %c14 = arith.constant 14 : index
    %c0_31 = arith.constant 0 : index
    %c0_32 = arith.constant 0 : index
    %117 = vector.load %arg2[%c14, %c0_31, %c0_32] : memref<25x20x1xbf16, #tpu.memory_space<vmem>>, vector<1x20x1xbf16>
    %118 = vector.shape_cast %117 : vector<1x20x1xbf16> to vector<20x1xbf16>
    %119 = arith.extf %118 : vector<20x1xbf16> to vector<20x1xf32>
    %120 = vector.broadcast %119 : vector<20x1xf32> to vector<20x668xf32>
    %121 = vector.broadcast %116 : vector<1x668xf32> to vector<20x668xf32>
    %122 = arith.mulf %120, %121 : vector<20x668xf32>
    %123 = arith.addf %115, %122 : vector<20x668xf32>
    %124 = vector.extract_strided_slice %3 {offsets = [0, 84], sizes = [1, 668], strides = [1, 1]} : vector<1x784xf32> to vector<1x668xf32>
    %c15 = arith.constant 15 : index
    %c0_33 = arith.constant 0 : index
    %c0_34 = arith.constant 0 : index
    %125 = vector.load %arg2[%c15, %c0_33, %c0_34] : memref<25x20x1xbf16, #tpu.memory_space<vmem>>, vector<1x20x1xbf16>
    %126 = vector.shape_cast %125 : vector<1x20x1xbf16> to vector<20x1xbf16>
    %127 = arith.extf %126 : vector<20x1xbf16> to vector<20x1xf32>
    %128 = vector.broadcast %127 : vector<20x1xf32> to vector<20x668xf32>
    %129 = vector.broadcast %124 : vector<1x668xf32> to vector<20x668xf32>
    %130 = arith.mulf %128, %129 : vector<20x668xf32>
    %131 = arith.addf %123, %130 : vector<20x668xf32>
    %132 = vector.extract_strided_slice %3 {offsets = [0, 85], sizes = [1, 668], strides = [1, 1]} : vector<1x784xf32> to vector<1x668xf32>
    %c16 = arith.constant 16 : index
    %c0_35 = arith.constant 0 : index
    %c0_36 = arith.constant 0 : index
    %133 = vector.load %arg2[%c16, %c0_35, %c0_36] : memref<25x20x1xbf16, #tpu.memory_space<vmem>>, vector<1x20x1xbf16>
    %134 = vector.shape_cast %133 : vector<1x20x1xbf16> to vector<20x1xbf16>
    %135 = arith.extf %134 : vector<20x1xbf16> to vector<20x1xf32>
    %136 = vector.broadcast %135 : vector<20x1xf32> to vector<20x668xf32>
    %137 = vector.broadcast %132 : vector<1x668xf32> to vector<20x668xf32>
    %138 = arith.mulf %136, %137 : vector<20x668xf32>
    %139 = arith.addf %131, %138 : vector<20x668xf32>
    %140 = vector.extract_strided_slice %3 {offsets = [0, 86], sizes = [1, 668], strides = [1, 1]} : vector<1x784xf32> to vector<1x668xf32>
    %c17 = arith.constant 17 : index
    %c0_37 = arith.constant 0 : index
    %c0_38 = arith.constant 0 : index
    %141 = vector.load %arg2[%c17, %c0_37, %c0_38] : memref<25x20x1xbf16, #tpu.memory_space<vmem>>, vector<1x20x1xbf16>
    %142 = vector.shape_cast %141 : vector<1x20x1xbf16> to vector<20x1xbf16>
    %143 = arith.extf %142 : vector<20x1xbf16> to vector<20x1xf32>
    %144 = vector.broadcast %143 : vector<20x1xf32> to vector<20x668xf32>
    %145 = vector.broadcast %140 : vector<1x668xf32> to vector<20x668xf32>
    %146 = arith.mulf %144, %145 : vector<20x668xf32>
    %147 = arith.addf %139, %146 : vector<20x668xf32>
    %148 = vector.extract_strided_slice %3 {offsets = [0, 87], sizes = [1, 668], strides = [1, 1]} : vector<1x784xf32> to vector<1x668xf32>
    %c18 = arith.constant 18 : index
    %c0_39 = arith.constant 0 : index
    %c0_40 = arith.constant 0 : index
    %149 = vector.load %arg2[%c18, %c0_39, %c0_40] : memref<25x20x1xbf16, #tpu.memory_space<vmem>>, vector<1x20x1xbf16>
    %150 = vector.shape_cast %149 : vector<1x20x1xbf16> to vector<20x1xbf16>
    %151 = arith.extf %150 : vector<20x1xbf16> to vector<20x1xf32>
    %152 = vector.broadcast %151 : vector<20x1xf32> to vector<20x668xf32>
    %153 = vector.broadcast %148 : vector<1x668xf32> to vector<20x668xf32>
    %154 = arith.mulf %152, %153 : vector<20x668xf32>
    %155 = arith.addf %147, %154 : vector<20x668xf32>
    %156 = vector.extract_strided_slice %3 {offsets = [0, 88], sizes = [1, 668], strides = [1, 1]} : vector<1x784xf32> to vector<1x668xf32>
    %c19 = arith.constant 19 : index
    %c0_41 = arith.constant 0 : index
    %c0_42 = arith.constant 0 : index
    %157 = vector.load %arg2[%c19, %c0_41, %c0_42] : memref<25x20x1xbf16, #tpu.memory_space<vmem>>, vector<1x20x1xbf16>
    %158 = vector.shape_cast %157 : vector<1x20x1xbf16> to vector<20x1xbf16>
    %159 = arith.extf %158 : vector<20x1xbf16> to vector<20x1xf32>
    %160 = vector.broadcast %159 : vector<20x1xf32> to vector<20x668xf32>
    %161 = vector.broadcast %156 : vector<1x668xf32> to vector<20x668xf32>
    %162 = arith.mulf %160, %161 : vector<20x668xf32>
    %163 = arith.addf %155, %162 : vector<20x668xf32>
    %164 = vector.extract_strided_slice %3 {offsets = [0, 112], sizes = [1, 668], strides = [1, 1]} : vector<1x784xf32> to vector<1x668xf32>
    %c20 = arith.constant 20 : index
    %c0_43 = arith.constant 0 : index
    %c0_44 = arith.constant 0 : index
    %165 = vector.load %arg2[%c20, %c0_43, %c0_44] : memref<25x20x1xbf16, #tpu.memory_space<vmem>>, vector<1x20x1xbf16>
    %166 = vector.shape_cast %165 : vector<1x20x1xbf16> to vector<20x1xbf16>
    %167 = arith.extf %166 : vector<20x1xbf16> to vector<20x1xf32>
    %168 = vector.broadcast %167 : vector<20x1xf32> to vector<20x668xf32>
    %169 = vector.broadcast %164 : vector<1x668xf32> to vector<20x668xf32>
    %170 = arith.mulf %168, %169 : vector<20x668xf32>
    %171 = arith.addf %163, %170 : vector<20x668xf32>
    %172 = vector.extract_strided_slice %3 {offsets = [0, 113], sizes = [1, 668], strides = [1, 1]} : vector<1x784xf32> to vector<1x668xf32>
    %c21 = arith.constant 21 : index
    %c0_45 = arith.constant 0 : index
    %c0_46 = arith.constant 0 : index
    %173 = vector.load %arg2[%c21, %c0_45, %c0_46] : memref<25x20x1xbf16, #tpu.memory_space<vmem>>, vector<1x20x1xbf16>
    %174 = vector.shape_cast %173 : vector<1x20x1xbf16> to vector<20x1xbf16>
    %175 = arith.extf %174 : vector<20x1xbf16> to vector<20x1xf32>
    %176 = vector.broadcast %175 : vector<20x1xf32> to vector<20x668xf32>
    %177 = vector.broadcast %172 : vector<1x668xf32> to vector<20x668xf32>
    %178 = arith.mulf %176, %177 : vector<20x668xf32>
    %179 = arith.addf %171, %178 : vector<20x668xf32>
    %180 = vector.extract_strided_slice %3 {offsets = [0, 114], sizes = [1, 668], strides = [1, 1]} : vector<1x784xf32> to vector<1x668xf32>
    %c22 = arith.constant 22 : index
    %c0_47 = arith.constant 0 : index
    %c0_48 = arith.constant 0 : index
    %181 = vector.load %arg2[%c22, %c0_47, %c0_48] : memref<25x20x1xbf16, #tpu.memory_space<vmem>>, vector<1x20x1xbf16>
    %182 = vector.shape_cast %181 : vector<1x20x1xbf16> to vector<20x1xbf16>
    %183 = arith.extf %182 : vector<20x1xbf16> to vector<20x1xf32>
    %184 = vector.broadcast %183 : vector<20x1xf32> to vector<20x668xf32>
    %185 = vector.broadcast %180 : vector<1x668xf32> to vector<20x668xf32>
    %186 = arith.mulf %184, %185 : vector<20x668xf32>
    %187 = arith.addf %179, %186 : vector<20x668xf32>
    %188 = vector.extract_strided_slice %3 {offsets = [0, 115], sizes = [1, 668], strides = [1, 1]} : vector<1x784xf32> to vector<1x668xf32>
    %c23 = arith.constant 23 : index
    %c0_49 = arith.constant 0 : index
    %c0_50 = arith.constant 0 : index
    %189 = vector.load %arg2[%c23, %c0_49, %c0_50] : memref<25x20x1xbf16, #tpu.memory_space<vmem>>, vector<1x20x1xbf16>
    %190 = vector.shape_cast %189 : vector<1x20x1xbf16> to vector<20x1xbf16>
    %191 = arith.extf %190 : vector<20x1xbf16> to vector<20x1xf32>
    %192 = vector.broadcast %191 : vector<20x1xf32> to vector<20x668xf32>
    %193 = vector.broadcast %188 : vector<1x668xf32> to vector<20x668xf32>
    %194 = arith.mulf %192, %193 : vector<20x668xf32>
    %195 = arith.addf %187, %194 : vector<20x668xf32>
    %196 = vector.extract_strided_slice %3 {offsets = [0, 116], sizes = [1, 668], strides = [1, 1]} : vector<1x784xf32> to vector<1x668xf32>
    %c24 = arith.constant 24 : index
    %c0_51 = arith.constant 0 : index
    %c0_52 = arith.constant 0 : index
    %197 = vector.load %arg2[%c24, %c0_51, %c0_52] : memref<25x20x1xbf16, #tpu.memory_space<vmem>>, vector<1x20x1xbf16>
    %198 = vector.shape_cast %197 : vector<1x20x1xbf16> to vector<20x1xbf16>
    %199 = arith.extf %198 : vector<20x1xbf16> to vector<20x1xf32>
    %200 = vector.broadcast %199 : vector<20x1xf32> to vector<20x668xf32>
    %201 = vector.broadcast %196 : vector<1x668xf32> to vector<20x668xf32>
    %202 = arith.mulf %200, %201 : vector<20x668xf32>
    %203 = arith.addf %195, %202 : vector<20x668xf32>
    %c0_53 = arith.constant 0 : index
    %c0_54 = arith.constant 0 : index
    %204 = vector.load %arg3[%c0_53, %c0_54] : memref<20x1xf32, #tpu.memory_space<vmem>>, vector<20x1xf32>
    %205 = vector.broadcast %204 : vector<20x1xf32> to vector<20x668xf32>
    %206 = arith.addf %203, %205 : vector<20x668xf32>
    %cst_55 = arith.constant 0.000000e+00 : f32
    %207 = vector.broadcast %cst_55 : f32 to vector<20x668xf32>
    %208 = arith.maximumf %206, %207 : vector<20x668xf32>
    %209 = vector.extract_strided_slice %208 {offsets = [0, 0], sizes = [20, 667], strides = [1, 1]} : vector<20x668xf32> to vector<20x667xf32>
    %210 = vector.extract_strided_slice %208 {offsets = [0, 1], sizes = [20, 667], strides = [1, 1]} : vector<20x668xf32> to vector<20x667xf32>
    %211 = arith.maximumf %209, %210 : vector<20x667xf32>
    %212 = vector.extract_strided_slice %211 {offsets = [0, 0], sizes = [20, 639], strides = [1, 1]} : vector<20x667xf32> to vector<20x639xf32>
    %213 = vector.extract_strided_slice %211 {offsets = [0, 28], sizes = [20, 639], strides = [1, 1]} : vector<20x667xf32> to vector<20x639xf32>
    %214 = arith.maximumf %212, %213 : vector<20x639xf32>
    %215 = arith.truncf %214 : vector<20x639xf32> to vector<20x639xbf16>
    %c0_56 = arith.constant 0 : index
    %c0_57 = arith.constant 0 : index
    %216 = vector.load %arg4[%c0_56, %c0_57] : memref<639x144xbf16, #tpu.memory_space<vmem>>, vector<639x144xbf16>
    %cst_58 = arith.constant dense<0.000000e+00> : vector<20x144xf32>
    %217 = tpu.matmul %215, %216, %cst_58 {dimension_numbers = #tpu.dot_dimension_numbers<[1], [0], [0], [1], [0, 0, 1, 1], [], []>} : vector<20x639xbf16>, vector<639x144xbf16>, vector<20x144xf32> -> vector<20x144xf32>
    %218 = arith.truncf %217 : vector<20x144xf32> to vector<20x144xbf16>
    %cst_59 = arith.constant 0.000000e+00 : f32
    %219 = vector.broadcast %cst_59 : f32 to vector<50x92xf32>
    %220 = vector.extract_strided_slice %218 {offsets = [0, 0], sizes = [20, 92], strides = [1, 1]} : vector<20x144xbf16> to vector<20x92xbf16>
    %c0_60 = arith.constant 0 : index
    %c0_61 = arith.constant 0 : index
    %c0_62 = arith.constant 0 : index
    %221 = vector.load %arg5[%c0_60, %c0_61, %c0_62] : memref<25x50x20xbf16, #tpu.memory_space<vmem>>, vector<1x50x20xbf16>
    %222 = vector.shape_cast %221 : vector<1x50x20xbf16> to vector<50x20xbf16>
    %cst_63 = arith.constant dense<0.000000e+00> : vector<50x92xf32>
    %223 = tpu.matmul %222, %220, %cst_63 {dimension_numbers = #tpu.dot_dimension_numbers<[1], [0], [0], [1], [0, 0, 1, 1], [], []>} : vector<50x20xbf16>, vector<20x92xbf16>, vector<50x92xf32> -> vector<50x92xf32>
    %224 = arith.addf %219, %223 : vector<50x92xf32>
    %225 = vector.extract_strided_slice %218 {offsets = [0, 1], sizes = [20, 92], strides = [1, 1]} : vector<20x144xbf16> to vector<20x92xbf16>
    %c1_64 = arith.constant 1 : index
    %c0_65 = arith.constant 0 : index
    %c0_66 = arith.constant 0 : index
    %226 = vector.load %arg5[%c1_64, %c0_65, %c0_66] : memref<25x50x20xbf16, #tpu.memory_space<vmem>>, vector<1x50x20xbf16>
    %227 = vector.shape_cast %226 : vector<1x50x20xbf16> to vector<50x20xbf16>
    %cst_67 = arith.constant dense<0.000000e+00> : vector<50x92xf32>
    %228 = tpu.matmul %227, %225, %cst_67 {dimension_numbers = #tpu.dot_dimension_numbers<[1], [0], [0], [1], [0, 0, 1, 1], [], []>} : vector<50x20xbf16>, vector<20x92xbf16>, vector<50x92xf32> -> vector<50x92xf32>
    %229 = arith.addf %224, %228 : vector<50x92xf32>
    %230 = vector.extract_strided_slice %218 {offsets = [0, 2], sizes = [20, 92], strides = [1, 1]} : vector<20x144xbf16> to vector<20x92xbf16>
    %c2_68 = arith.constant 2 : index
    %c0_69 = arith.constant 0 : index
    %c0_70 = arith.constant 0 : index
    %231 = vector.load %arg5[%c2_68, %c0_69, %c0_70] : memref<25x50x20xbf16, #tpu.memory_space<vmem>>, vector<1x50x20xbf16>
    %232 = vector.shape_cast %231 : vector<1x50x20xbf16> to vector<50x20xbf16>
    %cst_71 = arith.constant dense<0.000000e+00> : vector<50x92xf32>
    %233 = tpu.matmul %232, %230, %cst_71 {dimension_numbers = #tpu.dot_dimension_numbers<[1], [0], [0], [1], [0, 0, 1, 1], [], []>} : vector<50x20xbf16>, vector<20x92xbf16>, vector<50x92xf32> -> vector<50x92xf32>
    %234 = arith.addf %229, %233 : vector<50x92xf32>
    %235 = vector.extract_strided_slice %218 {offsets = [0, 3], sizes = [20, 92], strides = [1, 1]} : vector<20x144xbf16> to vector<20x92xbf16>
    %c3_72 = arith.constant 3 : index
    %c0_73 = arith.constant 0 : index
    %c0_74 = arith.constant 0 : index
    %236 = vector.load %arg5[%c3_72, %c0_73, %c0_74] : memref<25x50x20xbf16, #tpu.memory_space<vmem>>, vector<1x50x20xbf16>
    %237 = vector.shape_cast %236 : vector<1x50x20xbf16> to vector<50x20xbf16>
    %cst_75 = arith.constant dense<0.000000e+00> : vector<50x92xf32>
    %238 = tpu.matmul %237, %235, %cst_75 {dimension_numbers = #tpu.dot_dimension_numbers<[1], [0], [0], [1], [0, 0, 1, 1], [], []>} : vector<50x20xbf16>, vector<20x92xbf16>, vector<50x92xf32> -> vector<50x92xf32>
    %239 = arith.addf %234, %238 : vector<50x92xf32>
    %240 = vector.extract_strided_slice %218 {offsets = [0, 4], sizes = [20, 92], strides = [1, 1]} : vector<20x144xbf16> to vector<20x92xbf16>
    %c4_76 = arith.constant 4 : index
    %c0_77 = arith.constant 0 : index
    %c0_78 = arith.constant 0 : index
    %241 = vector.load %arg5[%c4_76, %c0_77, %c0_78] : memref<25x50x20xbf16, #tpu.memory_space<vmem>>, vector<1x50x20xbf16>
    %242 = vector.shape_cast %241 : vector<1x50x20xbf16> to vector<50x20xbf16>
    %cst_79 = arith.constant dense<0.000000e+00> : vector<50x92xf32>
    %243 = tpu.matmul %242, %240, %cst_79 {dimension_numbers = #tpu.dot_dimension_numbers<[1], [0], [0], [1], [0, 0, 1, 1], [], []>} : vector<50x20xbf16>, vector<20x92xbf16>, vector<50x92xf32> -> vector<50x92xf32>
    %244 = arith.addf %239, %243 : vector<50x92xf32>
    %245 = vector.extract_strided_slice %218 {offsets = [0, 12], sizes = [20, 92], strides = [1, 1]} : vector<20x144xbf16> to vector<20x92xbf16>
    %c5_80 = arith.constant 5 : index
    %c0_81 = arith.constant 0 : index
    %c0_82 = arith.constant 0 : index
    %246 = vector.load %arg5[%c5_80, %c0_81, %c0_82] : memref<25x50x20xbf16, #tpu.memory_space<vmem>>, vector<1x50x20xbf16>
    %247 = vector.shape_cast %246 : vector<1x50x20xbf16> to vector<50x20xbf16>
    %cst_83 = arith.constant dense<0.000000e+00> : vector<50x92xf32>
    %248 = tpu.matmul %247, %245, %cst_83 {dimension_numbers = #tpu.dot_dimension_numbers<[1], [0], [0], [1], [0, 0, 1, 1], [], []>} : vector<50x20xbf16>, vector<20x92xbf16>, vector<50x92xf32> -> vector<50x92xf32>
    %249 = arith.addf %244, %248 : vector<50x92xf32>
    %250 = vector.extract_strided_slice %218 {offsets = [0, 13], sizes = [20, 92], strides = [1, 1]} : vector<20x144xbf16> to vector<20x92xbf16>
    %c6_84 = arith.constant 6 : index
    %c0_85 = arith.constant 0 : index
    %c0_86 = arith.constant 0 : index
    %251 = vector.load %arg5[%c6_84, %c0_85, %c0_86] : memref<25x50x20xbf16, #tpu.memory_space<vmem>>, vector<1x50x20xbf16>
    %252 = vector.shape_cast %251 : vector<1x50x20xbf16> to vector<50x20xbf16>
    %cst_87 = arith.constant dense<0.000000e+00> : vector<50x92xf32>
    %253 = tpu.matmul %252, %250, %cst_87 {dimension_numbers = #tpu.dot_dimension_numbers<[1], [0], [0], [1], [0, 0, 1, 1], [], []>} : vector<50x20xbf16>, vector<20x92xbf16>, vector<50x92xf32> -> vector<50x92xf32>
    %254 = arith.addf %249, %253 : vector<50x92xf32>
    %255 = vector.extract_strided_slice %218 {offsets = [0, 14], sizes = [20, 92], strides = [1, 1]} : vector<20x144xbf16> to vector<20x92xbf16>
    %c7_88 = arith.constant 7 : index
    %c0_89 = arith.constant 0 : index
    %c0_90 = arith.constant 0 : index
    %256 = vector.load %arg5[%c7_88, %c0_89, %c0_90] : memref<25x50x20xbf16, #tpu.memory_space<vmem>>, vector<1x50x20xbf16>
    %257 = vector.shape_cast %256 : vector<1x50x20xbf16> to vector<50x20xbf16>
    %cst_91 = arith.constant dense<0.000000e+00> : vector<50x92xf32>
    %258 = tpu.matmul %257, %255, %cst_91 {dimension_numbers = #tpu.dot_dimension_numbers<[1], [0], [0], [1], [0, 0, 1, 1], [], []>} : vector<50x20xbf16>, vector<20x92xbf16>, vector<50x92xf32> -> vector<50x92xf32>
    %259 = arith.addf %254, %258 : vector<50x92xf32>
    %260 = vector.extract_strided_slice %218 {offsets = [0, 15], sizes = [20, 92], strides = [1, 1]} : vector<20x144xbf16> to vector<20x92xbf16>
    %c8_92 = arith.constant 8 : index
    %c0_93 = arith.constant 0 : index
    %c0_94 = arith.constant 0 : index
    %261 = vector.load %arg5[%c8_92, %c0_93, %c0_94] : memref<25x50x20xbf16, #tpu.memory_space<vmem>>, vector<1x50x20xbf16>
    %262 = vector.shape_cast %261 : vector<1x50x20xbf16> to vector<50x20xbf16>
    %cst_95 = arith.constant dense<0.000000e+00> : vector<50x92xf32>
    %263 = tpu.matmul %262, %260, %cst_95 {dimension_numbers = #tpu.dot_dimension_numbers<[1], [0], [0], [1], [0, 0, 1, 1], [], []>} : vector<50x20xbf16>, vector<20x92xbf16>, vector<50x92xf32> -> vector<50x92xf32>
    %264 = arith.addf %259, %263 : vector<50x92xf32>
    %265 = vector.extract_strided_slice %218 {offsets = [0, 16], sizes = [20, 92], strides = [1, 1]} : vector<20x144xbf16> to vector<20x92xbf16>
    %c9_96 = arith.constant 9 : index
    %c0_97 = arith.constant 0 : index
    %c0_98 = arith.constant 0 : index
    %266 = vector.load %arg5[%c9_96, %c0_97, %c0_98] : memref<25x50x20xbf16, #tpu.memory_space<vmem>>, vector<1x50x20xbf16>
    %267 = vector.shape_cast %266 : vector<1x50x20xbf16> to vector<50x20xbf16>
    %cst_99 = arith.constant dense<0.000000e+00> : vector<50x92xf32>
    %268 = tpu.matmul %267, %265, %cst_99 {dimension_numbers = #tpu.dot_dimension_numbers<[1], [0], [0], [1], [0, 0, 1, 1], [], []>} : vector<50x20xbf16>, vector<20x92xbf16>, vector<50x92xf32> -> vector<50x92xf32>
    %269 = arith.addf %264, %268 : vector<50x92xf32>
    %270 = vector.extract_strided_slice %218 {offsets = [0, 24], sizes = [20, 92], strides = [1, 1]} : vector<20x144xbf16> to vector<20x92xbf16>
    %c10_100 = arith.constant 10 : index
    %c0_101 = arith.constant 0 : index
    %c0_102 = arith.constant 0 : index
    %271 = vector.load %arg5[%c10_100, %c0_101, %c0_102] : memref<25x50x20xbf16, #tpu.memory_space<vmem>>, vector<1x50x20xbf16>
    %272 = vector.shape_cast %271 : vector<1x50x20xbf16> to vector<50x20xbf16>
    %cst_103 = arith.constant dense<0.000000e+00> : vector<50x92xf32>
    %273 = tpu.matmul %272, %270, %cst_103 {dimension_numbers = #tpu.dot_dimension_numbers<[1], [0], [0], [1], [0, 0, 1, 1], [], []>} : vector<50x20xbf16>, vector<20x92xbf16>, vector<50x92xf32> -> vector<50x92xf32>
    %274 = arith.addf %269, %273 : vector<50x92xf32>
    %275 = vector.extract_strided_slice %218 {offsets = [0, 25], sizes = [20, 92], strides = [1, 1]} : vector<20x144xbf16> to vector<20x92xbf16>
    %c11_104 = arith.constant 11 : index
    %c0_105 = arith.constant 0 : index
    %c0_106 = arith.constant 0 : index
    %276 = vector.load %arg5[%c11_104, %c0_105, %c0_106] : memref<25x50x20xbf16, #tpu.memory_space<vmem>>, vector<1x50x20xbf16>
    %277 = vector.shape_cast %276 : vector<1x50x20xbf16> to vector<50x20xbf16>
    %cst_107 = arith.constant dense<0.000000e+00> : vector<50x92xf32>
    %278 = tpu.matmul %277, %275, %cst_107 {dimension_numbers = #tpu.dot_dimension_numbers<[1], [0], [0], [1], [0, 0, 1, 1], [], []>} : vector<50x20xbf16>, vector<20x92xbf16>, vector<50x92xf32> -> vector<50x92xf32>
    %279 = arith.addf %274, %278 : vector<50x92xf32>
    %280 = vector.extract_strided_slice %218 {offsets = [0, 26], sizes = [20, 92], strides = [1, 1]} : vector<20x144xbf16> to vector<20x92xbf16>
    %c12_108 = arith.constant 12 : index
    %c0_109 = arith.constant 0 : index
    %c0_110 = arith.constant 0 : index
    %281 = vector.load %arg5[%c12_108, %c0_109, %c0_110] : memref<25x50x20xbf16, #tpu.memory_space<vmem>>, vector<1x50x20xbf16>
    %282 = vector.shape_cast %281 : vector<1x50x20xbf16> to vector<50x20xbf16>
    %cst_111 = arith.constant dense<0.000000e+00> : vector<50x92xf32>
    %283 = tpu.matmul %282, %280, %cst_111 {dimension_numbers = #tpu.dot_dimension_numbers<[1], [0], [0], [1], [0, 0, 1, 1], [], []>} : vector<50x20xbf16>, vector<20x92xbf16>, vector<50x92xf32> -> vector<50x92xf32>
    %284 = arith.addf %279, %283 : vector<50x92xf32>
    %285 = vector.extract_strided_slice %218 {offsets = [0, 27], sizes = [20, 92], strides = [1, 1]} : vector<20x144xbf16> to vector<20x92xbf16>
    %c13_112 = arith.constant 13 : index
    %c0_113 = arith.constant 0 : index
    %c0_114 = arith.constant 0 : index
    %286 = vector.load %arg5[%c13_112, %c0_113, %c0_114] : memref<25x50x20xbf16, #tpu.memory_space<vmem>>, vector<1x50x20xbf16>
    %287 = vector.shape_cast %286 : vector<1x50x20xbf16> to vector<50x20xbf16>
    %cst_115 = arith.constant dense<0.000000e+00> : vector<50x92xf32>
    %288 = tpu.matmul %287, %285, %cst_115 {dimension_numbers = #tpu.dot_dimension_numbers<[1], [0], [0], [1], [0, 0, 1, 1], [], []>} : vector<50x20xbf16>, vector<20x92xbf16>, vector<50x92xf32> -> vector<50x92xf32>
    %289 = arith.addf %284, %288 : vector<50x92xf32>
    %290 = vector.extract_strided_slice %218 {offsets = [0, 28], sizes = [20, 92], strides = [1, 1]} : vector<20x144xbf16> to vector<20x92xbf16>
    %c14_116 = arith.constant 14 : index
    %c0_117 = arith.constant 0 : index
    %c0_118 = arith.constant 0 : index
    %291 = vector.load %arg5[%c14_116, %c0_117, %c0_118] : memref<25x50x20xbf16, #tpu.memory_space<vmem>>, vector<1x50x20xbf16>
    %292 = vector.shape_cast %291 : vector<1x50x20xbf16> to vector<50x20xbf16>
    %cst_119 = arith.constant dense<0.000000e+00> : vector<50x92xf32>
    %293 = tpu.matmul %292, %290, %cst_119 {dimension_numbers = #tpu.dot_dimension_numbers<[1], [0], [0], [1], [0, 0, 1, 1], [], []>} : vector<50x20xbf16>, vector<20x92xbf16>, vector<50x92xf32> -> vector<50x92xf32>
    %294 = arith.addf %289, %293 : vector<50x92xf32>
    %295 = vector.extract_strided_slice %218 {offsets = [0, 36], sizes = [20, 92], strides = [1, 1]} : vector<20x144xbf16> to vector<20x92xbf16>
    %c15_120 = arith.constant 15 : index
    %c0_121 = arith.constant 0 : index
    %c0_122 = arith.constant 0 : index
    %296 = vector.load %arg5[%c15_120, %c0_121, %c0_122] : memref<25x50x20xbf16, #tpu.memory_space<vmem>>, vector<1x50x20xbf16>
    %297 = vector.shape_cast %296 : vector<1x50x20xbf16> to vector<50x20xbf16>
    %cst_123 = arith.constant dense<0.000000e+00> : vector<50x92xf32>
    %298 = tpu.matmul %297, %295, %cst_123 {dimension_numbers = #tpu.dot_dimension_numbers<[1], [0], [0], [1], [0, 0, 1, 1], [], []>} : vector<50x20xbf16>, vector<20x92xbf16>, vector<50x92xf32> -> vector<50x92xf32>
    %299 = arith.addf %294, %298 : vector<50x92xf32>
    %300 = vector.extract_strided_slice %218 {offsets = [0, 37], sizes = [20, 92], strides = [1, 1]} : vector<20x144xbf16> to vector<20x92xbf16>
    %c16_124 = arith.constant 16 : index
    %c0_125 = arith.constant 0 : index
    %c0_126 = arith.constant 0 : index
    %301 = vector.load %arg5[%c16_124, %c0_125, %c0_126] : memref<25x50x20xbf16, #tpu.memory_space<vmem>>, vector<1x50x20xbf16>
    %302 = vector.shape_cast %301 : vector<1x50x20xbf16> to vector<50x20xbf16>
    %cst_127 = arith.constant dense<0.000000e+00> : vector<50x92xf32>
    %303 = tpu.matmul %302, %300, %cst_127 {dimension_numbers = #tpu.dot_dimension_numbers<[1], [0], [0], [1], [0, 0, 1, 1], [], []>} : vector<50x20xbf16>, vector<20x92xbf16>, vector<50x92xf32> -> vector<50x92xf32>
    %304 = arith.addf %299, %303 : vector<50x92xf32>
    %305 = vector.extract_strided_slice %218 {offsets = [0, 38], sizes = [20, 92], strides = [1, 1]} : vector<20x144xbf16> to vector<20x92xbf16>
    %c17_128 = arith.constant 17 : index
    %c0_129 = arith.constant 0 : index
    %c0_130 = arith.constant 0 : index
    %306 = vector.load %arg5[%c17_128, %c0_129, %c0_130] : memref<25x50x20xbf16, #tpu.memory_space<vmem>>, vector<1x50x20xbf16>
    %307 = vector.shape_cast %306 : vector<1x50x20xbf16> to vector<50x20xbf16>
    %cst_131 = arith.constant dense<0.000000e+00> : vector<50x92xf32>
    %308 = tpu.matmul %307, %305, %cst_131 {dimension_numbers = #tpu.dot_dimension_numbers<[1], [0], [0], [1], [0, 0, 1, 1], [], []>} : vector<50x20xbf16>, vector<20x92xbf16>, vector<50x92xf32> -> vector<50x92xf32>
    %309 = arith.addf %304, %308 : vector<50x92xf32>
    %310 = vector.extract_strided_slice %218 {offsets = [0, 39], sizes = [20, 92], strides = [1, 1]} : vector<20x144xbf16> to vector<20x92xbf16>
    %c18_132 = arith.constant 18 : index
    %c0_133 = arith.constant 0 : index
    %c0_134 = arith.constant 0 : index
    %311 = vector.load %arg5[%c18_132, %c0_133, %c0_134] : memref<25x50x20xbf16, #tpu.memory_space<vmem>>, vector<1x50x20xbf16>
    %312 = vector.shape_cast %311 : vector<1x50x20xbf16> to vector<50x20xbf16>
    %cst_135 = arith.constant dense<0.000000e+00> : vector<50x92xf32>
    %313 = tpu.matmul %312, %310, %cst_135 {dimension_numbers = #tpu.dot_dimension_numbers<[1], [0], [0], [1], [0, 0, 1, 1], [], []>} : vector<50x20xbf16>, vector<20x92xbf16>, vector<50x92xf32> -> vector<50x92xf32>
    %314 = arith.addf %309, %313 : vector<50x92xf32>
    %315 = vector.extract_strided_slice %218 {offsets = [0, 40], sizes = [20, 92], strides = [1, 1]} : vector<20x144xbf16> to vector<20x92xbf16>
    %c19_136 = arith.constant 19 : index
    %c0_137 = arith.constant 0 : index
    %c0_138 = arith.constant 0 : index
    %316 = vector.load %arg5[%c19_136, %c0_137, %c0_138] : memref<25x50x20xbf16, #tpu.memory_space<vmem>>, vector<1x50x20xbf16>
    %317 = vector.shape_cast %316 : vector<1x50x20xbf16> to vector<50x20xbf16>
    %cst_139 = arith.constant dense<0.000000e+00> : vector<50x92xf32>
    %318 = tpu.matmul %317, %315, %cst_139 {dimension_numbers = #tpu.dot_dimension_numbers<[1], [0], [0], [1], [0, 0, 1, 1], [], []>} : vector<50x20xbf16>, vector<20x92xbf16>, vector<50x92xf32> -> vector<50x92xf32>
    %319 = arith.addf %314, %318 : vector<50x92xf32>
    %320 = vector.extract_strided_slice %218 {offsets = [0, 48], sizes = [20, 92], strides = [1, 1]} : vector<20x144xbf16> to vector<20x92xbf16>
    %c20_140 = arith.constant 20 : index
    %c0_141 = arith.constant 0 : index
    %c0_142 = arith.constant 0 : index
    %321 = vector.load %arg5[%c20_140, %c0_141, %c0_142] : memref<25x50x20xbf16, #tpu.memory_space<vmem>>, vector<1x50x20xbf16>
    %322 = vector.shape_cast %321 : vector<1x50x20xbf16> to vector<50x20xbf16>
    %cst_143 = arith.constant dense<0.000000e+00> : vector<50x92xf32>
    %323 = tpu.matmul %322, %320, %cst_143 {dimension_numbers = #tpu.dot_dimension_numbers<[1], [0], [0], [1], [0, 0, 1, 1], [], []>} : vector<50x20xbf16>, vector<20x92xbf16>, vector<50x92xf32> -> vector<50x92xf32>
    %324 = arith.addf %319, %323 : vector<50x92xf32>
    %325 = vector.extract_strided_slice %218 {offsets = [0, 49], sizes = [20, 92], strides = [1, 1]} : vector<20x144xbf16> to vector<20x92xbf16>
    %c21_144 = arith.constant 21 : index
    %c0_145 = arith.constant 0 : index
    %c0_146 = arith.constant 0 : index
    %326 = vector.load %arg5[%c21_144, %c0_145, %c0_146] : memref<25x50x20xbf16, #tpu.memory_space<vmem>>, vector<1x50x20xbf16>
    %327 = vector.shape_cast %326 : vector<1x50x20xbf16> to vector<50x20xbf16>
    %cst_147 = arith.constant dense<0.000000e+00> : vector<50x92xf32>
    %328 = tpu.matmul %327, %325, %cst_147 {dimension_numbers = #tpu.dot_dimension_numbers<[1], [0], [0], [1], [0, 0, 1, 1], [], []>} : vector<50x20xbf16>, vector<20x92xbf16>, vector<50x92xf32> -> vector<50x92xf32>
    %329 = arith.addf %324, %328 : vector<50x92xf32>
    %330 = vector.extract_strided_slice %218 {offsets = [0, 50], sizes = [20, 92], strides = [1, 1]} : vector<20x144xbf16> to vector<20x92xbf16>
    %c22_148 = arith.constant 22 : index
    %c0_149 = arith.constant 0 : index
    %c0_150 = arith.constant 0 : index
    %331 = vector.load %arg5[%c22_148, %c0_149, %c0_150] : memref<25x50x20xbf16, #tpu.memory_space<vmem>>, vector<1x50x20xbf16>
    %332 = vector.shape_cast %331 : vector<1x50x20xbf16> to vector<50x20xbf16>
    %cst_151 = arith.constant dense<0.000000e+00> : vector<50x92xf32>
    %333 = tpu.matmul %332, %330, %cst_151 {dimension_numbers = #tpu.dot_dimension_numbers<[1], [0], [0], [1], [0, 0, 1, 1], [], []>} : vector<50x20xbf16>, vector<20x92xbf16>, vector<50x92xf32> -> vector<50x92xf32>
    %334 = arith.addf %329, %333 : vector<50x92xf32>
    %335 = vector.extract_strided_slice %218 {offsets = [0, 51], sizes = [20, 92], strides = [1, 1]} : vector<20x144xbf16> to vector<20x92xbf16>
    %c23_152 = arith.constant 23 : index
    %c0_153 = arith.constant 0 : index
    %c0_154 = arith.constant 0 : index
    %336 = vector.load %arg5[%c23_152, %c0_153, %c0_154] : memref<25x50x20xbf16, #tpu.memory_space<vmem>>, vector<1x50x20xbf16>
    %337 = vector.shape_cast %336 : vector<1x50x20xbf16> to vector<50x20xbf16>
    %cst_155 = arith.constant dense<0.000000e+00> : vector<50x92xf32>
    %338 = tpu.matmul %337, %335, %cst_155 {dimension_numbers = #tpu.dot_dimension_numbers<[1], [0], [0], [1], [0, 0, 1, 1], [], []>} : vector<50x20xbf16>, vector<20x92xbf16>, vector<50x92xf32> -> vector<50x92xf32>
    %339 = arith.addf %334, %338 : vector<50x92xf32>
    %340 = vector.extract_strided_slice %218 {offsets = [0, 52], sizes = [20, 92], strides = [1, 1]} : vector<20x144xbf16> to vector<20x92xbf16>
    %c24_156 = arith.constant 24 : index
    %c0_157 = arith.constant 0 : index
    %c0_158 = arith.constant 0 : index
    %341 = vector.load %arg5[%c24_156, %c0_157, %c0_158] : memref<25x50x20xbf16, #tpu.memory_space<vmem>>, vector<1x50x20xbf16>
    %342 = vector.shape_cast %341 : vector<1x50x20xbf16> to vector<50x20xbf16>
    %cst_159 = arith.constant dense<0.000000e+00> : vector<50x92xf32>
    %343 = tpu.matmul %342, %340, %cst_159 {dimension_numbers = #tpu.dot_dimension_numbers<[1], [0], [0], [1], [0, 0, 1, 1], [], []>} : vector<50x20xbf16>, vector<20x92xbf16>, vector<50x92xf32> -> vector<50x92xf32>
    %344 = arith.addf %339, %343 : vector<50x92xf32>
    %c0_160 = arith.constant 0 : index
    %c0_161 = arith.constant 0 : index
    %345 = vector.load %arg6[%c0_160, %c0_161] : memref<50x1xf32, #tpu.memory_space<vmem>>, vector<50x1xf32>
    %346 = vector.broadcast %345 : vector<50x1xf32> to vector<50x92xf32>
    %347 = arith.addf %344, %346 : vector<50x92xf32>
    %cst_162 = arith.constant 0.000000e+00 : f32
    %348 = vector.broadcast %cst_162 : f32 to vector<50x92xf32>
    %349 = arith.maximumf %347, %348 : vector<50x92xf32>
    %350 = vector.extract_strided_slice %349 {offsets = [0, 0], sizes = [50, 91], strides = [1, 1]} : vector<50x92xf32> to vector<50x91xf32>
    %351 = vector.extract_strided_slice %349 {offsets = [0, 1], sizes = [50, 91], strides = [1, 1]} : vector<50x92xf32> to vector<50x91xf32>
    %352 = arith.maximumf %350, %351 : vector<50x91xf32>
    %353 = vector.extract_strided_slice %352 {offsets = [0, 0], sizes = [50, 79], strides = [1, 1]} : vector<50x91xf32> to vector<50x79xf32>
    %354 = vector.extract_strided_slice %352 {offsets = [0, 12], sizes = [50, 79], strides = [1, 1]} : vector<50x91xf32> to vector<50x79xf32>
    %355 = arith.maximumf %353, %354 : vector<50x79xf32>
    %356 = arith.truncf %355 : vector<50x79xf32> to vector<50x79xbf16>
    %c0_163 = arith.constant 0 : index
    %c0_164 = arith.constant 0 : index
    %357 = vector.load %arg7[%c0_163, %c0_164] : memref<79x16xbf16, #tpu.memory_space<vmem>>, vector<79x16xbf16>
    %cst_165 = arith.constant dense<0.000000e+00> : vector<50x16xf32>
    %358 = tpu.matmul %356, %357, %cst_165 {dimension_numbers = #tpu.dot_dimension_numbers<[1], [0], [0], [1], [0, 0, 1, 1], [], []>} : vector<50x79xbf16>, vector<79x16xbf16>, vector<50x16xf32> -> vector<50x16xf32>
    %359 = arith.truncf %358 : vector<50x16xf32> to vector<50x16xbf16>
    %c0_166 = arith.constant 0 : index
    %c0_167 = arith.constant 0 : index
    %c0_168 = arith.constant 0 : index
    %360 = vector.load %arg8[%c0_166, %c0_167, %c0_168] : memref<1x50x16xbf16, #tpu.memory_space<vmem>>, vector<1x50x16xbf16>
    %361 = vector.shape_cast %360 : vector<1x50x16xbf16> to vector<50x16xbf16>
    %362 = vector.shape_cast %359 : vector<50x16xbf16> to vector<1x50x16xbf16>
    tpu.vector_store %arg8[%c0_166, %c0_167, %c0_168], %362 {strides = array<i32>} : memref<1x50x16xbf16, #tpu.memory_space<vmem>>, vector<1x50x16xbf16>,
    return
  }
  func.func @transform_0(%arg0: i32) -> (i32, i32, i32) {
    %c0_i32 = arith.constant 0 : i32
    %c0_i32_0 = arith.constant 0 : i32
    %c0_i32_1 = arith.constant 0 : i32
    return %arg0, %c0_i32, %c0_i32_0 : i32, i32, i32
  }
  func.func @transform_1(%arg0: i32) -> (i32, i32, i32) {
    %c0_i32 = arith.constant 0 : i32
    %c0_i32_0 = arith.constant 0 : i32
    %c0_i32_1 = arith.constant 0 : i32
    %c0_i32_2 = arith.constant 0 : i32
    return %c0_i32, %c0_i32_0, %c0_i32_1 : i32, i32, i32
  }
  func.func @transform_2(%arg0: i32) -> (i32, i32) {
    %c0_i32 = arith.constant 0 : i32
    %c0_i32_0 = arith.constant 0 : i32
    %c0_i32_1 = arith.constant 0 : i32
    return %c0_i32, %c0_i32_0 : i32, i32
  }
  func.func @transform_3(%arg0: i32) -> (i32, i32) {
    %c0_i32 = arith.constant 0 : i32
    %c0_i32_0 = arith.constant 0 : i32
    %c0_i32_1 = arith.constant 0 : i32
    return %c0_i32, %c0_i32_0 : i32, i32
  }
  func.func @transform_4(%arg0: i32) -> (i32, i32, i32) {
    %c0_i32 = arith.constant 0 : i32
    %c0_i32_0 = arith.constant 0 : i32
    %c0_i32_1 = arith.constant 0 : i32
    %c0_i32_2 = arith.constant 0 : i32
    return %c0_i32, %c0_i32_0, %c0_i32_1 : i32, i32, i32
  }
  func.func @transform_5(%arg0: i32) -> (i32, i32) {
    %c0_i32 = arith.constant 0 : i32
    %c0_i32_0 = arith.constant 0 : i32
    %c0_i32_1 = arith.constant 0 : i32
    return %c0_i32, %c0_i32_0 : i32, i32
  }
  func.func @transform_6(%arg0: i32) -> (i32, i32) {
    %c0_i32 = arith.constant 0 : i32
    %c0_i32_0 = arith.constant 0 : i32
    %c0_i32_1 = arith.constant 0 : i32
    return %c0_i32, %c0_i32_0 : i32, i32
  }
  func.func @transform_7(%arg0: i32) -> (i32, i32, i32) {
    %c0_i32 = arith.constant 0 : i32
    %c0_i32_0 = arith.constant 0 : i32
    %c0_i32_1 = arith.constant 0 : i32
    return %arg0, %c0_i32, %c0_i32_0 : i32, i32, i32
  }
}

module attributes {stable_mosaic.version = 11 : i64} {
  func.func @_fc_head_kernel(%arg0: i32, %arg1: memref<2x800xbf16, #tpu.memory_space<vmem>>, %arg2: memref<800x500xbf16, #tpu.memory_space<vmem>>, %arg3: memref<1x500xf32, #tpu.memory_space<vmem>>, %arg4: memref<500x10xbf16, #tpu.memory_space<vmem>>, %arg5: memref<1x10xf32, #tpu.memory_space<vmem>>, %arg6: memref<2x10xf32, #tpu.memory_space<vmem>>) attributes {dimension_semantics = [#tpu.dimension_semantics<parallel>], iteration_bounds = array<i64: 1>, scalar_prefetch = 0 : i64, scratch_operands = 0 : i64, tpu.core_type = #tpu.core_type<tc>, window_params = [{transform_indices = @transform_0, window_bounds = array<i64: 2, 800>}, {pipeline_mode = #tpu.pipeline_mode<synchronous>, transform_indices = @transform_1, window_bounds = array<i64: 800, 500>}, {pipeline_mode = #tpu.pipeline_mode<synchronous>, transform_indices = @transform_2, window_bounds = array<i64: 1, 500>}, {pipeline_mode = #tpu.pipeline_mode<synchronous>, transform_indices = @transform_3, window_bounds = array<i64: 500, 10>}, {pipeline_mode = #tpu.pipeline_mode<synchronous>, transform_indices = @transform_4, window_bounds = array<i64: 1, 10>}, {transform_indices = @transform_5, window_bounds = array<i64: 2, 10>}]} {
    %c0 = arith.constant 0 : index
    %c0_0 = arith.constant 0 : index
    %0 = vector.load %arg1[%c0, %c0_0] : memref<2x800xbf16, #tpu.memory_space<vmem>>, vector<2x800xbf16>
    %c0_1 = arith.constant 0 : index
    %c0_2 = arith.constant 0 : index
    %1 = vector.load %arg2[%c0_1, %c0_2] : memref<800x500xbf16, #tpu.memory_space<vmem>>, vector<800x500xbf16>
    %cst = arith.constant dense<0.000000e+00> : vector<2x500xf32>
    %2 = tpu.matmul %0, %1, %cst {dimension_numbers = #tpu.dot_dimension_numbers<[1], [0], [0], [1], [0, 0, 1, 1], [], []>} : vector<2x800xbf16>, vector<800x500xbf16>, vector<2x500xf32> -> vector<2x500xf32>
    %c0_3 = arith.constant 0 : index
    %c0_4 = arith.constant 0 : index
    %3 = vector.load %arg3[%c0_3, %c0_4] : memref<1x500xf32, #tpu.memory_space<vmem>>, vector<1x500xf32>
    %4 = vector.broadcast %3 : vector<1x500xf32> to vector<2x500xf32>
    %5 = arith.addf %2, %4 : vector<2x500xf32>
    %cst_5 = arith.constant 0.000000e+00 : f32
    %6 = vector.broadcast %cst_5 : f32 to vector<2x500xf32>
    %7 = arith.maximumf %5, %6 : vector<2x500xf32>
    %8 = arith.truncf %7 : vector<2x500xf32> to vector<2x500xbf16>
    %c0_6 = arith.constant 0 : index
    %c0_7 = arith.constant 0 : index
    %9 = vector.load %arg4[%c0_6, %c0_7] : memref<500x10xbf16, #tpu.memory_space<vmem>>, vector<500x10xbf16>
    %cst_8 = arith.constant dense<0.000000e+00> : vector<2x10xf32>
    %10 = tpu.matmul %8, %9, %cst_8 {dimension_numbers = #tpu.dot_dimension_numbers<[1], [0], [0], [1], [0, 0, 1, 1], [], []>} : vector<2x500xbf16>, vector<500x10xbf16>, vector<2x10xf32> -> vector<2x10xf32>
    %c0_9 = arith.constant 0 : index
    %c0_10 = arith.constant 0 : index
    %11 = vector.load %arg5[%c0_9, %c0_10] : memref<1x10xf32, #tpu.memory_space<vmem>>, vector<1x10xf32>
    %12 = vector.broadcast %11 : vector<1x10xf32> to vector<2x10xf32>
    %13 = arith.addf %10, %12 : vector<2x10xf32>
    %cst_11 = arith.constant dense<0xFF800000> : vector<2xf32>
    %14 = vector.multi_reduction <maximumf>, %13, %cst_11 [1] : vector<2x10xf32> to vector<2xf32>
    %15 = vector.shape_cast %14 : vector<2xf32> to vector<2x1xf32>
    %16 = vector.broadcast %15 : vector<2x1xf32> to vector<2x10xf32>
    %17 = arith.subf %13, %16 : vector<2x10xf32>
    %18 = math.exp %17 : vector<2x10xf32>
    %cst_12 = arith.constant dense<0.000000e+00> : vector<2xf32>
    %19 = vector.multi_reduction <add>, %18, %cst_12 [1] : vector<2x10xf32> to vector<2xf32>
    %20 = vector.shape_cast %19 : vector<2xf32> to vector<2x1xf32>
    %21 = math.log %20 : vector<2x1xf32>
    %22 = arith.addf %15, %21 : vector<2x1xf32>
    %23 = vector.broadcast %22 : vector<2x1xf32> to vector<2x10xf32>
    %24 = arith.subf %13, %23 : vector<2x10xf32>
    %c0_13 = arith.constant 0 : index
    %c0_14 = arith.constant 0 : index
    %25 = vector.load %arg6[%c0_13, %c0_14] : memref<2x10xf32, #tpu.memory_space<vmem>>, vector<2x10xf32>
    tpu.vector_store %arg6[%c0_13, %c0_14], %24 {strides = array<i32>} : memref<2x10xf32, #tpu.memory_space<vmem>>, vector<2x10xf32>,
    return
  }
  func.func @transform_0(%arg0: i32) -> (i32, i32) {
    %c0_i32 = arith.constant 0 : i32
    %c0_i32_0 = arith.constant 0 : i32
    return %arg0, %c0_i32 : i32, i32
  }
  func.func @transform_1(%arg0: i32) -> (i32, i32) {
    %c0_i32 = arith.constant 0 : i32
    %c0_i32_0 = arith.constant 0 : i32
    %c0_i32_1 = arith.constant 0 : i32
    return %c0_i32, %c0_i32_0 : i32, i32
  }
  func.func @transform_2(%arg0: i32) -> (i32, i32) {
    %c0_i32 = arith.constant 0 : i32
    %c0_i32_0 = arith.constant 0 : i32
    %c0_i32_1 = arith.constant 0 : i32
    return %c0_i32, %c0_i32_0 : i32, i32
  }
  func.func @transform_3(%arg0: i32) -> (i32, i32) {
    %c0_i32 = arith.constant 0 : i32
    %c0_i32_0 = arith.constant 0 : i32
    %c0_i32_1 = arith.constant 0 : i32
    return %c0_i32, %c0_i32_0 : i32, i32
  }
  func.func @transform_4(%arg0: i32) -> (i32, i32) {
    %c0_i32 = arith.constant 0 : i32
    %c0_i32_0 = arith.constant 0 : i32
    %c0_i32_1 = arith.constant 0 : i32
    return %c0_i32, %c0_i32_0 : i32, i32
  }
  func.func @transform_5(%arg0: i32) -> (i32, i32) {
    %c0_i32 = arith.constant 0 : i32
    %c0_i32_0 = arith.constant 0 : i32
    return %arg0, %c0_i32 : i32, i32
  }
}

</mosaic_0001>

<llo_original>
// kernel: cnn_forward.3
$region0: #{cnn_forward.3}
  #allocation0 [shape = 'u32[]', space=smem, size = 0x4, offset = 0x4, fixed_abs, tag = 'smem constant byte address 0x4 - core index']
  #allocation1 [shape = 'u32[144,128]{1,0:T(1,128)}', space=vmem, size = 0x12000, scoped, tag = 'internal scratch']
  %s0 = inlined_call_operand.vmem [shape: bf16[2,800], index: 0, kind: input, shape index: {}]
  %s1 = inlined_call_operand.vmem [shape: bf16[800,500], index: 1, kind: input, shape index: {}]
  %s2 = inlined_call_operand.vmem [shape: f32[1,500], index: 2, kind: input, shape index: {}]
  %s3 = inlined_call_operand.vmem [shape: bf16[500,10], index: 3, kind: input, shape index: {}]
  %s4 = inlined_call_operand.vmem [shape: f32[1,10], index: 4, kind: input, shape index: {}]
  %s5 = inlined_call_operand.hbm [shape: f32[2,10], index: 5, kind: output, shape index: {}]
  %s6 = sld [smem:[#allocation0]]
  $region30: #{cnn_forward.3} parent=0
    _
  %s8 = ssub.s32 1, %s6
  %s9 = scalar_select 0, %s8, %s6
  $region1: #{cnn_forward.3} parent=0
    #allocation2 [shape = 'u8[1024]{0}', space=vmem, size = 0x400, scoped, tag = 'output window, operand 0, single buffered']
    #allocation3 [shape = 's32[1]{0}', space=sflag, size = 0x4, scoped, tag = 'scoped memory for cnn_forward.3']
    %10 = vsyncpa [#allocation3], 0
    // Predicated region
    $region2: #{cnn_forward.3} parent=1 // pred_check
      _
    $region3: #{cnn_forward.3} parent=1 // pred_check_branch
      %12 = sbr.rel (0) target = $region5
    $region4: #{cnn_forward.3} parent=1 // pred_region
      _
    $region5: #{cnn_forward.3} parent=1 // pred_fallthru
      _
    // Predicated region
    $region6: #{cnn_forward.3} parent=1 // pred_check
      _
    $region7: #{cnn_forward.3} parent=1 // pred_check_branch
      %14 = sbr.rel (0) target = $region9
    $region8: #{cnn_forward.3} parent=1 // pred_region
      _
    $region9: #{cnn_forward.3} parent=1 // pred_fallthru
      _
    // Predicated region
    $region10: #{cnn_forward.3} parent=1 // pred_check
      _
    $region11: #{cnn_forward.3} parent=1 // pred_check_branch
      %16 = sbr.rel (0) target = $region13
    $region12: #{cnn_forward.3} parent=1 // pred_region
      _
    $region13: #{cnn_forward.3} parent=1 // pred_fallthru
      _
    // Predicated region
    $region14: #{cnn_forward.3} parent=1 // pred_check
      _
    $region15: #{cnn_forward.3} parent=1 // pred_check_branch
      %18 = sbr.rel (0) target = $region17
    $region16: #{cnn_forward.3} parent=1 // pred_region
      _
    $region17: #{cnn_forward.3} parent=1 // pred_fallthru
      _
    // Predicated region
    $region18: #{cnn_forward.3} parent=1 // pred_check
      _
    $region19: #{cnn_forward.3} parent=1 // pred_check_branch
      %20 = sbr.rel (0) target = $region21
    $region20: #{cnn_forward.3} parent=1 // pred_region
      _
    $region21: #{cnn_forward.3} parent=1 // pred_fallthru
      _
    %v22 = vld [vmem:[%s0] sm:$0x7f]
    %v23 = vld [vmem:[%s1] sm:$0xff]
    %v24 = vld [vmem:[%s1 + $0x8] sm:$0xff]
    %v25 = vld [vmem:[%s1 + $0x10] sm:$0xff]
    %v26 = vld [vmem:[%s1 + $0x18] sm:$0xff]
    %v27 = vld [vmem:[%s1 + $0x20] sm:$0xff]
    %v28 = vld [vmem:[%s1 + $0x28] sm:$0xff]
    %v29 = vld [vmem:[%s1 + $0x30] sm:$0xff]
    %v30 = vld [vmem:[%s1 + $0x38] sm:$0xff]
    %v31 = vld [vmem:[%s1 + $0x40] sm:$0xff]
    %v32 = vld [vmem:[%s1 + $0x48] sm:$0xff]
    %v33 = vld [vmem:[%s1 + $0x50] sm:$0xff]
    %v34 = vld [vmem:[%s1 + $0x58] sm:$0xff]
    %v35 = vld [vmem:[%s1 + $0x60] sm:$0xff]
    %v36 = vld [vmem:[%s1 + $0x68] sm:$0xff]
    %v37 = vld [vmem:[%s1 + $0x70] sm:$0xff]
    %v38 = vld [vmem:[%s1 + $0x78] sm:$0xff]
    %v39 = vld [vmem:[%s1 + $0x80] sm:$0xff]
    %v40 = vld [vmem:[%s1 + $0x88] sm:$0xff]
    %v41 = vld [vmem:[%s1 + $0x90] sm:$0xff]
    %v42 = vld [vmem:[%s1 + $0x98] sm:$0xff]
    %v43 = vld [vmem:[%s1 + $0xa0] sm:$0xff]
    %v44 = vld [vmem:[%s1 + $0xa8] sm:$0xff]
    %v45 = vld [vmem:[%s1 + $0xb0] sm:$0xff]
    %v46 = vld [vmem:[%s1 + $0xb8] sm:$0xff]
    %v47 = vld [vmem:[%s1 + $0xc0] sm:$0xff]
    %v48 = vld [vmem:[%s1 + $0xc8] sm:$0xff]
    %v49 = vld [vmem:[%s1 + $0xd0] sm:$0xff]
    %v50 = vld [vmem:[%s1 + $0xd8] sm:$0xff]
    %v51 = vld [vmem:[%s1 + $0xe0] sm:$0xff]
    %v52 = vld [vmem:[%s1 + $0xe8] sm:$0xff]
    %v53 = vld [vmem:[%s1 + $0xf0] sm:$0xff]
    %v54 = vld [vmem:[%s1 + $0xf8] sm:$0xff]
    %v55 = vld [vmem:[%s1 + $0x100] sm:$0xff]
    %v56 = vld [vmem:[%s1 + $0x108] sm:$0xff]
    %v57 = vld [vmem:[%s1 + $0x110] sm:$0xff]
    %v58 = vld [vmem:[%s1 + $0x118] sm:$0xff]
    %v59 = vld [vmem:[%s1 + $0x120] sm:$0xff]
    %v60 = vld [vmem:[%s1 + $0x128] sm:$0xff]
    %v61 = vld [vmem:[%s1 + $0x130] sm:$0xff]
    %v62 = vld [vmem:[%s1 + $0x138] sm:$0xff]
    %v63 = vld [vmem:[%s1 + $0x140] sm:$0xff]
    %v64 = vld [vmem:[%s1 + $0x148] sm:$0xff]
    %v65 = vld [vmem:[%s1 + $0x150] sm:$0xff]
    %v66 = vld [vmem:[%s1 + $0x158] sm:$0xff]
    %v67 = vld [vmem:[%s1 + $0x160] sm:$0xff]
    %v68 = vld [vmem:[%s1 + $0x168] sm:$0xff]
    %v69 = vld [vmem:[%s1 + $0x170] sm:$0xff]
    %v70 = vld [vmem:[%s1 + $0x178] sm:$0xff]
    %v71 = vld [vmem:[%s1 + $0x180] sm:$0xff]
    %v72 = vld [vmem:[%s1 + $0x188] sm:$0xff]
    %v73 = vld [vmem:[%s1 + $0x190] sm:$0xff]
    %v74 = vld [vmem:[%s1 + $0x198] sm:$0xff]
    %v75 = vld [vmem:[%s1 + $0x1a0] sm:$0xff]
    %v76 = vld [vmem:[%s1 + $0x1a8] sm:$0xff]
    %v77 = vld [vmem:[%s1 + $0x1b0] sm:$0xff]
    %v78 = vld [vmem:[%s1 + $0x1b8] sm:$0xff]
    %v79 = vld [vmem:[%s1 + $0x1c0] sm:$0xff]
    %v80 = vld [vmem:[%s1 + $0x1c8] sm:$0xff]
    %v81 = vld [vmem:[%s1 + $0x1d0] sm:$0xff]
    %v82 = vld [vmem:[%s1 + $0x1d8] sm:$0xff]
    %v83 = vld [vmem:[%s1 + $0x1e0] sm:$0xff]
    %v84 = vld [vmem:[%s1 + $0x1e8] sm:$0xff]
    %v85 = vld [vmem:[%s1 + $0x1f0] sm:$0xff]
    %v86 = vld [vmem:[%s1 + $0x1f8] sm:$0xff]
    %v87 = vld [vmem:[%s1 + $0x200] sm:$0xff]
    %v88 = vld [vmem:[%s1 + $0x208] sm:$0xff]
    %v89 = vld [vmem:[%s1 + $0x210] sm:$0xff]
    %v90 = vld [vmem:[%s1 + $0x218] sm:$0xff]
    %v91 = vld [vmem:[%s1 + $0x220] sm:$0xff]
    %v92 = vld [vmem:[%s1 + $0x228] sm:$0xff]
    %v93 = vld [vmem:[%s1 + $0x230] sm:$0xff]
    %v94 = vld [vmem:[%s1 + $0x238] sm:$0xff]
    %v95 = vld [vmem:[%s1 + $0x240] sm:$0xff]
    %v96 = vld [vmem:[%s1 + $0x248] sm:$0xff]
    %v97 = vld [vmem:[%s1 + $0x250] sm:$0xff]
    %v98 = vld [vmem:[%s1 + $0x258] sm:$0xff]
    %v99 = vld [vmem:[%s1 + $0x260] sm:$0xff]
    %v100 = vld [vmem:[%s1 + $0x268] sm:$0xff]
    %v101 = vld [vmem:[%s1 + $0x270] sm:$0xff]
    %v102 = vld [vmem:[%s1 + $0x278] sm:$0xff]
    %v103 = vld [vmem:[%s1 + $0x280] sm:$0xff]
    %v104 = vld [vmem:[%s1 + $0x288] sm:$0xff]
    %v105 = vld [vmem:[%s1 + $0x290] sm:$0xff]
    %v106 = vld [vmem:[%s1 + $0x298] sm:$0xff]
    %v107 = vld [vmem:[%s1 + $0x2a0] sm:$0xff]
    %v108 = vld [vmem:[%s1 + $0x2a8] sm:$0xff]
    %v109 = vld [vmem:[%s1 + $0x2b0] sm:$0xff]
    %v110 = vld [vmem:[%s1 + $0x2b8] sm:$0xff]
    %v111 = vld [vmem:[%s1 + $0x2c0] sm:$0xff]
    %v112 = vld [vmem:[%s1 + $0x2c8] sm:$0xff]
    %v113 = vld [vmem:[%s1 + $0x2d0] sm:$0xff]
    %v114 = vld [vmem:[%s1 + $0x2d8] sm:$0xff]
    %v115 = vld [vmem:[%s1 + $0x2e0] sm:$0xff]
    %v116 = vld [vmem:[%s1 + $0x2e8] sm:$0xff]
    %v117 = vld [vmem:[%s1 + $0x2f0] sm:$0xff]
    %v118 = vld [vmem:[%s1 + $0x2f8] sm:$0xff]
    %v119 = vld [vmem:[%s1 + $0x300] sm:$0xff]
    %v120 = vld [vmem:[%s1 + $0x308] sm:$0xff]
    %v121 = vld [vmem:[%s1 + $0x310] sm:$0xff]
    %v122 = vld [vmem:[%s1 + $0x318] sm:$0xff]
    %v123 = vld [vmem:[%s1 + $0x320] sm:$0xff]
    %v124 = vld [vmem:[%s1 + $0x328] sm:$0xff]
    %v125 = vld [vmem:[%s1 + $0x330] sm:$0xff]
    %v126 = vld [vmem:[%s1 + $0x338] sm:$0xff]
    %v127 = vld [vmem:[%s1 + $0x340] sm:$0xff]
    %v128 = vld [vmem:[%s1 + $0x348] sm:$0xff]
    %v129 = vld [vmem:[%s1 + $0x350] sm:$0xff]
    %v130 = vld [vmem:[%s1 + $0x358] sm:$0xff]
    %v131 = vld [vmem:[%s1 + $0x360] sm:$0xff]
    %v132 = vld [vmem:[%s1 + $0x368] sm:$0xff]
    %v133 = vld [vmem:[%s1 + $0x370] sm:$0xff]
    %v134 = vld [vmem:[%s1 + $0x378] sm:$0xff]
    %v135 = vld [vmem:[%s1 + $0x380] sm:$0xff]
    %v136 = vld [vmem:[%s1 + $0x388] sm:$0xff]
    %v137 = vld [vmem:[%s1 + $0x390] sm:$0xff]
    %v138 = vld [vmem:[%s1 + $0x398] sm:$0xff]
    %v139 = vld [vmem:[%s1 + $0x3a0] sm:$0xff]
    %v140 = vld [vmem:[%s1 + $0x3a8] sm:$0xff]
    %v141 = vld [vmem:[%s1 + $0x3b0] sm:$0xff]
    %v142 = vld [vmem:[%s1 + $0x3b8] sm:$0xff]
    %v143 = vld [vmem:[%s1 + $0x3c0] sm:$0xff]
    %v144 = vld [vmem:[%s1 + $0x3c8] sm:$0xff]
    %v145 = vld [vmem:[%s1 + $0x3d0] sm:$0xff]
    %v146 = vld [vmem:[%s1 + $0x3d8] sm:$0xff]
    %v147 = vld [vmem:[%s1 + $0x3e0] sm:$0xff]
    %v148 = vld [vmem:[%s1 + $0x3e8] sm:$0xff]
    %v149 = vld [vmem:[%s1 + $0x3f0] sm:$0xff]
    %v150 = vld [vmem:[%s1 + $0x3f8] sm:$0xff]
    %v151 = vld [vmem:[%s1 + $0x400] sm:$0xff]
    %v152 = vld [vmem:[%s1 + $0x408] sm:$0xff]
    %v153 = vld [vmem:[%s1 + $0x410] sm:$0xff]
    %v154 = vld [vmem:[%s1 + $0x418] sm:$0xff]
    %v155 = vld [vmem:[%s1 + $0x420] sm:$0xff]
    %v156 = vld [vmem:[%s1 + $0x428] sm:$0xff]
    %v157 = vld [vmem:[%s1 + $0x430] sm:$0xff]
    %v158 = vld [vmem:[%s1 + $0x438] sm:$0xff]
    %v159 = vld [vmem:[%s1 + $0x440] sm:$0xff]
    %v160 = vld [vmem:[%s1 + $0x448] sm:$0xff]
    %v161 = vld [vmem:[%s1 + $0x450] sm:$0xff]
    %v162 = vld [vmem:[%s1 + $0x458] sm:$0xff]
    %v163 = vld [vmem:[%s1 + $0x460] sm:$0xff]
    %v164 = vld [vmem:[%s1 + $0x468] sm:$0xff]
    %v165 = vld [vmem:[%s1 + $0x470] sm:$0xff]
    %v166 = vld [vmem:[%s1 + $0x478] sm:$0xff]
    %v167 = vld [vmem:[%s1 + $0x480] sm:$0xff]
    %v168 = vld [vmem:[%s1 + $0x488] sm:$0xff]
    %v169 = vld [vmem:[%s1 + $0x490] sm:$0xff]
    %v170 = vld [vmem:[%s1 + $0x498] sm:$0xff]
    %v171 = vld [vmem:[%s1 + $0x4a0] sm:$0xff]
    %v172 = vld [vmem:[%s1 + $0x4a8] sm:$0xff]
    %v173 = vld [vmem:[%s1 + $0x4b0] sm:$0xff]
    %v174 = vld [vmem:[%s1 + $0x4b8] sm:$0xff]
    %v175 = vld [vmem:[%s1 + $0x4c0] sm:$0xff]
    %v176 = vld [vmem:[%s1 + $0x4c8] sm:$0xff]
    %v177 = vld [vmem:[%s1 + $0x4d0] sm:$0xff]
    %v178 = vld [vmem:[%s1 + $0x4d8] sm:$0xff]
    %v179 = vld [vmem:[%s1 + $0x4e0] sm:$0xff]
    %v180 = vld [vmem:[%s1 + $0x4e8] sm:$0xff]
    %v181 = vld [vmem:[%s1 + $0x4f0] sm:$0xff]
    %v182 = vld [vmem:[%s1 + $0x4f8] sm:$0xff]
    %v183 = vld [vmem:[%s1 + $0x500] sm:$0xff]
    %v184 = vld [vmem:[%s1 + $0x508] sm:$0xff]
    %v185 = vld [vmem:[%s1 + $0x510] sm:$0xff]
    %v186 = vld [vmem:[%s1 + $0x518] sm:$0xff]
    %v187 = vld [vmem:[%s1 + $0x520] sm:$0xff]
    %v188 = vld [vmem:[%s1 + $0x528] sm:$0xff]
    %v189 = vld [vmem:[%s1 + $0x530] sm:$0xff]
    %v190 = vld [vmem:[%s1 + $0x538] sm:$0xff]
    %v191 = vld [vmem:[%s1 + $0x540] sm:$0xff]
    %v192 = vld [vmem:[%s1 + $0x548] sm:$0xff]
    %v193 = vld [vmem:[%s1 + $0x550] sm:$0xff]
    %v194 = vld [vmem:[%s1 + $0x558] sm:$0xff]
    %v195 = vld [vmem:[%s1 + $0x560] sm:$0xff]
    %v196 = vld [vmem:[%s1 + $0x568] sm:$0xff]
    %v197 = vld [vmem:[%s1 + $0x570] sm:$0xff]
    %v198 = vld [vmem:[%s1 + $0x578] sm:$0xff]
    %v199 = vld [vmem:[%s1 + $0x580] sm:$0xff]
    %v200 = vld [vmem:[%s1 + $0x588] sm:$0xff]
    %v201 = vld [vmem:[%s1 + $0x590] sm:$0xff]
    %v202 = vld [vmem:[%s1 + $0x598] sm:$0xff]
    %v203 = vld [vmem:[%s1 + $0x5a0] sm:$0xff]
    %v204 = vld [vmem:[%s1 + $0x5a8] sm:$0xff]
    %v205 = vld [vmem:[%s1 + $0x5b0] sm:$0xff]
    %v206 = vld [vmem:[%s1 + $0x5b8] sm:$0xff]
    %v207 = vld [vmem:[%s1 + $0x5c0] sm:$0xff]
    %v208 = vld [vmem:[%s1 + $0x5c8] sm:$0xff]
    %v209 = vld [vmem:[%s1 + $0x5d0] sm:$0xff]
    %v210 = vld [vmem:[%s1 + $0x5d8] sm:$0xff]
    %v211 = vld [vmem:[%s1 + $0x5e0] sm:$0xff]
    %v212 = vld [vmem:[%s1 + $0x5e8] sm:$0xff]
    %v213 = vld [vmem:[%s1 + $0x5f0] sm:$0xff]
    %v214 = vld [vmem:[%s1 + $0x5f8] sm:$0xff]
    %v215 = vld [vmem:[%s1 + $0x600] sm:$0xff]
    %v216 = vld [vmem:[%s1 + $0x608] sm:$0xff]
    %v217 = vld [vmem:[%s1 + $0x610] sm:$0xff]
    %v218 = vld [vmem:[%s1 + $0x618] sm:$0xff]
    %v219 = vld [vmem:[%s1 + $0x620] sm:$0xff]
    %v220 = vld [vmem:[%s1 + $0x628] sm:$0xff]
    %v221 = vld [vmem:[%s1 + $0x630] sm:$0xff]
    %v222 = vld [vmem:[%s1 + $0x638] sm:$0xff]
    %v223 = vld [vmem:[%s2] sm:$0xf]
    %v225 = vlaneseq
    %v226 = vshrl.u32 %v225, 7
    %v227 = vsub.s32 0, %v226
    %v228 = vrot.slane %v223, %v227
    %v229 = vlaneseq
    %v230 = vshrl.u32 %v229, 7
    %v231 = vsub.s32 1, %v230
    %v232 = vrot.slane %v223, %v231
    %v233 = vlaneseq
    %v234 = vshrl.u32 %v233, 7
    %v235 = vsub.s32 2, %v234
    %v236 = vrot.slane %v223, %v235
    %v237 = vlaneseq
    %v238 = vshrl.u32 %v237, 7
    %v239 = vsub.s32 3, %v238
    %v240 = vrot.slane %v223, %v239
    %v246 = vcombine.high %v22, %v22
    %v248 = vunpack.c.l.s4 1966171168
    %v249 = vunpack.c.0.s8 %v248
    %v250 = vlaneseq
    %v251 = vshrl.u32 %v250, 7
    %v252 = vsub.s32 %v249, %v251
    %v253 = vrot.slane %v22, %v252
    %v255 = vunpack.c.l.s4 1966171168
    %v256 = vunpack.c.0.s8 %v255
    %v257 = vlaneseq
    %v258 = vshrl.u32 %v257, 7
    %v259 = vsub.s32 %v256, %v258
    %v260 = vrot.slane %v246, %v259
    %v261 = vcombine.high %v253, %v253
    %v262 = vcombine.high %v260, %v260
    %v264 = vunpack.c.l.s4 1966171168
    %v265 = vunpack.c.0.s8 %v264
    %v266 = vlaneseq
    %v267 = vshrl.u32 %v266, 7
    %v268 = vsub.s32 %v265, %v267
    %v269 = vrot.slane %v253, %v268
    %v271 = vunpack.c.l.s4 1966171168
    %v272 = vunpack.c.0.s8 %v271
    %v273 = vlaneseq
    %v274 = vshrl.u32 %v273, 7
    %v275 = vsub.s32 %v272, %v274
    %v276 = vrot.slane %v260, %v275
    %v278 = vunpack.c.l.s4 1966171168
    %v279 = vunpack.c.0.s8 %v278
    %v280 = vlaneseq
    %v281 = vshrl.u32 %v280, 7
    %v282 = vsub.s32 %v279, %v281
    %v283 = vrot.slane %v261, %v282
    %v285 = vunpack.c.l.s4 1966171168
    %v286 = vunpack.c.0.s8 %v285
    %v287 = vlaneseq
    %v288 = vshrl.u32 %v287, 7
    %v289 = vsub.s32 %v286, %v288
    %v290 = vrot.slane %v262, %v289
    %v291 = vcombine.high %v269, %v269
    %v292 = vcombine.high %v276, %v276
    %v293 = vcombine.high %v283, %v283
    %v500 = vunpack.c.l.b16 %v23
    %v501 = vunpack.c.h.b16 %v23
    %v502 = vunpack.c.l.b16 %v24
    %v503 = vunpack.c.h.b16 %v24
    %v504 = vunpack.c.l.b16 %v25
    %v505 = vunpack.c.h.b16 %v25
    %v506 = vunpack.c.l.b16 %v26
    %v507 = vunpack.c.h.b16 %v26
    %v508 = vunpack.c.l.b16 %v27
    %v509 = vunpack.c.h.b16 %v27
    %v510 = vunpack.c.l.b16 %v28
    %v511 = vunpack.c.h.b16 %v28
    %v512 = vunpack.c.l.b16 %v29
    %v513 = vunpack.c.h.b16 %v29
    %v514 = vunpack.c.l.b16 %v30
    %v515 = vunpack.c.h.b16 %v30
    %v516 = vunpack.c.l.b16 %v31
    %v517 = vunpack.c.h.b16 %v31
    %v518 = vunpack.c.l.b16 %v32
    %v519 = vunpack.c.h.b16 %v32
    %v520 = vunpack.c.l.b16 %v33
    %v521 = vunpack.c.h.b16 %v33
    %v522 = vunpack.c.l.b16 %v34
    %v523 = vunpack.c.h.b16 %v34
    %v524 = vunpack.c.l.b16 %v35
    %v525 = vunpack.c.h.b16 %v35
    %v526 = vunpack.c.l.b16 %v36
    %v527 = vunpack.c.h.b16 %v36
    %v528 = vunpack.c.l.b16 %v37
    %v529 = vunpack.c.h.b16 %v37
    %v530 = vunpack.c.l.b16 %v38
    %v531 = vunpack.c.h.b16 %v38
    %v532 = vunpack.c.l.b16 %v39
    %v533 = vunpack.c.h.b16 %v39
    %v534 = vunpack.c.l.b16 %v40
    %v535 = vunpack.c.h.b16 %v40
    %v536 = vunpack.c.l.b16 %v41
    %v537 = vunpack.c.h.b16 %v41
    %v538 = vunpack.c.l.b16 %v42
    %v539 = vunpack.c.h.b16 %v42
    %v540 = vunpack.c.l.b16 %v43
    %v541 = vunpack.c.h.b16 %v43
    %v542 = vunpack.c.l.b16 %v44
    %v543 = vunpack.c.h.b16 %v44
    %v544 = vunpack.c.l.b16 %v45
    %v545 = vunpack.c.h.b16 %v45
    %v546 = vunpack.c.l.b16 %v46
    %v547 = vunpack.c.h.b16 %v46
    %v548 = vunpack.c.l.b16 %v47
    %v549 = vunpack.c.h.b16 %v47
    %v550 = vunpack.c.l.b16 %v48
    %v551 = vunpack.c.h.b16 %v48
    %v552 = vunpack.c.l.b16 %v49
    %v553 = vunpack.c.h.b16 %v49
    %v554 = vunpack.c.l.b16 %v50
    %v555 = vunpack.c.h.b16 %v50
    %v556 = vunpack.c.l.b16 %v51
    %v557 = vunpack.c.h.b16 %v51
    %v558 = vunpack.c.l.b16 %v52
    %v559 = vunpack.c.h.b16 %v52
    %v560 = vunpack.c.l.b16 %v53
    %v561 = vunpack.c.h.b16 %v53
    %v562 = vunpack.c.l.b16 %v54
    %v563 = vunpack.c.h.b16 %v54
    %v564 = vunpack.c.l.b16 %v55
    %v565 = vunpack.c.h.b16 %v55
    %v566 = vunpack.c.l.b16 %v56
    %v567 = vunpack.c.h.b16 %v56
    %v568 = vunpack.c.l.b16 %v57
    %v569 = vunpack.c.h.b16 %v57
    %v570 = vunpack.c.l.b16 %v58
    %v571 = vunpack.c.h.b16 %v58
    %v572 = vunpack.c.l.b16 %v59
    %v573 = vunpack.c.h.b16 %v59
    %v574 = vunpack.c.l.b16 %v60
    %v575 = vunpack.c.h.b16 %v60
    %v576 = vunpack.c.l.b16 %v61
    %v577 = vunpack.c.h.b16 %v61
    %v578 = vunpack.c.l.b16 %v62
    %v579 = vunpack.c.h.b16 %v62
    %v580 = vunpack.c.l.b16 %v63
    %v581 = vunpack.c.h.b16 %v63
    %v582 = vunpack.c.l.b16 %v64
    %v583 = vunpack.c.h.b16 %v64
    %v584 = vunpack.c.l.b16 %v65
    %v585 = vunpack.c.h.b16 %v65
    %v586 = vunpack.c.l.b16 %v66
    %v587 = vunpack.c.h.b16 %v66
    %v588 = vunpack.c.l.b16 %v67
    %v589 = vunpack.c.h.b16 %v67
    %v590 = vunpack.c.l.b16 %v68
    %v591 = vunpack.c.h.b16 %v68
    %v592 = vunpack.c.l.b16 %v69
    %v593 = vunpack.c.h.b16 %v69
    %v594 = vunpack.c.l.b16 %v70
    %v595 = vunpack.c.h.b16 %v70
    %v596 = vunpack.c.l.b16 %v71
    %v597 = vunpack.c.h.b16 %v71
    %v598 = vunpack.c.l.b16 %v72
    %v599 = vunpack.c.h.b16 %v72
    %v600 = vunpack.c.l.b16 %v73
    %v601 = vunpack.c.h.b16 %v73
    %v602 = vunpack.c.l.b16 %v74
    %v603 = vunpack.c.h.b16 %v74
    %v604 = vunpack.c.l.b16 %v75
    %v605 = vunpack.c.h.b16 %v75
    %v606 = vunpack.c.l.b16 %v76
    %v607 = vunpack.c.h.b16 %v76
    %v608 = vunpack.c.l.b16 %v77
    %v609 = vunpack.c.h.b16 %v77
    %v610 = vunpack.c.l.b16 %v78
    %v611 = vunpack.c.h.b16 %v78
    %v612 = vunpack.c.l.b16 %v79
    %v613 = vunpack.c.h.b16 %v79
    %v614 = vunpack.c.l.b16 %v80
    %v615 = vunpack.c.h.b16 %v80
    %v616 = vunpack.c.l.b16 %v81
    %v617 = vunpack.c.h.b16 %v81
    %v618 = vunpack.c.l.b16 %v82
    %v619 = vunpack.c.h.b16 %v82
    %v620 = vunpack.c.l.b16 %v83
    %v621 = vunpack.c.h.b16 %v83
    %v622 = vunpack.c.l.b16 %v84
    %v623 = vunpack.c.h.b16 %v84
    %v624 = vunpack.c.l.b16 %v85
    %v625 = vunpack.c.h.b16 %v85
    %v626 = vunpack.c.l.b16 %v86
    %v627 = vunpack.c.h.b16 %v86
    %v628 = vunpack.c.l.b16 %v87
    %v629 = vunpack.c.h.b16 %v87
    %v630 = vunpack.c.l.b16 %v88
    %v631 = vunpack.c.h.b16 %v88
    %v632 = vunpack.c.l.b16 %v89
    %v633 = vunpack.c.h.b16 %v89
    %v634 = vunpack.c.l.b16 %v90
    %v635 = vunpack.c.h.b16 %v90
    %v636 = vunpack.c.l.b16 %v91
    %v637 = vunpack.c.h.b16 %v91
    %v638 = vunpack.c.l.b16 %v92
    %v639 = vunpack.c.h.b16 %v92
    %v640 = vunpack.c.l.b16 %v93
    %v641 = vunpack.c.h.b16 %v93
    %v642 = vunpack.c.l.b16 %v94
    %v643 = vunpack.c.h.b16 %v94
    %v644 = vunpack.c.l.b16 %v95
    %v645 = vunpack.c.h.b16 %v95
    %v646 = vunpack.c.l.b16 %v96
    %v647 = vunpack.c.h.b16 %v96
    %v648 = vunpack.c.l.b16 %v97
    %v649 = vunpack.c.h.b16 %v97
    %v650 = vunpack.c.l.b16 %v98
    %v651 = vunpack.c.h.b16 %v98
    %v652 = vunpack.c.l.b16 %v99
    %v653 = vunpack.c.h.b16 %v99
    %v654 = vunpack.c.l.b16 %v100
    %v655 = vunpack.c.h.b16 %v100
    %v656 = vunpack.c.l.b16 %v101
    %v657 = vunpack.c.h.b16 %v101
    %v658 = vunpack.c.l.b16 %v102
    %v659 = vunpack.c.h.b16 %v102
    %v660 = vunpack.c.l.b16 %v103
    %v661 = vunpack.c.h.b16 %v103
    %v662 = vunpack.c.l.b16 %v104
    %v663 = vunpack.c.h.b16 %v104
    %v664 = vunpack.c.l.b16 %v105
    %v665 = vunpack.c.h.b16 %v105
    %v666 = vunpack.c.l.b16 %v106
    %v667 = vunpack.c.h.b16 %v106
    %v668 = vunpack.c.l.b16 %v107
    %v669 = vunpack.c.h.b16 %v107
    %v670 = vunpack.c.l.b16 %v108
    %v671 = vunpack.c.h.b16 %v108
    %v672 = vunpack.c.l.b16 %v109
    %v673 = vunpack.c.h.b16 %v109
    %v674 = vunpack.c.l.b16 %v110
    %v675 = vunpack.c.h.b16 %v110
    %v676 = vunpack.c.l.b16 %v111
    %v677 = vunpack.c.h.b16 %v111
    %v678 = vunpack.c.l.b16 %v112
    %v679 = vunpack.c.h.b16 %v112
    %v680 = vunpack.c.l.b16 %v113
    %v681 = vunpack.c.h.b16 %v113
    %v682 = vunpack.c.l.b16 %v114
    %v683 = vunpack.c.h.b16 %v114
    %v684 = vunpack.c.l.b16 %v115
    %v685 = vunpack.c.h.b16 %v115
    %v686 = vunpack.c.l.b16 %v116
    %v687 = vunpack.c.h.b16 %v116
    %v688 = vunpack.c.l.b16 %v117
    %v689 = vunpack.c.h.b16 %v117
    %v690 = vunpack.c.l.b16 %v118
    %v691 = vunpack.c.h.b16 %v118
    %v692 = vunpack.c.l.b16 %v119
    %v693 = vunpack.c.h.b16 %v119
    %v694 = vunpack.c.l.b16 %v120
    %v695 = vunpack.c.h.b16 %v120
    %v696 = vunpack.c.l.b16 %v121
    %v697 = vunpack.c.h.b16 %v121
    %v698 = vunpack.c.l.b16 %v122
    %v699 = vunpack.c.h.b16 %v122
    %v700 = vunpack.c.l.b16 %v123
    %v701 = vunpack.c.h.b16 %v123
    %v702 = vunpack.c.l.b16 %v124
    %v703 = vunpack.c.h.b16 %v124
    %v704 = vunpack.c.l.b16 %v125
    %v705 = vunpack.c.h.b16 %v125
    %v706 = vunpack.c.l.b16 %v126
    %v707 = vunpack.c.h.b16 %v126
    %v708 = vunpack.c.l.b16 %v127
    %v709 = vunpack.c.h.b16 %v127
    %v710 = vunpack.c.l.b16 %v128
    %v711 = vunpack.c.h.b16 %v128
    %v712 = vunpack.c.l.b16 %v129
    %v713 = vunpack.c.h.b16 %v129
    %v714 = vunpack.c.l.b16 %v130
    %v715 = vunpack.c.h.b16 %v130
    %v716 = vunpack.c.l.b16 %v131
    %v717 = vunpack.c.h.b16 %v131
    %v718 = vunpack.c.l.b16 %v132
    %v719 = vunpack.c.h.b16 %v132
    %v720 = vunpack.c.l.b16 %v133
    %v721 = vunpack.c.h.b16 %v133
    %v722 = vunpack.c.l.b16 %v134
    %v723 = vunpack.c.h.b16 %v134
    %v724 = vunpack.c.l.b16 %v135
    %v725 = vunpack.c.h.b16 %v135
    %v726 = vunpack.c.l.b16 %v136
    %v727 = vunpack.c.h.b16 %v136
    %v728 = vunpack.c.l.b16 %v137
    %v729 = vunpack.c.h.b16 %v137
    %v730 = vunpack.c.l.b16 %v138
    %v731 = vunpack.c.h.b16 %v138
    %v732 = vunpack.c.l.b16 %v139
    %v733 = vunpack.c.h.b16 %v139
    %v734 = vunpack.c.l.b16 %v140
    %v735 = vunpack.c.h.b16 %v140
    %v736 = vunpack.c.l.b16 %v141
    %v737 = vunpack.c.h.b16 %v141
    %v738 = vunpack.c.l.b16 %v142
    %v739 = vunpack.c.h.b16 %v142
    %v740 = vunpack.c.l.b16 %v143
    %v741 = vunpack.c.h.b16 %v143
    %v742 = vunpack.c.l.b16 %v144
    %v743 = vunpack.c.h.b16 %v144
    %v744 = vunpack.c.l.b16 %v145
    %v745 = vunpack.c.h.b16 %v145
    %v746 = vunpack.c.l.b16 %v146
    %v747 = vunpack.c.h.b16 %v146
    %v748 = vunpack.c.l.b16 %v147
    %v749 = vunpack.c.h.b16 %v147
    %v750 = vunpack.c.l.b16 %v148
    %v751 = vunpack.c.h.b16 %v148
    %v752 = vunpack.c.l.b16 %v149
    %v753 = vunpack.c.h.b16 %v149
    %v754 = vunpack.c.l.b16 %v150
    %v755 = vunpack.c.h.b16 %v150
    %v756 = vunpack.c.l.b16 %v151
    %v757 = vunpack.c.h.b16 %v151
    %v758 = vunpack.c.l.b16 %v152
    %v759 = vunpack.c.h.b16 %v152
    %v760 = vunpack.c.l.b16 %v153
    %v761 = vunpack.c.h.b16 %v153
    %v762 = vunpack.c.l.b16 %v154
    %v763 = vunpack.c.h.b16 %v154
    %v764 = vunpack.c.l.b16 %v155
    %v765 = vunpack.c.h.b16 %v155
    %v766 = vunpack.c.l.b16 %v156
    %v767 = vunpack.c.h.b16 %v156
    %v768 = vunpack.c.l.b16 %v157
    %v769 = vunpack.c.h.b16 %v157
    %v770 = vunpack.c.l.b16 %v158
    %v771 = vunpack.c.h.b16 %v158
    %v772 = vunpack.c.l.b16 %v159
    %v773 = vunpack.c.h.b16 %v159
    %v774 = vunpack.c.l.b16 %v160
    %v775 = vunpack.c.h.b16 %v160
    %v776 = vunpack.c.l.b16 %v161
    %v777 = vunpack.c.h.b16 %v161
    %v778 = vunpack.c.l.b16 %v162
    %v779 = vunpack.c.h.b16 %v162
    %v780 = vunpack.c.l.b16 %v163
    %v781 = vunpack.c.h.b16 %v163
    %v782 = vunpack.c.l.b16 %v164
    %v783 = vunpack.c.h.b16 %v164
    %v784 = vunpack.c.l.b16 %v165
    %v785 = vunpack.c.h.b16 %v165
    %v786 = vunpack.c.l.b16 %v166
    %v787 = vunpack.c.h.b16 %v166
    %v788 = vunpack.c.l.b16 %v167
    %v789 = vunpack.c.h.b16 %v167
    %v790 = vunpack.c.l.b16 %v168
    %v791 = vunpack.c.h.b16 %v168
    %v792 = vunpack.c.l.b16 %v169
    %v793 = vunpack.c.h.b16 %v169
    %v794 = vunpack.c.l.b16 %v170
    %v795 = vunpack.c.h.b16 %v170
    %v796 = vunpack.c.l.b16 %v171
    %v797 = vunpack.c.h.b16 %v171
    %v798 = vunpack.c.l.b16 %v172
    %v799 = vunpack.c.h.b16 %v172
    %v800 = vunpack.c.l.b16 %v173
    %v801 = vunpack.c.h.b16 %v173
    %v802 = vunpack.c.l.b16 %v174
    %v803 = vunpack.c.h.b16 %v174
    %v804 = vunpack.c.l.b16 %v175
    %v805 = vunpack.c.h.b16 %v175
    %v806 = vunpack.c.l.b16 %v176
    %v807 = vunpack.c.h.b16 %v176
    %v808 = vunpack.c.l.b16 %v177
    %v809 = vunpack.c.h.b16 %v177
    %v810 = vunpack.c.l.b16 %v178
    %v811 = vunpack.c.h.b16 %v178
    %v812 = vunpack.c.l.b16 %v179
    %v813 = vunpack.c.h.b16 %v179
    %v814 = vunpack.c.l.b16 %v180
    %v815 = vunpack.c.h.b16 %v180
    %v816 = vunpack.c.l.b16 %v181
    %v817 = vunpack.c.h.b16 %v181
    %v818 = vunpack.c.l.b16 %v182
    %v819 = vunpack.c.h.b16 %v182
    %v820 = vunpack.c.l.b16 %v183
    %v821 = vunpack.c.h.b16 %v183
    %v822 = vunpack.c.l.b16 %v184
    %v823 = vunpack.c.h.b16 %v184
    %v824 = vunpack.c.l.b16 %v185
    %v825 = vunpack.c.h.b16 %v185
    %v826 = vunpack.c.l.b16 %v186
    %v827 = vunpack.c.h.b16 %v186
    %v828 = vunpack.c.l.b16 %v187
    %v829 = vunpack.c.h.b16 %v187
    %v830 = vunpack.c.l.b16 %v188
    %v831 = vunpack.c.h.b16 %v188
    %v832 = vunpack.c.l.b16 %v189
    %v833 = vunpack.c.h.b16 %v189
    %v834 = vunpack.c.l.b16 %v190
    %v835 = vunpack.c.h.b16 %v190
    %v836 = vunpack.c.l.b16 %v191
    %v837 = vunpack.c.h.b16 %v191
    %v838 = vunpack.c.l.b16 %v192
    %v839 = vunpack.c.h.b16 %v192
    %v840 = vunpack.c.l.b16 %v193
    %v841 = vunpack.c.h.b16 %v193
    %v842 = vunpack.c.l.b16 %v194
    %v843 = vunpack.c.h.b16 %v194
    %v844 = vunpack.c.l.b16 %v195
    %v845 = vunpack.c.h.b16 %v195
    %v846 = vunpack.c.l.b16 %v196
    %v847 = vunpack.c.h.b16 %v196
    %v848 = vunpack.c.l.b16 %v197
    %v849 = vunpack.c.h.b16 %v197
    %v850 = vunpack.c.l.b16 %v198
    %v851 = vunpack.c.h.b16 %v198
    %v852 = vunpack.c.l.b16 %v199
    %v853 = vunpack.c.h.b16 %v199
    %v854 = vunpack.c.l.b16 %v200
    %v855 = vunpack.c.h.b16 %v200
    %v856 = vunpack.c.l.b16 %v201
    %v857 = vunpack.c.h.b16 %v201
    %v858 = vunpack.c.l.b16 %v202
    %v859 = vunpack.c.h.b16 %v202
    %v860 = vunpack.c.l.b16 %v203
    %v861 = vunpack.c.h.b16 %v203
    %v862 = vunpack.c.l.b16 %v204
    %v863 = vunpack.c.h.b16 %v204
    %v864 = vunpack.c.l.b16 %v205
    %v865 = vunpack.c.h.b16 %v205
    %v866 = vunpack.c.l.b16 %v206
    %v867 = vunpack.c.h.b16 %v206
    %v868 = vunpack.c.l.b16 %v207
    %v869 = vunpack.c.h.b16 %v207
    %v870 = vunpack.c.l.b16 %v208
    %v871 = vunpack.c.h.b16 %v208
    %v872 = vunpack.c.l.b16 %v209
    %v873 = vunpack.c.h.b16 %v209
    %v874 = vunpack.c.l.b16 %v210
    %v875 = vunpack.c.h.b16 %v210
    %v876 = vunpack.c.l.b16 %v211
    %v877 = vunpack.c.h.b16 %v211
    %v878 = vunpack.c.l.b16 %v212
    %v879 = vunpack.c.h.b16 %v212
    %v880 = vunpack.c.l.b16 %v213
    %v881 = vunpack.c.h.b16 %v213
    %v882 = vunpack.c.l.b16 %v214
    %v883 = vunpack.c.h.b16 %v214
    %v884 = vunpack.c.l.b16 %v215
    %v885 = vunpack.c.h.b16 %v215
    %v886 = vunpack.c.l.b16 %v216
    %v887 = vunpack.c.h.b16 %v216
    %v888 = vunpack.c.l.b16 %v217
    %v889 = vunpack.c.h.b16 %v217
    %v890 = vunpack.c.l.b16 %v218
    %v891 = vunpack.c.h.b16 %v218
    %v892 = vunpack.c.l.b16 %v219
    %v893 = vunpack.c.h.b16 %v219
    %v894 = vunpack.c.l.b16 %v220
    %v895 = vunpack.c.h.b16 %v220
    %v896 = vunpack.c.l.b16 %v221
    %v897 = vunpack.c.h.b16 %v221
    %v898 = vunpack.c.l.b16 %v222
    %v899 = vunpack.c.h.b16 %v222
    %v900 = vpack.c.b16 %v504, %v500
    %v901 = vpack.c.b16 %v505, %v501
    %v902 = vpack.c.b16 %v506, %v502
    %v903 = vpack.c.b16 %v507, %v503
    %v904 = vpack.c.b16 %v512, %v508
    %v905 = vpack.c.b16 %v513, %v509
    %v906 = vpack.c.b16 %v514, %v510
    %v907 = vpack.c.b16 %v515, %v511
    %v908 = vpack.c.b16 %v520, %v516
    %v909 = vpack.c.b16 %v521, %v517
    %v910 = vpack.c.b16 %v522, %v518
    %v911 = vpack.c.b16 %v523, %v519
    %v912 = vpack.c.b16 %v528, %v524
    %v913 = vpack.c.b16 %v529, %v525
    %v914 = vpack.c.b16 %v530, %v526
    %v915 = vpack.c.b16 %v531, %v527
    %v916 = vpack.c.b16 %v536, %v532
    %v917 = vpack.c.b16 %v537, %v533
    %v918 = vpack.c.b16 %v538, %v534
    %v919 = vpack.c.b16 %v539, %v535
    %v920 = vpack.c.b16 %v544, %v540
    %v921 = vpack.c.b16 %v545, %v541
    %v922 = vpack.c.b16 %v546, %v542
    %v923 = vpack.c.b16 %v547, %v543
    %v924 = vpack.c.b16 %v552, %v548
    %v925 = vpack.c.b16 %v553, %v549
    %v926 = vpack.c.b16 %v554, %v550
    %v927 = vpack.c.b16 %v555, %v551
    %v928 = vpack.c.b16 %v560, %v556
    %v929 = vpack.c.b16 %v561, %v557
    %v930 = vpack.c.b16 %v562, %v558
    %v931 = vpack.c.b16 %v563, %v559
    %v932 = vpack.c.b16 %v568, %v564
    %v933 = vpack.c.b16 %v569, %v565
    %v934 = vpack.c.b16 %v570, %v566
    %v935 = vpack.c.b16 %v571, %v567
    %v936 = vpack.c.b16 %v576, %v572
    %v937 = vpack.c.b16 %v577, %v573
    %v938 = vpack.c.b16 %v578, %v574
    %v939 = vpack.c.b16 %v579, %v575
    %v940 = vpack.c.b16 %v584, %v580
    %v941 = vpack.c.b16 %v585, %v581
    %v942 = vpack.c.b16 %v586, %v582
    %v943 = vpack.c.b16 %v587, %v583
    %v944 = vpack.c.b16 %v592, %v588
    %v945 = vpack.c.b16 %v593, %v589
    %v946 = vpack.c.b16 %v594, %v590
    %v947 = vpack.c.b16 %v595, %v591
    %v948 = vpack.c.b16 %v600, %v596
    %v949 = vpack.c.b16 %v601, %v597
    %v950 = vpack.c.b16 %v602, %v598
    %v951 = vpack.c.b16 %v603, %v599
    %v952 = vpack.c.b16 %v608, %v604
    %v953 = vpack.c.b16 %v609, %v605
    %v954 = vpack.c.b16 %v610, %v606
    %v955 = vpack.c.b16 %v611, %v607
    %v956 = vpack.c.b16 %v616, %v612
    %v957 = vpack.c.b16 %v617, %v613
    %v958 = vpack.c.b16 %v618, %v614
    %v959 = vpack.c.b16 %v619, %v615
    %v960 = vpack.c.b16 %v624, %v620
    %v961 = vpack.c.b16 %v625, %v621
    %v962 = vpack.c.b16 %v626, %v622
    %v963 = vpack.c.b16 %v627, %v623
    %v964 = vpack.c.b16 %v632, %v628
    %v965 = vpack.c.b16 %v633, %v629
    %v966 = vpack.c.b16 %v634, %v630
    %v967 = vpack.c.b16 %v635, %v631
    %v968 = vpack.c.b16 %v640, %v636
    %v969 = vpack.c.b16 %v641, %v637
    %v970 = vpack.c.b16 %v642, %v638
    %v971 = vpack.c.b16 %v643, %v639
    %v972 = vpack.c.b16 %v648, %v644
    %v973 = vpack.c.b16 %v649, %v645
    %v974 = vpack.c.b16 %v650, %v646
    %v975 = vpack.c.b16 %v651, %v647
    %v976 = vpack.c.b16 %v656, %v652
    %v977 = vpack.c.b16 %v657, %v653
    %v978 = vpack.c.b16 %v658, %v654
    %v979 = vpack.c.b16 %v659, %v655
    %v980 = vpack.c.b16 %v664, %v660
    %v981 = vpack.c.b16 %v665, %v661
    %v982 = vpack.c.b16 %v666, %v662
    %v983 = vpack.c.b16 %v667, %v663
    %v984 = vpack.c.b16 %v672, %v668
    %v985 = vpack.c.b16 %v673, %v669
    %v986 = vpack.c.b16 %v674, %v670
    %v987 = vpack.c.b16 %v675, %v671
    %v988 = vpack.c.b16 %v680, %v676
    %v989 = vpack.c.b16 %v681, %v677
    %v990 = vpack.c.b16 %v682, %v678
    %v991 = vpack.c.b16 %v683, %v679
    %v992 = vpack.c.b16 %v688, %v684
    %v993 = vpack.c.b16 %v689, %v685
    %v994 = vpack.c.b16 %v690, %v686
    %v995 = vpack.c.b16 %v691, %v687
    %v996 = vpack.c.b16 %v696, %v692
    %v997 = vpack.c.b16 %v697, %v693
    %v998 = vpack.c.b16 %v698, %v694
    %v999 = vpack.c.b16 %v699, %v695
    %v1000 = vpack.c.b16 %v704, %v700
    %v1001 = vpack.c.b16 %v705, %v701
    %v1002 = vpack.c.b16 %v706, %v702
    %v1003 = vpack.c.b16 %v707, %v703
    %v1004 = vpack.c.b16 %v712, %v708
    %v1005 = vpack.c.b16 %v713, %v709
    %v1006 = vpack.c.b16 %v714, %v710
    %v1007 = vpack.c.b16 %v715, %v711
    %v1008 = vpack.c.b16 %v720, %v716
    %v1009 = vpack.c.b16 %v721, %v717
    %v1010 = vpack.c.b16 %v722, %v718
    %v1011 = vpack.c.b16 %v723, %v719
    %v1012 = vpack.c.b16 %v728, %v724
    %v1013 = vpack.c.b16 %v729, %v725
    %v1014 = vpack.c.b16 %v730, %v726
    %v1015 = vpack.c.b16 %v731, %v727
    %v1016 = vpack.c.b16 %v736, %v732
    %v1017 = vpack.c.b16 %v737, %v733
    %v1018 = vpack.c.b16 %v738, %v734
    %v1019 = vpack.c.b16 %v739, %v735
    %v1020 = vpack.c.b16 %v744, %v740
    %v1021 = vpack.c.b16 %v745, %v741
    %v1022 = vpack.c.b16 %v746, %v742
    %v1023 = vpack.c.b16 %v747, %v743
    %v1024 = vpack.c.b16 %v752, %v748
    %v1025 = vpack.c.b16 %v753, %v749
    %v1026 = vpack.c.b16 %v754, %v750
    %v1027 = vpack.c.b16 %v755, %v751
    %v1028 = vpack.c.b16 %v760, %v756
    %v1029 = vpack.c.b16 %v761, %v757
    %v1030 = vpack.c.b16 %v762, %v758
    %v1031 = vpack.c.b16 %v763, %v759
    %v1032 = vpack.c.b16 %v768, %v764
    %v1033 = vpack.c.b16 %v769, %v765
    %v1034 = vpack.c.b16 %v770, %v766
    %v1035 = vpack.c.b16 %v771, %v767
    %v1036 = vpack.c.b16 %v776, %v772
    %v1037 = vpack.c.b16 %v777, %v773
    %v1038 = vpack.c.b16 %v778, %v774
    %v1039 = vpack.c.b16 %v779, %v775
    %v1040 = vpack.c.b16 %v784, %v780
    %v1041 = vpack.c.b16 %v785, %v781
    %v1042 = vpack.c.b16 %v786, %v782
    %v1043 = vpack.c.b16 %v787, %v783
    %v1044 = vpack.c.b16 %v792, %v788
    %v1045 = vpack.c.b16 %v793, %v789
    %v1046 = vpack.c.b16 %v794, %v790
    %v1047 = vpack.c.b16 %v795, %v791
    %v1048 = vpack.c.b16 %v800, %v796
    %v1049 = vpack.c.b16 %v801, %v797
    %v1050 = vpack.c.b16 %v802, %v798
    %v1051 = vpack.c.b16 %v803, %v799
    %v1052 = vpack.c.b16 %v808, %v804
    %v1053 = vpack.c.b16 %v809, %v805
    %v1054 = vpack.c.b16 %v810, %v806
    %v1055 = vpack.c.b16 %v811, %v807
    %v1056 = vpack.c.b16 %v816, %v812
    %v1057 = vpack.c.b16 %v817, %v813
    %v1058 = vpack.c.b16 %v818, %v814
    %v1059 = vpack.c.b16 %v819, %v815
    %v1060 = vpack.c.b16 %v824, %v820
    %v1061 = vpack.c.b16 %v825, %v821
    %v1062 = vpack.c.b16 %v826, %v822
    %v1063 = vpack.c.b16 %v827, %v823
    %v1064 = vpack.c.b16 %v832, %v828
    %v1065 = vpack.c.b16 %v833, %v829
    %v1066 = vpack.c.b16 %v834, %v830
    %v1067 = vpack.c.b16 %v835, %v831
    %v1068 = vpack.c.b16 %v840, %v836
    %v1069 = vpack.c.b16 %v841, %v837
    %v1070 = vpack.c.b16 %v842, %v838
    %v1071 = vpack.c.b16 %v843, %v839
    %v1072 = vpack.c.b16 %v848, %v844
    %v1073 = vpack.c.b16 %v849, %v845
    %v1074 = vpack.c.b16 %v850, %v846
    %v1075 = vpack.c.b16 %v851, %v847
    %v1076 = vpack.c.b16 %v856, %v852
    %v1077 = vpack.c.b16 %v857, %v853
    %v1078 = vpack.c.b16 %v858, %v854
    %v1079 = vpack.c.b16 %v859, %v855
    %v1080 = vpack.c.b16 %v864, %v860
    %v1081 = vpack.c.b16 %v865, %v861
    %v1082 = vpack.c.b16 %v866, %v862
    %v1083 = vpack.c.b16 %v867, %v863
    %v1084 = vpack.c.b16 %v872, %v868
    %v1085 = vpack.c.b16 %v873, %v869
    %v1086 = vpack.c.b16 %v874, %v870
    %v1087 = vpack.c.b16 %v875, %v871
    %v1088 = vpack.c.b16 %v880, %v876
    %v1089 = vpack.c.b16 %v881, %v877
    %v1090 = vpack.c.b16 %v882, %v878
    %v1091 = vpack.c.b16 %v883, %v879
    %v1092 = vpack.c.b16 %v888, %v884
    %v1093 = vpack.c.b16 %v889, %v885
    %v1094 = vpack.c.b16 %v890, %v886
    %v1095 = vpack.c.b16 %v891, %v887
    %v1096 = vpack.c.b16 %v896, %v892
    %v1097 = vpack.c.b16 %v897, %v893
    %v1098 = vpack.c.b16 %v898, %v894
    %v1099 = vpack.c.b16 %v899, %v895
    %vm1300 = vcmask 261120
    %v1302 = vsel %vm1300, %v292, 0
    %1304 = vmatprep.subr.bf16.mxu0 %v929
    %1305 = vmatpush1.bf16.msra.mxu0 %v928
    %1306 = vmatprep.subr.bf16.mxu0 %v925
    %1307 = vmatpush1.bf16.msra.mxu0 %v924
    %1308 = vmatprep.subr.bf16.mxu0 %v921
    %1309 = vmatpush1.bf16.msra.mxu0 %v920
    %1310 = vmatprep.subr.bf16.mxu0 %v917
    %1311 = vmatpush1.bf16.msra.mxu0 %v916
    %1312 = vmatprep.subr.bf16.mxu0 %v913
    %1313 = vmatpush1.bf16.msra.mxu0 %v912
    %1314 = vmatprep.subr.bf16.mxu0 %v909
    %1315 = vmatpush1.bf16.msra.mxu0 %v908
    %1316 = vmatprep.subr.bf16.mxu0 %v905
    %1317 = vmatpush1.bf16.msra.mxu0 %v904
    %1318 = vmatprep.subr.bf16.mxu0 %v901
    %1319 = vmatpush1.bf16.msra.mxu0 %v900
    %1320 = vmatprep.subr.bf16.mxu0 %v961
    %1321 = vmatpush2.bf16.msra.mxu0 %v960
    %1322 = vmatprep.subr.bf16.mxu0 %v957
    %1323 = vmatpush2.bf16.msra.mxu0 %v956
    %1324 = vmatprep.subr.bf16.mxu0 %v953
    %1325 = vmatpush2.bf16.msra.mxu0 %v952
    %1326 = vmatprep.subr.bf16.mxu0 %v949
    %1327 = vmatpush2.bf16.msra.mxu0 %v948
    %1328 = vmatprep.subr.bf16.mxu0 %v945
    %1329 = vmatpush2.bf16.msra.mxu0 %v944
    %1330 = vmatprep.subr.bf16.mxu0 %v941
    %1331 = vmatpush2.bf16.msra.mxu0 %v940
    %1332 = vmatprep.subr.bf16.mxu0 %v937
    %1333 = vmatpush2.bf16.msra.mxu0 %v936
    %1334 = vmatprep.subr.bf16.mxu0 %v933
    %1335 = vmatpush2.bf16.msra.mxu0 %v932
    %1336 = vmatprep.mubr.bf16.mxu0 %v283
    %1337 = vmatmul.mubr.bf16.gmra.mxu0 %v269
    %v1338 = vpop.f32.mrf.mxu0
    %v1339 = vadd.f32 %v228, %v1338
    %v1340 = vpop.f32.mrf.mxu0
    %v1341 = vadd.f32 %v232, %v1340
    %v1342 = vpop.f32.mrf.mxu0
    %v1343 = vpop.f32.mrf.mxu0
    %1344 = vdwg.mxu0
    %1345 = vmatprep.subr.bf16.mxu0 %v993
    %1346 = vmatpush1.bf16.msra.mxu0 %v992
    %1347 = vmatprep.subr.bf16.mxu0 %v989
    %1348 = vmatpush1.bf16.msra.mxu0 %v988
    %1349 = vmatprep.subr.bf16.mxu0 %v985
    %1350 = vmatpush1.bf16.msra.mxu0 %v984
    %1351 = vmatprep.subr.bf16.mxu0 %v981
    %1352 = vmatpush1.bf16.msra.mxu0 %v980
    %1353 = vmatprep.subr.bf16.mxu0 %v977
    %1354 = vmatpush1.bf16.msra.mxu0 %v976
    %1355 = vmatprep.subr.bf16.mxu0 %v973
    %1356 = vmatpush1.bf16.msra.mxu0 %v972
    %1357 = vmatprep.subr.bf16.mxu0 %v969
    %1358 = vmatpush1.bf16.msra.mxu0 %v968
    %1359 = vmatprep.subr.bf16.mxu0 %v965
    %1360 = vmatpush1.bf16.msra.mxu0 %v964
    %1361 = vmatprep.subr.bf16.mxu0 %v1025
    %1362 = vmatpush2.bf16.msra.mxu0 %v1024
    %1363 = vmatprep.subr.bf16.mxu0 %v1021
    %1364 = vmatpush2.bf16.msra.mxu0 %v1020
    %1365 = vmatprep.subr.bf16.mxu0 %v1017
    %1366 = vmatpush2.bf16.msra.mxu0 %v1016
    %1367 = vmatprep.subr.bf16.mxu0 %v1013
    %1368 = vmatpush2.bf16.msra.mxu0 %v1012
    %1369 = vmatprep.subr.bf16.mxu0 %v1009
    %1370 = vmatpush2.bf16.msra.mxu0 %v1008
    %1371 = vmatprep.subr.bf16.mxu0 %v1005
    %1372 = vmatpush2.bf16.msra.mxu0 %v1004
    %1373 = vmatprep.subr.bf16.mxu0 %v1001
    %1374 = vmatpush2.bf16.msra.mxu0 %v1000
    %1375 = vmatprep.subr.bf16.mxu0 %v997
    %1376 = vmatpush2.bf16.msra.mxu0 %v996
    %1377 = vmatprep.mubr.bf16.mxu0 %v293
    %1378 = vmatmul.mubr.bf16.gmra.mxu0 %v291
    %v1379 = vpop.f32.mrf.mxu0
    %v1380 = vadd.f32 %v1339, %v1379
    %v1381 = vpop.f32.mrf.mxu0
    %v1382 = vadd.f32 %v1341, %v1381
    %v1383 = vpop.f32.mrf.mxu0
    %v1384 = vpop.f32.mrf.mxu0
    %1385 = vdwg.mxu0
    %1386 = vmatprep.subr.bf16.mxu0 %v1057
    %1387 = vmatpush1.bf16.msra.mxu0 %v1056
    %1388 = vmatprep.subr.bf16.mxu0 %v1053
    %1389 = vmatpush1.bf16.msra.mxu0 %v1052
    %1390 = vmatprep.subr.bf16.mxu0 %v1049
    %1391 = vmatpush1.bf16.msra.mxu0 %v1048
    %1392 = vmatprep.subr.bf16.mxu0 %v1045
    %1393 = vmatpush1.bf16.msra.mxu0 %v1044
    %1394 = vmatprep.subr.bf16.mxu0 %v1041
    %1395 = vmatpush1.bf16.msra.mxu0 %v1040
    %1396 = vmatprep.subr.bf16.mxu0 %v1037
    %1397 = vmatpush1.bf16.msra.mxu0 %v1036
    %1398 = vmatprep.subr.bf16.mxu0 %v1033
    %1399 = vmatpush1.bf16.msra.mxu0 %v1032
    %1400 = vmatprep.subr.bf16.mxu0 %v1029
    %1401 = vmatpush1.bf16.msra.mxu0 %v1028
    %1402 = vmatprep.subr.bf16.mxu0 %v1089
    %1403 = vmatpush2.bf16.msra.mxu0 %v1088
    %1404 = vmatprep.subr.bf16.mxu0 %v1085
    %1405 = vmatpush2.bf16.msra.mxu0 %v1084
    %1406 = vmatprep.subr.bf16.mxu0 %v1081
    %1407 = vmatpush2.bf16.msra.mxu0 %v1080
    %1408 = vmatprep.subr.bf16.mxu0 %v1077
    %1409 = vmatpush2.bf16.msra.mxu0 %v1076
    %1410 = vmatprep.subr.bf16.mxu0 %v1073
    %1411 = vmatpush2.bf16.msra.mxu0 %v1072
    %1412 = vmatprep.subr.bf16.mxu0 %v1069
    %1413 = vmatpush2.bf16.msra.mxu0 %v1068
    %1414 = vmatprep.subr.bf16.mxu0 %v1065
    %1415 = vmatpush2.bf16.msra.mxu0 %v1064
    %1416 = vmatprep.subr.bf16.mxu0 %v1061
    %1417 = vmatpush2.bf16.msra.mxu0 %v1060
    %1418 = vmatprep.mubr.bf16.mxu0 %v290
    %1419 = vmatmul.mubr.bf16.gmra.mxu0 %v276
    %v1420 = vpop.f32.mrf.mxu0
    %v1421 = vadd.f32 %v1380, %v1420
    %v1422 = vpop.f32.mrf.mxu0
    %v1423 = vadd.f32 %v1382, %v1422
    %v1424 = vpop.f32.mrf.mxu0
    %v1425 = vpop.f32.mrf.mxu0
    %1426 = vdwg.mxu0
    %1427 = vmatprep.subr.bf16.mxu0 0
    %1428 = vmatpush1.bf16.msra.mxu0 0
    %1429 = vmatprep.subr.bf16.mxu0 0
    %1430 = vmatpush1.bf16.msra.mxu0 0
    %1431 = vmatprep.subr.bf16.mxu0 0
    %1432 = vmatpush1.bf16.msra.mxu0 0
    %1433 = vmatprep.subr.bf16.mxu0 0
    %1434 = vmatpush1.bf16.msra.mxu0 0
    %1435 = vmatprep.subr.bf16.mxu0 0
    %1436 = vmatpush1.bf16.msra.mxu0 0
    %1437 = vmatprep.subr.bf16.mxu0 0
    %1438 = vmatpush1.bf16.msra.mxu0 0
    %1439 = vmatprep.subr.bf16.mxu0 %v1097
    %1440 = vmatpush1.bf16.msra.mxu0 %v1096
    %1441 = vmatprep.subr.bf16.mxu0 %v1093
    %1442 = vmatpush1.bf16.msra.mxu0 %v1092
    %1443 = vmatprep.subr.bf16.mxu0 0
    %1444 = vmatpush2.bf16.msra.mxu0 0
    %1445 = vmatprep.subr.bf16.mxu0 0
    %1446 = vmatpush2.bf16.msra.mxu0 0
    %1447 = vmatprep.subr.bf16.mxu0 0
    %1448 = vmatpush2.bf16.msra.mxu0 0
    %1449 = vmatprep.subr.bf16.mxu0 0
    %1450 = vmatpush2.bf16.msra.mxu0 0
    %1451 = vmatprep.subr.bf16.mxu0 0
    %1452 = vmatpush2.bf16.msra.mxu0 0
    %1453 = vmatprep.subr.bf16.mxu0 0
    %1454 = vmatpush2.bf16.msra.mxu0 0
    %1455 = vmatprep.subr.bf16.mxu0 0
    %1456 = vmatpush2.bf16.msra.mxu0 0
    %1457 = vmatprep.subr.bf16.mxu0 0
    %1458 = vmatpush2.bf16.msra.mxu0 0
    %1459 = vmatprep.mubr.bf16.mxu0 0
    %1460 = vmatmul.mubr.bf16.gmra.mxu0 %v1302
    %v1461 = vpop.f32.mrf.mxu0
    %v1462 = vadd.f32 %v1421, %v1461
    %v1463 = vpop.f32.mrf.mxu0
    %v1464 = vadd.f32 %v1423, %v1463
    %v1465 = vpop.f32.mrf.mxu0
    %v1466 = vpop.f32.mrf.mxu0
    %1467 = vdwg.mxu0
    %1468 = vmatprep.subr.bf16.mxu0 %v931
    %1469 = vmatpush1.bf16.msra.mxu0 %v930
    %1470 = vmatprep.subr.bf16.mxu0 %v927
    %1471 = vmatpush1.bf16.msra.mxu0 %v926
    %1472 = vmatprep.subr.bf16.mxu0 %v923
    %1473 = vmatpush1.bf16.msra.mxu0 %v922
    %1474 = vmatprep.subr.bf16.mxu0 %v919
    %1475 = vmatpush1.bf16.msra.mxu0 %v918
    %1476 = vmatprep.subr.bf16.mxu0 %v915
    %1477 = vmatpush1.bf16.msra.mxu0 %v914
    %1478 = vmatprep.subr.bf16.mxu0 %v911
    %1479 = vmatpush1.bf16.msra.mxu0 %v910
    %1480 = vmatprep.subr.bf16.mxu0 %v907
    %1481 = vmatpush1.bf16.msra.mxu0 %v906
    %1482 = vmatprep.subr.bf16.mxu0 %v903
    %1483 = vmatpush1.bf16.msra.mxu0 %v902
    %1484 = vmatprep.subr.bf16.mxu0 %v963
    %1485 = vmatpush2.bf16.msra.mxu0 %v962
    %1486 = vmatprep.subr.bf16.mxu0 %v959
    %1487 = vmatpush2.bf16.msra.mxu0 %v958
    %1488 = vmatprep.subr.bf16.mxu0 %v955
    %1489 = vmatpush2.bf16.msra.mxu0 %v954
    %1490 = vmatprep.subr.bf16.mxu0 %v951
    %1491 = vmatpush2.bf16.msra.mxu0 %v950
    %1492 = vmatprep.subr.bf16.mxu0 %v947
    %1493 = vmatpush2.bf16.msra.mxu0 %v946
    %1494 = vmatprep.subr.bf16.mxu0 %v943
    %1495 = vmatpush2.bf16.msra.mxu0 %v942
    %1496 = vmatprep.subr.bf16.mxu0 %v939
    %1497 = vmatpush2.bf16.msra.mxu0 %v938
    %1498 = vmatprep.subr.bf16.mxu0 %v935
    %1499 = vmatpush2.bf16.msra.mxu0 %v934
    %1500 = vmatprep.mubr.bf16.mxu0 %v283
    %1501 = vmatmul.mubr.bf16.gmra.mxu0 %v269
    %v1502 = vpop.f32.mrf.mxu0
    %v1503 = vadd.f32 %v236, %v1502
    %v1504 = vpop.f32.mrf.mxu0
    %v1505 = vadd.f32 %v240, %v1504
    %v1506 = vpop.f32.mrf.mxu0
    %v1507 = vpop.f32.mrf.mxu0
    %1508 = vdwg.mxu0
    %1509 = vmatprep.subr.bf16.mxu0 %v995
    %1510 = vmatpush1.bf16.msra.mxu0 %v994
    %1511 = vmatprep.subr.bf16.mxu0 %v991
    %1512 = vmatpush1.bf16.msra.mxu0 %v990
    %1513 = vmatprep.subr.bf16.mxu0 %v987
    %1514 = vmatpush1.bf16.msra.mxu0 %v986
    %1515 = vmatprep.subr.bf16.mxu0 %v983
    %1516 = vmatpush1.bf16.msra.mxu0 %v982
    %1517 = vmatprep.subr.bf16.mxu0 %v979
    %1518 = vmatpush1.bf16.msra.mxu0 %v978
    %1519 = vmatprep.subr.bf16.mxu0 %v975
    %1520 = vmatpush1.bf16.msra.mxu0 %v974
    %1521 = vmatprep.subr.bf16.mxu0 %v971
    %1522 = vmatpush1.bf16.msra.mxu0 %v970
    %1523 = vmatprep.subr.bf16.mxu0 %v967
    %1524 = vmatpush1.bf16.msra.mxu0 %v966
    %1525 = vmatprep.subr.bf16.mxu0 %v1027
    %1526 = vmatpush2.bf16.msra.mxu0 %v1026
    %1527 = vmatprep.subr.bf16.mxu0 %v1023
    %1528 = vmatpush2.bf16.msra.mxu0 %v1022
    %1529 = vmatprep.subr.bf16.mxu0 %v1019
    %1530 = vmatpush2.bf16.msra.mxu0 %v1018
    %1531 = vmatprep.subr.bf16.mxu0 %v1015
    %1532 = vmatpush2.bf16.msra.mxu0 %v1014
    %1533 = vmatprep.subr.bf16.mxu0 %v1011
    %1534 = vmatpush2.bf16.msra.mxu0 %v1010
    %1535 = vmatprep.subr.bf16.mxu0 %v1007
    %1536 = vmatpush2.bf16.msra.mxu0 %v1006
    %1537 = vmatprep.subr.bf16.mxu0 %v1003
    %1538 = vmatpush2.bf16.msra.mxu0 %v1002
    %1539 = vmatprep.subr.bf16.mxu0 %v999
    %1540 = vmatpush2.bf16.msra.mxu0 %v998
    %1541 = vmatprep.mubr.bf16.mxu0 %v293
    %1542 = vmatmul.mubr.bf16.gmra.mxu0 %v291
    %v1543 = vpop.f32.mrf.mxu0
    %v1544 = vadd.f32 %v1503, %v1543
    %v1545 = vpop.f32.mrf.mxu0
    %v1546 = vadd.f32 %v1505, %v1545
    %v1547 = vpop.f32.mrf.mxu0
    %v1548 = vpop.f32.mrf.mxu0
    %1549 = vdwg.mxu0
    %1550 = vmatprep.subr.bf16.mxu0 %v1059
    %1551 = vmatpush1.bf16.msra.mxu0 %v1058
    %1552 = vmatprep.subr.bf16.mxu0 %v1055
    %1553 = vmatpush1.bf16.msra.mxu0 %v1054
    %1554 = vmatprep.subr.bf16.mxu0 %v1051
    %1555 = vmatpush1.bf16.msra.mxu0 %v1050
    %1556 = vmatprep.subr.bf16.mxu0 %v1047
    %1557 = vmatpush1.bf16.msra.mxu0 %v1046
    %1558 = vmatprep.subr.bf16.mxu0 %v1043
    %1559 = vmatpush1.bf16.msra.mxu0 %v1042
    %1560 = vmatprep.subr.bf16.mxu0 %v1039
    %1561 = vmatpush1.bf16.msra.mxu0 %v1038
    %1562 = vmatprep.subr.bf16.mxu0 %v1035
    %1563 = vmatpush1.bf16.msra.mxu0 %v1034
    %1564 = vmatprep.subr.bf16.mxu0 %v1031
    %1565 = vmatpush1.bf16.msra.mxu0 %v1030
    %1566 = vmatprep.subr.bf16.mxu0 %v1091
    %1567 = vmatpush2.bf16.msra.mxu0 %v1090
    %1568 = vmatprep.subr.bf16.mxu0 %v1087
    %1569 = vmatpush2.bf16.msra.mxu0 %v1086
    %1570 = vmatprep.subr.bf16.mxu0 %v1083
    %1571 = vmatpush2.bf16.msra.mxu0 %v1082
    %1572 = vmatprep.subr.bf16.mxu0 %v1079
    %1573 = vmatpush2.bf16.msra.mxu0 %v1078
    %1574 = vmatprep.subr.bf16.mxu0 %v1075
    %1575 = vmatpush2.bf16.msra.mxu0 %v1074
    %1576 = vmatprep.subr.bf16.mxu0 %v1071
    %1577 = vmatpush2.bf16.msra.mxu0 %v1070
    %1578 = vmatprep.subr.bf16.mxu0 %v1067
    %1579 = vmatpush2.bf16.msra.mxu0 %v1066
    %1580 = vmatprep.subr.bf16.mxu0 %v1063
    %1581 = vmatpush2.bf16.msra.mxu0 %v1062
    %1582 = vmatprep.mubr.bf16.mxu0 %v290
    %1583 = vmatmul.mubr.bf16.gmra.mxu0 %v276
    %v1584 = vpop.f32.mrf.mxu0
    %v1585 = vadd.f32 %v1544, %v1584
    %v1586 = vpop.f32.mrf.mxu0
    %v1587 = vadd.f32 %v1546, %v1586
    %v1588 = vpop.f32.mrf.mxu0
    %v1589 = vpop.f32.mrf.mxu0
    %1590 = vdwg.mxu0
    %1591 = vmatprep.subr.bf16.mxu0 0
    %1592 = vmatpush1.bf16.msra.mxu0 0
    %1593 = vmatprep.subr.bf16.mxu0 0
    %1594 = vmatpush1.bf16.msra.mxu0 0
    %1595 = vmatprep.subr.bf16.mxu0 0
    %1596 = vmatpush1.bf16.msra.mxu0 0
    %1597 = vmatprep.subr.bf16.mxu0 0
    %1598 = vmatpush1.bf16.msra.mxu0 0
    %1599 = vmatprep.subr.bf16.mxu0 0
    %1600 = vmatpush1.bf16.msra.mxu0 0
    %1601 = vmatprep.subr.bf16.mxu0 0
    %1602 = vmatpush1.bf16.msra.mxu0 0
    %1603 = vmatprep.subr.bf16.mxu0 %v1099
    %1604 = vmatpush1.bf16.msra.mxu0 %v1098
    %1605 = vmatprep.subr.bf16.mxu0 %v1095
    %1606 = vmatpush1.bf16.msra.mxu0 %v1094
    %1607 = vmatprep.subr.bf16.mxu0 0
    %1608 = vmatpush2.bf16.msra.mxu0 0
    %1609 = vmatprep.subr.bf16.mxu0 0
    %1610 = vmatpush2.bf16.msra.mxu0 0
    %1611 = vmatprep.subr.bf16.mxu0 0
    %1612 = vmatpush2.bf16.msra.mxu0 0
    %1613 = vmatprep.subr.bf16.mxu0 0
    %1614 = vmatpush2.bf16.msra.mxu0 0
    %1615 = vmatprep.subr.bf16.mxu0 0
    %1616 = vmatpush2.bf16.msra.mxu0 0
    %1617 = vmatprep.subr.bf16.mxu0 0
    %1618 = vmatpush2.bf16.msra.mxu0 0
    %1619 = vmatprep.subr.bf16.mxu0 0
    %1620 = vmatpush2.bf16.msra.mxu0 0
    %1621 = vmatprep.subr.bf16.mxu0 0
    %1622 = vmatpush2.bf16.msra.mxu0 0
    %1623 = vmatprep.mubr.bf16.mxu0 0
    %1624 = vmatmul.mubr.bf16.gmra.mxu0 %v1302
    %v1625 = vpop.f32.mrf.mxu0
    %v1626 = vadd.f32 %v1585, %v1625
    %v1627 = vpop.f32.mrf.mxu0
    %v1628 = vadd.f32 %v1587, %v1627
    %v1629 = vpop.f32.mrf.mxu0
    %v1630 = vpop.f32.mrf.mxu0
    %1631 = vdwg.mxu0
    %v1632 = vmax.f32 %v1462, 0.0
    %v1633 = vmax.f32 %v1464, 0.0
    %v1634 = vmax.f32 %v1626, 0.0
    %v1635 = vmax.f32 %v1628, 0.0
    %v1636 = vpack.c.bf16 %v1632, %v1632
    %v1637 = vpack.c.bf16 %v1633, %v1633
    %v1638 = vpack.c.bf16 %v1634, %v1634
    %v1639 = vpack.c.bf16 %v1635, %v1635
    %v1640 = vld [vmem:[%s3] sm:$0xf]
    %v1641 = vld [vmem:[%s3 + $0x4] sm:$0xf]
    %v1642 = vld [vmem:[%s3 + $0x8] sm:$0xf]
    %v1643 = vld [vmem:[%s3 + $0xc] sm:$0xf]
    %v1644 = vld [vmem:[%s3 + $0x10] sm:$0xf]
    %v1645 = vld [vmem:[%s3 + $0x14] sm:$0xf]
    %v1646 = vld [vmem:[%s3 + $0x18] sm:$0xf]
    %v1647 = vld [vmem:[%s3 + $0x1c] sm:$0xf]
    %v1648 = vld [vmem:[%s3 + $0x20] sm:$0xf]
    %v1649 = vld [vmem:[%s3 + $0x24] sm:$0xf]
    %v1650 = vld [vmem:[%s3 + $0x28] sm:$0xf]
    %v1651 = vld [vmem:[%s3 + $0x2c] sm:$0xf]
    %v1652 = vld [vmem:[%s3 + $0x30] sm:$0xf]
    %v1653 = vld [vmem:[%s3 + $0x34] sm:$0xf]
    %v1654 = vld [vmem:[%s3 + $0x38] sm:$0xf]
    %v1655 = vld [vmem:[%s3 + $0x3c] sm:$0xf]
    %v1656 = vld [vmem:[%s3 + $0x40] sm:$0xf]
    %v1657 = vld [vmem:[%s3 + $0x44] sm:$0xf]
    %v1658 = vld [vmem:[%s3 + $0x48] sm:$0xf]
    %v1659 = vld [vmem:[%s3 + $0x4c] sm:$0xf]
    %v1660 = vld [vmem:[%s3 + $0x50] sm:$0xf]
    %v1661 = vld [vmem:[%s3 + $0x54] sm:$0xf]
    %v1662 = vld [vmem:[%s3 + $0x58] sm:$0xf]
    %v1663 = vld [vmem:[%s3 + $0x5c] sm:$0xf]
    %v1664 = vld [vmem:[%s3 + $0x60] sm:$0xf]
    %v1665 = vld [vmem:[%s3 + $0x64] sm:$0xf]
    %v1666 = vld [vmem:[%s3 + $0x68] sm:$0xf]
    %v1667 = vld [vmem:[%s3 + $0x6c] sm:$0xf]
    %v1668 = vld [vmem:[%s3 + $0x70] sm:$0xf]
    %v1669 = vld [vmem:[%s3 + $0x74] sm:$0xf]
    %v1670 = vld [vmem:[%s3 + $0x78] sm:$0xf]
    %v1671 = vld [vmem:[%s3 + $0x7c] sm:$0xf]
    %v1672 = vld [vmem:[%s3 + $0x80] sm:$0xf]
    %v1673 = vld [vmem:[%s3 + $0x84] sm:$0xf]
    %v1674 = vld [vmem:[%s3 + $0x88] sm:$0xf]
    %v1675 = vld [vmem:[%s3 + $0x8c] sm:$0xf]
    %v1676 = vld [vmem:[%s3 + $0x90] sm:$0xf]
    %v1677 = vld [vmem:[%s3 + $0x94] sm:$0xf]
    %v1678 = vld [vmem:[%s3 + $0x98] sm:$0xf]
    %v1679 = vld [vmem:[%s3 + $0x9c] sm:$0xf]
    %v1680 = vld [vmem:[%s3 + $0xa0] sm:$0xf]
    %v1681 = vld [vmem:[%s3 + $0xa4] sm:$0xf]
    %v1682 = vld [vmem:[%s3 + $0xa8] sm:$0xf]
    %v1683 = vld [vmem:[%s3 + $0xac] sm:$0xf]
    %v1684 = vld [vmem:[%s3 + $0xb0] sm:$0xf]
    %v1685 = vld [vmem:[%s3 + $0xb4] sm:$0xf]
    %v1686 = vld [vmem:[%s3 + $0xb8] sm:$0xf]
    %v1687 = vld [vmem:[%s3 + $0xbc] sm:$0xf]
    %v1688 = vld [vmem:[%s3 + $0xc0] sm:$0xf]
    %v1689 = vld [vmem:[%s3 + $0xc4] sm:$0xf]
    %v1690 = vld [vmem:[%s3 + $0xc8] sm:$0xf]
    %v1691 = vld [vmem:[%s3 + $0xcc] sm:$0xf]
    %v1692 = vld [vmem:[%s3 + $0xd0] sm:$0xf]
    %v1693 = vld [vmem:[%s3 + $0xd4] sm:$0xf]
    %v1694 = vld [vmem:[%s3 + $0xd8] sm:$0xf]
    %v1695 = vld [vmem:[%s3 + $0xdc] sm:$0xf]
    %v1696 = vld [vmem:[%s3 + $0xe0] sm:$0xf]
    %v1697 = vld [vmem:[%s3 + $0xe4] sm:$0xf]
    %v1698 = vld [vmem:[%s3 + $0xe8] sm:$0xf]
    %v1699 = vld [vmem:[%s3 + $0xec] sm:$0xf]
    %v1700 = vld [vmem:[%s3 + $0xf0] sm:$0xf]
    %v1701 = vld [vmem:[%s3 + $0xf4] sm:$0xf]
    %v1702 = vld [vmem:[%s3 + $0xf8] sm:$0x3]
    %v1703 = vld [vmem:[%s4] sm:$0x1]
    %v1705 = vlaneseq
    %v1706 = vshrl.u32 %v1705, 7
    %v1707 = vsub.s32 0, %v1706
    %v1708 = vrot.slane %v1703, %v1707
    %v1773 = vunpack.c.l.b16 %v1640
    %v1774 = vunpack.c.l.b16 %v1641
    %v1775 = vunpack.c.l.b16 %v1642
    %v1776 = vunpack.c.l.b16 %v1643
    %v1777 = vunpack.c.l.b16 %v1644
    %v1778 = vunpack.c.l.b16 %v1645
    %v1779 = vunpack.c.l.b16 %v1646
    %v1780 = vunpack.c.l.b16 %v1647
    %v1781 = vunpack.c.l.b16 %v1648
    %v1782 = vunpack.c.l.b16 %v1649
    %v1783 = vunpack.c.l.b16 %v1650
    %v1784 = vunpack.c.l.b16 %v1651
    %v1785 = vunpack.c.l.b16 %v1652
    %v1786 = vunpack.c.l.b16 %v1653
    %v1787 = vunpack.c.l.b16 %v1654
    %v1788 = vunpack.c.l.b16 %v1655
    %v1789 = vunpack.c.l.b16 %v1656
    %v1790 = vunpack.c.l.b16 %v1657
    %v1791 = vunpack.c.l.b16 %v1658
    %v1792 = vunpack.c.l.b16 %v1659
    %v1793 = vunpack.c.l.b16 %v1660
    %v1794 = vunpack.c.l.b16 %v1661
    %v1795 = vunpack.c.l.b16 %v1662
    %v1796 = vunpack.c.l.b16 %v1663
    %v1797 = vunpack.c.l.b16 %v1664
    %v1798 = vunpack.c.l.b16 %v1665
    %v1799 = vunpack.c.l.b16 %v1666
    %v1800 = vunpack.c.l.b16 %v1667
    %v1801 = vunpack.c.l.b16 %v1668
    %v1802 = vunpack.c.l.b16 %v1669
    %v1803 = vunpack.c.l.b16 %v1670
    %v1804 = vunpack.c.l.b16 %v1671
    %v1805 = vunpack.c.l.b16 %v1672
    %v1806 = vunpack.c.l.b16 %v1673
    %v1807 = vunpack.c.l.b16 %v1674
    %v1808 = vunpack.c.l.b16 %v1675
    %v1809 = vunpack.c.l.b16 %v1676
    %v1810 = vunpack.c.l.b16 %v1677
    %v1811 = vunpack.c.l.b16 %v1678
    %v1812 = vunpack.c.l.b16 %v1679
    %v1813 = vunpack.c.l.b16 %v1680
    %v1814 = vunpack.c.l.b16 %v1681
    %v1815 = vunpack.c.l.b16 %v1682
    %v1816 = vunpack.c.l.b16 %v1683
    %v1817 = vunpack.c.l.b16 %v1684
    %v1818 = vunpack.c.l.b16 %v1685
    %v1819 = vunpack.c.l.b16 %v1686
    %v1820 = vunpack.c.l.b16 %v1687
    %v1821 = vunpack.c.l.b16 %v1688
    %v1822 = vunpack.c.l.b16 %v1689
    %v1823 = vunpack.c.l.b16 %v1690
    %v1824 = vunpack.c.l.b16 %v1691
    %v1825 = vunpack.c.l.b16 %v1692
    %v1826 = vunpack.c.l.b16 %v1693
    %v1827 = vunpack.c.l.b16 %v1694
    %v1828 = vunpack.c.l.b16 %v1695
    %v1829 = vunpack.c.l.b16 %v1696
    %v1830 = vunpack.c.l.b16 %v1697
    %v1831 = vunpack.c.l.b16 %v1698
    %v1832 = vunpack.c.l.b16 %v1699
    %v1833 = vunpack.c.l.b16 %v1700
    %v1834 = vunpack.c.l.b16 %v1701
    %v1835 = vunpack.c.l.b16 %v1702
    %v1836 = vpack.c.b16 %v1774, %v1773
    %v1837 = vpack.c.b16 %v1776, %v1775
    %v1838 = vpack.c.b16 %v1778, %v1777
    %v1839 = vpack.c.b16 %v1780, %v1779
    %v1840 = vpack.c.b16 %v1782, %v1781
    %v1841 = vpack.c.b16 %v1784, %v1783
    %v1842 = vpack.c.b16 %v1786, %v1785
    %v1843 = vpack.c.b16 %v1788, %v1787
    %v1844 = vpack.c.b16 %v1790, %v1789
    %v1845 = vpack.c.b16 %v1792, %v1791
    %v1846 = vpack.c.b16 %v1794, %v1793
    %v1847 = vpack.c.b16 %v1796, %v1795
    %v1848 = vpack.c.b16 %v1798, %v1797
    %v1849 = vpack.c.b16 %v1800, %v1799
    %v1850 = vpack.c.b16 %v1802, %v1801
    %v1851 = vpack.c.b16 %v1804, %v1803
    %v1852 = vpack.c.b16 %v1806, %v1805
    %v1853 = vpack.c.b16 %v1808, %v1807
    %v1854 = vpack.c.b16 %v1810, %v1809
    %v1855 = vpack.c.b16 %v1812, %v1811
    %v1856 = vpack.c.b16 %v1814, %v1813
    %v1857 = vpack.c.b16 %v1816, %v1815
    %v1858 = vpack.c.b16 %v1818, %v1817
    %v1859 = vpack.c.b16 %v1820, %v1819
    %v1860 = vpack.c.b16 %v1822, %v1821
    %v1861 = vpack.c.b16 %v1824, %v1823
    %v1862 = vpack.c.b16 %v1826, %v1825
    %v1863 = vpack.c.b16 %v1828, %v1827
    %v1864 = vpack.c.b16 %v1830, %v1829
    %v1865 = vpack.c.b16 %v1832, %v1831
    %v1866 = vpack.c.b16 %v1834, %v1833
    %v1867 = vpack.c.b16 %v1835, %v1835
    %vm1899 = vcmask 949248
    %v1901 = vsel %vm1899, %v1639, 0
    %vm1903 = vcmask 1041408
    %v1905 = vsel %vm1903, %v1867, 0
    %1907 = vmatprep.subr.bf16.mxu0 0
    %1908 = vmatpush1.bf16.msra.mxu0 %v1843
    %1909 = vmatprep.subr.bf16.mxu0 0
    %1910 = vmatpush1.bf16.msra.mxu0 %v1842
    %1911 = vmatprep.subr.bf16.mxu0 0
    %1912 = vmatpush1.bf16.msra.mxu0 %v1841
    %1913 = vmatprep.subr.bf16.mxu0 0
    %1914 = vmatpush1.bf16.msra.mxu0 %v1840
    %1915 = vmatprep.subr.bf16.mxu0 0
    %1916 = vmatpush1.bf16.msra.mxu0 %v1839
    %1917 = vmatprep.subr.bf16.mxu0 0
    %1918 = vmatpush1.bf16.msra.mxu0 %v1838
    %1919 = vmatprep.subr.bf16.mxu0 0
    %1920 = vmatpush1.bf16.msra.mxu0 %v1837
    %1921 = vmatprep.subr.bf16.mxu0 0
    %1922 = vmatpush1.bf16.msra.mxu0 %v1836
    %1923 = vmatprep.subr.bf16.mxu0 0
    %1924 = vmatpush2.bf16.msra.mxu0 %v1851
    %1925 = vmatprep.subr.bf16.mxu0 0
    %1926 = vmatpush2.bf16.msra.mxu0 %v1850
    %1927 = vmatprep.subr.bf16.mxu0 0
    %1928 = vmatpush2.bf16.msra.mxu0 %v1849
    %1929 = vmatprep.subr.bf16.mxu0 0
    %1930 = vmatpush2.bf16.msra.mxu0 %v1848
    %1931 = vmatprep.subr.bf16.mxu0 0
    %1932 = vmatpush2.bf16.msra.mxu0 %v1847
    %1933 = vmatprep.subr.bf16.mxu0 0
    %1934 = vmatpush2.bf16.msra.mxu0 %v1846
    %1935 = vmatprep.subr.bf16.mxu0 0
    %1936 = vmatpush2.bf16.msra.mxu0 %v1845
    %1937 = vmatprep.subr.bf16.mxu0 0
    %1938 = vmatpush2.bf16.msra.mxu0 %v1844
    %1939 = vmatprep.mubr.bf16.mxu0 %v1637
    %1940 = vmatmul.mubr.bf16.gmra.mxu0 %v1636
    %v1941 = vpop.f32.mrf.mxu0
    %v1942 = vadd.f32 %v1708, %v1941
    %v1943 = vpop.f32.mrf.mxu0
    %v1944 = vpop.f32.mrf.mxu0
    %v1945 = vpop.f32.mrf.mxu0
    %1946 = vdwg.mxu0
    %1947 = vmatprep.subr.bf16.mxu0 0
    %1948 = vmatpush1.bf16.msra.mxu0 %v1859
    %1949 = vmatprep.subr.bf16.mxu0 0
    %1950 = vmatpush1.bf16.msra.mxu0 %v1858
    %1951 = vmatprep.subr.bf16.mxu0 0
    %1952 = vmatpush1.bf16.msra.mxu0 %v1857
    %1953 = vmatprep.subr.bf16.mxu0 0
    %1954 = vmatpush1.bf16.msra.mxu0 %v1856
    %1955 = vmatprep.subr.bf16.mxu0 0
    %1956 = vmatpush1.bf16.msra.mxu0 %v1855
    %1957 = vmatprep.subr.bf16.mxu0 0
    %1958 = vmatpush1.bf16.msra.mxu0 %v1854
    %1959 = vmatprep.subr.bf16.mxu0 0
    %1960 = vmatpush1.bf16.msra.mxu0 %v1853
    %1961 = vmatprep.subr.bf16.mxu0 0
    %1962 = vmatpush1.bf16.msra.mxu0 %v1852
    %1963 = vmatprep.subr.bf16.mxu0 0
    %1964 = vmatpush2.bf16.msra.mxu0 %v1905
    %1965 = vmatprep.subr.bf16.mxu0 0
    %1966 = vmatpush2.bf16.msra.mxu0 %v1866
    %1967 = vmatprep.subr.bf16.mxu0 0
    %1968 = vmatpush2.bf16.msra.mxu0 %v1865
    %1969 = vmatprep.subr.bf16.mxu0 0
    %1970 = vmatpush2.bf16.msra.mxu0 %v1864
    %1971 = vmatprep.subr.bf16.mxu0 0
    %1972 = vmatpush2.bf16.msra.mxu0 %v1863
    %1973 = vmatprep.subr.bf16.mxu0 0
    %1974 = vmatpush2.bf16.msra.mxu0 %v1862
    %1975 = vmatprep.subr.bf16.mxu0 0
    %1976 = vmatpush2.bf16.msra.mxu0 %v1861
    %1977 = vmatprep.subr.bf16.mxu0 0
    %1978 = vmatpush2.bf16.msra.mxu0 %v1860
    %1979 = vmatprep.mubr.bf16.mxu0 %v1901
    %1980 = vmatmul.mubr.bf16.gmra.mxu0 %v1638
    %v1981 = vpop.f32.mrf.mxu0
    %v1982 = vadd.f32 %v1942, %v1981
    %v1983 = vpop.f32.mrf.mxu0
    %v1984 = vpop.f32.mrf.mxu0
    %v1985 = vpop.f32.mrf.mxu0
    %1986 = vdwg.mxu0
    %vm1987 = vcmask 74752
    %v1988 = vsel %vm1987, %v1982, -inf
    %1989 = vmax.xlane.f32.xlu0 %v1988
    %v1990 = vpop.xlane.xlu0 %1989
    %v1991 = vsub.f32 %v1982, %v1990
    %v1992 = vmul.f32 %v1991, 1.442695
    %v1993 = vpow.pop %v1992
    %v1994 = vsel %vm1987, %v1993, 0.0
    %1995 = vadd.xlane.f32.xlu0 %v1994
    %v1996 = vpop.xlane.xlu0 %1995
    %v1997 = vlog2.pop %v1996
    %v1998 = vmul.f32 %v1997, 0.6931472
    %v1999 = vadd.f32 %v1990, %v1998
    %v2000 = vsub.f32 %v1982, %v1999
    %2001 = vst.msk [vmem:[#allocation2] sm:$0x3] %vm1987, %v2000
    // Predicated region
    $region22: #{cnn_forward.3} parent=1 // pred_check
      _
    $region23: #{cnn_forward.3} parent=1 // pred_check_branch
      %2003 = sbr.rel (0) target = $region25
    $region24: #{cnn_forward.3} parent=1 // pred_region
      %s2005 = ssub.s32 32, 32
      %2006 = vsyncadd [#allocation3], %s2005
      %s2008 = sshll.u32 [#allocation2], 4
      %s2009 = int_to_ptr.vmem [resolvable:$true] %s2008
      %2011 = dma.vmem_to_hbm [thread:$0]  %s2009, 32, %s5, [#allocation3]
    $region25: #{cnn_forward.3} parent=1 // pred_fallthru
      _
    // Predicated region
    $region26: #{cnn_forward.3} parent=1 // pred_check
      _
    $region27: #{cnn_forward.3} parent=1 // pred_check_branch
      %2013 = sbr.rel (0) target = $region29
    $region28: #{cnn_forward.3} parent=1 // pred_region
      %2014 = dma.done [#allocation3], 32
    $region29: #{cnn_forward.3} parent=1 // pred_fallthru
      _
    %2015 = vsyncpa [#allocation3], 1

// kernel: cnn_forward.2
$region0: #{cnn_forward.2}
  #allocation0 [shape = 'u32[]', space=smem, size = 0x4, offset = 0x4, fixed_abs, tag = 'smem constant byte address 0x4 - core index']
  #allocation1 [shape = 'u32[144,128]{1,0:T(1,128)}', space=vmem, size = 0x12000, scoped, tag = 'internal scratch']
  %s0 = inlined_call_operand.vmem [shape: bf16[2,1,784], index: 0, kind: input, shape index: {}]
  %s1 = inlined_call_operand.vmem [shape: bf16[25,20,1], index: 1, kind: input, shape index: {}]
  %s2 = inlined_call_operand.vmem [shape: f32[20,1], index: 2, kind: input, shape index: {}]
  %s3 = inlined_call_operand.vmem [shape: bf16[639,144], index: 3, kind: input, shape index: {}]
  %s4 = inlined_call_operand.vmem [shape: bf16[25,50,20], index: 4, kind: input, shape index: {}]
  %s5 = inlined_call_operand.vmem [shape: f32[50,1], index: 5, kind: input, shape index: {}]
  %s6 = inlined_call_operand.vmem [shape: bf16[79,16], index: 6, kind: input, shape index: {}]
  %s7 = inlined_call_operand.vmem [shape: bf16[2,50,16], index: 7, kind: output, shape index: {}]
  %s8 = sld [smem:[#allocation0]]
  $region61: #{cnn_forward.2} parent=0
    _
  %s10 = ssub.s32 1, %s8
  %s11 = scalar_select 0, %s10, %s8
  loop: start=0, step=1, limit=4
  $region2: #{cnn_forward.2} parent=0 // loop_pre_header
    _
  $region3: #{cnn_forward.2} parent=0 // loop_header
    %s13 = sphi 0, %s17
    %p14 = scmp.ge.s32.totalorder %s13, 4
    %s23 = sphi 0, %s25
    %s26 = sphi 0, %s23
    %s27 = sphi 0, %s26
    %s43 = sphi 0, %s27
    %s47 = sphi 0, %s47
    %s49 = sphi 0, %s47
    %s50 = sphi 0, %s49
    %s64 = sphi 0, %s50
    %s68 = sphi 0, %s68
    %s70 = sphi 0, %s68
    %s71 = sphi 0, %s70
    %s85 = sphi 0, %s71
    %s89 = sphi 0, %s89
    %s91 = sphi 0, %s89
    %s92 = sphi 0, %s91
    %s106 = sphi 0, %s92
    %s110 = sphi 0, %s110
    %s112 = sphi 0, %s110
    %s113 = sphi 0, %s112
    %s127 = sphi 0, %s113
    %s131 = sphi 0, %s131
    %s133 = sphi 0, %s131
    %s134 = sphi 0, %s133
    %s148 = sphi 0, %s134
    %s152 = sphi 0, %s152
    %s154 = sphi 0, %s152
    %s155 = sphi 0, %s154
    %s169 = sphi 0, %s155
    %s175 = sphi 0, %s177
    %s178 = sphi 0, %s175
    %s179 = sphi 0, %s178
    %s195 = sphi 0, %s179
  $region4: #{cnn_forward.2} parent=0 // loop_header_branch
    %16 = sbr.rel (%p14) target = $region8
  $region5: #{cnn_forward.2} parent=0 // loop_body
    %s18 = ssub.s32 %s13, 1
    %s19 = ssub.s32 %s13, 2
    %s20 = sadd.s32 %s13, 1
    %s21 = ssub.s32 %s13, %s20
    %p22 = scmp.eq.s32.totalorder %s21, 0
    %s24 = sadd.s32 %s23, 1
    %s25 = scalar_select %p22, %s23, %s24
    %p28 = pneg %p22
    %p29 = scmp.eq.s32.totalorder %s13, 1
    %p30 = por %p28, %p29
    %p31 = scmp.ne.s32.totalorder %s23, %s26
    %p32 = scmp.eq.s32.totalorder %s13, 0
    %p33 = por %p31, %p32
    %p34 = scmp.ne.s32.totalorder %s23, %s26
    %p35 = scmp.eq.s32.totalorder %s18, 1
    %p36 = por %p34, %p35
    %p37 = scmp.ne.s32.totalorder %s26, %s27
    %p38 = scmp.eq.s32.totalorder %s18, 0
    %p39 = por %p37, %p38
    %p40 = scmp.ne.s32.totalorder %s26, %s27
    %p41 = scmp.eq.s32.totalorder %s19, 1
    %p42 = por %p40, %p41
    %p44 = scmp.ne.s32.totalorder %s27, %s43
    %p45 = scmp.eq.s32.totalorder %s19, 0
    %p46 = por %p44, %p45
    %s48 = sadd.s32 %s47, 1
    %p51 = scmp.eq.s32.totalorder %s13, 1
    %p52 = scmp.ne.s32.totalorder %s47, %s49
    %p53 = scmp.eq.s32.totalorder %s13, 0
    %p54 = por %p52, %p53
    %p55 = scmp.ne.s32.totalorder %s47, %s49
    %p56 = scmp.eq.s32.totalorder %s18, 1
    %p57 = por %p55, %p56
    %p58 = scmp.ne.s32.totalorder %s49, %s50
    %p59 = scmp.eq.s32.totalorder %s18, 0
    %p60 = por %p58, %p59
    %p61 = scmp.ne.s32.totalorder %s49, %s50
    %p62 = scmp.eq.s32.totalorder %s19, 1
    %p63 = por %p61, %p62
    %p65 = scmp.ne.s32.totalorder %s50, %s64
    %p66 = scmp.eq.s32.totalorder %s19, 0
    %p67 = por %p65, %p66
    %s69 = sadd.s32 %s68, 1
    %p72 = scmp.eq.s32.totalorder %s13, 1
    %p73 = scmp.ne.s32.totalorder %s68, %s70
    %p74 = scmp.eq.s32.totalorder %s13, 0
    %p75 = por %p73, %p74
    %p76 = scmp.ne.s32.totalorder %s68, %s70
    %p77 = scmp.eq.s32.totalorder %s18, 1
    %p78 = por %p76, %p77
    %p79 = scmp.ne.s32.totalorder %s70, %s71
    %p80 = scmp.eq.s32.totalorder %s18, 0
    %p81 = por %p79, %p80
    %p82 = scmp.ne.s32.totalorder %s70, %s71
    %p83 = scmp.eq.s32.totalorder %s19, 1
    %p84 = por %p82, %p83
    %p86 = scmp.ne.s32.totalorder %s71, %s85
    %p87 = scmp.eq.s32.totalorder %s19, 0
    %p88 = por %p86, %p87
    %s90 = sadd.s32 %s89, 1
    %p93 = scmp.eq.s32.totalorder %s13, 1
    %p94 = scmp.ne.s32.totalorder %s89, %s91
    %p95 = scmp.eq.s32.totalorder %s13, 0
    %p96 = por %p94, %p95
    %p97 = scmp.ne.s32.totalorder %s89, %s91
    %p98 = scmp.eq.s32.totalorder %s18, 1
    %p99 = por %p97, %p98
    %p100 = scmp.ne.s32.totalorder %s91, %s92
    %p101 = scmp.eq.s32.totalorder %s18, 0
    %p102 = por %p100, %p101
    %p103 = scmp.ne.s32.totalorder %s91, %s92
    %p104 = scmp.eq.s32.totalorder %s19, 1
    %p105 = por %p103, %p104
    %p107 = scmp.ne.s32.totalorder %s92, %s106
    %p108 = scmp.eq.s32.totalorder %s19, 0
    %p109 = por %p107, %p108
    %s111 = sadd.s32 %s110, 1
    %p114 = scmp.eq.s32.totalorder %s13, 1
    %p115 = scmp.ne.s32.totalorder %s110, %s112
    %p116 = scmp.eq.s32.totalorder %s13, 0
    %p117 = por %p115, %p116
    %p118 = scmp.ne.s32.totalorder %s110, %s112
    %p119 = scmp.eq.s32.totalorder %s18, 1
    %p120 = por %p118, %p119
    %p121 = scmp.ne.s32.totalorder %s112, %s113
    %p122 = scmp.eq.s32.totalorder %s18, 0
    %p123 = por %p121, %p122
    %p124 = scmp.ne.s32.totalorder %s112, %s113
    %p125 = scmp.eq.s32.totalorder %s19, 1
    %p126 = por %p124, %p125
    %p128 = scmp.ne.s32.totalorder %s113, %s127
    %p129 = scmp.eq.s32.totalorder %s19, 0
    %p130 = por %p128, %p129
    %s132 = sadd.s32 %s131, 1
    %p135 = scmp.eq.s32.totalorder %s13, 1
    %p136 = scmp.ne.s32.totalorder %s131, %s133
    %p137 = scmp.eq.s32.totalorder %s13, 0
    %p138 = por %p136, %p137
    %p139 = scmp.ne.s32.totalorder %s131, %s133
    %p140 = scmp.eq.s32.totalorder %s18, 1
    %p141 = por %p139, %p140
    %p142 = scmp.ne.s32.totalorder %s133, %s134
    %p143 = scmp.eq.s32.totalorder %s18, 0
    %p144 = por %p142, %p143
    %p145 = scmp.ne.s32.totalorder %s133, %s134
    %p146 = scmp.eq.s32.totalorder %s19, 1
    %p147 = por %p145, %p146
    %p149 = scmp.ne.s32.totalorder %s134, %s148
    %p150 = scmp.eq.s32.totalorder %s19, 0
    %p151 = por %p149, %p150
    %s153 = sadd.s32 %s152, 1
    %p156 = scmp.eq.s32.totalorder %s13, 1
    %p157 = scmp.ne.s32.totalorder %s152, %s154
    %p158 = scmp.eq.s32.totalorder %s13, 0
    %p159 = por %p157, %p158
    %p160 = scmp.ne.s32.totalorder %s152, %s154
    %p161 = scmp.eq.s32.totalorder %s18, 1
    %p162 = por %p160, %p161
    %p163 = scmp.ne.s32.totalorder %s154, %s155
    %p164 = scmp.eq.s32.totalorder %s18, 0
    %p165 = por %p163, %p164
    %p166 = scmp.ne.s32.totalorder %s154, %s155
    %p167 = scmp.eq.s32.totalorder %s19, 1
    %p168 = por %p166, %p167
    %p170 = scmp.ne.s32.totalorder %s155, %s169
    %p171 = scmp.eq.s32.totalorder %s19, 0
    %p172 = por %p170, %p171
    %s173 = ssub.s32 %s13, %s20
    %p174 = scmp.eq.s32.totalorder %s173, 0
    %s176 = sadd.s32 %s175, 1
    %s177 = scalar_select %p174, %s175, %s176
    %p180 = pneg %p174
    %p181 = scmp.eq.s32.totalorder %s13, 1
    %p182 = por %p180, %p181
    %p183 = scmp.ne.s32.totalorder %s175, %s178
    %p184 = scmp.eq.s32.totalorder %s13, 0
    %p185 = por %p183, %p184
    %p186 = scmp.ne.s32.totalorder %s175, %s178
    %p187 = scmp.eq.s32.totalorder %s18, 1
    %p188 = por %p186, %p187
    %p189 = scmp.ne.s32.totalorder %s178, %s179
    %p190 = scmp.eq.s32.totalorder %s18, 0
    %p191 = por %p189, %p190
    %p192 = scmp.ne.s32.totalorder %s178, %s179
    %p193 = scmp.eq.s32.totalorder %s19, 1
    %p194 = por %p192, %p193
    %p196 = scmp.ne.s32.totalorder %s179, %s195
    %p197 = scmp.eq.s32.totalorder %s19, 0
    %p198 = por %p196, %p197
    %p199 = scmp.le.s32.totalorder 1, %s13
    %p200 = scmp.lt.s32.totalorder %s13, 3
    %p201 = pnand %p199, %p200
    %p202 = pneg %p201
    // Predicated region
    $region9: #{cnn_forward.2} parent=5 // pred_check
      _
    $region10: #{cnn_forward.2} parent=5 // pred_check_branch
      %204 = sbr.rel (%p201) target = $region12
    $region11: #{cnn_forward.2} parent=5 // pred_region
      %s205 = ssub.s32 %s13, 1
      // Predicated region
      $region13: #{cnn_forward.2} parent=11 // pred_check
        %p206 = pneg %p60
      $region14: #{cnn_forward.2} parent=11 // pred_check_branch
        %208 = sbr.rel (%p206) target = $region16
      $region15: #{cnn_forward.2} parent=11 // pred_region
        _
      $region16: #{cnn_forward.2} parent=11 // pred_fallthru
        _
      // Predicated region
      $region17: #{cnn_forward.2} parent=11 // pred_check
        %p209 = pneg %p81
      $region18: #{cnn_forward.2} parent=11 // pred_check_branch
        %211 = sbr.rel (%p209) target = $region20
      $region19: #{cnn_forward.2} parent=11 // pred_region
        _
      $region20: #{cnn_forward.2} parent=11 // pred_fallthru
        _
      // Predicated region
      $region21: #{cnn_forward.2} parent=11 // pred_check
        %p212 = pneg %p102
      $region22: #{cnn_forward.2} parent=11 // pred_check_branch
        %214 = sbr.rel (%p212) target = $region24
      $region23: #{cnn_forward.2} parent=11 // pred_region
        _
      $region24: #{cnn_forward.2} parent=11 // pred_fallthru
        _
      // Predicated region
      $region25: #{cnn_forward.2} parent=11 // pred_check
        %p215 = pneg %p123
      $region26: #{cnn_forward.2} parent=11 // pred_check_branch
        %217 = sbr.rel (%p215) target = $region28
      $region27: #{cnn_forward.2} parent=11 // pred_region
        _
      $region28: #{cnn_forward.2} parent=11 // pred_fallthru
        _
      // Predicated region
      $region29: #{cnn_forward.2} parent=11 // pred_check
        %p218 = pneg %p144
      $region30: #{cnn_forward.2} parent=11 // pred_check_branch
        %220 = sbr.rel (%p218) target = $region32
      $region31: #{cnn_forward.2} parent=11 // pred_region
        _
      $region32: #{cnn_forward.2} parent=11 // pred_fallthru
        _
      // Predicated region
      $region33: #{cnn_forward.2} parent=11 // pred_check
        %p221 = pneg %p165
      $region34: #{cnn_forward.2} parent=11 // pred_check_branch
        %223 = sbr.rel (%p221) target = $region36
      $region35: #{cnn_forward.2} parent=11 // pred_region
        _
      $region36: #{cnn_forward.2} parent=11 // pred_fallthru
        _
    $region12: #{cnn_forward.2} parent=5 // pred_fallthru
      _
    %p224 = scmp.lt.s32.totalorder %s13, 2
    // Predicated region
    $region37: #{cnn_forward.2} parent=5 // pred_check
      %p225 = pneg %p224
    $region38: #{cnn_forward.2} parent=5 // pred_check_branch
      %227 = sbr.rel (%p225) target = $region40
    $region39: #{cnn_forward.2} parent=5 // pred_region
      // Predicated region
      $region41: #{cnn_forward.2} parent=39 // pred_check
        %p228 = pneg %p33
      $region42: #{cnn_forward.2} parent=39 // pred_check_branch
        %230 = sbr.rel (%p228) target = $region44
      $region43: #{cnn_forward.2} parent=39 // pred_region
        %p231 = scmp.lt.s32.totalorder %s13, 1
        %s232 = scalar_select %p231, %s13, 1
        %s233 = smul.addr %s232, 7
        %s234 = scalar_lea.vmem %s0, %s233
      $region44: #{cnn_forward.2} parent=39 // pred_fallthru
        _
    $region40: #{cnn_forward.2} parent=5 // pred_fallthru
      _
    %p235 = scmp.le.s32.totalorder 1, %s13
    %p236 = scmp.lt.s32.totalorder %s13, 3
    %p237 = pnand %p235, %p236
    %p238 = pneg %p237
    // Predicated region
    $region45: #{cnn_forward.2} parent=5 // pred_check
      _
    $region46: #{cnn_forward.2} parent=5 // pred_check_branch
      %240 = sbr.rel (%p237) target = $region48
    $region47: #{cnn_forward.2} parent=5 // pred_region
      %s241 = ssub.s32 %s13, 1
      %p242 = scmp.lt.s32.totalorder %s18, 1
      %s243 = scalar_select %p242, %s18, 1
      %s244 = smul.addr %s243, 7
      %s245 = scalar_lea.vmem %s0, %s244
      %p246 = pneg %p39
      %p247 = pneg %p36
      %p248 = pneg %p60
      %p249 = pneg %p57
      %p250 = pneg %p81
      %p251 = pneg %p78
      %p252 = pneg %p102
      %p253 = pneg %p99
      %p254 = pneg %p123
      %p255 = pneg %p120
      %p256 = pneg %p144
      %p257 = pneg %p141
      %p258 = pneg %p165
      %p259 = pneg %p162
      %p260 = pneg %p191
      %p261 = pneg %p188
      %p262 = scmp.lt.s32.totalorder %s18, 1
      %s263 = scalar_select %p262, %s18, 1
      %s264 = smul.addr %s263, 7
      %s265 = smul.addr %s264, 4
      %s266 = scalar_lea.vmem %s7, %s265
      %p267 = scmp.lt.s32.totalorder %s18, 1
      %s268 = scalar_select %p267, %s18, 1
      %s269 = smul.addr %s268, 7
      %s270 = scalar_lea.vmem %s0, %s269
      %p271 = scmp.lt.s32.totalorder %s18, 1
      %s272 = scalar_select %p271, %s18, 1
      %s273 = smul.addr %s272, 7
      %s274 = smul.addr %s273, 4
      %s275 = scalar_lea.vmem %s7, %s274
      %v277 = vld [vmem:[%s270] sm:$0x7f]
      %v278 = vunpack.c.l.bf16 %v277
      %v279 = vunpack.c.h.bf16 %v277
      %v280 = vld [vmem:[%s1] sm:$0xf]
      %v281 = vld [vmem:[%s1 + $0x4] sm:$0xf]
      %v282 = vld [vmem:[%s1 + $0x8] sm:$0x3]
      %v283 = vunpack.c.l.bf16 %v280
      %v284 = vunpack.c.l.bf16 %v281
      %v285 = vunpack.c.l.bf16 %v282
      %287 = vset.pattern.permute.xlu0 0
      %288 = vperm.xlu0 %287, %v283
      %v289 = vpop.permute.xlu0 %288
      %292 = vset.pattern.permute.xlu0 0
      %293 = vperm.xlu0 %292, %v284
      %v294 = vpop.permute.xlu0 %293
      %297 = vset.pattern.permute.xlu0 0
      %298 = vperm.xlu0 %297, %v285
      %v299 = vpop.permute.xlu0 %298
      %v303 = vlaneseq
      %v304 = vshrl.u32 %v303, 7
      %v305 = vsub.s32 0, %v304
      %v306 = vrot.slane %v278, %v305
      %v307 = vlaneseq
      %v308 = vshrl.u32 %v307, 7
      %v309 = vsub.s32 2, %v308
      %v310 = vrot.slane %v278, %v309
      %v311 = vlaneseq
      %v312 = vshrl.u32 %v311, 7
      %v313 = vsub.s32 4, %v312
      %v314 = vrot.slane %v278, %v313
      %v315 = vlaneseq
      %v316 = vshrl.u32 %v315, 7
      %v317 = vsub.s32 6, %v316
      %v318 = vrot.slane %v278, %v317
      %v319 = vlaneseq
      %v320 = vshrl.u32 %v319, 7
      %v321 = vsub.s32 0, %v320
      %v322 = vrot.slane %v279, %v321
      %v323 = vlaneseq
      %v324 = vshrl.u32 %v323, 7
      %v325 = vsub.s32 2, %v324
      %v326 = vrot.slane %v279, %v325
      %v333 = vlaneseq
      %v334 = vshrl.u32 %v333, 7
      %v335 = vsub.s32 0, %v334
      %v336 = vrot.slane %v306, %v335
      %v337 = vlaneseq
      %v338 = vshrl.u32 %v337, 7
      %v339 = vsub.s32 0, %v338
      %v340 = vrot.slane %v310, %v339
      %v341 = vlaneseq
      %v342 = vshrl.u32 %v341, 7
      %v343 = vsub.s32 0, %v342
      %v344 = vrot.slane %v314, %v343
      %v345 = vlaneseq
      %v346 = vshrl.u32 %v345, 7
      %v347 = vsub.s32 0, %v346
      %v348 = vrot.slane %v318, %v347
      %v349 = vlaneseq
      %v350 = vshrl.u32 %v349, 7
      %v351 = vsub.s32 0, %v350
      %v352 = vrot.slane %v322, %v351
      %v353 = vlaneseq
      %v354 = vshrl.u32 %v353, 7
      %v355 = vsub.s32 0, %v354
      %v356 = vrot.slane %v326, %v355
      %v357 = vmul.f32 %v289, %v336
      %v358 = vmul.f32 %v289, %v340
      %v359 = vmul.f32 %v289, %v344
      %v360 = vmul.f32 %v289, %v348
      %v361 = vmul.f32 %v289, %v352
      %v362 = vmul.f32 %v289, %v356
      %v363 = vmul.f32 %v294, %v336
      %v364 = vmul.f32 %v294, %v340
      %v365 = vmul.f32 %v294, %v344
      %v366 = vmul.f32 %v294, %v348
      %v367 = vmul.f32 %v294, %v352
      %v368 = vmul.f32 %v294, %v356
      %v369 = vmul.f32 %v299, %v336
      %v370 = vmul.f32 %v299, %v340
      %v371 = vmul.f32 %v299, %v344
      %v372 = vmul.f32 %v299, %v348
      %v373 = vmul.f32 %v299, %v352
      %v374 = vmul.f32 %v299, %v356
      %v375 = vadd.f32 %v357, 0.0
      %v376 = vadd.f32 %v358, 0.0
      %v377 = vadd.f32 %v359, 0.0
      %v378 = vadd.f32 %v360, 0.0
      %v379 = vadd.f32 %v361, 0.0
      %v380 = vadd.f32 %v362, 0.0
      %v381 = vadd.f32 %v363, 0.0
      %v382 = vadd.f32 %v364, 0.0
      %v383 = vadd.f32 %v365, 0.0
      %v384 = vadd.f32 %v366, 0.0
      %v385 = vadd.f32 %v367, 0.0
      %v386 = vadd.f32 %v368, 0.0
      %v387 = vadd.f32 %v369, 0.0
      %v388 = vadd.f32 %v370, 0.0
      %v389 = vadd.f32 %v371, 0.0
      %v390 = vadd.f32 %v372, 0.0
      %v391 = vadd.f32 %v373, 0.0
      %v392 = vadd.f32 %v374, 0.0
      %s393 = scalar_lea.vmem %s1, 12
      %v394 = vld [vmem:[%s393] sm:$0xf]
      %v395 = vld [vmem:[%s393 + $0x4] sm:$0xf]
      %v396 = vld [vmem:[%s393 + $0x8] sm:$0x3]
      %v397 = vunpack.c.l.bf16 %v394
      %v398 = vunpack.c.l.bf16 %v395
      %v399 = vunpack.c.l.bf16 %v396
      %401 = vset.pattern.permute.xlu0 0
      %402 = vperm.xlu0 %401, %v397
      %v403 = vpop.permute.xlu0 %402
      %406 = vset.pattern.permute.xlu0 0
      %407 = vperm.xlu0 %406, %v398
      %v408 = vpop.permute.xlu0 %407
      %411 = vset.pattern.permute.xlu0 0
      %412 = vperm.xlu0 %411, %v399
      %v413 = vpop.permute.xlu0 %412
      %v415 = vmul.f32 %v403, %v336
      %v416 = vmul.f32 %v403, %v340
      %v417 = vmul.f32 %v403, %v344
      %v418 = vmul.f32 %v403, %v348
      %v419 = vmul.f32 %v403, %v352
      %v420 = vmul.f32 %v403, %v356
      %v421 = vmul.f32 %v408, %v336
      %v422 = vmul.f32 %v408, %v340
      %v423 = vmul.f32 %v408, %v344
      %v424 = vmul.f32 %v408, %v348
      %v425 = vmul.f32 %v408, %v352
      %v426 = vmul.f32 %v408, %v356
      %v427 = vmul.f32 %v413, %v336
      %v428 = vmul.f32 %v413, %v340
      %v429 = vmul.f32 %v413, %v344
      %v430 = vmul.f32 %v413, %v348
      %v431 = vmul.f32 %v413, %v352
      %v432 = vmul.f32 %v413, %v356
      %451 = vrot.lane.b32.xlu0 %v415, 127
      %v452 = vpop.permute.xlu0 %451
      %453 = vrot.lane.b32.xlu0 %v416, 127
      %v454 = vpop.permute.xlu0 %453
      %455 = vrot.lane.b32.xlu0 %v417, 127
      %v456 = vpop.permute.xlu0 %455
      %457 = vrot.lane.b32.xlu0 %v418, 127
      %v458 = vpop.permute.xlu0 %457
      %459 = vrot.lane.b32.xlu0 %v419, 127
      %v460 = vpop.permute.xlu0 %459
      %461 = vrot.lane.b32.xlu0 %v420, 127
      %v462 = vpop.permute.xlu0 %461
      %463 = vrot.lane.b32.xlu0 %v421, 127
      %v464 = vpop.permute.xlu0 %463
      %465 = vrot.lane.b32.xlu0 %v422, 127
      %v466 = vpop.permute.xlu0 %465
      %467 = vrot.lane.b32.xlu0 %v423, 127
      %v468 = vpop.permute.xlu0 %467
      %469 = vrot.lane.b32.xlu0 %v424, 127
      %v470 = vpop.permute.xlu0 %469
      %471 = vrot.lane.b32.xlu0 %v425, 127
      %v472 = vpop.permute.xlu0 %471
      %473 = vrot.lane.b32.xlu0 %v426, 127
      %v474 = vpop.permute.xlu0 %473
      %475 = vrot.lane.b32.xlu0 %v427, 127
      %v476 = vpop.permute.xlu0 %475
      %477 = vrot.lane.b32.xlu0 %v428, 127
      %v478 = vpop.permute.xlu0 %477
      %479 = vrot.lane.b32.xlu0 %v429, 127
      %v480 = vpop.permute.xlu0 %479
      %481 = vrot.lane.b32.xlu0 %v430, 127
      %v482 = vpop.permute.xlu0 %481
      %483 = vrot.lane.b32.xlu0 %v431, 127
      %v484 = vpop.permute.xlu0 %483
      %485 = vrot.lane.b32.xlu0 %v432, 127
      %v486 = vpop.permute.xlu0 %485
      %vm487 = vcmask 1039360
      %v488 = vsel %vm487, %v452, %v454
      %v489 = vsel %vm487, %v454, %v456
      %v490 = vsel %vm487, %v456, %v458
      %v491 = vsel %vm487, %v458, %v460
      %v492 = vsel %vm487, %v460, %v462
      %v493 = vsel %vm487, %v464, %v466
      %v494 = vsel %vm487, %v466, %v468
      %v495 = vsel %vm487, %v468, %v470
      %v496 = vsel %vm487, %v470, %v472
      %v497 = vsel %vm487, %v472, %v474
      %v498 = vsel %vm487, %v476, %v478
      %v499 = vsel %vm487, %v478, %v480
      %v500 = vsel %vm487, %v480, %v482
      %v501 = vsel %vm487, %v482, %v484
      %v502 = vsel %vm487, %v484, %v486
      %v521 = vadd.f32 %v375, %v488
      %v522 = vadd.f32 %v376, %v489
      %v523 = vadd.f32 %v377, %v490
      %v524 = vadd.f32 %v378, %v491
      %v525 = vadd.f32 %v379, %v492
      %v526 = vadd.f32 %v380, %v462
      %v527 = vadd.f32 %v381, %v493
      %v528 = vadd.f32 %v382, %v494
      %v529 = vadd.f32 %v383, %v495
      %v530 = vadd.f32 %v384, %v496
      %v531 = vadd.f32 %v385, %v497
      %v532 = vadd.f32 %v386, %v474
      %v533 = vadd.f32 %v387, %v498
      %v534 = vadd.f32 %v388, %v499
      %v535 = vadd.f32 %v389, %v500
      %v536 = vadd.f32 %v390, %v501
      %v537 = vadd.f32 %v391, %v502
      %v538 = vadd.f32 %v392, %v486
      %s539 = scalar_lea.vmem %s1, 24
      %v540 = vld [vmem:[%s539] sm:$0xf]
      %v541 = vld [vmem:[%s539 + $0x4] sm:$0xf]
      %v542 = vld [vmem:[%s539 + $0x8] sm:$0x3]
      %v543 = vunpack.c.l.bf16 %v540
      %v544 = vunpack.c.l.bf16 %v541
      %v545 = vunpack.c.l.bf16 %v542
      %547 = vset.pattern.permute.xlu0 0
      %548 = vperm.xlu0 %547, %v543
      %v549 = vpop.permute.xlu0 %548
      %552 = vset.pattern.permute.xlu0 0
      %553 = vperm.xlu0 %552, %v544
      %v554 = vpop.permute.xlu0 %553
      %557 = vset.pattern.permute.xlu0 0
      %558 = vperm.xlu0 %557, %v545
      %v559 = vpop.permute.xlu0 %558
      %v561 = vmul.f32 %v549, %v336
      %v562 = vmul.f32 %v549, %v340
      %v563 = vmul.f32 %v549, %v344
      %v564 = vmul.f32 %v549, %v348
      %v565 = vmul.f32 %v549, %v352
      %v566 = vmul.f32 %v549, %v356
      %v567 = vmul.f32 %v554, %v336
      %v568 = vmul.f32 %v554, %v340
      %v569 = vmul.f32 %v554, %v344
      %v570 = vmul.f32 %v554, %v348
      %v571 = vmul.f32 %v554, %v352
      %v572 = vmul.f32 %v554, %v356
      %v573 = vmul.f32 %v559, %v336
      %v574 = vmul.f32 %v559, %v340
      %v575 = vmul.f32 %v559, %v344
      %v576 = vmul.f32 %v559, %v348
      %v577 = vmul.f32 %v559, %v352
      %v578 = vmul.f32 %v559, %v356
      %597 = vrot.lane.b32.xlu0 %v561, 126
      %v598 = vpop.permute.xlu0 %597
      %599 = vrot.lane.b32.xlu0 %v562, 126
      %v600 = vpop.permute.xlu0 %599
      %601 = vrot.lane.b32.xlu0 %v563, 126
      %v602 = vpop.permute.xlu0 %601
      %603 = vrot.lane.b32.xlu0 %v564, 126
      %v604 = vpop.permute.xlu0 %603
      %605 = vrot.lane.b32.xlu0 %v565, 126
      %v606 = vpop.permute.xlu0 %605
      %607 = vrot.lane.b32.xlu0 %v566, 126
      %v608 = vpop.permute.xlu0 %607
      %609 = vrot.lane.b32.xlu0 %v567, 126
      %v610 = vpop.permute.xlu0 %609
      %611 = vrot.lane.b32.xlu0 %v568, 126
      %v612 = vpop.permute.xlu0 %611
      %613 = vrot.lane.b32.xlu0 %v569, 126
      %v614 = vpop.permute.xlu0 %613
      %615 = vrot.lane.b32.xlu0 %v570, 126
      %v616 = vpop.permute.xlu0 %615
      %617 = vrot.lane.b32.xlu0 %v571, 126
      %v618 = vpop.permute.xlu0 %617
      %619 = vrot.lane.b32.xlu0 %v572, 126
      %v620 = vpop.permute.xlu0 %619
      %621 = vrot.lane.b32.xlu0 %v573, 126
      %v622 = vpop.permute.xlu0 %621
      %623 = vrot.lane.b32.xlu0 %v574, 126
      %v624 = vpop.permute.xlu0 %623
      %625 = vrot.lane.b32.xlu0 %v575, 126
      %v626 = vpop.permute.xlu0 %625
      %627 = vrot.lane.b32.xlu0 %v576, 126
      %v628 = vpop.permute.xlu0 %627
      %629 = vrot.lane.b32.xlu0 %v577, 126
      %v630 = vpop.permute.xlu0 %629
      %631 = vrot.lane.b32.xlu0 %v578, 126
      %v632 = vpop.permute.xlu0 %631
      %vm633 = vcmask 1031168
      %v634 = vsel %vm633, %v598, %v600
      %v635 = vsel %vm633, %v600, %v602
      %v636 = vsel %vm633, %v602, %v604
      %v637 = vsel %vm633, %v604, %v606
      %v638 = vsel %vm633, %v606, %v608
      %v639 = vsel %vm633, %v610, %v612
      %v640 = vsel %vm633, %v612, %v614
      %v641 = vsel %vm633, %v614, %v616
      %v642 = vsel %vm633, %v616, %v618
      %v643 = vsel %vm633, %v618, %v620
      %v644 = vsel %vm633, %v622, %v624
      %v645 = vsel %vm633, %v624, %v626
      %v646 = vsel %vm633, %v626, %v628
      %v647 = vsel %vm633, %v628, %v630
      %v648 = vsel %vm633, %v630, %v632
      %v667 = vadd.f32 %v521, %v634
      %v668 = vadd.f32 %v522, %v635
      %v669 = vadd.f32 %v523, %v636
      %v670 = vadd.f32 %v524, %v637
      %v671 = vadd.f32 %v525, %v638
      %v672 = vadd.f32 %v526, %v608
      %v673 = vadd.f32 %v527, %v639
      %v674 = vadd.f32 %v528, %v640
      %v675 = vadd.f32 %v529, %v641
      %v676 = vadd.f32 %v530, %v642
      %v677 = vadd.f32 %v531, %v643
      %v678 = vadd.f32 %v532, %v620
      %v679 = vadd.f32 %v533, %v644
      %v680 = vadd.f32 %v534, %v645
      %v681 = vadd.f32 %v535, %v646
      %v682 = vadd.f32 %v536, %v647
      %v683 = vadd.f32 %v537, %v648
      %v684 = vadd.f32 %v538, %v632
      %s685 = scalar_lea.vmem %s1, 36
      %v686 = vld [vmem:[%s685] sm:$0xf]
      %v687 = vld [vmem:[%s685 + $0x4] sm:$0xf]
      %v688 = vld [vmem:[%s685 + $0x8] sm:$0x3]
      %v689 = vunpack.c.l.bf16 %v686
      %v690 = vunpack.c.l.bf16 %v687
      %v691 = vunpack.c.l.bf16 %v688
      %693 = vset.pattern.permute.xlu0 0
      %694 = vperm.xlu0 %693, %v689
      %v695 = vpop.permute.xlu0 %694
      %698 = vset.pattern.permute.xlu0 0
      %699 = vperm.xlu0 %698, %v690
      %v700 = vpop.permute.xlu0 %699
      %703 = vset.pattern.permute.xlu0 0
      %704 = vperm.xlu0 %703, %v691
      %v705 = vpop.permute.xlu0 %704
      %v707 = vmul.f32 %v695, %v336
      %v708 = vmul.f32 %v695, %v340
      %v709 = vmul.f32 %v695, %v344
      %v710 = vmul.f32 %v695, %v348
      %v711 = vmul.f32 %v695, %v352
      %v712 = vmul.f32 %v695, %v356
      %v713 = vmul.f32 %v700, %v336
      %v714 = vmul.f32 %v700, %v340
      %v715 = vmul.f32 %v700, %v344
      %v716 = vmul.f32 %v700, %v348
      %v717 = vmul.f32 %v700, %v352
      %v718 = vmul.f32 %v700, %v356
      %v719 = vmul.f32 %v705, %v336
      %v720 = vmul.f32 %v705, %v340
      %v721 = vmul.f32 %v705, %v344
      %v722 = vmul.f32 %v705, %v348
      %v723 = vmul.f32 %v705, %v352
      %v724 = vmul.f32 %v705, %v356
      %743 = vrot.lane.b32.xlu0 %v707, 125
      %v744 = vpop.permute.xlu0 %743
      %745 = vrot.lane.b32.xlu0 %v708, 125
      %v746 = vpop.permute.xlu0 %745
      %747 = vrot.lane.b32.xlu0 %v709, 125
      %v748 = vpop.permute.xlu0 %747
      %749 = vrot.lane.b32.xlu0 %v710, 125
      %v750 = vpop.permute.xlu0 %749
      %751 = vrot.lane.b32.xlu0 %v711, 125
      %v752 = vpop.permute.xlu0 %751
      %753 = vrot.lane.b32.xlu0 %v712, 125
      %v754 = vpop.permute.xlu0 %753
      %755 = vrot.lane.b32.xlu0 %v713, 125
      %v756 = vpop.permute.xlu0 %755
      %757 = vrot.lane.b32.xlu0 %v714, 125
      %v758 = vpop.permute.xlu0 %757
      %759 = vrot.lane.b32.xlu0 %v715, 125
      %v760 = vpop.permute.xlu0 %759
      %761 = vrot.lane.b32.xlu0 %v716, 125
      %v762 = vpop.permute.xlu0 %761
      %763 = vrot.lane.b32.xlu0 %v717, 125
      %v764 = vpop.permute.xlu0 %763
      %765 = vrot.lane.b32.xlu0 %v718, 125
      %v766 = vpop.permute.xlu0 %765
      %767 = vrot.lane.b32.xlu0 %v719, 125
      %v768 = vpop.permute.xlu0 %767
      %769 = vrot.lane.b32.xlu0 %v720, 125
      %v770 = vpop.permute.xlu0 %769
      %771 = vrot.lane.b32.xlu0 %v721, 125
      %v772 = vpop.permute.xlu0 %771
      %773 = vrot.lane.b32.xlu0 %v722, 125
      %v774 = vpop.permute.xlu0 %773
      %775 = vrot.lane.b32.xlu0 %v723, 125
      %v776 = vpop.permute.xlu0 %775
      %777 = vrot.lane.b32.xlu0 %v724, 125
      %v778 = vpop.permute.xlu0 %777
      %vm779 = vcmask 1022976
      %v780 = vsel %vm779, %v744, %v746
      %v781 = vsel %vm779, %v746, %v748
      %v782 = vsel %vm779, %v748, %v750
      %v783 = vsel %vm779, %v750, %v752
      %v784 = vsel %vm779, %v752, %v754
      %v785 = vsel %vm779, %v756, %v758
      %v786 = vsel %vm779, %v758, %v760
      %v787 = vsel %vm779, %v760, %v762
      %v788 = vsel %vm779, %v762, %v764
      %v789 = vsel %vm779, %v764, %v766
      %v790 = vsel %vm779, %v768, %v770
      %v791 = vsel %vm779, %v770, %v772
      %v792 = vsel %vm779, %v772, %v774
      %v793 = vsel %vm779, %v774, %v776
      %v794 = vsel %vm779, %v776, %v778
      %v813 = vadd.f32 %v667, %v780
      %v814 = vadd.f32 %v668, %v781
      %v815 = vadd.f32 %v669, %v782
      %v816 = vadd.f32 %v670, %v783
      %v817 = vadd.f32 %v671, %v784
      %v818 = vadd.f32 %v672, %v754
      %v819 = vadd.f32 %v673, %v785
      %v820 = vadd.f32 %v674, %v786
      %v821 = vadd.f32 %v675, %v787
      %v822 = vadd.f32 %v676, %v788
      %v823 = vadd.f32 %v677, %v789
      %v824 = vadd.f32 %v678, %v766
      %v825 = vadd.f32 %v679, %v790
      %v826 = vadd.f32 %v680, %v791
      %v827 = vadd.f32 %v681, %v792
      %v828 = vadd.f32 %v682, %v793
      %v829 = vadd.f32 %v683, %v794
      %v830 = vadd.f32 %v684, %v778
      %s831 = scalar_lea.vmem %s1, 48
      %v832 = vld [vmem:[%s831] sm:$0xf]
      %v833 = vld [vmem:[%s831 + $0x4] sm:$0xf]
      %v834 = vld [vmem:[%s831 + $0x8] sm:$0x3]
      %v835 = vunpack.c.l.bf16 %v832
      %v836 = vunpack.c.l.bf16 %v833
      %v837 = vunpack.c.l.bf16 %v834
      %839 = vset.pattern.permute.xlu0 0
      %840 = vperm.xlu0 %839, %v835
      %v841 = vpop.permute.xlu0 %840
      %844 = vset.pattern.permute.xlu0 0
      %845 = vperm.xlu0 %844, %v836
      %v846 = vpop.permute.xlu0 %845
      %849 = vset.pattern.permute.xlu0 0
      %850 = vperm.xlu0 %849, %v837
      %v851 = vpop.permute.xlu0 %850
      %v853 = vmul.f32 %v841, %v336
      %v854 = vmul.f32 %v841, %v340
      %v855 = vmul.f32 %v841, %v344
      %v856 = vmul.f32 %v841, %v348
      %v857 = vmul.f32 %v841, %v352
      %v858 = vmul.f32 %v841, %v356
      %v859 = vmul.f32 %v846, %v336
      %v860 = vmul.f32 %v846, %v340
      %v861 = vmul.f32 %v846, %v344
      %v862 = vmul.f32 %v846, %v348
      %v863 = vmul.f32 %v846, %v352
      %v864 = vmul.f32 %v846, %v356
      %v865 = vmul.f32 %v851, %v336
      %v866 = vmul.f32 %v851, %v340
      %v867 = vmul.f32 %v851, %v344
      %v868 = vmul.f32 %v851, %v348
      %v869 = vmul.f32 %v851, %v352
      %v870 = vmul.f32 %v851, %v356
      %889 = vrot.lane.b32.xlu0 %v853, 124
      %v890 = vpop.permute.xlu0 %889
      %891 = vrot.lane.b32.xlu0 %v854, 124
      %v892 = vpop.permute.xlu0 %891
      %893 = vrot.lane.b32.xlu0 %v855, 124
      %v894 = vpop.permute.xlu0 %893
      %895 = vrot.lane.b32.xlu0 %v856, 124
      %v896 = vpop.permute.xlu0 %895
      %897 = vrot.lane.b32.xlu0 %v857, 124
      %v898 = vpop.permute.xlu0 %897
      %899 = vrot.lane.b32.xlu0 %v858, 124
      %v900 = vpop.permute.xlu0 %899
      %901 = vrot.lane.b32.xlu0 %v859, 124
      %v902 = vpop.permute.xlu0 %901
      %903 = vrot.lane.b32.xlu0 %v860, 124
      %v904 = vpop.permute.xlu0 %903
      %905 = vrot.lane.b32.xlu0 %v861, 124
      %v906 = vpop.permute.xlu0 %905
      %907 = vrot.lane.b32.xlu0 %v862, 124
      %v908 = vpop.permute.xlu0 %907
      %909 = vrot.lane.b32.xlu0 %v863, 124
      %v910 = vpop.permute.xlu0 %909
      %911 = vrot.lane.b32.xlu0 %v864, 124
      %v912 = vpop.permute.xlu0 %911
      %913 = vrot.lane.b32.xlu0 %v865, 124
      %v914 = vpop.permute.xlu0 %913
      %915 = vrot.lane.b32.xlu0 %v866, 124
      %v916 = vpop.permute.xlu0 %915
      %917 = vrot.lane.b32.xlu0 %v867, 124
      %v918 = vpop.permute.xlu0 %917
      %919 = vrot.lane.b32.xlu0 %v868, 124
      %v920 = vpop.permute.xlu0 %919
      %921 = vrot.lane.b32.xlu0 %v869, 124
      %v922 = vpop.permute.xlu0 %921
      %923 = vrot.lane.b32.xlu0 %v870, 124
      %v924 = vpop.permute.xlu0 %923
      %vm925 = vcmask 1014784
      %v926 = vsel %vm925, %v890, %v892
      %v927 = vsel %vm925, %v892, %v894
      %v928 = vsel %vm925, %v894, %v896
      %v929 = vsel %vm925, %v896, %v898
      %v930 = vsel %vm925, %v898, %v900
      %v931 = vsel %vm925, %v902, %v904
      %v932 = vsel %vm925, %v904, %v906
      %v933 = vsel %vm925, %v906, %v908
      %v934 = vsel %vm925, %v908, %v910
      %v935 = vsel %vm925, %v910, %v912
      %v936 = vsel %vm925, %v914, %v916
      %v937 = vsel %vm925, %v916, %v918
      %v938 = vsel %vm925, %v918, %v920
      %v939 = vsel %vm925, %v920, %v922
      %v940 = vsel %vm925, %v922, %v924
      %v959 = vadd.f32 %v813, %v926
      %v960 = vadd.f32 %v814, %v927
      %v961 = vadd.f32 %v815, %v928
      %v962 = vadd.f32 %v816, %v929
      %v963 = vadd.f32 %v817, %v930
      %v964 = vadd.f32 %v818, %v900
      %v965 = vadd.f32 %v819, %v931
      %v966 = vadd.f32 %v820, %v932
      %v967 = vadd.f32 %v821, %v933
      %v968 = vadd.f32 %v822, %v934
      %v969 = vadd.f32 %v823, %v935
      %v970 = vadd.f32 %v824, %v912
      %v971 = vadd.f32 %v825, %v936
      %v972 = vadd.f32 %v826, %v937
      %v973 = vadd.f32 %v827, %v938
      %v974 = vadd.f32 %v828, %v939
      %v975 = vadd.f32 %v829, %v940
      %v976 = vadd.f32 %v830, %v924
      %s977 = scalar_lea.vmem %s1, 60
      %v978 = vld [vmem:[%s977] sm:$0xf]
      %v979 = vld [vmem:[%s977 + $0x4] sm:$0xf]
      %v980 = vld [vmem:[%s977 + $0x8] sm:$0x3]
      %v981 = vunpack.c.l.bf16 %v978
      %v982 = vunpack.c.l.bf16 %v979
      %v983 = vunpack.c.l.bf16 %v980
      %985 = vset.pattern.permute.xlu0 0
      %986 = vperm.xlu0 %985, %v981
      %v987 = vpop.permute.xlu0 %986
      %990 = vset.pattern.permute.xlu0 0
      %991 = vperm.xlu0 %990, %v982
      %v992 = vpop.permute.xlu0 %991
      %995 = vset.pattern.permute.xlu0 0
      %996 = vperm.xlu0 %995, %v983
      %v997 = vpop.permute.xlu0 %996
      %v999 = vmul.f32 %v987, %v336
      %v1000 = vmul.f32 %v987, %v340
      %v1001 = vmul.f32 %v987, %v344
      %v1002 = vmul.f32 %v987, %v348
      %v1003 = vmul.f32 %v987, %v352
      %v1004 = vmul.f32 %v987, %v356
      %v1005 = vmul.f32 %v992, %v336
      %v1006 = vmul.f32 %v992, %v340
      %v1007 = vmul.f32 %v992, %v344
      %v1008 = vmul.f32 %v992, %v348
      %v1009 = vmul.f32 %v992, %v352
      %v1010 = vmul.f32 %v992, %v356
      %v1011 = vmul.f32 %v997, %v336
      %v1012 = vmul.f32 %v997, %v340
      %v1013 = vmul.f32 %v997, %v344
      %v1014 = vmul.f32 %v997, %v348
      %v1015 = vmul.f32 %v997, %v352
      %v1016 = vmul.f32 %v997, %v356
      %1035 = vrot.lane.b32.xlu0 %v999, 100
      %v1036 = vpop.permute.xlu0 %1035
      %1037 = vrot.lane.b32.xlu0 %v1000, 100
      %v1038 = vpop.permute.xlu0 %1037
      %1039 = vrot.lane.b32.xlu0 %v1001, 100
      %v1040 = vpop.permute.xlu0 %1039
      %1041 = vrot.lane.b32.xlu0 %v1002, 100
      %v1042 = vpop.permute.xlu0 %1041
      %1043 = vrot.lane.b32.xlu0 %v1003, 100
      %v1044 = vpop.permute.xlu0 %1043
      %1045 = vrot.lane.b32.xlu0 %v1004, 100
      %v1046 = vpop.permute.xlu0 %1045
      %1047 = vrot.lane.b32.xlu0 %v1005, 100
      %v1048 = vpop.permute.xlu0 %1047
      %1049 = vrot.lane.b32.xlu0 %v1006, 100
      %v1050 = vpop.permute.xlu0 %1049
      %1051 = vrot.lane.b32.xlu0 %v1007, 100
      %v1052 = vpop.permute.xlu0 %1051
      %1053 = vrot.lane.b32.xlu0 %v1008, 100
      %v1054 = vpop.permute.xlu0 %1053
      %1055 = vrot.lane.b32.xlu0 %v1009, 100
      %v1056 = vpop.permute.xlu0 %1055
      %1057 = vrot.lane.b32.xlu0 %v1010, 100
      %v1058 = vpop.permute.xlu0 %1057
      %1059 = vrot.lane.b32.xlu0 %v1011, 100
      %v1060 = vpop.permute.xlu0 %1059
      %1061 = vrot.lane.b32.xlu0 %v1012, 100
      %v1062 = vpop.permute.xlu0 %1061
      %1063 = vrot.lane.b32.xlu0 %v1013, 100
      %v1064 = vpop.permute.xlu0 %1063
      %1065 = vrot.lane.b32.xlu0 %v1014, 100
      %v1066 = vpop.permute.xlu0 %1065
      %1067 = vrot.lane.b32.xlu0 %v1015, 100
      %v1068 = vpop.permute.xlu0 %1067
      %1069 = vrot.lane.b32.xlu0 %v1016, 100
      %v1070 = vpop.permute.xlu0 %1069
      %vm1071 = vcmask 818176
      %v1072 = vsel %vm1071, %v1036, %v1038
      %v1073 = vsel %vm1071, %v1038, %v1040
      %v1074 = vsel %vm1071, %v1040, %v1042
      %v1075 = vsel %vm1071, %v1042, %v1044
      %v1076 = vsel %vm1071, %v1044, %v1046
      %v1077 = vsel %vm1071, %v1048, %v1050
      %v1078 = vsel %vm1071, %v1050, %v1052
      %v1079 = vsel %vm1071, %v1052, %v1054
      %v1080 = vsel %vm1071, %v1054, %v1056
      %v1081 = vsel %vm1071, %v1056, %v1058
      %v1082 = vsel %vm1071, %v1060, %v1062
      %v1083 = vsel %vm1071, %v1062, %v1064
      %v1084 = vsel %vm1071, %v1064, %v1066
      %v1085 = vsel %vm1071, %v1066, %v1068
      %v1086 = vsel %vm1071, %v1068, %v1070
      %v1105 = vadd.f32 %v959, %v1072
      %v1106 = vadd.f32 %v960, %v1073
      %v1107 = vadd.f32 %v961, %v1074
      %v1108 = vadd.f32 %v962, %v1075
      %v1109 = vadd.f32 %v963, %v1076
      %v1110 = vadd.f32 %v964, %v1046
      %v1111 = vadd.f32 %v965, %v1077
      %v1112 = vadd.f32 %v966, %v1078
      %v1113 = vadd.f32 %v967, %v1079
      %v1114 = vadd.f32 %v968, %v1080
      %v1115 = vadd.f32 %v969, %v1081
      %v1116 = vadd.f32 %v970, %v1058
      %v1117 = vadd.f32 %v971, %v1082
      %v1118 = vadd.f32 %v972, %v1083
      %v1119 = vadd.f32 %v973, %v1084
      %v1120 = vadd.f32 %v974, %v1085
      %v1121 = vadd.f32 %v975, %v1086
      %v1122 = vadd.f32 %v976, %v1070
      %s1123 = scalar_lea.vmem %s1, 72
      %v1124 = vld [vmem:[%s1123] sm:$0xf]
      %v1125 = vld [vmem:[%s1123 + $0x4] sm:$0xf]
      %v1126 = vld [vmem:[%s1123 + $0x8] sm:$0x3]
      %v1127 = vunpack.c.l.bf16 %v1124
      %v1128 = vunpack.c.l.bf16 %v1125
      %v1129 = vunpack.c.l.bf16 %v1126
      %1131 = vset.pattern.permute.xlu0 0
      %1132 = vperm.xlu0 %1131, %v1127
      %v1133 = vpop.permute.xlu0 %1132
      %1136 = vset.pattern.permute.xlu0 0
      %1137 = vperm.xlu0 %1136, %v1128
      %v1138 = vpop.permute.xlu0 %1137
      %1141 = vset.pattern.permute.xlu0 0
      %1142 = vperm.xlu0 %1141, %v1129
      %v1143 = vpop.permute.xlu0 %1142
      %v1145 = vmul.f32 %v1133, %v336
      %v1146 = vmul.f32 %v1133, %v340
      %v1147 = vmul.f32 %v1133, %v344
      %v1148 = vmul.f32 %v1133, %v348
      %v1149 = vmul.f32 %v1133, %v352
      %v1150 = vmul.f32 %v1133, %v356
      %v1151 = vmul.f32 %v1138, %v336
      %v1152 = vmul.f32 %v1138, %v340
      %v1153 = vmul.f32 %v1138, %v344
      %v1154 = vmul.f32 %v1138, %v348
      %v1155 = vmul.f32 %v1138, %v352
      %v1156 = vmul.f32 %v1138, %v356
      %v1157 = vmul.f32 %v1143, %v336
      %v1158 = vmul.f32 %v1143, %v340
      %v1159 = vmul.f32 %v1143, %v344
      %v1160 = vmul.f32 %v1143, %v348
      %v1161 = vmul.f32 %v1143, %v352
      %v1162 = vmul.f32 %v1143, %v356
      %1181 = vrot.lane.b32.xlu0 %v1145, 99
      %v1182 = vpop.permute.xlu0 %1181
      %1183 = vrot.lane.b32.xlu0 %v1146, 99
      %v1184 = vpop.permute.xlu0 %1183
      %1185 = vrot.lane.b32.xlu0 %v1147, 99
      %v1186 = vpop.permute.xlu0 %1185
      %1187 = vrot.lane.b32.xlu0 %v1148, 99
      %v1188 = vpop.permute.xlu0 %1187
      %1189 = vrot.lane.b32.xlu0 %v1149, 99
      %v1190 = vpop.permute.xlu0 %1189
      %1191 = vrot.lane.b32.xlu0 %v1150, 99
      %v1192 = vpop.permute.xlu0 %1191
      %1193 = vrot.lane.b32.xlu0 %v1151, 99
      %v1194 = vpop.permute.xlu0 %1193
      %1195 = vrot.lane.b32.xlu0 %v1152, 99
      %v1196 = vpop.permute.xlu0 %1195
      %1197 = vrot.lane.b32.xlu0 %v1153, 99
      %v1198 = vpop.permute.xlu0 %1197
      %1199 = vrot.lane.b32.xlu0 %v1154, 99
      %v1200 = vpop.permute.xlu0 %1199
      %1201 = vrot.lane.b32.xlu0 %v1155, 99
      %v1202 = vpop.permute.xlu0 %1201
      %1203 = vrot.lane.b32.xlu0 %v1156, 99
      %v1204 = vpop.permute.xlu0 %1203
      %1205 = vrot.lane.b32.xlu0 %v1157, 99
      %v1206 = vpop.permute.xlu0 %1205
      %1207 = vrot.lane.b32.xlu0 %v1158, 99
      %v1208 = vpop.permute.xlu0 %1207
      %1209 = vrot.lane.b32.xlu0 %v1159, 99
      %v1210 = vpop.permute.xlu0 %1209
      %1211 = vrot.lane.b32.xlu0 %v1160, 99
      %v1212 = vpop.permute.xlu0 %1211
      %1213 = vrot.lane.b32.xlu0 %v1161, 99
      %v1214 = vpop.permute.xlu0 %1213
      %1215 = vrot.lane.b32.xlu0 %v1162, 99
      %v1216 = vpop.permute.xlu0 %1215
      %vm1217 = vcmask 809984
      %v1218 = vsel %vm1217, %v1182, %v1184
      %v1219 = vsel %vm1217, %v1184, %v1186
      %v1220 = vsel %vm1217, %v1186, %v1188
      %v1221 = vsel %vm1217, %v1188, %v1190
      %v1222 = vsel %vm1217, %v1190, %v1192
      %v1223 = vsel %vm1217, %v1194, %v1196
      %v1224 = vsel %vm1217, %v1196, %v1198
      %v1225 = vsel %vm1217, %v1198, %v1200
      %v1226 = vsel %vm1217, %v1200, %v1202
      %v1227 = vsel %vm1217, %v1202, %v1204
      %v1228 = vsel %vm1217, %v1206, %v1208
      %v1229 = vsel %vm1217, %v1208, %v1210
      %v1230 = vsel %vm1217, %v1210, %v1212
      %v1231 = vsel %vm1217, %v1212, %v1214
      %v1232 = vsel %vm1217, %v1214, %v1216
      %v1251 = vadd.f32 %v1105, %v1218
      %v1252 = vadd.f32 %v1106, %v1219
      %v1253 = vadd.f32 %v1107, %v1220
      %v1254 = vadd.f32 %v1108, %v1221
      %v1255 = vadd.f32 %v1109, %v1222
      %v1256 = vadd.f32 %v1110, %v1192
      %v1257 = vadd.f32 %v1111, %v1223
      %v1258 = vadd.f32 %v1112, %v1224
      %v1259 = vadd.f32 %v1113, %v1225
      %v1260 = vadd.f32 %v1114, %v1226
      %v1261 = vadd.f32 %v1115, %v1227
      %v1262 = vadd.f32 %v1116, %v1204
      %v1263 = vadd.f32 %v1117, %v1228
      %v1264 = vadd.f32 %v1118, %v1229
      %v1265 = vadd.f32 %v1119, %v1230
      %v1266 = vadd.f32 %v1120, %v1231
      %v1267 = vadd.f32 %v1121, %v1232
      %v1268 = vadd.f32 %v1122, %v1216
      %s1269 = scalar_lea.vmem %s1, 84
      %v1270 = vld [vmem:[%s1269] sm:$0xf]
      %v1271 = vld [vmem:[%s1269 + $0x4] sm:$0xf]
      %v1272 = vld [vmem:[%s1269 + $0x8] sm:$0x3]
      %v1273 = vunpack.c.l.bf16 %v1270
      %v1274 = vunpack.c.l.bf16 %v1271
      %v1275 = vunpack.c.l.bf16 %v1272
      %1277 = vset.pattern.permute.xlu0 0
      %1278 = vperm.xlu0 %1277, %v1273
      %v1279 = vpop.permute.xlu0 %1278
      %1282 = vset.pattern.permute.xlu0 0
      %1283 = vperm.xlu0 %1282, %v1274
      %v1284 = vpop.permute.xlu0 %1283
      %1287 = vset.pattern.permute.xlu0 0
      %1288 = vperm.xlu0 %1287, %v1275
      %v1289 = vpop.permute.xlu0 %1288
      %v1291 = vmul.f32 %v1279, %v336
      %v1292 = vmul.f32 %v1279, %v340
      %v1293 = vmul.f32 %v1279, %v344
      %v1294 = vmul.f32 %v1279, %v348
      %v1295 = vmul.f32 %v1279, %v352
      %v1296 = vmul.f32 %v1279, %v356
      %v1297 = vmul.f32 %v1284, %v336
      %v1298 = vmul.f32 %v1284, %v340
      %v1299 = vmul.f32 %v1284, %v344
      %v1300 = vmul.f32 %v1284, %v348
      %v1301 = vmul.f32 %v1284, %v352
      %v1302 = vmul.f32 %v1284, %v356
      %v1303 = vmul.f32 %v1289, %v336
      %v1304 = vmul.f32 %v1289, %v340
      %v1305 = vmul.f32 %v1289, %v344
      %v1306 = vmul.f32 %v1289, %v348
      %v1307 = vmul.f32 %v1289, %v352
      %v1308 = vmul.f32 %v1289, %v356
      %1327 = vrot.lane.b32.xlu0 %v1291, 98
      %v1328 = vpop.permute.xlu0 %1327
      %1329 = vrot.lane.b32.xlu0 %v1292, 98
      %v1330 = vpop.permute.xlu0 %1329
      %1331 = vrot.lane.b32.xlu0 %v1293, 98
      %v1332 = vpop.permute.xlu0 %1331
      %1333 = vrot.lane.b32.xlu0 %v1294, 98
      %v1334 = vpop.permute.xlu0 %1333
      %1335 = vrot.lane.b32.xlu0 %v1295, 98
      %v1336 = vpop.permute.xlu0 %1335
      %1337 = vrot.lane.b32.xlu0 %v1296, 98
      %v1338 = vpop.permute.xlu0 %1337
      %1339 = vrot.lane.b32.xlu0 %v1297, 98
      %v1340 = vpop.permute.xlu0 %1339
      %1341 = vrot.lane.b32.xlu0 %v1298, 98
      %v1342 = vpop.permute.xlu0 %1341
      %1343 = vrot.lane.b32.xlu0 %v1299, 98
      %v1344 = vpop.permute.xlu0 %1343
      %1345 = vrot.lane.b32.xlu0 %v1300, 98
      %v1346 = vpop.permute.xlu0 %1345
      %1347 = vrot.lane.b32.xlu0 %v1301, 98
      %v1348 = vpop.permute.xlu0 %1347
      %1349 = vrot.lane.b32.xlu0 %v1302, 98
      %v1350 = vpop.permute.xlu0 %1349
      %1351 = vrot.lane.b32.xlu0 %v1303, 98
      %v1352 = vpop.permute.xlu0 %1351
      %1353 = vrot.lane.b32.xlu0 %v1304, 98
      %v1354 = vpop.permute.xlu0 %1353
      %1355 = vrot.lane.b32.xlu0 %v1305, 98
      %v1356 = vpop.permute.xlu0 %1355
      %1357 = vrot.lane.b32.xlu0 %v1306, 98
      %v1358 = vpop.permute.xlu0 %1357
      %1359 = vrot.lane.b32.xlu0 %v1307, 98
      %v1360 = vpop.permute.xlu0 %1359
      %1361 = vrot.lane.b32.xlu0 %v1308, 98
      %v1362 = vpop.permute.xlu0 %1361
      %vm1363 = vcmask 801792
      %v1364 = vsel %vm1363, %v1328, %v1330
      %v1365 = vsel %vm1363, %v1330, %v1332
      %v1366 = vsel %vm1363, %v1332, %v1334
      %v1367 = vsel %vm1363, %v1334, %v1336
      %v1368 = vsel %vm1363, %v1336, %v1338
      %v1369 = vsel %vm1363, %v1340, %v1342
      %v1370 = vsel %vm1363, %v1342, %v1344
      %v1371 = vsel %vm1363, %v1344, %v1346
      %v1372 = vsel %vm1363, %v1346, %v1348
      %v1373 = vsel %vm1363, %v1348, %v1350
      %v1374 = vsel %vm1363, %v1352, %v1354
      %v1375 = vsel %vm1363, %v1354, %v1356
      %v1376 = vsel %vm1363, %v1356, %v1358
      %v1377 = vsel %vm1363, %v1358, %v1360
      %v1378 = vsel %vm1363, %v1360, %v1362
      %v1397 = vadd.f32 %v1251, %v1364
      %v1398 = vadd.f32 %v1252, %v1365
      %v1399 = vadd.f32 %v1253, %v1366
      %v1400 = vadd.f32 %v1254, %v1367
      %v1401 = vadd.f32 %v1255, %v1368
      %v1402 = vadd.f32 %v1256, %v1338
      %v1403 = vadd.f32 %v1257, %v1369
      %v1404 = vadd.f32 %v1258, %v1370
      %v1405 = vadd.f32 %v1259, %v1371
      %v1406 = vadd.f32 %v1260, %v1372
      %v1407 = vadd.f32 %v1261, %v1373
      %v1408 = vadd.f32 %v1262, %v1350
      %v1409 = vadd.f32 %v1263, %v1374
      %v1410 = vadd.f32 %v1264, %v1375
      %v1411 = vadd.f32 %v1265, %v1376
      %v1412 = vadd.f32 %v1266, %v1377
      %v1413 = vadd.f32 %v1267, %v1378
      %v1414 = vadd.f32 %v1268, %v1362
      %s1415 = scalar_lea.vmem %s1, 96
      %v1416 = vld [vmem:[%s1415] sm:$0xf]
      %v1417 = vld [vmem:[%s1415 + $0x4] sm:$0xf]
      %v1418 = vld [vmem:[%s1415 + $0x8] sm:$0x3]
      %v1419 = vunpack.c.l.bf16 %v1416
      %v1420 = vunpack.c.l.bf16 %v1417
      %v1421 = vunpack.c.l.bf16 %v1418
      %1423 = vset.pattern.permute.xlu0 0
      %1424 = vperm.xlu0 %1423, %v1419
      %v1425 = vpop.permute.xlu0 %1424
      %1428 = vset.pattern.permute.xlu0 0
      %1429 = vperm.xlu0 %1428, %v1420
      %v1430 = vpop.permute.xlu0 %1429
      %1433 = vset.pattern.permute.xlu0 0
      %1434 = vperm.xlu0 %1433, %v1421
      %v1435 = vpop.permute.xlu0 %1434
      %v1437 = vmul.f32 %v1425, %v336
      %v1438 = vmul.f32 %v1425, %v340
      %v1439 = vmul.f32 %v1425, %v344
      %v1440 = vmul.f32 %v1425, %v348
      %v1441 = vmul.f32 %v1425, %v352
      %v1442 = vmul.f32 %v1425, %v356
      %v1443 = vmul.f32 %v1430, %v336
      %v1444 = vmul.f32 %v1430, %v340
      %v1445 = vmul.f32 %v1430, %v344
      %v1446 = vmul.f32 %v1430, %v348
      %v1447 = vmul.f32 %v1430, %v352
      %v1448 = vmul.f32 %v1430, %v356
      %v1449 = vmul.f32 %v1435, %v336
      %v1450 = vmul.f32 %v1435, %v340
      %v1451 = vmul.f32 %v1435, %v344
      %v1452 = vmul.f32 %v1435, %v348
      %v1453 = vmul.f32 %v1435, %v352
      %v1454 = vmul.f32 %v1435, %v356
      %1473 = vrot.lane.b32.xlu0 %v1437, 97
      %v1474 = vpop.permute.xlu0 %1473
      %1475 = vrot.lane.b32.xlu0 %v1438, 97
      %v1476 = vpop.permute.xlu0 %1475
      %1477 = vrot.lane.b32.xlu0 %v1439, 97
      %v1478 = vpop.permute.xlu0 %1477
      %1479 = vrot.lane.b32.xlu0 %v1440, 97
      %v1480 = vpop.permute.xlu0 %1479
      %1481 = vrot.lane.b32.xlu0 %v1441, 97
      %v1482 = vpop.permute.xlu0 %1481
      %1483 = vrot.lane.b32.xlu0 %v1442, 97
      %v1484 = vpop.permute.xlu0 %1483
      %1485 = vrot.lane.b32.xlu0 %v1443, 97
      %v1486 = vpop.permute.xlu0 %1485
      %1487 = vrot.lane.b32.xlu0 %v1444, 97
      %v1488 = vpop.permute.xlu0 %1487
      %1489 = vrot.lane.b32.xlu0 %v1445, 97
      %v1490 = vpop.permute.xlu0 %1489
      %1491 = vrot.lane.b32.xlu0 %v1446, 97
      %v1492 = vpop.permute.xlu0 %1491
      %1493 = vrot.lane.b32.xlu0 %v1447, 97
      %v1494 = vpop.permute.xlu0 %1493
      %1495 = vrot.lane.b32.xlu0 %v1448, 97
      %v1496 = vpop.permute.xlu0 %1495
      %1497 = vrot.lane.b32.xlu0 %v1449, 97
      %v1498 = vpop.permute.xlu0 %1497
      %1499 = vrot.lane.b32.xlu0 %v1450, 97
      %v1500 = vpop.permute.xlu0 %1499
      %1501 = vrot.lane.b32.xlu0 %v1451, 97
      %v1502 = vpop.permute.xlu0 %1501
      %1503 = vrot.lane.b32.xlu0 %v1452, 97
      %v1504 = vpop.permute.xlu0 %1503
      %1505 = vrot.lane.b32.xlu0 %v1453, 97
      %v1506 = vpop.permute.xlu0 %1505
      %1507 = vrot.lane.b32.xlu0 %v1454, 97
      %v1508 = vpop.permute.xlu0 %1507
      %vm1509 = vcmask 793600
      %v1510 = vsel %vm1509, %v1474, %v1476
      %v1511 = vsel %vm1509, %v1476, %v1478
      %v1512 = vsel %vm1509, %v1478, %v1480
      %v1513 = vsel %vm1509, %v1480, %v1482
      %v1514 = vsel %vm1509, %v1482, %v1484
      %v1515 = vsel %vm1509, %v1486, %v1488
      %v1516 = vsel %vm1509, %v1488, %v1490
      %v1517 = vsel %vm1509, %v1490, %v1492
      %v1518 = vsel %vm1509, %v1492, %v1494
      %v1519 = vsel %vm1509, %v1494, %v1496
      %v1520 = vsel %vm1509, %v1498, %v1500
      %v1521 = vsel %vm1509, %v1500, %v1502
      %v1522 = vsel %vm1509, %v1502, %v1504
      %v1523 = vsel %vm1509, %v1504, %v1506
      %v1524 = vsel %vm1509, %v1506, %v1508
      %v1543 = vadd.f32 %v1397, %v1510
      %v1544 = vadd.f32 %v1398, %v1511
      %v1545 = vadd.f32 %v1399, %v1512
      %v1546 = vadd.f32 %v1400, %v1513
      %v1547 = vadd.f32 %v1401, %v1514
      %v1548 = vadd.f32 %v1402, %v1484
      %v1549 = vadd.f32 %v1403, %v1515
      %v1550 = vadd.f32 %v1404, %v1516
      %v1551 = vadd.f32 %v1405, %v1517
      %v1552 = vadd.f32 %v1406, %v1518
      %v1553 = vadd.f32 %v1407, %v1519
      %v1554 = vadd.f32 %v1408, %v1496
      %v1555 = vadd.f32 %v1409, %v1520
      %v1556 = vadd.f32 %v1410, %v1521
      %v1557 = vadd.f32 %v1411, %v1522
      %v1558 = vadd.f32 %v1412, %v1523
      %v1559 = vadd.f32 %v1413, %v1524
      %v1560 = vadd.f32 %v1414, %v1508
      %s1561 = scalar_lea.vmem %s1, 108
      %v1562 = vld [vmem:[%s1561] sm:$0xf]
      %v1563 = vld [vmem:[%s1561 + $0x4] sm:$0xf]
      %v1564 = vld [vmem:[%s1561 + $0x8] sm:$0x3]
      %v1565 = vunpack.c.l.bf16 %v1562
      %v1566 = vunpack.c.l.bf16 %v1563
      %v1567 = vunpack.c.l.bf16 %v1564
      %1569 = vset.pattern.permute.xlu0 0
      %1570 = vperm.xlu0 %1569, %v1565
      %v1571 = vpop.permute.xlu0 %1570
      %1574 = vset.pattern.permute.xlu0 0
      %1575 = vperm.xlu0 %1574, %v1566
      %v1576 = vpop.permute.xlu0 %1575
      %1579 = vset.pattern.permute.xlu0 0
      %1580 = vperm.xlu0 %1579, %v1567
      %v1581 = vpop.permute.xlu0 %1580
      %v1583 = vmul.f32 %v1571, %v336
      %v1584 = vmul.f32 %v1571, %v340
      %v1585 = vmul.f32 %v1571, %v344
      %v1586 = vmul.f32 %v1571, %v348
      %v1587 = vmul.f32 %v1571, %v352
      %v1588 = vmul.f32 %v1571, %v356
      %v1589 = vmul.f32 %v1576, %v336
      %v1590 = vmul.f32 %v1576, %v340
      %v1591 = vmul.f32 %v1576, %v344
      %v1592 = vmul.f32 %v1576, %v348
      %v1593 = vmul.f32 %v1576, %v352
      %v1594 = vmul.f32 %v1576, %v356
      %v1595 = vmul.f32 %v1581, %v336
      %v1596 = vmul.f32 %v1581, %v340
      %v1597 = vmul.f32 %v1581, %v344
      %v1598 = vmul.f32 %v1581, %v348
      %v1599 = vmul.f32 %v1581, %v352
      %v1600 = vmul.f32 %v1581, %v356
      %1619 = vrot.lane.b32.xlu0 %v1583, 96
      %v1620 = vpop.permute.xlu0 %1619
      %1621 = vrot.lane.b32.xlu0 %v1584, 96
      %v1622 = vpop.permute.xlu0 %1621
      %1623 = vrot.lane.b32.xlu0 %v1585, 96
      %v1624 = vpop.permute.xlu0 %1623
      %1625 = vrot.lane.b32.xlu0 %v1586, 96
      %v1626 = vpop.permute.xlu0 %1625
      %1627 = vrot.lane.b32.xlu0 %v1587, 96
      %v1628 = vpop.permute.xlu0 %1627
      %1629 = vrot.lane.b32.xlu0 %v1588, 96
      %v1630 = vpop.permute.xlu0 %1629
      %1631 = vrot.lane.b32.xlu0 %v1589, 96
      %v1632 = vpop.permute.xlu0 %1631
      %1633 = vrot.lane.b32.xlu0 %v1590, 96
      %v1634 = vpop.permute.xlu0 %1633
      %1635 = vrot.lane.b32.xlu0 %v1591, 96
      %v1636 = vpop.permute.xlu0 %1635
      %1637 = vrot.lane.b32.xlu0 %v1592, 96
      %v1638 = vpop.permute.xlu0 %1637
      %1639 = vrot.lane.b32.xlu0 %v1593, 96
      %v1640 = vpop.permute.xlu0 %1639
      %1641 = vrot.lane.b32.xlu0 %v1594, 96
      %v1642 = vpop.permute.xlu0 %1641
      %1643 = vrot.lane.b32.xlu0 %v1595, 96
      %v1644 = vpop.permute.xlu0 %1643
      %1645 = vrot.lane.b32.xlu0 %v1596, 96
      %v1646 = vpop.permute.xlu0 %1645
      %1647 = vrot.lane.b32.xlu0 %v1597, 96
      %v1648 = vpop.permute.xlu0 %1647
      %1649 = vrot.lane.b32.xlu0 %v1598, 96
      %v1650 = vpop.permute.xlu0 %1649
      %1651 = vrot.lane.b32.xlu0 %v1599, 96
      %v1652 = vpop.permute.xlu0 %1651
      %1653 = vrot.lane.b32.xlu0 %v1600, 96
      %v1654 = vpop.permute.xlu0 %1653
      %vm1655 = vcmask 785408
      %v1656 = vsel %vm1655, %v1620, %v1622
      %v1657 = vsel %vm1655, %v1622, %v1624
      %v1658 = vsel %vm1655, %v1624, %v1626
      %v1659 = vsel %vm1655, %v1626, %v1628
      %v1660 = vsel %vm1655, %v1628, %v1630
      %v1661 = vsel %vm1655, %v1632, %v1634
      %v1662 = vsel %vm1655, %v1634, %v1636
      %v1663 = vsel %vm1655, %v1636, %v1638
      %v1664 = vsel %vm1655, %v1638, %v1640
      %v1665 = vsel %vm1655, %v1640, %v1642
      %v1666 = vsel %vm1655, %v1644, %v1646
      %v1667 = vsel %vm1655, %v1646, %v1648
      %v1668 = vsel %vm1655, %v1648, %v1650
      %v1669 = vsel %vm1655, %v1650, %v1652
      %v1670 = vsel %vm1655, %v1652, %v1654
      %v1689 = vadd.f32 %v1543, %v1656
      %v1690 = vadd.f32 %v1544, %v1657
      %v1691 = vadd.f32 %v1545, %v1658
      %v1692 = vadd.f32 %v1546, %v1659
      %v1693 = vadd.f32 %v1547, %v1660
      %v1694 = vadd.f32 %v1548, %v1630
      %v1695 = vadd.f32 %v1549, %v1661
      %v1696 = vadd.f32 %v1550, %v1662
      %v1697 = vadd.f32 %v1551, %v1663
      %v1698 = vadd.f32 %v1552, %v1664
      %v1699 = vadd.f32 %v1553, %v1665
      %v1700 = vadd.f32 %v1554, %v1642
      %v1701 = vadd.f32 %v1555, %v1666
      %v1702 = vadd.f32 %v1556, %v1667
      %v1703 = vadd.f32 %v1557, %v1668
      %v1704 = vadd.f32 %v1558, %v1669
      %v1705 = vadd.f32 %v1559, %v1670
      %v1706 = vadd.f32 %v1560, %v1654
      %s1707 = scalar_lea.vmem %s1, 120
      %v1708 = vld [vmem:[%s1707] sm:$0xf]
      %v1709 = vld [vmem:[%s1707 + $0x4] sm:$0xf]
      %v1710 = vld [vmem:[%s1707 + $0x8] sm:$0x3]
      %v1711 = vunpack.c.l.bf16 %v1708
      %v1712 = vunpack.c.l.bf16 %v1709
      %v1713 = vunpack.c.l.bf16 %v1710
      %1715 = vset.pattern.permute.xlu0 0
      %1716 = vperm.xlu0 %1715, %v1711
      %v1717 = vpop.permute.xlu0 %1716
      %1720 = vset.pattern.permute.xlu0 0
      %1721 = vperm.xlu0 %1720, %v1712
      %v1722 = vpop.permute.xlu0 %1721
      %1725 = vset.pattern.permute.xlu0 0
      %1726 = vperm.xlu0 %1725, %v1713
      %v1727 = vpop.permute.xlu0 %1726
      %v1729 = vmul.f32 %v1717, %v336
      %v1730 = vmul.f32 %v1717, %v340
      %v1731 = vmul.f32 %v1717, %v344
      %v1732 = vmul.f32 %v1717, %v348
      %v1733 = vmul.f32 %v1717, %v352
      %v1734 = vmul.f32 %v1717, %v356
      %v1735 = vmul.f32 %v1722, %v336
      %v1736 = vmul.f32 %v1722, %v340
      %v1737 = vmul.f32 %v1722, %v344
      %v1738 = vmul.f32 %v1722, %v348
      %v1739 = vmul.f32 %v1722, %v352
      %v1740 = vmul.f32 %v1722, %v356
      %v1741 = vmul.f32 %v1727, %v336
      %v1742 = vmul.f32 %v1727, %v340
      %v1743 = vmul.f32 %v1727, %v344
      %v1744 = vmul.f32 %v1727, %v348
      %v1745 = vmul.f32 %v1727, %v352
      %v1746 = vmul.f32 %v1727, %v356
      %1765 = vrot.lane.b32.xlu0 %v1729, 72
      %v1766 = vpop.permute.xlu0 %1765
      %1767 = vrot.lane.b32.xlu0 %v1730, 72
      %v1768 = vpop.permute.xlu0 %1767
      %1769 = vrot.lane.b32.xlu0 %v1731, 72
      %v1770 = vpop.permute.xlu0 %1769
      %1771 = vrot.lane.b32.xlu0 %v1732, 72
      %v1772 = vpop.permute.xlu0 %1771
      %1773 = vrot.lane.b32.xlu0 %v1733, 72
      %v1774 = vpop.permute.xlu0 %1773
      %1775 = vrot.lane.b32.xlu0 %v1734, 72
      %v1776 = vpop.permute.xlu0 %1775
      %1777 = vrot.lane.b32.xlu0 %v1735, 72
      %v1778 = vpop.permute.xlu0 %1777
      %1779 = vrot.lane.b32.xlu0 %v1736, 72
      %v1780 = vpop.permute.xlu0 %1779
      %1781 = vrot.lane.b32.xlu0 %v1737, 72
      %v1782 = vpop.permute.xlu0 %1781
      %1783 = vrot.lane.b32.xlu0 %v1738, 72
      %v1784 = vpop.permute.xlu0 %1783
      %1785 = vrot.lane.b32.xlu0 %v1739, 72
      %v1786 = vpop.permute.xlu0 %1785
      %1787 = vrot.lane.b32.xlu0 %v1740, 72
      %v1788 = vpop.permute.xlu0 %1787
      %1789 = vrot.lane.b32.xlu0 %v1741, 72
      %v1790 = vpop.permute.xlu0 %1789
      %1791 = vrot.lane.b32.xlu0 %v1742, 72
      %v1792 = vpop.permute.xlu0 %1791
      %1793 = vrot.lane.b32.xlu0 %v1743, 72
      %v1794 = vpop.permute.xlu0 %1793
      %1795 = vrot.lane.b32.xlu0 %v1744, 72
      %v1796 = vpop.permute.xlu0 %1795
      %1797 = vrot.lane.b32.xlu0 %v1745, 72
      %v1798 = vpop.permute.xlu0 %1797
      %1799 = vrot.lane.b32.xlu0 %v1746, 72
      %v1800 = vpop.permute.xlu0 %1799
      %vm1801 = vcmask 588800
      %v1802 = vsel %vm1801, %v1766, %v1768
      %v1803 = vsel %vm1801, %v1768, %v1770
      %v1804 = vsel %vm1801, %v1770, %v1772
      %v1805 = vsel %vm1801, %v1772, %v1774
      %v1806 = vsel %vm1801, %v1774, %v1776
      %v1807 = vsel %vm1801, %v1778, %v1780
      %v1808 = vsel %vm1801, %v1780, %v1782
      %v1809 = vsel %vm1801, %v1782, %v1784
      %v1810 = vsel %vm1801, %v1784, %v1786
      %v1811 = vsel %vm1801, %v1786, %v1788
      %v1812 = vsel %vm1801, %v1790, %v1792
      %v1813 = vsel %vm1801, %v1792, %v1794
      %v1814 = vsel %vm1801, %v1794, %v1796
      %v1815 = vsel %vm1801, %v1796, %v1798
      %v1816 = vsel %vm1801, %v1798, %v1800
      %v1835 = vadd.f32 %v1689, %v1802
      %v1836 = vadd.f32 %v1690, %v1803
      %v1837 = vadd.f32 %v1691, %v1804
      %v1838 = vadd.f32 %v1692, %v1805
      %v1839 = vadd.f32 %v1693, %v1806
      %v1840 = vadd.f32 %v1694, %v1776
      %v1841 = vadd.f32 %v1695, %v1807
      %v1842 = vadd.f32 %v1696, %v1808
      %v1843 = vadd.f32 %v1697, %v1809
      %v1844 = vadd.f32 %v1698, %v1810
      %v1845 = vadd.f32 %v1699, %v1811
      %v1846 = vadd.f32 %v1700, %v1788
      %v1847 = vadd.f32 %v1701, %v1812
      %v1848 = vadd.f32 %v1702, %v1813
      %v1849 = vadd.f32 %v1703, %v1814
      %v1850 = vadd.f32 %v1704, %v1815
      %v1851 = vadd.f32 %v1705, %v1816
      %v1852 = vadd.f32 %v1706, %v1800
      %s1853 = scalar_lea.vmem %s1, 132
      %v1854 = vld [vmem:[%s1853] sm:$0xf]
      %v1855 = vld [vmem:[%s1853 + $0x4] sm:$0xf]
      %v1856 = vld [vmem:[%s1853 + $0x8] sm:$0x3]
      %v1857 = vunpack.c.l.bf16 %v1854
      %v1858 = vunpack.c.l.bf16 %v1855
      %v1859 = vunpack.c.l.bf16 %v1856
      %1861 = vset.pattern.permute.xlu0 0
      %1862 = vperm.xlu0 %1861, %v1857
      %v1863 = vpop.permute.xlu0 %1862
      %1866 = vset.pattern.permute.xlu0 0
      %1867 = vperm.xlu0 %1866, %v1858
      %v1868 = vpop.permute.xlu0 %1867
      %1871 = vset.pattern.permute.xlu0 0
      %1872 = vperm.xlu0 %1871, %v1859
      %v1873 = vpop.permute.xlu0 %1872
      %v1875 = vmul.f32 %v1863, %v336
      %v1876 = vmul.f32 %v1863, %v340
      %v1877 = vmul.f32 %v1863, %v344
      %v1878 = vmul.f32 %v1863, %v348
      %v1879 = vmul.f32 %v1863, %v352
      %v1880 = vmul.f32 %v1863, %v356
      %v1881 = vmul.f32 %v1868, %v336
      %v1882 = vmul.f32 %v1868, %v340
      %v1883 = vmul.f32 %v1868, %v344
      %v1884 = vmul.f32 %v1868, %v348
      %v1885 = vmul.f32 %v1868, %v352
      %v1886 = vmul.f32 %v1868, %v356
      %v1887 = vmul.f32 %v1873, %v336
      %v1888 = vmul.f32 %v1873, %v340
      %v1889 = vmul.f32 %v1873, %v344
      %v1890 = vmul.f32 %v1873, %v348
      %v1891 = vmul.f32 %v1873, %v352
      %v1892 = vmul.f32 %v1873, %v356
      %1911 = vrot.lane.b32.xlu0 %v1875, 71
      %v1912 = vpop.permute.xlu0 %1911
      %1913 = vrot.lane.b32.xlu0 %v1876, 71
      %v1914 = vpop.permute.xlu0 %1913
      %1915 = vrot.lane.b32.xlu0 %v1877, 71
      %v1916 = vpop.permute.xlu0 %1915
      %1917 = vrot.lane.b32.xlu0 %v1878, 71
      %v1918 = vpop.permute.xlu0 %1917
      %1919 = vrot.lane.b32.xlu0 %v1879, 71
      %v1920 = vpop.permute.xlu0 %1919
      %1921 = vrot.lane.b32.xlu0 %v1880, 71
      %v1922 = vpop.permute.xlu0 %1921
      %1923 = vrot.lane.b32.xlu0 %v1881, 71
      %v1924 = vpop.permute.xlu0 %1923
      %1925 = vrot.lane.b32.xlu0 %v1882, 71
      %v1926 = vpop.permute.xlu0 %1925
      %1927 = vrot.lane.b32.xlu0 %v1883, 71
      %v1928 = vpop.permute.xlu0 %1927
      %1929 = vrot.lane.b32.xlu0 %v1884, 71
      %v1930 = vpop.permute.xlu0 %1929
      %1931 = vrot.lane.b32.xlu0 %v1885, 71
      %v1932 = vpop.permute.xlu0 %1931
      %1933 = vrot.lane.b32.xlu0 %v1886, 71
      %v1934 = vpop.permute.xlu0 %1933
      %1935 = vrot.lane.b32.xlu0 %v1887, 71
      %v1936 = vpop.permute.xlu0 %1935
      %1937 = vrot.lane.b32.xlu0 %v1888, 71
      %v1938 = vpop.permute.xlu0 %1937
      %1939 = vrot.lane.b32.xlu0 %v1889, 71
      %v1940 = vpop.permute.xlu0 %1939
      %1941 = vrot.lane.b32.xlu0 %v1890, 71
      %v1942 = vpop.permute.xlu0 %1941
      %1943 = vrot.lane.b32.xlu0 %v1891, 71
      %v1944 = vpop.permute.xlu0 %1943
      %1945 = vrot.lane.b32.xlu0 %v1892, 71
      %v1946 = vpop.permute.xlu0 %1945
      %vm1947 = vcmask 580608
      %v1948 = vsel %vm1947, %v1912, %v1914
      %v1949 = vsel %vm1947, %v1914, %v1916
      %v1950 = vsel %vm1947, %v1916, %v1918
      %v1951 = vsel %vm1947, %v1918, %v1920
      %v1952 = vsel %vm1947, %v1920, %v1922
      %v1953 = vsel %vm1947, %v1924, %v1926
      %v1954 = vsel %vm1947, %v1926, %v1928
      %v1955 = vsel %vm1947, %v1928, %v1930
      %v1956 = vsel %vm1947, %v1930, %v1932
      %v1957 = vsel %vm1947, %v1932, %v1934
      %v1958 = vsel %vm1947, %v1936, %v1938
      %v1959 = vsel %vm1947, %v1938, %v1940
      %v1960 = vsel %vm1947, %v1940, %v1942
      %v1961 = vsel %vm1947, %v1942, %v1944
      %v1962 = vsel %vm1947, %v1944, %v1946
      %v1981 = vadd.f32 %v1835, %v1948
      %v1982 = vadd.f32 %v1836, %v1949
      %v1983 = vadd.f32 %v1837, %v1950
      %v1984 = vadd.f32 %v1838, %v1951
      %v1985 = vadd.f32 %v1839, %v1952
      %v1986 = vadd.f32 %v1840, %v1922
      %v1987 = vadd.f32 %v1841, %v1953
      %v1988 = vadd.f32 %v1842, %v1954
      %v1989 = vadd.f32 %v1843, %v1955
      %v1990 = vadd.f32 %v1844, %v1956
      %v1991 = vadd.f32 %v1845, %v1957
      %v1992 = vadd.f32 %v1846, %v1934
      %v1993 = vadd.f32 %v1847, %v1958
      %v1994 = vadd.f32 %v1848, %v1959
      %v1995 = vadd.f32 %v1849, %v1960
      %v1996 = vadd.f32 %v1850, %v1961
      %v1997 = vadd.f32 %v1851, %v1962
      %v1998 = vadd.f32 %v1852, %v1946
      %s1999 = scalar_lea.vmem %s1, 144
      %v2000 = vld [vmem:[%s1999] sm:$0xf]
      %v2001 = vld [vmem:[%s1999 + $0x4] sm:$0xf]
      %v2002 = vld [vmem:[%s1999 + $0x8] sm:$0x3]
      %v2003 = vunpack.c.l.bf16 %v2000
      %v2004 = vunpack.c.l.bf16 %v2001
      %v2005 = vunpack.c.l.bf16 %v2002
      %2007 = vset.pattern.permute.xlu0 0
      %2008 = vperm.xlu0 %2007, %v2003
      %v2009 = vpop.permute.xlu0 %2008
      %2012 = vset.pattern.permute.xlu0 0
      %2013 = vperm.xlu0 %2012, %v2004
      %v2014 = vpop.permute.xlu0 %2013
      %2017 = vset.pattern.permute.xlu0 0
      %2018 = vperm.xlu0 %2017, %v2005
      %v2019 = vpop.permute.xlu0 %2018
      %v2021 = vmul.f32 %v2009, %v336
      %v2022 = vmul.f32 %v2009, %v340
      %v2023 = vmul.f32 %v2009, %v344
      %v2024 = vmul.f32 %v2009, %v348
      %v2025 = vmul.f32 %v2009, %v352
      %v2026 = vmul.f32 %v2009, %v356
      %v2027 = vmul.f32 %v2014, %v336
      %v2028 = vmul.f32 %v2014, %v340
      %v2029 = vmul.f32 %v2014, %v344
      %v2030 = vmul.f32 %v2014, %v348
      %v2031 = vmul.f32 %v2014, %v352
      %v2032 = vmul.f32 %v2014, %v356
      %v2033 = vmul.f32 %v2019, %v336
      %v2034 = vmul.f32 %v2019, %v340
      %v2035 = vmul.f32 %v2019, %v344
      %v2036 = vmul.f32 %v2019, %v348
      %v2037 = vmul.f32 %v2019, %v352
      %v2038 = vmul.f32 %v2019, %v356
      %2057 = vrot.lane.b32.xlu0 %v2021, 70
      %v2058 = vpop.permute.xlu0 %2057
      %2059 = vrot.lane.b32.xlu0 %v2022, 70
      %v2060 = vpop.permute.xlu0 %2059
      %2061 = vrot.lane.b32.xlu0 %v2023, 70
      %v2062 = vpop.permute.xlu0 %2061
      %2063 = vrot.lane.b32.xlu0 %v2024, 70
      %v2064 = vpop.permute.xlu0 %2063
      %2065 = vrot.lane.b32.xlu0 %v2025, 70
      %v2066 = vpop.permute.xlu0 %2065
      %2067 = vrot.lane.b32.xlu0 %v2026, 70
      %v2068 = vpop.permute.xlu0 %2067
      %2069 = vrot.lane.b32.xlu0 %v2027, 70
      %v2070 = vpop.permute.xlu0 %2069
      %2071 = vrot.lane.b32.xlu0 %v2028, 70
      %v2072 = vpop.permute.xlu0 %2071
      %2073 = vrot.lane.b32.xlu0 %v2029, 70
      %v2074 = vpop.permute.xlu0 %2073
      %2075 = vrot.lane.b32.xlu0 %v2030, 70
      %v2076 = vpop.permute.xlu0 %2075
      %2077 = vrot.lane.b32.xlu0 %v2031, 70
      %v2078 = vpop.permute.xlu0 %2077
      %2079 = vrot.lane.b32.xlu0 %v2032, 70
      %v2080 = vpop.permute.xlu0 %2079
      %2081 = vrot.lane.b32.xlu0 %v2033, 70
      %v2082 = vpop.permute.xlu0 %2081
      %2083 = vrot.lane.b32.xlu0 %v2034, 70
      %v2084 = vpop.permute.xlu0 %2083
      %2085 = vrot.lane.b32.xlu0 %v2035, 70
      %v2086 = vpop.permute.xlu0 %2085
      %2087 = vrot.lane.b32.xlu0 %v2036, 70
      %v2088 = vpop.permute.xlu0 %2087
      %2089 = vrot.lane.b32.xlu0 %v2037, 70
      %v2090 = vpop.permute.xlu0 %2089
      %2091 = vrot.lane.b32.xlu0 %v2038, 70
      %v2092 = vpop.permute.xlu0 %2091
      %vm2093 = vcmask 572416
      %v2094 = vsel %vm2093, %v2058, %v2060
      %v2095 = vsel %vm2093, %v2060, %v2062
      %v2096 = vsel %vm2093, %v2062, %v2064
      %v2097 = vsel %vm2093, %v2064, %v2066
      %v2098 = vsel %vm2093, %v2066, %v2068
      %v2099 = vsel %vm2093, %v2070, %v2072
      %v2100 = vsel %vm2093, %v2072, %v2074
      %v2101 = vsel %vm2093, %v2074, %v2076
      %v2102 = vsel %vm2093, %v2076, %v2078
      %v2103 = vsel %vm2093, %v2078, %v2080
      %v2104 = vsel %vm2093, %v2082, %v2084
      %v2105 = vsel %vm2093, %v2084, %v2086
      %v2106 = vsel %vm2093, %v2086, %v2088
      %v2107 = vsel %vm2093, %v2088, %v2090
      %v2108 = vsel %vm2093, %v2090, %v2092
      %v2127 = vadd.f32 %v1981, %v2094
      %v2128 = vadd.f32 %v1982, %v2095
      %v2129 = vadd.f32 %v1983, %v2096
      %v2130 = vadd.f32 %v1984, %v2097
      %v2131 = vadd.f32 %v1985, %v2098
      %v2132 = vadd.f32 %v1986, %v2068
      %v2133 = vadd.f32 %v1987, %v2099
      %v2134 = vadd.f32 %v1988, %v2100
      %v2135 = vadd.f32 %v1989, %v2101
      %v2136 = vadd.f32 %v1990, %v2102
      %v2137 = vadd.f32 %v1991, %v2103
      %v2138 = vadd.f32 %v1992, %v2080
      %v2139 = vadd.f32 %v1993, %v2104
      %v2140 = vadd.f32 %v1994, %v2105
      %v2141 = vadd.f32 %v1995, %v2106
      %v2142 = vadd.f32 %v1996, %v2107
      %v2143 = vadd.f32 %v1997, %v2108
      %v2144 = vadd.f32 %v1998, %v2092
      %s2145 = scalar_lea.vmem %s1, 156
      %v2146 = vld [vmem:[%s2145] sm:$0xf]
      %v2147 = vld [vmem:[%s2145 + $0x4] sm:$0xf]
      %v2148 = vld [vmem:[%s2145 + $0x8] sm:$0x3]
      %v2149 = vunpack.c.l.bf16 %v2146
      %v2150 = vunpack.c.l.bf16 %v2147
      %v2151 = vunpack.c.l.bf16 %v2148
      %2153 = vset.pattern.permute.xlu0 0
      %2154 = vperm.xlu0 %2153, %v2149
      %v2155 = vpop.permute.xlu0 %2154
      %2158 = vset.pattern.permute.xlu0 0
      %2159 = vperm.xlu0 %2158, %v2150
      %v2160 = vpop.permute.xlu0 %2159
      %2163 = vset.pattern.permute.xlu0 0
      %2164 = vperm.xlu0 %2163, %v2151
      %v2165 = vpop.permute.xlu0 %2164
      %v2167 = vmul.f32 %v2155, %v336
      %v2168 = vmul.f32 %v2155, %v340
      %v2169 = vmul.f32 %v2155, %v344
      %v2170 = vmul.f32 %v2155, %v348
      %v2171 = vmul.f32 %v2155, %v352
      %v2172 = vmul.f32 %v2155, %v356
      %v2173 = vmul.f32 %v2160, %v336
      %v2174 = vmul.f32 %v2160, %v340
      %v2175 = vmul.f32 %v2160, %v344
      %v2176 = vmul.f32 %v2160, %v348
      %v2177 = vmul.f32 %v2160, %v352
      %v2178 = vmul.f32 %v2160, %v356
      %v2179 = vmul.f32 %v2165, %v336
      %v2180 = vmul.f32 %v2165, %v340
      %v2181 = vmul.f32 %v2165, %v344
      %v2182 = vmul.f32 %v2165, %v348
      %v2183 = vmul.f32 %v2165, %v352
      %v2184 = vmul.f32 %v2165, %v356
      %2203 = vrot.lane.b32.xlu0 %v2167, 69
      %v2204 = vpop.permute.xlu0 %2203
      %2205 = vrot.lane.b32.xlu0 %v2168, 69
      %v2206 = vpop.permute.xlu0 %2205
      %2207 = vrot.lane.b32.xlu0 %v2169, 69
      %v2208 = vpop.permute.xlu0 %2207
      %2209 = vrot.lane.b32.xlu0 %v2170, 69
      %v2210 = vpop.permute.xlu0 %2209
      %2211 = vrot.lane.b32.xlu0 %v2171, 69
      %v2212 = vpop.permute.xlu0 %2211
      %2213 = vrot.lane.b32.xlu0 %v2172, 69
      %v2214 = vpop.permute.xlu0 %2213
      %2215 = vrot.lane.b32.xlu0 %v2173, 69
      %v2216 = vpop.permute.xlu0 %2215
      %2217 = vrot.lane.b32.xlu0 %v2174, 69
      %v2218 = vpop.permute.xlu0 %2217
      %2219 = vrot.lane.b32.xlu0 %v2175, 69
      %v2220 = vpop.permute.xlu0 %2219
      %2221 = vrot.lane.b32.xlu0 %v2176, 69
      %v2222 = vpop.permute.xlu0 %2221
      %2223 = vrot.lane.b32.xlu0 %v2177, 69
      %v2224 = vpop.permute.xlu0 %2223
      %2225 = vrot.lane.b32.xlu0 %v2178, 69
      %v2226 = vpop.permute.xlu0 %2225
      %2227 = vrot.lane.b32.xlu0 %v2179, 69
      %v2228 = vpop.permute.xlu0 %2227
      %2229 = vrot.lane.b32.xlu0 %v2180, 69
      %v2230 = vpop.permute.xlu0 %2229
      %2231 = vrot.lane.b32.xlu0 %v2181, 69
      %v2232 = vpop.permute.xlu0 %2231
      %2233 = vrot.lane.b32.xlu0 %v2182, 69
      %v2234 = vpop.permute.xlu0 %2233
      %2235 = vrot.lane.b32.xlu0 %v2183, 69
      %v2236 = vpop.permute.xlu0 %2235
      %2237 = vrot.lane.b32.xlu0 %v2184, 69
      %v2238 = vpop.permute.xlu0 %2237
      %vm2239 = vcmask 564224
      %v2240 = vsel %vm2239, %v2204, %v2206
      %v2241 = vsel %vm2239, %v2206, %v2208
      %v2242 = vsel %vm2239, %v2208, %v2210
      %v2243 = vsel %vm2239, %v2210, %v2212
      %v2244 = vsel %vm2239, %v2212, %v2214
      %v2245 = vsel %vm2239, %v2216, %v2218
      %v2246 = vsel %vm2239, %v2218, %v2220
      %v2247 = vsel %vm2239, %v2220, %v2222
      %v2248 = vsel %vm2239, %v2222, %v2224
      %v2249 = vsel %vm2239, %v2224, %v2226
      %v2250 = vsel %vm2239, %v2228, %v2230
      %v2251 = vsel %vm2239, %v2230, %v2232
      %v2252 = vsel %vm2239, %v2232, %v2234
      %v2253 = vsel %vm2239, %v2234, %v2236
      %v2254 = vsel %vm2239, %v2236, %v2238
      %v2273 = vadd.f32 %v2127, %v2240
      %v2274 = vadd.f32 %v2128, %v2241
      %v2275 = vadd.f32 %v2129, %v2242
      %v2276 = vadd.f32 %v2130, %v2243
      %v2277 = vadd.f32 %v2131, %v2244
      %v2278 = vadd.f32 %v2132, %v2214
      %v2279 = vadd.f32 %v2133, %v2245
      %v2280 = vadd.f32 %v2134, %v2246
      %v2281 = vadd.f32 %v2135, %v2247
      %v2282 = vadd.f32 %v2136, %v2248
      %v2283 = vadd.f32 %v2137, %v2249
      %v2284 = vadd.f32 %v2138, %v2226
      %v2285 = vadd.f32 %v2139, %v2250
      %v2286 = vadd.f32 %v2140, %v2251
      %v2287 = vadd.f32 %v2141, %v2252
      %v2288 = vadd.f32 %v2142, %v2253
      %v2289 = vadd.f32 %v2143, %v2254
      %v2290 = vadd.f32 %v2144, %v2238
      %s2291 = scalar_lea.vmem %s1, 168
      %v2292 = vld [vmem:[%s2291] sm:$0xf]
      %v2293 = vld [vmem:[%s2291 + $0x4] sm:$0xf]
      %v2294 = vld [vmem:[%s2291 + $0x8] sm:$0x3]
      %v2295 = vunpack.c.l.bf16 %v2292
      %v2296 = vunpack.c.l.bf16 %v2293
      %v2297 = vunpack.c.l.bf16 %v2294
      %2299 = vset.pattern.permute.xlu0 0
      %2300 = vperm.xlu0 %2299, %v2295
      %v2301 = vpop.permute.xlu0 %2300
      %2304 = vset.pattern.permute.xlu0 0
      %2305 = vperm.xlu0 %2304, %v2296
      %v2306 = vpop.permute.xlu0 %2305
      %2309 = vset.pattern.permute.xlu0 0
      %2310 = vperm.xlu0 %2309, %v2297
      %v2311 = vpop.permute.xlu0 %2310
      %v2313 = vmul.f32 %v2301, %v336
      %v2314 = vmul.f32 %v2301, %v340
      %v2315 = vmul.f32 %v2301, %v344
      %v2316 = vmul.f32 %v2301, %v348
      %v2317 = vmul.f32 %v2301, %v352
      %v2318 = vmul.f32 %v2301, %v356
      %v2319 = vmul.f32 %v2306, %v336
      %v2320 = vmul.f32 %v2306, %v340
      %v2321 = vmul.f32 %v2306, %v344
      %v2322 = vmul.f32 %v2306, %v348
      %v2323 = vmul.f32 %v2306, %v352
      %v2324 = vmul.f32 %v2306, %v356
      %v2325 = vmul.f32 %v2311, %v336
      %v2326 = vmul.f32 %v2311, %v340
      %v2327 = vmul.f32 %v2311, %v344
      %v2328 = vmul.f32 %v2311, %v348
      %v2329 = vmul.f32 %v2311, %v352
      %v2330 = vmul.f32 %v2311, %v356
      %2349 = vrot.lane.b32.xlu0 %v2313, 68
      %v2350 = vpop.permute.xlu0 %2349
      %2351 = vrot.lane.b32.xlu0 %v2314, 68
      %v2352 = vpop.permute.xlu0 %2351
      %2353 = vrot.lane.b32.xlu0 %v2315, 68
      %v2354 = vpop.permute.xlu0 %2353
      %2355 = vrot.lane.b32.xlu0 %v2316, 68
      %v2356 = vpop.permute.xlu0 %2355
      %2357 = vrot.lane.b32.xlu0 %v2317, 68
      %v2358 = vpop.permute.xlu0 %2357
      %2359 = vrot.lane.b32.xlu0 %v2318, 68
      %v2360 = vpop.permute.xlu0 %2359
      %2361 = vrot.lane.b32.xlu0 %v2319, 68
      %v2362 = vpop.permute.xlu0 %2361
      %2363 = vrot.lane.b32.xlu0 %v2320, 68
      %v2364 = vpop.permute.xlu0 %2363
      %2365 = vrot.lane.b32.xlu0 %v2321, 68
      %v2366 = vpop.permute.xlu0 %2365
      %2367 = vrot.lane.b32.xlu0 %v2322, 68
      %v2368 = vpop.permute.xlu0 %2367
      %2369 = vrot.lane.b32.xlu0 %v2323, 68
      %v2370 = vpop.permute.xlu0 %2369
      %2371 = vrot.lane.b32.xlu0 %v2324, 68
      %v2372 = vpop.permute.xlu0 %2371
      %2373 = vrot.lane.b32.xlu0 %v2325, 68
      %v2374 = vpop.permute.xlu0 %2373
      %2375 = vrot.lane.b32.xlu0 %v2326, 68
      %v2376 = vpop.permute.xlu0 %2375
      %2377 = vrot.lane.b32.xlu0 %v2327, 68
      %v2378 = vpop.permute.xlu0 %2377
      %2379 = vrot.lane.b32.xlu0 %v2328, 68
      %v2380 = vpop.permute.xlu0 %2379
      %2381 = vrot.lane.b32.xlu0 %v2329, 68
      %v2382 = vpop.permute.xlu0 %2381
      %2383 = vrot.lane.b32.xlu0 %v2330, 68
      %v2384 = vpop.permute.xlu0 %2383
      %vm2385 = vcmask 556032
      %v2386 = vsel %vm2385, %v2350, %v2352
      %v2387 = vsel %vm2385, %v2352, %v2354
      %v2388 = vsel %vm2385, %v2354, %v2356
      %v2389 = vsel %vm2385, %v2356, %v2358
      %v2390 = vsel %vm2385, %v2358, %v2360
      %v2391 = vsel %vm2385, %v2362, %v2364
      %v2392 = vsel %vm2385, %v2364, %v2366
      %v2393 = vsel %vm2385, %v2366, %v2368
      %v2394 = vsel %vm2385, %v2368, %v2370
      %v2395 = vsel %vm2385, %v2370, %v2372
      %v2396 = vsel %vm2385, %v2374, %v2376
      %v2397 = vsel %vm2385, %v2376, %v2378
      %v2398 = vsel %vm2385, %v2378, %v2380
      %v2399 = vsel %vm2385, %v2380, %v2382
      %v2400 = vsel %vm2385, %v2382, %v2384
      %v2419 = vadd.f32 %v2273, %v2386
      %v2420 = vadd.f32 %v2274, %v2387
      %v2421 = vadd.f32 %v2275, %v2388
      %v2422 = vadd.f32 %v2276, %v2389
      %v2423 = vadd.f32 %v2277, %v2390
      %v2424 = vadd.f32 %v2278, %v2360
      %v2425 = vadd.f32 %v2279, %v2391
      %v2426 = vadd.f32 %v2280, %v2392
      %v2427 = vadd.f32 %v2281, %v2393
      %v2428 = vadd.f32 %v2282, %v2394
      %v2429 = vadd.f32 %v2283, %v2395
      %v2430 = vadd.f32 %v2284, %v2372
      %v2431 = vadd.f32 %v2285, %v2396
      %v2432 = vadd.f32 %v2286, %v2397
      %v2433 = vadd.f32 %v2287, %v2398
      %v2434 = vadd.f32 %v2288, %v2399
      %v2435 = vadd.f32 %v2289, %v2400
      %v2436 = vadd.f32 %v2290, %v2384
      %s2437 = scalar_lea.vmem %s1, 180
      %v2438 = vld [vmem:[%s2437] sm:$0xf]
      %v2439 = vld [vmem:[%s2437 + $0x4] sm:$0xf]
      %v2440 = vld [vmem:[%s2437 + $0x8] sm:$0x3]
      %v2441 = vunpack.c.l.bf16 %v2438
      %v2442 = vunpack.c.l.bf16 %v2439
      %v2443 = vunpack.c.l.bf16 %v2440
      %2445 = vset.pattern.permute.xlu0 0
      %2446 = vperm.xlu0 %2445, %v2441
      %v2447 = vpop.permute.xlu0 %2446
      %2450 = vset.pattern.permute.xlu0 0
      %2451 = vperm.xlu0 %2450, %v2442
      %v2452 = vpop.permute.xlu0 %2451
      %2455 = vset.pattern.permute.xlu0 0
      %2456 = vperm.xlu0 %2455, %v2443
      %v2457 = vpop.permute.xlu0 %2456
      %v2459 = vmul.f32 %v2447, %v336
      %v2460 = vmul.f32 %v2447, %v340
      %v2461 = vmul.f32 %v2447, %v344
      %v2462 = vmul.f32 %v2447, %v348
      %v2463 = vmul.f32 %v2447, %v352
      %v2464 = vmul.f32 %v2447, %v356
      %v2465 = vmul.f32 %v2452, %v336
      %v2466 = vmul.f32 %v2452, %v340
      %v2467 = vmul.f32 %v2452, %v344
      %v2468 = vmul.f32 %v2452, %v348
      %v2469 = vmul.f32 %v2452, %v352
      %v2470 = vmul.f32 %v2452, %v356
      %v2471 = vmul.f32 %v2457, %v336
      %v2472 = vmul.f32 %v2457, %v340
      %v2473 = vmul.f32 %v2457, %v344
      %v2474 = vmul.f32 %v2457, %v348
      %v2475 = vmul.f32 %v2457, %v352
      %v2476 = vmul.f32 %v2457, %v356
      %2495 = vrot.lane.b32.xlu0 %v2459, 44
      %v2496 = vpop.permute.xlu0 %2495
      %2497 = vrot.lane.b32.xlu0 %v2460, 44
      %v2498 = vpop.permute.xlu0 %2497
      %2499 = vrot.lane.b32.xlu0 %v2461, 44
      %v2500 = vpop.permute.xlu0 %2499
      %2501 = vrot.lane.b32.xlu0 %v2462, 44
      %v2502 = vpop.permute.xlu0 %2501
      %2503 = vrot.lane.b32.xlu0 %v2463, 44
      %v2504 = vpop.permute.xlu0 %2503
      %2505 = vrot.lane.b32.xlu0 %v2464, 44
      %v2506 = vpop.permute.xlu0 %2505
      %2507 = vrot.lane.b32.xlu0 %v2465, 44
      %v2508 = vpop.permute.xlu0 %2507
      %2509 = vrot.lane.b32.xlu0 %v2466, 44
      %v2510 = vpop.permute.xlu0 %2509
      %2511 = vrot.lane.b32.xlu0 %v2467, 44
      %v2512 = vpop.permute.xlu0 %2511
      %2513 = vrot.lane.b32.xlu0 %v2468, 44
      %v2514 = vpop.permute.xlu0 %2513
      %2515 = vrot.lane.b32.xlu0 %v2469, 44
      %v2516 = vpop.permute.xlu0 %2515
      %2517 = vrot.lane.b32.xlu0 %v2470, 44
      %v2518 = vpop.permute.xlu0 %2517
      %2519 = vrot.lane.b32.xlu0 %v2471, 44
      %v2520 = vpop.permute.xlu0 %2519
      %2521 = vrot.lane.b32.xlu0 %v2472, 44
      %v2522 = vpop.permute.xlu0 %2521
      %2523 = vrot.lane.b32.xlu0 %v2473, 44
      %v2524 = vpop.permute.xlu0 %2523
      %2525 = vrot.lane.b32.xlu0 %v2474, 44
      %v2526 = vpop.permute.xlu0 %2525
      %2527 = vrot.lane.b32.xlu0 %v2475, 44
      %v2528 = vpop.permute.xlu0 %2527
      %2529 = vrot.lane.b32.xlu0 %v2476, 44
      %v2530 = vpop.permute.xlu0 %2529
      %vm2531 = vcmask 359424
      %v2532 = vsel %vm2531, %v2496, %v2498
      %v2533 = vsel %vm2531, %v2498, %v2500
      %v2534 = vsel %vm2531, %v2500, %v2502
      %v2535 = vsel %vm2531, %v2502, %v2504
      %v2536 = vsel %vm2531, %v2504, %v2506
      %v2537 = vsel %vm2531, %v2508, %v2510
      %v2538 = vsel %vm2531, %v2510, %v2512
      %v2539 = vsel %vm2531, %v2512, %v2514
      %v2540 = vsel %vm2531, %v2514, %v2516
      %v2541 = vsel %vm2531, %v2516, %v2518
      %v2542 = vsel %vm2531, %v2520, %v2522
      %v2543 = vsel %vm2531, %v2522, %v2524
      %v2544 = vsel %vm2531, %v2524, %v2526
      %v2545 = vsel %vm2531, %v2526, %v2528
      %v2546 = vsel %vm2531, %v2528, %v2530
      %v2565 = vadd.f32 %v2419, %v2532
      %v2566 = vadd.f32 %v2420, %v2533
      %v2567 = vadd.f32 %v2421, %v2534
      %v2568 = vadd.f32 %v2422, %v2535
      %v2569 = vadd.f32 %v2423, %v2536
      %v2570 = vadd.f32 %v2424, %v2506
      %v2571 = vadd.f32 %v2425, %v2537
      %v2572 = vadd.f32 %v2426, %v2538
      %v2573 = vadd.f32 %v2427, %v2539
      %v2574 = vadd.f32 %v2428, %v2540
      %v2575 = vadd.f32 %v2429, %v2541
      %v2576 = vadd.f32 %v2430, %v2518
      %v2577 = vadd.f32 %v2431, %v2542
      %v2578 = vadd.f32 %v2432, %v2543
      %v2579 = vadd.f32 %v2433, %v2544
      %v2580 = vadd.f32 %v2434, %v2545
      %v2581 = vadd.f32 %v2435, %v2546
      %v2582 = vadd.f32 %v2436, %v2530
      %s2583 = scalar_lea.vmem %s1, 192
      %v2584 = vld [vmem:[%s2583] sm:$0xf]
      %v2585 = vld [vmem:[%s2583 + $0x4] sm:$0xf]
      %v2586 = vld [vmem:[%s2583 + $0x8] sm:$0x3]
      %v2587 = vunpack.c.l.bf16 %v2584
      %v2588 = vunpack.c.l.bf16 %v2585
      %v2589 = vunpack.c.l.bf16 %v2586
      %2591 = vset.pattern.permute.xlu0 0
      %2592 = vperm.xlu0 %2591, %v2587
      %v2593 = vpop.permute.xlu0 %2592
      %2596 = vset.pattern.permute.xlu0 0
      %2597 = vperm.xlu0 %2596, %v2588
      %v2598 = vpop.permute.xlu0 %2597
      %2601 = vset.pattern.permute.xlu0 0
      %2602 = vperm.xlu0 %2601, %v2589
      %v2603 = vpop.permute.xlu0 %2602
      %v2605 = vmul.f32 %v2593, %v336
      %v2606 = vmul.f32 %v2593, %v340
      %v2607 = vmul.f32 %v2593, %v344
      %v2608 = vmul.f32 %v2593, %v348
      %v2609 = vmul.f32 %v2593, %v352
      %v2610 = vmul.f32 %v2593, %v356
      %v2611 = vmul.f32 %v2598, %v336
      %v2612 = vmul.f32 %v2598, %v340
      %v2613 = vmul.f32 %v2598, %v344
      %v2614 = vmul.f32 %v2598, %v348
      %v2615 = vmul.f32 %v2598, %v352
      %v2616 = vmul.f32 %v2598, %v356
      %v2617 = vmul.f32 %v2603, %v336
      %v2618 = vmul.f32 %v2603, %v340
      %v2619 = vmul.f32 %v2603, %v344
      %v2620 = vmul.f32 %v2603, %v348
      %v2621 = vmul.f32 %v2603, %v352
      %v2622 = vmul.f32 %v2603, %v356
      %2641 = vrot.lane.b32.xlu0 %v2605, 43
      %v2642 = vpop.permute.xlu0 %2641
      %2643 = vrot.lane.b32.xlu0 %v2606, 43
      %v2644 = vpop.permute.xlu0 %2643
      %2645 = vrot.lane.b32.xlu0 %v2607, 43
      %v2646 = vpop.permute.xlu0 %2645
      %2647 = vrot.lane.b32.xlu0 %v2608, 43
      %v2648 = vpop.permute.xlu0 %2647
      %2649 = vrot.lane.b32.xlu0 %v2609, 43
      %v2650 = vpop.permute.xlu0 %2649
      %2651 = vrot.lane.b32.xlu0 %v2610, 43
      %v2652 = vpop.permute.xlu0 %2651
      %2653 = vrot.lane.b32.xlu0 %v2611, 43
      %v2654 = vpop.permute.xlu0 %2653
      %2655 = vrot.lane.b32.xlu0 %v2612, 43
      %v2656 = vpop.permute.xlu0 %2655
      %2657 = vrot.lane.b32.xlu0 %v2613, 43
      %v2658 = vpop.permute.xlu0 %2657
      %2659 = vrot.lane.b32.xlu0 %v2614, 43
      %v2660 = vpop.permute.xlu0 %2659
      %2661 = vrot.lane.b32.xlu0 %v2615, 43
      %v2662 = vpop.permute.xlu0 %2661
      %2663 = vrot.lane.b32.xlu0 %v2616, 43
      %v2664 = vpop.permute.xlu0 %2663
      %2665 = vrot.lane.b32.xlu0 %v2617, 43
      %v2666 = vpop.permute.xlu0 %2665
      %2667 = vrot.lane.b32.xlu0 %v2618, 43
      %v2668 = vpop.permute.xlu0 %2667
      %2669 = vrot.lane.b32.xlu0 %v2619, 43
      %v2670 = vpop.permute.xlu0 %2669
      %2671 = vrot.lane.b32.xlu0 %v2620, 43
      %v2672 = vpop.permute.xlu0 %2671
      %2673 = vrot.lane.b32.xlu0 %v2621, 43
      %v2674 = vpop.permute.xlu0 %2673
      %2675 = vrot.lane.b32.xlu0 %v2622, 43
      %v2676 = vpop.permute.xlu0 %2675
      %vm2677 = vcmask 351232
      %v2678 = vsel %vm2677, %v2642, %v2644
      %v2679 = vsel %vm2677, %v2644, %v2646
      %v2680 = vsel %vm2677, %v2646, %v2648
      %v2681 = vsel %vm2677, %v2648, %v2650
      %v2682 = vsel %vm2677, %v2650, %v2652
      %v2683 = vsel %vm2677, %v2654, %v2656
      %v2684 = vsel %vm2677, %v2656, %v2658
      %v2685 = vsel %vm2677, %v2658, %v2660
      %v2686 = vsel %vm2677, %v2660, %v2662
      %v2687 = vsel %vm2677, %v2662, %v2664
      %v2688 = vsel %vm2677, %v2666, %v2668
      %v2689 = vsel %vm2677, %v2668, %v2670
      %v2690 = vsel %vm2677, %v2670, %v2672
      %v2691 = vsel %vm2677, %v2672, %v2674
      %v2692 = vsel %vm2677, %v2674, %v2676
      %v2711 = vadd.f32 %v2565, %v2678
      %v2712 = vadd.f32 %v2566, %v2679
      %v2713 = vadd.f32 %v2567, %v2680
      %v2714 = vadd.f32 %v2568, %v2681
      %v2715 = vadd.f32 %v2569, %v2682
      %v2716 = vadd.f32 %v2570, %v2652
      %v2717 = vadd.f32 %v2571, %v2683
      %v2718 = vadd.f32 %v2572, %v2684
      %v2719 = vadd.f32 %v2573, %v2685
      %v2720 = vadd.f32 %v2574, %v2686
      %v2721 = vadd.f32 %v2575, %v2687
      %v2722 = vadd.f32 %v2576, %v2664
      %v2723 = vadd.f32 %v2577, %v2688
      %v2724 = vadd.f32 %v2578, %v2689
      %v2725 = vadd.f32 %v2579, %v2690
      %v2726 = vadd.f32 %v2580, %v2691
      %v2727 = vadd.f32 %v2581, %v2692
      %v2728 = vadd.f32 %v2582, %v2676
      %s2729 = scalar_lea.vmem %s1, 204
      %v2730 = vld [vmem:[%s2729] sm:$0xf]
      %v2731 = vld [vmem:[%s2729 + $0x4] sm:$0xf]
      %v2732 = vld [vmem:[%s2729 + $0x8] sm:$0x3]
      %v2733 = vunpack.c.l.bf16 %v2730
      %v2734 = vunpack.c.l.bf16 %v2731
      %v2735 = vunpack.c.l.bf16 %v2732
      %2737 = vset.pattern.permute.xlu0 0
      %2738 = vperm.xlu0 %2737, %v2733
      %v2739 = vpop.permute.xlu0 %2738
      %2742 = vset.pattern.permute.xlu0 0
      %2743 = vperm.xlu0 %2742, %v2734
      %v2744 = vpop.permute.xlu0 %2743
      %2747 = vset.pattern.permute.xlu0 0
      %2748 = vperm.xlu0 %2747, %v2735
      %v2749 = vpop.permute.xlu0 %2748
      %v2751 = vmul.f32 %v2739, %v336
      %v2752 = vmul.f32 %v2739, %v340
      %v2753 = vmul.f32 %v2739, %v344
      %v2754 = vmul.f32 %v2739, %v348
      %v2755 = vmul.f32 %v2739, %v352
      %v2756 = vmul.f32 %v2739, %v356
      %v2757 = vmul.f32 %v2744, %v336
      %v2758 = vmul.f32 %v2744, %v340
      %v2759 = vmul.f32 %v2744, %v344
      %v2760 = vmul.f32 %v2744, %v348
      %v2761 = vmul.f32 %v2744, %v352
      %v2762 = vmul.f32 %v2744, %v356
      %v2763 = vmul.f32 %v2749, %v336
      %v2764 = vmul.f32 %v2749, %v340
      %v2765 = vmul.f32 %v2749, %v344
      %v2766 = vmul.f32 %v2749, %v348
      %v2767 = vmul.f32 %v2749, %v352
      %v2768 = vmul.f32 %v2749, %v356
      %2787 = vrot.lane.b32.xlu0 %v2751, 42
      %v2788 = vpop.permute.xlu0 %2787
      %2789 = vrot.lane.b32.xlu0 %v2752, 42
      %v2790 = vpop.permute.xlu0 %2789
      %2791 = vrot.lane.b32.xlu0 %v2753, 42
      %v2792 = vpop.permute.xlu0 %2791
      %2793 = vrot.lane.b32.xlu0 %v2754, 42
      %v2794 = vpop.permute.xlu0 %2793
      %2795 = vrot.lane.b32.xlu0 %v2755, 42
      %v2796 = vpop.permute.xlu0 %2795
      %2797 = vrot.lane.b32.xlu0 %v2756, 42
      %v2798 = vpop.permute.xlu0 %2797
      %2799 = vrot.lane.b32.xlu0 %v2757, 42
      %v2800 = vpop.permute.xlu0 %2799
      %2801 = vrot.lane.b32.xlu0 %v2758, 42
      %v2802 = vpop.permute.xlu0 %2801
      %2803 = vrot.lane.b32.xlu0 %v2759, 42
      %v2804 = vpop.permute.xlu0 %2803
      %2805 = vrot.lane.b32.xlu0 %v2760, 42
      %v2806 = vpop.permute.xlu0 %2805
      %2807 = vrot.lane.b32.xlu0 %v2761, 42
      %v2808 = vpop.permute.xlu0 %2807
      %2809 = vrot.lane.b32.xlu0 %v2762, 42
      %v2810 = vpop.permute.xlu0 %2809
      %2811 = vrot.lane.b32.xlu0 %v2763, 42
      %v2812 = vpop.permute.xlu0 %2811
      %2813 = vrot.lane.b32.xlu0 %v2764, 42
      %v2814 = vpop.permute.xlu0 %2813
      %2815 = vrot.lane.b32.xlu0 %v2765, 42
      %v2816 = vpop.permute.xlu0 %2815
      %2817 = vrot.lane.b32.xlu0 %v2766, 42
      %v2818 = vpop.permute.xlu0 %2817
      %2819 = vrot.lane.b32.xlu0 %v2767, 42
      %v2820 = vpop.permute.xlu0 %2819
      %2821 = vrot.lane.b32.xlu0 %v2768, 42
      %v2822 = vpop.permute.xlu0 %2821
      %vm2823 = vcmask 343040
      %v2824 = vsel %vm2823, %v2788, %v2790
      %v2825 = vsel %vm2823, %v2790, %v2792
      %v2826 = vsel %vm2823, %v2792, %v2794
      %v2827 = vsel %vm2823, %v2794, %v2796
      %v2828 = vsel %vm2823, %v2796, %v2798
      %v2829 = vsel %vm2823, %v2800, %v2802
      %v2830 = vsel %vm2823, %v2802, %v2804
      %v2831 = vsel %vm2823, %v2804, %v2806
      %v2832 = vsel %vm2823, %v2806, %v2808
      %v2833 = vsel %vm2823, %v2808, %v2810
      %v2834 = vsel %vm2823, %v2812, %v2814
      %v2835 = vsel %vm2823, %v2814, %v2816
      %v2836 = vsel %vm2823, %v2816, %v2818
      %v2837 = vsel %vm2823, %v2818, %v2820
      %v2838 = vsel %vm2823, %v2820, %v2822
      %v2857 = vadd.f32 %v2711, %v2824
      %v2858 = vadd.f32 %v2712, %v2825
      %v2859 = vadd.f32 %v2713, %v2826
      %v2860 = vadd.f32 %v2714, %v2827
      %v2861 = vadd.f32 %v2715, %v2828
      %v2862 = vadd.f32 %v2716, %v2798
      %v2863 = vadd.f32 %v2717, %v2829
      %v2864 = vadd.f32 %v2718, %v2830
      %v2865 = vadd.f32 %v2719, %v2831
      %v2866 = vadd.f32 %v2720, %v2832
      %v2867 = vadd.f32 %v2721, %v2833
      %v2868 = vadd.f32 %v2722, %v2810
      %v2869 = vadd.f32 %v2723, %v2834
      %v2870 = vadd.f32 %v2724, %v2835
      %v2871 = vadd.f32 %v2725, %v2836
      %v2872 = vadd.f32 %v2726, %v2837
      %v2873 = vadd.f32 %v2727, %v2838
      %v2874 = vadd.f32 %v2728, %v2822
      %s2875 = scalar_lea.vmem %s1, 216
      %v2876 = vld [vmem:[%s2875] sm:$0xf]
      %v2877 = vld [vmem:[%s2875 + $0x4] sm:$0xf]
      %v2878 = vld [vmem:[%s2875 + $0x8] sm:$0x3]
      %v2879 = vunpack.c.l.bf16 %v2876
      %v2880 = vunpack.c.l.bf16 %v2877
      %v2881 = vunpack.c.l.bf16 %v2878
      %2883 = vset.pattern.permute.xlu0 0
      %2884 = vperm.xlu0 %2883, %v2879
      %v2885 = vpop.permute.xlu0 %2884
      %2888 = vset.pattern.permute.xlu0 0
      %2889 = vperm.xlu0 %2888, %v2880
      %v2890 = vpop.permute.xlu0 %2889
      %2893 = vset.pattern.permute.xlu0 0
      %2894 = vperm.xlu0 %2893, %v2881
      %v2895 = vpop.permute.xlu0 %2894
      %v2897 = vmul.f32 %v2885, %v336
      %v2898 = vmul.f32 %v2885, %v340
      %v2899 = vmul.f32 %v2885, %v344
      %v2900 = vmul.f32 %v2885, %v348
      %v2901 = vmul.f32 %v2885, %v352
      %v2902 = vmul.f32 %v2885, %v356
      %v2903 = vmul.f32 %v2890, %v336
      %v2904 = vmul.f32 %v2890, %v340
      %v2905 = vmul.f32 %v2890, %v344
      %v2906 = vmul.f32 %v2890, %v348
      %v2907 = vmul.f32 %v2890, %v352
      %v2908 = vmul.f32 %v2890, %v356
      %v2909 = vmul.f32 %v2895, %v336
      %v2910 = vmul.f32 %v2895, %v340
      %v2911 = vmul.f32 %v2895, %v344
      %v2912 = vmul.f32 %v2895, %v348
      %v2913 = vmul.f32 %v2895, %v352
      %v2914 = vmul.f32 %v2895, %v356
      %2933 = vrot.lane.b32.xlu0 %v2897, 41
      %v2934 = vpop.permute.xlu0 %2933
      %2935 = vrot.lane.b32.xlu0 %v2898, 41
      %v2936 = vpop.permute.xlu0 %2935
      %2937 = vrot.lane.b32.xlu0 %v2899, 41
      %v2938 = vpop.permute.xlu0 %2937
      %2939 = vrot.lane.b32.xlu0 %v2900, 41
      %v2940 = vpop.permute.xlu0 %2939
      %2941 = vrot.lane.b32.xlu0 %v2901, 41
      %v2942 = vpop.permute.xlu0 %2941
      %2943 = vrot.lane.b32.xlu0 %v2902, 41
      %v2944 = vpop.permute.xlu0 %2943
      %2945 = vrot.lane.b32.xlu0 %v2903, 41
      %v2946 = vpop.permute.xlu0 %2945
      %2947 = vrot.lane.b32.xlu0 %v2904, 41
      %v2948 = vpop.permute.xlu0 %2947
      %2949 = vrot.lane.b32.xlu0 %v2905, 41
      %v2950 = vpop.permute.xlu0 %2949
      %2951 = vrot.lane.b32.xlu0 %v2906, 41
      %v2952 = vpop.permute.xlu0 %2951
      %2953 = vrot.lane.b32.xlu0 %v2907, 41
      %v2954 = vpop.permute.xlu0 %2953
      %2955 = vrot.lane.b32.xlu0 %v2908, 41
      %v2956 = vpop.permute.xlu0 %2955
      %2957 = vrot.lane.b32.xlu0 %v2909, 41
      %v2958 = vpop.permute.xlu0 %2957
      %2959 = vrot.lane.b32.xlu0 %v2910, 41
      %v2960 = vpop.permute.xlu0 %2959
      %2961 = vrot.lane.b32.xlu0 %v2911, 41
      %v2962 = vpop.permute.xlu0 %2961
      %2963 = vrot.lane.b32.xlu0 %v2912, 41
      %v2964 = vpop.permute.xlu0 %2963
      %2965 = vrot.lane.b32.xlu0 %v2913, 41
      %v2966 = vpop.permute.xlu0 %2965
      %2967 = vrot.lane.b32.xlu0 %v2914, 41
      %v2968 = vpop.permute.xlu0 %2967
      %vm2969 = vcmask 334848
      %v2970 = vsel %vm2969, %v2934, %v2936
      %v2971 = vsel %vm2969, %v2936, %v2938
      %v2972 = vsel %vm2969, %v2938, %v2940
      %v2973 = vsel %vm2969, %v2940, %v2942
      %v2974 = vsel %vm2969, %v2942, %v2944
      %v2975 = vsel %vm2969, %v2946, %v2948
      %v2976 = vsel %vm2969, %v2948, %v2950
      %v2977 = vsel %vm2969, %v2950, %v2952
      %v2978 = vsel %vm2969, %v2952, %v2954
      %v2979 = vsel %vm2969, %v2954, %v2956
      %v2980 = vsel %vm2969, %v2958, %v2960
      %v2981 = vsel %vm2969, %v2960, %v2962
      %v2982 = vsel %vm2969, %v2962, %v2964
      %v2983 = vsel %vm2969, %v2964, %v2966
      %v2984 = vsel %vm2969, %v2966, %v2968
      %v3003 = vadd.f32 %v2857, %v2970
      %v3004 = vadd.f32 %v2858, %v2971
      %v3005 = vadd.f32 %v2859, %v2972
      %v3006 = vadd.f32 %v2860, %v2973
      %v3007 = vadd.f32 %v2861, %v2974
      %v3008 = vadd.f32 %v2862, %v2944
      %v3009 = vadd.f32 %v2863, %v2975
      %v3010 = vadd.f32 %v2864, %v2976
      %v3011 = vadd.f32 %v2865, %v2977
      %v3012 = vadd.f32 %v2866, %v2978
      %v3013 = vadd.f32 %v2867, %v2979
      %v3014 = vadd.f32 %v2868, %v2956
      %v3015 = vadd.f32 %v2869, %v2980
      %v3016 = vadd.f32 %v2870, %v2981
      %v3017 = vadd.f32 %v2871, %v2982
      %v3018 = vadd.f32 %v2872, %v2983
      %v3019 = vadd.f32 %v2873, %v2984
      %v3020 = vadd.f32 %v2874, %v2968
      %s3021 = scalar_lea.vmem %s1, 228
      %v3022 = vld [vmem:[%s3021] sm:$0xf]
      %v3023 = vld [vmem:[%s3021 + $0x4] sm:$0xf]
      %v3024 = vld [vmem:[%s3021 + $0x8] sm:$0x3]
      %v3025 = vunpack.c.l.bf16 %v3022
      %v3026 = vunpack.c.l.bf16 %v3023
      %v3027 = vunpack.c.l.bf16 %v3024
      %3029 = vset.pattern.permute.xlu0 0
      %3030 = vperm.xlu0 %3029, %v3025
      %v3031 = vpop.permute.xlu0 %3030
      %3034 = vset.pattern.permute.xlu0 0
      %3035 = vperm.xlu0 %3034, %v3026
      %v3036 = vpop.permute.xlu0 %3035
      %3039 = vset.pattern.permute.xlu0 0
      %3040 = vperm.xlu0 %3039, %v3027
      %v3041 = vpop.permute.xlu0 %3040
      %v3043 = vmul.f32 %v3031, %v336
      %v3044 = vmul.f32 %v3031, %v340
      %v3045 = vmul.f32 %v3031, %v344
      %v3046 = vmul.f32 %v3031, %v348
      %v3047 = vmul.f32 %v3031, %v352
      %v3048 = vmul.f32 %v3031, %v356
      %v3049 = vmul.f32 %v3036, %v336
      %v3050 = vmul.f32 %v3036, %v340
      %v3051 = vmul.f32 %v3036, %v344
      %v3052 = vmul.f32 %v3036, %v348
      %v3053 = vmul.f32 %v3036, %v352
      %v3054 = vmul.f32 %v3036, %v356
      %v3055 = vmul.f32 %v3041, %v336
      %v3056 = vmul.f32 %v3041, %v340
      %v3057 = vmul.f32 %v3041, %v344
      %v3058 = vmul.f32 %v3041, %v348
      %v3059 = vmul.f32 %v3041, %v352
      %v3060 = vmul.f32 %v3041, %v356
      %3079 = vrot.lane.b32.xlu0 %v3043, 40
      %v3080 = vpop.permute.xlu0 %3079
      %3081 = vrot.lane.b32.xlu0 %v3044, 40
      %v3082 = vpop.permute.xlu0 %3081
      %3083 = vrot.lane.b32.xlu0 %v3045, 40
      %v3084 = vpop.permute.xlu0 %3083
      %3085 = vrot.lane.b32.xlu0 %v3046, 40
      %v3086 = vpop.permute.xlu0 %3085
      %3087 = vrot.lane.b32.xlu0 %v3047, 40
      %v3088 = vpop.permute.xlu0 %3087
      %3089 = vrot.lane.b32.xlu0 %v3048, 40
      %v3090 = vpop.permute.xlu0 %3089
      %3091 = vrot.lane.b32.xlu0 %v3049, 40
      %v3092 = vpop.permute.xlu0 %3091
      %3093 = vrot.lane.b32.xlu0 %v3050, 40
      %v3094 = vpop.permute.xlu0 %3093
      %3095 = vrot.lane.b32.xlu0 %v3051, 40
      %v3096 = vpop.permute.xlu0 %3095
      %3097 = vrot.lane.b32.xlu0 %v3052, 40
      %v3098 = vpop.permute.xlu0 %3097
      %3099 = vrot.lane.b32.xlu0 %v3053, 40
      %v3100 = vpop.permute.xlu0 %3099
      %3101 = vrot.lane.b32.xlu0 %v3054, 40
      %v3102 = vpop.permute.xlu0 %3101
      %3103 = vrot.lane.b32.xlu0 %v3055, 40
      %v3104 = vpop.permute.xlu0 %3103
      %3105 = vrot.lane.b32.xlu0 %v3056, 40
      %v3106 = vpop.permute.xlu0 %3105
      %3107 = vrot.lane.b32.xlu0 %v3057, 40
      %v3108 = vpop.permute.xlu0 %3107
      %3109 = vrot.lane.b32.xlu0 %v3058, 40
      %v3110 = vpop.permute.xlu0 %3109
      %3111 = vrot.lane.b32.xlu0 %v3059, 40
      %v3112 = vpop.permute.xlu0 %3111
      %3113 = vrot.lane.b32.xlu0 %v3060, 40
      %v3114 = vpop.permute.xlu0 %3113
      %vm3115 = vcmask 326656
      %v3116 = vsel %vm3115, %v3080, %v3082
      %v3117 = vsel %vm3115, %v3082, %v3084
      %v3118 = vsel %vm3115, %v3084, %v3086
      %v3119 = vsel %vm3115, %v3086, %v3088
      %v3120 = vsel %vm3115, %v3088, %v3090
      %v3121 = vsel %vm3115, %v3092, %v3094
      %v3122 = vsel %vm3115, %v3094, %v3096
      %v3123 = vsel %vm3115, %v3096, %v3098
      %v3124 = vsel %vm3115, %v3098, %v3100
      %v3125 = vsel %vm3115, %v3100, %v3102
      %v3126 = vsel %vm3115, %v3104, %v3106
      %v3127 = vsel %vm3115, %v3106, %v3108
      %v3128 = vsel %vm3115, %v3108, %v3110
      %v3129 = vsel %vm3115, %v3110, %v3112
      %v3130 = vsel %vm3115, %v3112, %v3114
      %v3149 = vadd.f32 %v3003, %v3116
      %v3150 = vadd.f32 %v3004, %v3117
      %v3151 = vadd.f32 %v3005, %v3118
      %v3152 = vadd.f32 %v3006, %v3119
      %v3153 = vadd.f32 %v3007, %v3120
      %v3154 = vadd.f32 %v3008, %v3090
      %v3155 = vadd.f32 %v3009, %v3121
      %v3156 = vadd.f32 %v3010, %v3122
      %v3157 = vadd.f32 %v3011, %v3123
      %v3158 = vadd.f32 %v3012, %v3124
      %v3159 = vadd.f32 %v3013, %v3125
      %v3160 = vadd.f32 %v3014, %v3102
      %v3161 = vadd.f32 %v3015, %v3126
      %v3162 = vadd.f32 %v3016, %v3127
      %v3163 = vadd.f32 %v3017, %v3128
      %v3164 = vadd.f32 %v3018, %v3129
      %v3165 = vadd.f32 %v3019, %v3130
      %v3166 = vadd.f32 %v3020, %v3114
      %s3167 = scalar_lea.vmem %s1, 240
      %v3168 = vld [vmem:[%s3167] sm:$0xf]
      %v3169 = vld [vmem:[%s3167 + $0x4] sm:$0xf]
      %v3170 = vld [vmem:[%s3167 + $0x8] sm:$0x3]
      %v3171 = vunpack.c.l.bf16 %v3168
      %v3172 = vunpack.c.l.bf16 %v3169
      %v3173 = vunpack.c.l.bf16 %v3170
      %3175 = vset.pattern.permute.xlu0 0
      %3176 = vperm.xlu0 %3175, %v3171
      %v3177 = vpop.permute.xlu0 %3176
      %3180 = vset.pattern.permute.xlu0 0
      %3181 = vperm.xlu0 %3180, %v3172
      %v3182 = vpop.permute.xlu0 %3181
      %3185 = vset.pattern.permute.xlu0 0
      %3186 = vperm.xlu0 %3185, %v3173
      %v3187 = vpop.permute.xlu0 %3186
      %v3189 = vlaneseq
      %v3190 = vshrl.u32 %v3189, 7
      %v3191 = vsub.s32 4, %v3190
      %v3192 = vrot.slane %v279, %v3191
      %v3194 = vlaneseq
      %v3195 = vshrl.u32 %v3194, 7
      %v3196 = vsub.s32 0, %v3195
      %v3197 = vrot.slane %v3192, %v3196
      %v3198 = vmul.f32 %v3177, %v336
      %v3199 = vmul.f32 %v3177, %v340
      %v3200 = vmul.f32 %v3177, %v344
      %v3201 = vmul.f32 %v3177, %v348
      %v3202 = vmul.f32 %v3177, %v352
      %v3203 = vmul.f32 %v3177, %v356
      %v3204 = vmul.f32 %v3177, %v3197
      %v3205 = vmul.f32 %v3182, %v336
      %v3206 = vmul.f32 %v3182, %v340
      %v3207 = vmul.f32 %v3182, %v344
      %v3208 = vmul.f32 %v3182, %v348
      %v3209 = vmul.f32 %v3182, %v352
      %v3210 = vmul.f32 %v3182, %v356
      %v3211 = vmul.f32 %v3182, %v3197
      %v3212 = vmul.f32 %v3187, %v336
      %v3213 = vmul.f32 %v3187, %v340
      %v3214 = vmul.f32 %v3187, %v344
      %v3215 = vmul.f32 %v3187, %v348
      %v3216 = vmul.f32 %v3187, %v352
      %v3217 = vmul.f32 %v3187, %v356
      %v3218 = vmul.f32 %v3187, %v3197
      %3240 = vrot.lane.b32.xlu0 %v3198, 16
      %v3241 = vpop.permute.xlu0 %3240
      %3242 = vrot.lane.b32.xlu0 %v3199, 16
      %v3243 = vpop.permute.xlu0 %3242
      %3244 = vrot.lane.b32.xlu0 %v3200, 16
      %v3245 = vpop.permute.xlu0 %3244
      %3246 = vrot.lane.b32.xlu0 %v3201, 16
      %v3247 = vpop.permute.xlu0 %3246
      %3248 = vrot.lane.b32.xlu0 %v3202, 16
      %v3249 = vpop.permute.xlu0 %3248
      %3250 = vrot.lane.b32.xlu0 %v3203, 16
      %v3251 = vpop.permute.xlu0 %3250
      %3252 = vrot.lane.b32.xlu0 %v3204, 16
      %v3253 = vpop.permute.xlu0 %3252
      %3254 = vrot.lane.b32.xlu0 %v3205, 16
      %v3255 = vpop.permute.xlu0 %3254
      %3256 = vrot.lane.b32.xlu0 %v3206, 16
      %v3257 = vpop.permute.xlu0 %3256
      %3258 = vrot.lane.b32.xlu0 %v3207, 16
      %v3259 = vpop.permute.xlu0 %3258
      %3260 = vrot.lane.b32.xlu0 %v3208, 16
      %v3261 = vpop.permute.xlu0 %3260
      %3262 = vrot.lane.b32.xlu0 %v3209, 16
      %v3263 = vpop.permute.xlu0 %3262
      %3264 = vrot.lane.b32.xlu0 %v3210, 16
      %v3265 = vpop.permute.xlu0 %3264
      %3266 = vrot.lane.b32.xlu0 %v3211, 16
      %v3267 = vpop.permute.xlu0 %3266
      %3268 = vrot.lane.b32.xlu0 %v3212, 16
      %v3269 = vpop.permute.xlu0 %3268
      %3270 = vrot.lane.b32.xlu0 %v3213, 16
      %v3271 = vpop.permute.xlu0 %3270
      %3272 = vrot.lane.b32.xlu0 %v3214, 16
      %v3273 = vpop.permute.xlu0 %3272
      %3274 = vrot.lane.b32.xlu0 %v3215, 16
      %v3275 = vpop.permute.xlu0 %3274
      %3276 = vrot.lane.b32.xlu0 %v3216, 16
      %v3277 = vpop.permute.xlu0 %3276
      %3278 = vrot.lane.b32.xlu0 %v3217, 16
      %v3279 = vpop.permute.xlu0 %3278
      %3280 = vrot.lane.b32.xlu0 %v3218, 16
      %v3281 = vpop.permute.xlu0 %3280
      %vm3282 = vcmask 130048
      %v3283 = vsel %vm3282, %v3241, %v3243
      %v3284 = vsel %vm3282, %v3243, %v3245
      %v3285 = vsel %vm3282, %v3245, %v3247
      %v3286 = vsel %vm3282, %v3247, %v3249
      %v3287 = vsel %vm3282, %v3249, %v3251
      %v3288 = vsel %vm3282, %v3251, %v3253
      %v3289 = vsel %vm3282, %v3255, %v3257
      %v3290 = vsel %vm3282, %v3257, %v3259
      %v3291 = vsel %vm3282, %v3259, %v3261
      %v3292 = vsel %vm3282, %v3261, %v3263
      %v3293 = vsel %vm3282, %v3263, %v3265
      %v3294 = vsel %vm3282, %v3265, %v3267
      %v3295 = vsel %vm3282, %v3269, %v3271
      %v3296 = vsel %vm3282, %v3271, %v3273
      %v3297 = vsel %vm3282, %v3273, %v3275
      %v3298 = vsel %vm3282, %v3275, %v3277
      %v3299 = vsel %vm3282, %v3277, %v3279
      %v3300 = vsel %vm3282, %v3279, %v3281
      %v3319 = vadd.f32 %v3149, %v3283
      %v3320 = vadd.f32 %v3150, %v3284
      %v3321 = vadd.f32 %v3151, %v3285
      %v3322 = vadd.f32 %v3152, %v3286
      %v3323 = vadd.f32 %v3153, %v3287
      %v3324 = vadd.f32 %v3154, %v3288
      %v3325 = vadd.f32 %v3155, %v3289
      %v3326 = vadd.f32 %v3156, %v3290
      %v3327 = vadd.f32 %v3157, %v3291
      %v3328 = vadd.f32 %v3158, %v3292
      %v3329 = vadd.f32 %v3159, %v3293
      %v3330 = vadd.f32 %v3160, %v3294
      %v3331 = vadd.f32 %v3161, %v3295
      %v3332 = vadd.f32 %v3162, %v3296
      %v3333 = vadd.f32 %v3163, %v3297
      %v3334 = vadd.f32 %v3164, %v3298
      %v3335 = vadd.f32 %v3165, %v3299
      %v3336 = vadd.f32 %v3166, %v3300
      %s3337 = scalar_lea.vmem %s1, 252
      %v3338 = vld [vmem:[%s3337] sm:$0xf]
      %v3339 = vld [vmem:[%s3337 + $0x4] sm:$0xf]
      %v3340 = vld [vmem:[%s3337 + $0x8] sm:$0x3]
      %v3341 = vunpack.c.l.bf16 %v3338
      %v3342 = vunpack.c.l.bf16 %v3339
      %v3343 = vunpack.c.l.bf16 %v3340
      %3345 = vset.pattern.permute.xlu0 0
      %3346 = vperm.xlu0 %3345, %v3341
      %v3347 = vpop.permute.xlu0 %3346
      %3350 = vset.pattern.permute.xlu0 0
      %3351 = vperm.xlu0 %3350, %v3342
      %v3352 = vpop.permute.xlu0 %3351
      %3355 = vset.pattern.permute.xlu0 0
      %3356 = vperm.xlu0 %3355, %v3343
      %v3357 = vpop.permute.xlu0 %3356
      %v3359 = vmul.f32 %v3347, %v336
      %v3360 = vmul.f32 %v3347, %v340
      %v3361 = vmul.f32 %v3347, %v344
      %v3362 = vmul.f32 %v3347, %v348
      %v3363 = vmul.f32 %v3347, %v352
      %v3364 = vmul.f32 %v3347, %v356
      %v3365 = vmul.f32 %v3347, %v3197
      %v3366 = vmul.f32 %v3352, %v336
      %v3367 = vmul.f32 %v3352, %v340
      %v3368 = vmul.f32 %v3352, %v344
      %v3369 = vmul.f32 %v3352, %v348
      %v3370 = vmul.f32 %v3352, %v352
      %v3371 = vmul.f32 %v3352, %v356
      %v3372 = vmul.f32 %v3352, %v3197
      %v3373 = vmul.f32 %v3357, %v336
      %v3374 = vmul.f32 %v3357, %v340
      %v3375 = vmul.f32 %v3357, %v344
      %v3376 = vmul.f32 %v3357, %v348
      %v3377 = vmul.f32 %v3357, %v352
      %v3378 = vmul.f32 %v3357, %v356
      %v3379 = vmul.f32 %v3357, %v3197
      %3401 = vrot.lane.b32.xlu0 %v3359, 15
      %v3402 = vpop.permute.xlu0 %3401
      %3403 = vrot.lane.b32.xlu0 %v3360, 15
      %v3404 = vpop.permute.xlu0 %3403
      %3405 = vrot.lane.b32.xlu0 %v3361, 15
      %v3406 = vpop.permute.xlu0 %3405
      %3407 = vrot.lane.b32.xlu0 %v3362, 15
      %v3408 = vpop.permute.xlu0 %3407
      %3409 = vrot.lane.b32.xlu0 %v3363, 15
      %v3410 = vpop.permute.xlu0 %3409
      %3411 = vrot.lane.b32.xlu0 %v3364, 15
      %v3412 = vpop.permute.xlu0 %3411
      %3413 = vrot.lane.b32.xlu0 %v3365, 15
      %v3414 = vpop.permute.xlu0 %3413
      %3415 = vrot.lane.b32.xlu0 %v3366, 15
      %v3416 = vpop.permute.xlu0 %3415
      %3417 = vrot.lane.b32.xlu0 %v3367, 15
      %v3418 = vpop.permute.xlu0 %3417
      %3419 = vrot.lane.b32.xlu0 %v3368, 15
      %v3420 = vpop.permute.xlu0 %3419
      %3421 = vrot.lane.b32.xlu0 %v3369, 15
      %v3422 = vpop.permute.xlu0 %3421
      %3423 = vrot.lane.b32.xlu0 %v3370, 15
      %v3424 = vpop.permute.xlu0 %3423
      %3425 = vrot.lane.b32.xlu0 %v3371, 15
      %v3426 = vpop.permute.xlu0 %3425
      %3427 = vrot.lane.b32.xlu0 %v3372, 15
      %v3428 = vpop.permute.xlu0 %3427
      %3429 = vrot.lane.b32.xlu0 %v3373, 15
      %v3430 = vpop.permute.xlu0 %3429
      %3431 = vrot.lane.b32.xlu0 %v3374, 15
      %v3432 = vpop.permute.xlu0 %3431
      %3433 = vrot.lane.b32.xlu0 %v3375, 15
      %v3434 = vpop.permute.xlu0 %3433
      %3435 = vrot.lane.b32.xlu0 %v3376, 15
      %v3436 = vpop.permute.xlu0 %3435
      %3437 = vrot.lane.b32.xlu0 %v3377, 15
      %v3438 = vpop.permute.xlu0 %3437
      %3439 = vrot.lane.b32.xlu0 %v3378, 15
      %v3440 = vpop.permute.xlu0 %3439
      %3441 = vrot.lane.b32.xlu0 %v3379, 15
      %v3442 = vpop.permute.xlu0 %3441
      %vm3443 = vcmask 121856
      %v3444 = vsel %vm3443, %v3402, %v3404
      %v3445 = vsel %vm3443, %v3404, %v3406
      %v3446 = vsel %vm3443, %v3406, %v3408
      %v3447 = vsel %vm3443, %v3408, %v3410
      %v3448 = vsel %vm3443, %v3410, %v3412
      %v3449 = vsel %vm3443, %v3412, %v3414
      %v3450 = vsel %vm3443, %v3416, %v3418
      %v3451 = vsel %vm3443, %v3418, %v3420
      %v3452 = vsel %vm3443, %v3420, %v3422
      %v3453 = vsel %vm3443, %v3422, %v3424
      %v3454 = vsel %vm3443, %v3424, %v3426
      %v3455 = vsel %vm3443, %v3426, %v3428
      %v3456 = vsel %vm3443, %v3430, %v3432
      %v3457 = vsel %vm3443, %v3432, %v3434
      %v3458 = vsel %vm3443, %v3434, %v3436
      %v3459 = vsel %vm3443, %v3436, %v3438
      %v3460 = vsel %vm3443, %v3438, %v3440
      %v3461 = vsel %vm3443, %v3440, %v3442
      %v3480 = vadd.f32 %v3319, %v3444
      %v3481 = vadd.f32 %v3320, %v3445
      %v3482 = vadd.f32 %v3321, %v3446
      %v3483 = vadd.f32 %v3322, %v3447
      %v3484 = vadd.f32 %v3323, %v3448
      %v3485 = vadd.f32 %v3324, %v3449
      %v3486 = vadd.f32 %v3325, %v3450
      %v3487 = vadd.f32 %v3326, %v3451
      %v3488 = vadd.f32 %v3327, %v3452
      %v3489 = vadd.f32 %v3328, %v3453
      %v3490 = vadd.f32 %v3329, %v3454
      %v3491 = vadd.f32 %v3330, %v3455
      %v3492 = vadd.f32 %v3331, %v3456
      %v3493 = vadd.f32 %v3332, %v3457
      %v3494 = vadd.f32 %v3333, %v3458
      %v3495 = vadd.f32 %v3334, %v3459
      %v3496 = vadd.f32 %v3335, %v3460
      %v3497 = vadd.f32 %v3336, %v3461
      %s3498 = scalar_lea.vmem %s1, 264
      %v3499 = vld [vmem:[%s3498] sm:$0xf]
      %v3500 = vld [vmem:[%s3498 + $0x4] sm:$0xf]
      %v3501 = vld [vmem:[%s3498 + $0x8] sm:$0x3]
      %v3502 = vunpack.c.l.bf16 %v3499
      %v3503 = vunpack.c.l.bf16 %v3500
      %v3504 = vunpack.c.l.bf16 %v3501
      %3506 = vset.pattern.permute.xlu0 0
      %3507 = vperm.xlu0 %3506, %v3502
      %v3508 = vpop.permute.xlu0 %3507
      %3511 = vset.pattern.permute.xlu0 0
      %3512 = vperm.xlu0 %3511, %v3503
      %v3513 = vpop.permute.xlu0 %3512
      %3516 = vset.pattern.permute.xlu0 0
      %3517 = vperm.xlu0 %3516, %v3504
      %v3518 = vpop.permute.xlu0 %3517
      %v3520 = vmul.f32 %v3508, %v336
      %v3521 = vmul.f32 %v3508, %v340
      %v3522 = vmul.f32 %v3508, %v344
      %v3523 = vmul.f32 %v3508, %v348
      %v3524 = vmul.f32 %v3508, %v352
      %v3525 = vmul.f32 %v3508, %v356
      %v3526 = vmul.f32 %v3508, %v3197
      %v3527 = vmul.f32 %v3513, %v336
      %v3528 = vmul.f32 %v3513, %v340
      %v3529 = vmul.f32 %v3513, %v344
      %v3530 = vmul.f32 %v3513, %v348
      %v3531 = vmul.f32 %v3513, %v352
      %v3532 = vmul.f32 %v3513, %v356
      %v3533 = vmul.f32 %v3513, %v3197
      %v3534 = vmul.f32 %v3518, %v336
      %v3535 = vmul.f32 %v3518, %v340
      %v3536 = vmul.f32 %v3518, %v344
      %v3537 = vmul.f32 %v3518, %v348
      %v3538 = vmul.f32 %v3518, %v352
      %v3539 = vmul.f32 %v3518, %v356
      %v3540 = vmul.f32 %v3518, %v3197
      %3562 = vrot.lane.b32.xlu0 %v3520, 14
      %v3563 = vpop.permute.xlu0 %3562
      %3564 = vrot.lane.b32.xlu0 %v3521, 14
      %v3565 = vpop.permute.xlu0 %3564
      %3566 = vrot.lane.b32.xlu0 %v3522, 14
      %v3567 = vpop.permute.xlu0 %3566
      %3568 = vrot.lane.b32.xlu0 %v3523, 14
      %v3569 = vpop.permute.xlu0 %3568
      %3570 = vrot.lane.b32.xlu0 %v3524, 14
      %v3571 = vpop.permute.xlu0 %3570
      %3572 = vrot.lane.b32.xlu0 %v3525, 14
      %v3573 = vpop.permute.xlu0 %3572
      %3574 = vrot.lane.b32.xlu0 %v3526, 14
      %v3575 = vpop.permute.xlu0 %3574
      %3576 = vrot.lane.b32.xlu0 %v3527, 14
      %v3577 = vpop.permute.xlu0 %3576
      %3578 = vrot.lane.b32.xlu0 %v3528, 14
      %v3579 = vpop.permute.xlu0 %3578
      %3580 = vrot.lane.b32.xlu0 %v3529, 14
      %v3581 = vpop.permute.xlu0 %3580
      %3582 = vrot.lane.b32.xlu0 %v3530, 14
      %v3583 = vpop.permute.xlu0 %3582
      %3584 = vrot.lane.b32.xlu0 %v3531, 14
      %v3585 = vpop.permute.xlu0 %3584
      %3586 = vrot.lane.b32.xlu0 %v3532, 14
      %v3587 = vpop.permute.xlu0 %3586
      %3588 = vrot.lane.b32.xlu0 %v3533, 14
      %v3589 = vpop.permute.xlu0 %3588
      %3590 = vrot.lane.b32.xlu0 %v3534, 14
      %v3591 = vpop.permute.xlu0 %3590
      %3592 = vrot.lane.b32.xlu0 %v3535, 14
      %v3593 = vpop.permute.xlu0 %3592
      %3594 = vrot.lane.b32.xlu0 %v3536, 14
      %v3595 = vpop.permute.xlu0 %3594
      %3596 = vrot.lane.b32.xlu0 %v3537, 14
      %v3597 = vpop.permute.xlu0 %3596
      %3598 = vrot.lane.b32.xlu0 %v3538, 14
      %v3599 = vpop.permute.xlu0 %3598
      %3600 = vrot.lane.b32.xlu0 %v3539, 14
      %v3601 = vpop.permute.xlu0 %3600
      %3602 = vrot.lane.b32.xlu0 %v3540, 14
      %v3603 = vpop.permute.xlu0 %3602
      %vm3604 = vcmask 113664
      %v3605 = vsel %vm3604, %v3563, %v3565
      %v3606 = vsel %vm3604, %v3565, %v3567
      %v3607 = vsel %vm3604, %v3567, %v3569
      %v3608 = vsel %vm3604, %v3569, %v3571
      %v3609 = vsel %vm3604, %v3571, %v3573
      %v3610 = vsel %vm3604, %v3573, %v3575
      %v3611 = vsel %vm3604, %v3577, %v3579
      %v3612 = vsel %vm3604, %v3579, %v3581
      %v3613 = vsel %vm3604, %v3581, %v3583
      %v3614 = vsel %vm3604, %v3583, %v3585
      %v3615 = vsel %vm3604, %v3585, %v3587
      %v3616 = vsel %vm3604, %v3587, %v3589
      %v3617 = vsel %vm3604, %v3591, %v3593
      %v3618 = vsel %vm3604, %v3593, %v3595
      %v3619 = vsel %vm3604, %v3595, %v3597
      %v3620 = vsel %vm3604, %v3597, %v3599
      %v3621 = vsel %vm3604, %v3599, %v3601
      %v3622 = vsel %vm3604, %v3601, %v3603
      %v3641 = vadd.f32 %v3480, %v3605
      %v3642 = vadd.f32 %v3481, %v3606
      %v3643 = vadd.f32 %v3482, %v3607
      %v3644 = vadd.f32 %v3483, %v3608
      %v3645 = vadd.f32 %v3484, %v3609
      %v3646 = vadd.f32 %v3485, %v3610
      %v3647 = vadd.f32 %v3486, %v3611
      %v3648 = vadd.f32 %v3487, %v3612
      %v3649 = vadd.f32 %v3488, %v3613
      %v3650 = vadd.f32 %v3489, %v3614
      %v3651 = vadd.f32 %v3490, %v3615
      %v3652 = vadd.f32 %v3491, %v3616
      %v3653 = vadd.f32 %v3492, %v3617
      %v3654 = vadd.f32 %v3493, %v3618
      %v3655 = vadd.f32 %v3494, %v3619
      %v3656 = vadd.f32 %v3495, %v3620
      %v3657 = vadd.f32 %v3496, %v3621
      %v3658 = vadd.f32 %v3497, %v3622
      %s3659 = scalar_lea.vmem %s1, 276
      %v3660 = vld [vmem:[%s3659] sm:$0xf]
      %v3661 = vld [vmem:[%s3659 + $0x4] sm:$0xf]
      %v3662 = vld [vmem:[%s3659 + $0x8] sm:$0x3]
      %v3663 = vunpack.c.l.bf16 %v3660
      %v3664 = vunpack.c.l.bf16 %v3661
      %v3665 = vunpack.c.l.bf16 %v3662
      %3667 = vset.pattern.permute.xlu0 0
      %3668 = vperm.xlu0 %3667, %v3663
      %v3669 = vpop.permute.xlu0 %3668
      %3672 = vset.pattern.permute.xlu0 0
      %3673 = vperm.xlu0 %3672, %v3664
      %v3674 = vpop.permute.xlu0 %3673
      %3677 = vset.pattern.permute.xlu0 0
      %3678 = vperm.xlu0 %3677, %v3665
      %v3679 = vpop.permute.xlu0 %3678
      %v3681 = vmul.f32 %v3669, %v336
      %v3682 = vmul.f32 %v3669, %v340
      %v3683 = vmul.f32 %v3669, %v344
      %v3684 = vmul.f32 %v3669, %v348
      %v3685 = vmul.f32 %v3669, %v352
      %v3686 = vmul.f32 %v3669, %v356
      %v3687 = vmul.f32 %v3669, %v3197
      %v3688 = vmul.f32 %v3674, %v336
      %v3689 = vmul.f32 %v3674, %v340
      %v3690 = vmul.f32 %v3674, %v344
      %v3691 = vmul.f32 %v3674, %v348
      %v3692 = vmul.f32 %v3674, %v352
      %v3693 = vmul.f32 %v3674, %v356
      %v3694 = vmul.f32 %v3674, %v3197
      %v3695 = vmul.f32 %v3679, %v336
      %v3696 = vmul.f32 %v3679, %v340
      %v3697 = vmul.f32 %v3679, %v344
      %v3698 = vmul.f32 %v3679, %v348
      %v3699 = vmul.f32 %v3679, %v352
      %v3700 = vmul.f32 %v3679, %v356
      %v3701 = vmul.f32 %v3679, %v3197
      %3723 = vrot.lane.b32.xlu0 %v3681, 13
      %v3724 = vpop.permute.xlu0 %3723
      %3725 = vrot.lane.b32.xlu0 %v3682, 13
      %v3726 = vpop.permute.xlu0 %3725
      %3727 = vrot.lane.b32.xlu0 %v3683, 13
      %v3728 = vpop.permute.xlu0 %3727
      %3729 = vrot.lane.b32.xlu0 %v3684, 13
      %v3730 = vpop.permute.xlu0 %3729
      %3731 = vrot.lane.b32.xlu0 %v3685, 13
      %v3732 = vpop.permute.xlu0 %3731
      %3733 = vrot.lane.b32.xlu0 %v3686, 13
      %v3734 = vpop.permute.xlu0 %3733
      %3735 = vrot.lane.b32.xlu0 %v3687, 13
      %v3736 = vpop.permute.xlu0 %3735
      %3737 = vrot.lane.b32.xlu0 %v3688, 13
      %v3738 = vpop.permute.xlu0 %3737
      %3739 = vrot.lane.b32.xlu0 %v3689, 13
      %v3740 = vpop.permute.xlu0 %3739
      %3741 = vrot.lane.b32.xlu0 %v3690, 13
      %v3742 = vpop.permute.xlu0 %3741
      %3743 = vrot.lane.b32.xlu0 %v3691, 13
      %v3744 = vpop.permute.xlu0 %3743
      %3745 = vrot.lane.b32.xlu0 %v3692, 13
      %v3746 = vpop.permute.xlu0 %3745
      %3747 = vrot.lane.b32.xlu0 %v3693, 13
      %v3748 = vpop.permute.xlu0 %3747
      %3749 = vrot.lane.b32.xlu0 %v3694, 13
      %v3750 = vpop.permute.xlu0 %3749
      %3751 = vrot.lane.b32.xlu0 %v3695, 13
      %v3752 = vpop.permute.xlu0 %3751
      %3753 = vrot.lane.b32.xlu0 %v3696, 13
      %v3754 = vpop.permute.xlu0 %3753
      %3755 = vrot.lane.b32.xlu0 %v3697, 13
      %v3756 = vpop.permute.xlu0 %3755
      %3757 = vrot.lane.b32.xlu0 %v3698, 13
      %v3758 = vpop.permute.xlu0 %3757
      %3759 = vrot.lane.b32.xlu0 %v3699, 13
      %v3760 = vpop.permute.xlu0 %3759
      %3761 = vrot.lane.b32.xlu0 %v3700, 13
      %v3762 = vpop.permute.xlu0 %3761
      %3763 = vrot.lane.b32.xlu0 %v3701, 13
      %v3764 = vpop.permute.xlu0 %3763
      %vm3765 = vcmask 105472
      %v3766 = vsel %vm3765, %v3724, %v3726
      %v3767 = vsel %vm3765, %v3726, %v3728
      %v3768 = vsel %vm3765, %v3728, %v3730
      %v3769 = vsel %vm3765, %v3730, %v3732
      %v3770 = vsel %vm3765, %v3732, %v3734
      %v3771 = vsel %vm3765, %v3734, %v3736
      %v3772 = vsel %vm3765, %v3738, %v3740
      %v3773 = vsel %vm3765, %v3740, %v3742
      %v3774 = vsel %vm3765, %v3742, %v3744
      %v3775 = vsel %vm3765, %v3744, %v3746
      %v3776 = vsel %vm3765, %v3746, %v3748
      %v3777 = vsel %vm3765, %v3748, %v3750
      %v3778 = vsel %vm3765, %v3752, %v3754
      %v3779 = vsel %vm3765, %v3754, %v3756
      %v3780 = vsel %vm3765, %v3756, %v3758
      %v3781 = vsel %vm3765, %v3758, %v3760
      %v3782 = vsel %vm3765, %v3760, %v3762
      %v3783 = vsel %vm3765, %v3762, %v3764
      %v3802 = vadd.f32 %v3641, %v3766
      %v3803 = vadd.f32 %v3642, %v3767
      %v3804 = vadd.f32 %v3643, %v3768
      %v3805 = vadd.f32 %v3644, %v3769
      %v3806 = vadd.f32 %v3645, %v3770
      %v3807 = vadd.f32 %v3646, %v3771
      %v3808 = vadd.f32 %v3647, %v3772
      %v3809 = vadd.f32 %v3648, %v3773
      %v3810 = vadd.f32 %v3649, %v3774
      %v3811 = vadd.f32 %v3650, %v3775
      %v3812 = vadd.f32 %v3651, %v3776
      %v3813 = vadd.f32 %v3652, %v3777
      %v3814 = vadd.f32 %v3653, %v3778
      %v3815 = vadd.f32 %v3654, %v3779
      %v3816 = vadd.f32 %v3655, %v3780
      %v3817 = vadd.f32 %v3656, %v3781
      %v3818 = vadd.f32 %v3657, %v3782
      %v3819 = vadd.f32 %v3658, %v3783
      %s3820 = scalar_lea.vmem %s1, 288
      %v3821 = vld [vmem:[%s3820] sm:$0xf]
      %v3822 = vld [vmem:[%s3820 + $0x4] sm:$0xf]
      %v3823 = vld [vmem:[%s3820 + $0x8] sm:$0x3]
      %v3824 = vunpack.c.l.bf16 %v3821
      %v3825 = vunpack.c.l.bf16 %v3822
      %v3826 = vunpack.c.l.bf16 %v3823
      %3828 = vset.pattern.permute.xlu0 0
      %3829 = vperm.xlu0 %3828, %v3824
      %v3830 = vpop.permute.xlu0 %3829
      %3833 = vset.pattern.permute.xlu0 0
      %3834 = vperm.xlu0 %3833, %v3825
      %v3835 = vpop.permute.xlu0 %3834
      %3838 = vset.pattern.permute.xlu0 0
      %3839 = vperm.xlu0 %3838, %v3826
      %v3840 = vpop.permute.xlu0 %3839
      %v3842 = vmul.f32 %v3830, %v336
      %v3843 = vmul.f32 %v3830, %v340
      %v3844 = vmul.f32 %v3830, %v344
      %v3845 = vmul.f32 %v3830, %v348
      %v3846 = vmul.f32 %v3830, %v352
      %v3847 = vmul.f32 %v3830, %v356
      %v3848 = vmul.f32 %v3830, %v3197
      %v3849 = vmul.f32 %v3835, %v336
      %v3850 = vmul.f32 %v3835, %v340
      %v3851 = vmul.f32 %v3835, %v344
      %v3852 = vmul.f32 %v3835, %v348
      %v3853 = vmul.f32 %v3835, %v352
      %v3854 = vmul.f32 %v3835, %v356
      %v3855 = vmul.f32 %v3835, %v3197
      %v3856 = vmul.f32 %v3840, %v336
      %v3857 = vmul.f32 %v3840, %v340
      %v3858 = vmul.f32 %v3840, %v344
      %v3859 = vmul.f32 %v3840, %v348
      %v3860 = vmul.f32 %v3840, %v352
      %v3861 = vmul.f32 %v3840, %v356
      %v3862 = vmul.f32 %v3840, %v3197
      %3884 = vrot.lane.b32.xlu0 %v3842, 12
      %v3885 = vpop.permute.xlu0 %3884
      %3886 = vrot.lane.b32.xlu0 %v3843, 12
      %v3887 = vpop.permute.xlu0 %3886
      %3888 = vrot.lane.b32.xlu0 %v3844, 12
      %v3889 = vpop.permute.xlu0 %3888
      %3890 = vrot.lane.b32.xlu0 %v3845, 12
      %v3891 = vpop.permute.xlu0 %3890
      %3892 = vrot.lane.b32.xlu0 %v3846, 12
      %v3893 = vpop.permute.xlu0 %3892
      %3894 = vrot.lane.b32.xlu0 %v3847, 12
      %v3895 = vpop.permute.xlu0 %3894
      %3896 = vrot.lane.b32.xlu0 %v3848, 12
      %v3897 = vpop.permute.xlu0 %3896
      %3898 = vrot.lane.b32.xlu0 %v3849, 12
      %v3899 = vpop.permute.xlu0 %3898
      %3900 = vrot.lane.b32.xlu0 %v3850, 12
      %v3901 = vpop.permute.xlu0 %3900
      %3902 = vrot.lane.b32.xlu0 %v3851, 12
      %v3903 = vpop.permute.xlu0 %3902
      %3904 = vrot.lane.b32.xlu0 %v3852, 12
      %v3905 = vpop.permute.xlu0 %3904
      %3906 = vrot.lane.b32.xlu0 %v3853, 12
      %v3907 = vpop.permute.xlu0 %3906
      %3908 = vrot.lane.b32.xlu0 %v3854, 12
      %v3909 = vpop.permute.xlu0 %3908
      %3910 = vrot.lane.b32.xlu0 %v3855, 12
      %v3911 = vpop.permute.xlu0 %3910
      %3912 = vrot.lane.b32.xlu0 %v3856, 12
      %v3913 = vpop.permute.xlu0 %3912
      %3914 = vrot.lane.b32.xlu0 %v3857, 12
      %v3915 = vpop.permute.xlu0 %3914
      %3916 = vrot.lane.b32.xlu0 %v3858, 12
      %v3917 = vpop.permute.xlu0 %3916
      %3918 = vrot.lane.b32.xlu0 %v3859, 12
      %v3919 = vpop.permute.xlu0 %3918
      %3920 = vrot.lane.b32.xlu0 %v3860, 12
      %v3921 = vpop.permute.xlu0 %3920
      %3922 = vrot.lane.b32.xlu0 %v3861, 12
      %v3923 = vpop.permute.xlu0 %3922
      %3924 = vrot.lane.b32.xlu0 %v3862, 12
      %v3925 = vpop.permute.xlu0 %3924
      %vm3926 = vcmask 97280
      %v3927 = vsel %vm3926, %v3885, %v3887
      %v3928 = vsel %vm3926, %v3887, %v3889
      %v3929 = vsel %vm3926, %v3889, %v3891
      %v3930 = vsel %vm3926, %v3891, %v3893
      %v3931 = vsel %vm3926, %v3893, %v3895
      %v3932 = vsel %vm3926, %v3895, %v3897
      %v3933 = vsel %vm3926, %v3899, %v3901
      %v3934 = vsel %vm3926, %v3901, %v3903
      %v3935 = vsel %vm3926, %v3903, %v3905
      %v3936 = vsel %vm3926, %v3905, %v3907
      %v3937 = vsel %vm3926, %v3907, %v3909
      %v3938 = vsel %vm3926, %v3909, %v3911
      %v3939 = vsel %vm3926, %v3913, %v3915
      %v3940 = vsel %vm3926, %v3915, %v3917
      %v3941 = vsel %vm3926, %v3917, %v3919
      %v3942 = vsel %vm3926, %v3919, %v3921
      %v3943 = vsel %vm3926, %v3921, %v3923
      %v3944 = vsel %vm3926, %v3923, %v3925
      %v3963 = vadd.f32 %v3802, %v3927
      %v3964 = vadd.f32 %v3803, %v3928
      %v3965 = vadd.f32 %v3804, %v3929
      %v3966 = vadd.f32 %v3805, %v3930
      %v3967 = vadd.f32 %v3806, %v3931
      %v3968 = vadd.f32 %v3807, %v3932
      %v3969 = vadd.f32 %v3808, %v3933
      %v3970 = vadd.f32 %v3809, %v3934
      %v3971 = vadd.f32 %v3810, %v3935
      %v3972 = vadd.f32 %v3811, %v3936
      %v3973 = vadd.f32 %v3812, %v3937
      %v3974 = vadd.f32 %v3813, %v3938
      %v3975 = vadd.f32 %v3814, %v3939
      %v3976 = vadd.f32 %v3815, %v3940
      %v3977 = vadd.f32 %v3816, %v3941
      %v3978 = vadd.f32 %v3817, %v3942
      %v3979 = vadd.f32 %v3818, %v3943
      %v3980 = vadd.f32 %v3819, %v3944
      %v3981 = vld [vmem:[%s2] sm:$0xff]
      %v3982 = vld [vmem:[%s2 + $0x8] sm:$0xff]
      %v3983 = vld [vmem:[%s2 + $0x10] sm:$0xf]
      %3985 = vset.pattern.permute.xlu0 0
      %3986 = vperm.xlu0 %3985, %v3981
      %v3987 = vpop.permute.xlu0 %3986
      %3990 = vset.pattern.permute.xlu0 0
      %3991 = vperm.xlu0 %3990, %v3982
      %v3992 = vpop.permute.xlu0 %3991
      %3995 = vset.pattern.permute.xlu0 0
      %3996 = vperm.xlu0 %3995, %v3983
      %v3997 = vpop.permute.xlu0 %3996
      %v3999 = vadd.f32 %v3963, %v3987
      %v4000 = vadd.f32 %v3964, %v3987
      %v4001 = vadd.f32 %v3965, %v3987
      %v4002 = vadd.f32 %v3966, %v3987
      %v4003 = vadd.f32 %v3967, %v3987
      %v4004 = vadd.f32 %v3968, %v3987
      %v4005 = vadd.f32 %v3969, %v3992
      %v4006 = vadd.f32 %v3970, %v3992
      %v4007 = vadd.f32 %v3971, %v3992
      %v4008 = vadd.f32 %v3972, %v3992
      %v4009 = vadd.f32 %v3973, %v3992
      %v4010 = vadd.f32 %v3974, %v3992
      %v4011 = vadd.f32 %v3975, %v3997
      %v4012 = vadd.f32 %v3976, %v3997
      %v4013 = vadd.f32 %v3977, %v3997
      %v4014 = vadd.f32 %v3978, %v3997
      %v4015 = vadd.f32 %v3979, %v3997
      %v4016 = vadd.f32 %v3980, %v3997
      %v4017 = vmax.f32 %v3999, 0.0
      %v4018 = vmax.f32 %v4000, 0.0
      %v4019 = vmax.f32 %v4001, 0.0
      %v4020 = vmax.f32 %v4002, 0.0
      %v4021 = vmax.f32 %v4003, 0.0
      %v4022 = vmax.f32 %v4004, 0.0
      %v4023 = vmax.f32 %v4005, 0.0
      %v4024 = vmax.f32 %v4006, 0.0
      %v4025 = vmax.f32 %v4007, 0.0
      %v4026 = vmax.f32 %v4008, 0.0
      %v4027 = vmax.f32 %v4009, 0.0
      %v4028 = vmax.f32 %v4010, 0.0
      %v4029 = vmax.f32 %v4011, 0.0
      %v4030 = vmax.f32 %v4012, 0.0
      %v4031 = vmax.f32 %v4013, 0.0
      %v4032 = vmax.f32 %v4014, 0.0
      %v4033 = vmax.f32 %v4015, 0.0
      %v4034 = vmax.f32 %v4016, 0.0
      %4053 = vrot.lane.b32.xlu0 %v4017, 127
      %v4054 = vpop.permute.xlu0 %4053
      %4055 = vrot.lane.b32.xlu0 %v4018, 127
      %v4056 = vpop.permute.xlu0 %4055
      %4057 = vrot.lane.b32.xlu0 %v4019, 127
      %v4058 = vpop.permute.xlu0 %4057
      %4059 = vrot.lane.b32.xlu0 %v4020, 127
      %v4060 = vpop.permute.xlu0 %4059
      %4061 = vrot.lane.b32.xlu0 %v4021, 127
      %v4062 = vpop.permute.xlu0 %4061
      %4063 = vrot.lane.b32.xlu0 %v4022, 127
      %v4064 = vpop.permute.xlu0 %4063
      %4065 = vrot.lane.b32.xlu0 %v4023, 127
      %v4066 = vpop.permute.xlu0 %4065
      %4067 = vrot.lane.b32.xlu0 %v4024, 127
      %v4068 = vpop.permute.xlu0 %4067
      %4069 = vrot.lane.b32.xlu0 %v4025, 127
      %v4070 = vpop.permute.xlu0 %4069
      %4071 = vrot.lane.b32.xlu0 %v4026, 127
      %v4072 = vpop.permute.xlu0 %4071
      %4073 = vrot.lane.b32.xlu0 %v4027, 127
      %v4074 = vpop.permute.xlu0 %4073
      %4075 = vrot.lane.b32.xlu0 %v4028, 127
      %v4076 = vpop.permute.xlu0 %4075
      %4077 = vrot.lane.b32.xlu0 %v4029, 127
      %v4078 = vpop.permute.xlu0 %4077
      %4079 = vrot.lane.b32.xlu0 %v4030, 127
      %v4080 = vpop.permute.xlu0 %4079
      %4081 = vrot.lane.b32.xlu0 %v4031, 127
      %v4082 = vpop.permute.xlu0 %4081
      %4083 = vrot.lane.b32.xlu0 %v4032, 127
      %v4084 = vpop.permute.xlu0 %4083
      %4085 = vrot.lane.b32.xlu0 %v4033, 127
      %v4086 = vpop.permute.xlu0 %4085
      %4087 = vrot.lane.b32.xlu0 %v4034, 127
      %v4088 = vpop.permute.xlu0 %4087
      %v4089 = vsel %vm487, %v4054, %v4056
      %v4090 = vsel %vm487, %v4056, %v4058
      %v4091 = vsel %vm487, %v4058, %v4060
      %v4092 = vsel %vm487, %v4060, %v4062
      %v4093 = vsel %vm487, %v4062, %v4064
      %v4094 = vsel %vm487, %v4066, %v4068
      %v4095 = vsel %vm487, %v4068, %v4070
      %v4096 = vsel %vm487, %v4070, %v4072
      %v4097 = vsel %vm487, %v4072, %v4074
      %v4098 = vsel %vm487, %v4074, %v4076
      %v4099 = vsel %vm487, %v4078, %v4080
      %v4100 = vsel %vm487, %v4080, %v4082
      %v4101 = vsel %vm487, %v4082, %v4084
      %v4102 = vsel %vm487, %v4084, %v4086
      %v4103 = vsel %vm487, %v4086, %v4088
      %v4122 = vmax.f32 %v4017, %v4089
      %v4123 = vmax.f32 %v4018, %v4090
      %v4124 = vmax.f32 %v4019, %v4091
      %v4125 = vmax.f32 %v4020, %v4092
      %v4126 = vmax.f32 %v4021, %v4093
      %v4127 = vmax.f32 %v4022, %v4064
      %v4128 = vmax.f32 %v4023, %v4094
      %v4129 = vmax.f32 %v4024, %v4095
      %v4130 = vmax.f32 %v4025, %v4096
      %v4131 = vmax.f32 %v4026, %v4097
      %v4132 = vmax.f32 %v4027, %v4098
      %v4133 = vmax.f32 %v4028, %v4076
      %v4134 = vmax.f32 %v4029, %v4099
      %v4135 = vmax.f32 %v4030, %v4100
      %v4136 = vmax.f32 %v4031, %v4101
      %v4137 = vmax.f32 %v4032, %v4102
      %v4138 = vmax.f32 %v4033, %v4103
      %v4139 = vmax.f32 %v4034, %v4088
      %4158 = vrot.lane.b32.xlu0 %v4122, 100
      %v4159 = vpop.permute.xlu0 %4158
      %4160 = vrot.lane.b32.xlu0 %v4123, 100
      %v4161 = vpop.permute.xlu0 %4160
      %4162 = vrot.lane.b32.xlu0 %v4124, 100
      %v4163 = vpop.permute.xlu0 %4162
      %4164 = vrot.lane.b32.xlu0 %v4125, 100
      %v4165 = vpop.permute.xlu0 %4164
      %4166 = vrot.lane.b32.xlu0 %v4126, 100
      %v4167 = vpop.permute.xlu0 %4166
      %4168 = vrot.lane.b32.xlu0 %v4127, 100
      %v4169 = vpop.permute.xlu0 %4168
      %4170 = vrot.lane.b32.xlu0 %v4128, 100
      %v4171 = vpop.permute.xlu0 %4170
      %4172 = vrot.lane.b32.xlu0 %v4129, 100
      %v4173 = vpop.permute.xlu0 %4172
      %4174 = vrot.lane.b32.xlu0 %v4130, 100
      %v4175 = vpop.permute.xlu0 %4174
      %4176 = vrot.lane.b32.xlu0 %v4131, 100
      %v4177 = vpop.permute.xlu0 %4176
      %4178 = vrot.lane.b32.xlu0 %v4132, 100
      %v4179 = vpop.permute.xlu0 %4178
      %4180 = vrot.lane.b32.xlu0 %v4133, 100
      %v4181 = vpop.permute.xlu0 %4180
      %4182 = vrot.lane.b32.xlu0 %v4134, 100
      %v4183 = vpop.permute.xlu0 %4182
      %4184 = vrot.lane.b32.xlu0 %v4135, 100
      %v4185 = vpop.permute.xlu0 %4184
      %4186 = vrot.lane.b32.xlu0 %v4136, 100
      %v4187 = vpop.permute.xlu0 %4186
      %4188 = vrot.lane.b32.xlu0 %v4137, 100
      %v4189 = vpop.permute.xlu0 %4188
      %4190 = vrot.lane.b32.xlu0 %v4138, 100
      %v4191 = vpop.permute.xlu0 %4190
      %4192 = vrot.lane.b32.xlu0 %v4139, 100
      %v4193 = vpop.permute.xlu0 %4192
      %v4194 = vsel %vm1071, %v4159, %v4161
      %v4195 = vsel %vm1071, %v4161, %v4163
      %v4196 = vsel %vm1071, %v4163, %v4165
      %v4197 = vsel %vm1071, %v4165, %v4167
      %v4198 = vsel %vm1071, %v4167, %v4169
      %v4199 = vsel %vm1071, %v4171, %v4173
      %v4200 = vsel %vm1071, %v4173, %v4175
      %v4201 = vsel %vm1071, %v4175, %v4177
      %v4202 = vsel %vm1071, %v4177, %v4179
      %v4203 = vsel %vm1071, %v4179, %v4181
      %v4204 = vsel %vm1071, %v4183, %v4185
      %v4205 = vsel %vm1071, %v4185, %v4187
      %v4206 = vsel %vm1071, %v4187, %v4189
      %v4207 = vsel %vm1071, %v4189, %v4191
      %v4208 = vsel %vm1071, %v4191, %v4193
      %v4224 = vmax.f32 %v4122, %v4194
      %v4225 = vmax.f32 %v4123, %v4195
      %v4226 = vmax.f32 %v4124, %v4196
      %v4227 = vmax.f32 %v4125, %v4197
      %v4228 = vmax.f32 %v4126, %v4198
      %v4229 = vmax.f32 %v4128, %v4199
      %v4230 = vmax.f32 %v4129, %v4200
      %v4231 = vmax.f32 %v4130, %v4201
      %v4232 = vmax.f32 %v4131, %v4202
      %v4233 = vmax.f32 %v4132, %v4203
      %v4234 = vmax.f32 %v4134, %v4204
      %v4235 = vmax.f32 %v4135, %v4205
      %v4236 = vmax.f32 %v4136, %v4206
      %v4237 = vmax.f32 %v4137, %v4207
      %v4238 = vmax.f32 %v4138, %v4208
      %v4239 = vpack.c.bf16 %v4229, %v4224
      %v4240 = vpack.c.bf16 %v4230, %v4225
      %v4241 = vpack.c.bf16 %v4231, %v4226
      %v4242 = vpack.c.bf16 %v4232, %v4227
      %v4243 = vpack.c.bf16 %v4233, %v4228
      %v4244 = vpack.c.bf16 %v4234, %v4234
      %v4245 = vpack.c.bf16 %v4235, %v4235
      %v4246 = vpack.c.bf16 %v4236, %v4236
      %v4247 = vpack.c.bf16 %v4237, %v4237
      %v4248 = vpack.c.bf16 %v4238, %v4238
      %v4249 = vld [vmem:[%s3] sm:$0xff]
      %v4250 = vld [vmem:[%s3 + $0x8] sm:$0xff]
      %v4251 = vld [vmem:[%s3 + $0x10] sm:$0xff]
      %v4252 = vld [vmem:[%s3 + $0x18] sm:$0xff]
      %v4253 = vld [vmem:[%s3 + $0x20] sm:$0xff]
      %v4254 = vld [vmem:[%s3 + $0x28] sm:$0xff]
      %v4255 = vld [vmem:[%s3 + $0x30] sm:$0xff]
      %v4256 = vld [vmem:[%s3 + $0x38] sm:$0xff]
      %v4257 = vld [vmem:[%s3 + $0x40] sm:$0xff]
      %v4258 = vld [vmem:[%s3 + $0x48] sm:$0xff]
      %v4259 = vld [vmem:[%s3 + $0x50] sm:$0xff]
      %v4260 = vld [vmem:[%s3 + $0x58] sm:$0xff]
      %v4261 = vld [vmem:[%s3 + $0x60] sm:$0xff]
      %v4262 = vld [vmem:[%s3 + $0x68] sm:$0xff]
      %v4263 = vld [vmem:[%s3 + $0x70] sm:$0xff]
      %v4264 = vld [vmem:[%s3 + $0x78] sm:$0xff]
      %v4265 = vld [vmem:[%s3 + $0x80] sm:$0xff]
      %v4266 = vld [vmem:[%s3 + $0x88] sm:$0xff]
      %v4267 = vld [vmem:[%s3 + $0x90] sm:$0xff]
      %v4268 = vld [vmem:[%s3 + $0x98] sm:$0xff]
      %v4269 = vld [vmem:[%s3 + $0xa0] sm:$0xff]
      %v4270 = vld [vmem:[%s3 + $0xa8] sm:$0xff]
      %v4271 = vld [vmem:[%s3 + $0xb0] sm:$0xff]
      %v4272 = vld [vmem:[%s3 + $0xb8] sm:$0xff]
      %v4273 = vld [vmem:[%s3 + $0xc0] sm:$0xff]
      %v4274 = vld [vmem:[%s3 + $0xc8] sm:$0xff]
      %v4275 = vld [vmem:[%s3 + $0xd0] sm:$0xff]
      %v4276 = vld [vmem:[%s3 + $0xd8] sm:$0xff]
      %v4277 = vld [vmem:[%s3 + $0xe0] sm:$0xff]
      %v4278 = vld [vmem:[%s3 + $0xe8] sm:$0xff]
      %v4279 = vld [vmem:[%s3 + $0xf0] sm:$0xff]
      %v4280 = vld [vmem:[%s3 + $0xf8] sm:$0xff]
      %v4281 = vld [vmem:[%s3 + $0x100] sm:$0xff]
      %v4282 = vld [vmem:[%s3 + $0x108] sm:$0xff]
      %v4283 = vld [vmem:[%s3 + $0x110] sm:$0xff]
      %v4284 = vld [vmem:[%s3 + $0x118] sm:$0xff]
      %v4285 = vld [vmem:[%s3 + $0x120] sm:$0xff]
      %v4286 = vld [vmem:[%s3 + $0x128] sm:$0xff]
      %v4287 = vld [vmem:[%s3 + $0x130] sm:$0xff]
      %v4288 = vld [vmem:[%s3 + $0x138] sm:$0xff]
      %v4289 = vld [vmem:[%s3 + $0x140] sm:$0xff]
      %v4290 = vld [vmem:[%s3 + $0x148] sm:$0xff]
      %v4291 = vld [vmem:[%s3 + $0x150] sm:$0xff]
      %v4292 = vld [vmem:[%s3 + $0x158] sm:$0xff]
      %v4293 = vld [vmem:[%s3 + $0x160] sm:$0xff]
      %v4294 = vld [vmem:[%s3 + $0x168] sm:$0xff]
      %v4295 = vld [vmem:[%s3 + $0x170] sm:$0xff]
      %v4296 = vld [vmem:[%s3 + $0x178] sm:$0xff]
      %v4297 = vld [vmem:[%s3 + $0x180] sm:$0xff]
      %v4298 = vld [vmem:[%s3 + $0x188] sm:$0xff]
      %v4299 = vld [vmem:[%s3 + $0x190] sm:$0xff]
      %v4300 = vld [vmem:[%s3 + $0x198] sm:$0xff]
      %v4301 = vld [vmem:[%s3 + $0x1a0] sm:$0xff]
      %v4302 = vld [vmem:[%s3 + $0x1a8] sm:$0xff]
      %v4303 = vld [vmem:[%s3 + $0x1b0] sm:$0xff]
      %v4304 = vld [vmem:[%s3 + $0x1b8] sm:$0xff]
      %v4305 = vld [vmem:[%s3 + $0x1c0] sm:$0xff]
      %v4306 = vld [vmem:[%s3 + $0x1c8] sm:$0xff]
      %v4307 = vld [vmem:[%s3 + $0x1d0] sm:$0xff]
      %v4308 = vld [vmem:[%s3 + $0x1d8] sm:$0xff]
      %v4309 = vld [vmem:[%s3 + $0x1e0] sm:$0xff]
      %v4310 = vld [vmem:[%s3 + $0x1e8] sm:$0xff]
      %v4311 = vld [vmem:[%s3 + $0x1f0] sm:$0xff]
      %v4312 = vld [vmem:[%s3 + $0x1f8] sm:$0xff]
      %v4313 = vld [vmem:[%s3 + $0x200] sm:$0xff]
      %v4314 = vld [vmem:[%s3 + $0x208] sm:$0xff]
      %v4315 = vld [vmem:[%s3 + $0x210] sm:$0xff]
      %v4316 = vld [vmem:[%s3 + $0x218] sm:$0xff]
      %v4317 = vld [vmem:[%s3 + $0x220] sm:$0xff]
      %v4318 = vld [vmem:[%s3 + $0x228] sm:$0xff]
      %v4319 = vld [vmem:[%s3 + $0x230] sm:$0xff]
      %v4320 = vld [vmem:[%s3 + $0x238] sm:$0xff]
      %v4321 = vld [vmem:[%s3 + $0x240] sm:$0xff]
      %v4322 = vld [vmem:[%s3 + $0x248] sm:$0xff]
      %v4323 = vld [vmem:[%s3 + $0x250] sm:$0xff]
      %v4324 = vld [vmem:[%s3 + $0x258] sm:$0xff]
      %v4325 = vld [vmem:[%s3 + $0x260] sm:$0xff]
      %v4326 = vld [vmem:[%s3 + $0x268] sm:$0xff]
      %v4327 = vld [vmem:[%s3 + $0x270] sm:$0xff]
      %v4328 = vld [vmem:[%s3 + $0x278] sm:$0xff]
      %v4409 = vunpack.c.l.b16 %v4249
      %v4410 = vunpack.c.h.b16 %v4249
      %v4411 = vunpack.c.l.b16 %v4250
      %v4412 = vunpack.c.h.b16 %v4250
      %v4413 = vunpack.c.l.b16 %v4251
      %v4414 = vunpack.c.h.b16 %v4251
      %v4415 = vunpack.c.l.b16 %v4252
      %v4416 = vunpack.c.h.b16 %v4252
      %v4417 = vunpack.c.l.b16 %v4253
      %v4418 = vunpack.c.h.b16 %v4253
      %v4419 = vunpack.c.l.b16 %v4254
      %v4420 = vunpack.c.h.b16 %v4254
      %v4421 = vunpack.c.l.b16 %v4255
      %v4422 = vunpack.c.h.b16 %v4255
      %v4423 = vunpack.c.l.b16 %v4256
      %v4424 = vunpack.c.h.b16 %v4256
      %v4425 = vunpack.c.l.b16 %v4257
      %v4426 = vunpack.c.h.b16 %v4257
      %v4427 = vunpack.c.l.b16 %v4258
      %v4428 = vunpack.c.h.b16 %v4258
      %v4429 = vunpack.c.l.b16 %v4259
      %v4430 = vunpack.c.h.b16 %v4259
      %v4431 = vunpack.c.l.b16 %v4260
      %v4432 = vunpack.c.h.b16 %v4260
      %v4433 = vunpack.c.l.b16 %v4261
      %v4434 = vunpack.c.h.b16 %v4261
      %v4435 = vunpack.c.l.b16 %v4262
      %v4436 = vunpack.c.h.b16 %v4262
      %v4437 = vunpack.c.l.b16 %v4263
      %v4438 = vunpack.c.h.b16 %v4263
      %v4439 = vunpack.c.l.b16 %v4264
      %v4440 = vunpack.c.h.b16 %v4264
      %v4441 = vunpack.c.l.b16 %v4265
      %v4442 = vunpack.c.h.b16 %v4265
      %v4443 = vunpack.c.l.b16 %v4266
      %v4444 = vunpack.c.h.b16 %v4266
      %v4445 = vunpack.c.l.b16 %v4267
      %v4446 = vunpack.c.h.b16 %v4267
      %v4447 = vunpack.c.l.b16 %v4268
      %v4448 = vunpack.c.h.b16 %v4268
      %v4449 = vunpack.c.l.b16 %v4269
      %v4450 = vunpack.c.h.b16 %v4269
      %v4451 = vunpack.c.l.b16 %v4270
      %v4452 = vunpack.c.h.b16 %v4270
      %v4453 = vunpack.c.l.b16 %v4271
      %v4454 = vunpack.c.h.b16 %v4271
      %v4455 = vunpack.c.l.b16 %v4272
      %v4456 = vunpack.c.h.b16 %v4272
      %v4457 = vunpack.c.l.b16 %v4273
      %v4458 = vunpack.c.h.b16 %v4273
      %v4459 = vunpack.c.l.b16 %v4274
      %v4460 = vunpack.c.h.b16 %v4274
      %v4461 = vunpack.c.l.b16 %v4275
      %v4462 = vunpack.c.h.b16 %v4275
      %v4463 = vunpack.c.l.b16 %v4276
      %v4464 = vunpack.c.h.b16 %v4276
      %v4465 = vunpack.c.l.b16 %v4277
      %v4466 = vunpack.c.h.b16 %v4277
      %v4467 = vunpack.c.l.b16 %v4278
      %v4468 = vunpack.c.h.b16 %v4278
      %v4469 = vunpack.c.l.b16 %v4279
      %v4470 = vunpack.c.h.b16 %v4279
      %v4471 = vunpack.c.l.b16 %v4280
      %v4472 = vunpack.c.h.b16 %v4280
      %v4473 = vunpack.c.l.b16 %v4281
      %v4474 = vunpack.c.h.b16 %v4281
      %v4475 = vunpack.c.l.b16 %v4282
      %v4476 = vunpack.c.h.b16 %v4282
      %v4477 = vunpack.c.l.b16 %v4283
      %v4478 = vunpack.c.h.b16 %v4283
      %v4479 = vunpack.c.l.b16 %v4284
      %v4480 = vunpack.c.h.b16 %v4284
      %v4481 = vunpack.c.l.b16 %v4285
      %v4482 = vunpack.c.h.b16 %v4285
      %v4483 = vunpack.c.l.b16 %v4286
      %v4484 = vunpack.c.h.b16 %v4286
      %v4485 = vunpack.c.l.b16 %v4287
      %v4486 = vunpack.c.h.b16 %v4287
      %v4487 = vunpack.c.l.b16 %v4288
      %v4488 = vunpack.c.h.b16 %v4288
      %v4489 = vunpack.c.l.b16 %v4289
      %v4490 = vunpack.c.h.b16 %v4289
      %v4491 = vunpack.c.l.b16 %v4290
      %v4492 = vunpack.c.h.b16 %v4290
      %v4493 = vunpack.c.l.b16 %v4291
      %v4494 = vunpack.c.h.b16 %v4291
      %v4495 = vunpack.c.l.b16 %v4292
      %v4496 = vunpack.c.h.b16 %v4292
      %v4497 = vunpack.c.l.b16 %v4293
      %v4498 = vunpack.c.h.b16 %v4293
      %v4499 = vunpack.c.l.b16 %v4294
      %v4500 = vunpack.c.h.b16 %v4294
      %v4501 = vunpack.c.l.b16 %v4295
      %v4502 = vunpack.c.h.b16 %v4295
      %v4503 = vunpack.c.l.b16 %v4296
      %v4504 = vunpack.c.h.b16 %v4296
      %v4505 = vunpack.c.l.b16 %v4297
      %v4506 = vunpack.c.h.b16 %v4297
      %v4507 = vunpack.c.l.b16 %v4298
      %v4508 = vunpack.c.h.b16 %v4298
      %v4509 = vunpack.c.l.b16 %v4299
      %v4510 = vunpack.c.h.b16 %v4299
      %v4511 = vunpack.c.l.b16 %v4300
      %v4512 = vunpack.c.h.b16 %v4300
      %v4513 = vunpack.c.l.b16 %v4301
      %v4514 = vunpack.c.h.b16 %v4301
      %v4515 = vunpack.c.l.b16 %v4302
      %v4516 = vunpack.c.h.b16 %v4302
      %v4517 = vunpack.c.l.b16 %v4303
      %v4518 = vunpack.c.h.b16 %v4303
      %v4519 = vunpack.c.l.b16 %v4304
      %v4520 = vunpack.c.h.b16 %v4304
      %v4521 = vunpack.c.l.b16 %v4305
      %v4522 = vunpack.c.h.b16 %v4305
      %v4523 = vunpack.c.l.b16 %v4306
      %v4524 = vunpack.c.h.b16 %v4306
      %v4525 = vunpack.c.l.b16 %v4307
      %v4526 = vunpack.c.h.b16 %v4307
      %v4527 = vunpack.c.l.b16 %v4308
      %v4528 = vunpack.c.h.b16 %v4308
      %v4529 = vunpack.c.l.b16 %v4309
      %v4530 = vunpack.c.h.b16 %v4309
      %v4531 = vunpack.c.l.b16 %v4310
      %v4532 = vunpack.c.h.b16 %v4310
      %v4533 = vunpack.c.l.b16 %v4311
      %v4534 = vunpack.c.h.b16 %v4311
      %v4535 = vunpack.c.l.b16 %v4312
      %v4536 = vunpack.c.h.b16 %v4312
      %v4537 = vunpack.c.l.b16 %v4313
      %v4538 = vunpack.c.h.b16 %v4313
      %v4539 = vunpack.c.l.b16 %v4314
      %v4540 = vunpack.c.h.b16 %v4314
      %v4541 = vunpack.c.l.b16 %v4315
      %v4542 = vunpack.c.h.b16 %v4315
      %v4543 = vunpack.c.l.b16 %v4316
      %v4544 = vunpack.c.h.b16 %v4316
      %v4545 = vunpack.c.l.b16 %v4317
      %v4546 = vunpack.c.h.b16 %v4317
      %v4547 = vunpack.c.l.b16 %v4318
      %v4548 = vunpack.c.h.b16 %v4318
      %v4549 = vunpack.c.l.b16 %v4319
      %v4550 = vunpack.c.h.b16 %v4319
      %v4551 = vunpack.c.l.b16 %v4320
      %v4552 = vunpack.c.h.b16 %v4320
      %v4553 = vunpack.c.l.b16 %v4321
      %v4554 = vunpack.c.h.b16 %v4321
      %v4555 = vunpack.c.l.b16 %v4322
      %v4556 = vunpack.c.h.b16 %v4322
      %v4557 = vunpack.c.l.b16 %v4323
      %v4558 = vunpack.c.h.b16 %v4323
      %v4559 = vunpack.c.l.b16 %v4324
      %v4560 = vunpack.c.h.b16 %v4324
      %v4561 = vunpack.c.l.b16 %v4325
      %v4562 = vunpack.c.h.b16 %v4325
      %v4563 = vunpack.c.l.b16 %v4326
      %v4564 = vunpack.c.h.b16 %v4326
      %v4565 = vunpack.c.l.b16 %v4327
      %v4566 = vunpack.c.h.b16 %v4327
      %v4567 = vunpack.c.l.b16 %v4328
      %v4568 = vunpack.c.h.b16 %v4328
      %v4569 = vpack.c.b16 %v4411, %v4409
      %v4570 = vpack.c.b16 %v4412, %v4410
      %v4571 = vpack.c.b16 %v4415, %v4413
      %v4572 = vpack.c.b16 %v4416, %v4414
      %v4573 = vpack.c.b16 %v4419, %v4417
      %v4574 = vpack.c.b16 %v4420, %v4418
      %v4575 = vpack.c.b16 %v4423, %v4421
      %v4576 = vpack.c.b16 %v4424, %v4422
      %v4577 = vpack.c.b16 %v4427, %v4425
      %v4578 = vpack.c.b16 %v4428, %v4426
      %v4579 = vpack.c.b16 %v4431, %v4429
      %v4580 = vpack.c.b16 %v4432, %v4430
      %v4581 = vpack.c.b16 %v4435, %v4433
      %v4582 = vpack.c.b16 %v4436, %v4434
      %v4583 = vpack.c.b16 %v4439, %v4437
      %v4584 = vpack.c.b16 %v4440, %v4438
      %v4585 = vpack.c.b16 %v4443, %v4441
      %v4586 = vpack.c.b16 %v4444, %v4442
      %v4587 = vpack.c.b16 %v4447, %v4445
      %v4588 = vpack.c.b16 %v4448, %v4446
      %v4589 = vpack.c.b16 %v4451, %v4449
      %v4590 = vpack.c.b16 %v4452, %v4450
      %v4591 = vpack.c.b16 %v4455, %v4453
      %v4592 = vpack.c.b16 %v4456, %v4454
      %v4593 = vpack.c.b16 %v4459, %v4457
      %v4594 = vpack.c.b16 %v4460, %v4458
      %v4595 = vpack.c.b16 %v4463, %v4461
      %v4596 = vpack.c.b16 %v4464, %v4462
      %v4597 = vpack.c.b16 %v4467, %v4465
      %v4598 = vpack.c.b16 %v4468, %v4466
      %v4599 = vpack.c.b16 %v4471, %v4469
      %v4600 = vpack.c.b16 %v4472, %v4470
      %v4601 = vpack.c.b16 %v4475, %v4473
      %v4602 = vpack.c.b16 %v4476, %v4474
      %v4603 = vpack.c.b16 %v4479, %v4477
      %v4604 = vpack.c.b16 %v4480, %v4478
      %v4605 = vpack.c.b16 %v4483, %v4481
      %v4606 = vpack.c.b16 %v4484, %v4482
      %v4607 = vpack.c.b16 %v4487, %v4485
      %v4608 = vpack.c.b16 %v4488, %v4486
      %v4609 = vpack.c.b16 %v4491, %v4489
      %v4610 = vpack.c.b16 %v4492, %v4490
      %v4611 = vpack.c.b16 %v4495, %v4493
      %v4612 = vpack.c.b16 %v4496, %v4494
      %v4613 = vpack.c.b16 %v4499, %v4497
      %v4614 = vpack.c.b16 %v4500, %v4498
      %v4615 = vpack.c.b16 %v4503, %v4501
      %v4616 = vpack.c.b16 %v4504, %v4502
      %v4617 = vpack.c.b16 %v4507, %v4505
      %v4618 = vpack.c.b16 %v4508, %v4506
      %v4619 = vpack.c.b16 %v4511, %v4509
      %v4620 = vpack.c.b16 %v4512, %v4510
      %v4621 = vpack.c.b16 %v4515, %v4513
      %v4622 = vpack.c.b16 %v4516, %v4514
      %v4623 = vpack.c.b16 %v4519, %v4517
      %v4624 = vpack.c.b16 %v4520, %v4518
      %v4625 = vpack.c.b16 %v4523, %v4521
      %v4626 = vpack.c.b16 %v4524, %v4522
      %v4627 = vpack.c.b16 %v4527, %v4525
      %v4628 = vpack.c.b16 %v4528, %v4526
      %v4629 = vpack.c.b16 %v4531, %v4529
      %v4630 = vpack.c.b16 %v4532, %v4530
      %v4631 = vpack.c.b16 %v4535, %v4533
      %v4632 = vpack.c.b16 %v4536, %v4534
      %v4633 = vpack.c.b16 %v4539, %v4537
      %v4634 = vpack.c.b16 %v4540, %v4538
      %v4635 = vpack.c.b16 %v4543, %v4541
      %v4636 = vpack.c.b16 %v4544, %v4542
      %v4637 = vpack.c.b16 %v4547, %v4545
      %v4638 = vpack.c.b16 %v4548, %v4546
      %v4639 = vpack.c.b16 %v4551, %v4549
      %v4640 = vpack.c.b16 %v4552, %v4550
      %v4641 = vpack.c.b16 %v4555, %v4553
      %v4642 = vpack.c.b16 %v4556, %v4554
      %v4643 = vpack.c.b16 %v4559, %v4557
      %v4644 = vpack.c.b16 %v4560, %v4558
      %v4645 = vpack.c.b16 %v4563, %v4561
      %v4646 = vpack.c.b16 %v4564, %v4562
      %v4647 = vpack.c.b16 %v4567, %v4565
      %v4648 = vpack.c.b16 %v4568, %v4566
      %v4728 = vsel %vm487, %v4243, 0
      %v4731 = vsel %vm487, %v4248, 0
      %vm4733 = vcmask 1046528
      %vm4734 = vcmask 1047552
      %v4735 = vsel %vm4733, 4294967295, 65535
      %v4736 = vsel %vm4734, %v4735, 0
      %v4738 = vand.u32 %v4647, %v4736
      %v4741 = vand.u32 %v4648, %v4736
      %4743 = vmatprep.subr.bf16.mxu0 %v4584
      %4744 = vmatpush1.bf16.msra.mxu0 %v4583
      %4745 = vmatprep.subr.bf16.mxu0 %v4582
      %4746 = vmatpush1.bf16.msra.mxu0 %v4581
      %4747 = vmatprep.subr.bf16.mxu0 %v4580
      %4748 = vmatpush1.bf16.msra.mxu0 %v4579
      %4749 = vmatprep.subr.bf16.mxu0 %v4578
      %4750 = vmatpush1.bf16.msra.mxu0 %v4577
      %4751 = vmatprep.subr.bf16.mxu0 %v4576
      %4752 = vmatpush1.bf16.msra.mxu0 %v4575
      %4753 = vmatprep.subr.bf16.mxu0 %v4574
      %4754 = vmatpush1.bf16.msra.mxu0 %v4573
      %4755 = vmatprep.subr.bf16.mxu0 %v4572
      %4756 = vmatpush1.bf16.msra.mxu0 %v4571
      %4757 = vmatprep.subr.bf16.mxu0 %v4570
      %4758 = vmatpush1.bf16.msra.mxu0 %v4569
      %4759 = vmatprep.subr.bf16.mxu0 %v4600
      %4760 = vmatpush2.bf16.msra.mxu0 %v4599
      %4761 = vmatprep.subr.bf16.mxu0 %v4598
      %4762 = vmatpush2.bf16.msra.mxu0 %v4597
      %4763 = vmatprep.subr.bf16.mxu0 %v4596
      %4764 = vmatpush2.bf16.msra.mxu0 %v4595
      %4765 = vmatprep.subr.bf16.mxu0 %v4594
      %4766 = vmatpush2.bf16.msra.mxu0 %v4593
      %4767 = vmatprep.subr.bf16.mxu0 %v4592
      %4768 = vmatpush2.bf16.msra.mxu0 %v4591
      %4769 = vmatprep.subr.bf16.mxu0 %v4590
      %4770 = vmatpush2.bf16.msra.mxu0 %v4589
      %4771 = vmatprep.subr.bf16.mxu0 %v4588
      %4772 = vmatpush2.bf16.msra.mxu0 %v4587
      %4773 = vmatprep.subr.bf16.mxu0 %v4586
      %4774 = vmatpush2.bf16.msra.mxu0 %v4585
      %4775 = vmatprep.mubr.bf16.mxu0 %v4240
      %4776 = vmatmul.mubr.bf16.gmra.mxu0 %v4239
      %v4777 = vpop.f32.mrf.mxu0
      %v4778 = vadd.f32 0.0, %v4777
      %v4779 = vpop.f32.mrf.mxu0
      %v4780 = vadd.f32 0.0, %v4779
      %v4781 = vpop.f32.mrf.mxu0
      %v4782 = vadd.f32 0.0, %v4781
      %v4783 = vpop.f32.mrf.mxu0
      %v4784 = vadd.f32 0.0, %v4783
      %4785 = vmatprep.mubr.bf16.mxu0 %v4245
      %4786 = vmatmul.mubr.bf16.gmra.mxu0 %v4244
      %v4787 = vpop.f32.mrf.mxu0
      %v4788 = vadd.f32 0.0, %v4787
      %v4789 = vpop.f32.mrf.mxu0
      %v4790 = vadd.f32 0.0, %v4789
      %v4791 = vpop.f32.mrf.mxu0
      %v4792 = vpop.f32.mrf.mxu0
      %4793 = vdwg.mxu0
      %4794 = vmatprep.subr.bf16.mxu0 %v4616
      %4795 = vmatpush1.bf16.msra.mxu0 %v4615
      %4796 = vmatprep.subr.bf16.mxu0 %v4614
      %4797 = vmatpush1.bf16.msra.mxu0 %v4613
      %4798 = vmatprep.subr.bf16.mxu0 %v4612
      %4799 = vmatpush1.bf16.msra.mxu0 %v4611
      %4800 = vmatprep.subr.bf16.mxu0 %v4610
      %4801 = vmatpush1.bf16.msra.mxu0 %v4609
      %4802 = vmatprep.subr.bf16.mxu0 %v4608
      %4803 = vmatpush1.bf16.msra.mxu0 %v4607
      %4804 = vmatprep.subr.bf16.mxu0 %v4606
      %4805 = vmatpush1.bf16.msra.mxu0 %v4605
      %4806 = vmatprep.subr.bf16.mxu0 %v4604
      %4807 = vmatpush1.bf16.msra.mxu0 %v4603
      %4808 = vmatprep.subr.bf16.mxu0 %v4602
      %4809 = vmatpush1.bf16.msra.mxu0 %v4601
      %4810 = vmatprep.subr.bf16.mxu0 %v4632
      %4811 = vmatpush2.bf16.msra.mxu0 %v4631
      %4812 = vmatprep.subr.bf16.mxu0 %v4630
      %4813 = vmatpush2.bf16.msra.mxu0 %v4629
      %4814 = vmatprep.subr.bf16.mxu0 %v4628
      %4815 = vmatpush2.bf16.msra.mxu0 %v4627
      %4816 = vmatprep.subr.bf16.mxu0 %v4626
      %4817 = vmatpush2.bf16.msra.mxu0 %v4625
      %4818 = vmatprep.subr.bf16.mxu0 %v4624
      %4819 = vmatpush2.bf16.msra.mxu0 %v4623
      %4820 = vmatprep.subr.bf16.mxu0 %v4622
      %4821 = vmatpush2.bf16.msra.mxu0 %v4621
      %4822 = vmatprep.subr.bf16.mxu0 %v4620
      %4823 = vmatpush2.bf16.msra.mxu0 %v4619
      %4824 = vmatprep.subr.bf16.mxu0 %v4618
      %4825 = vmatpush2.bf16.msra.mxu0 %v4617
      %4826 = vmatprep.mubr.bf16.mxu0 %v4242
      %4827 = vmatmul.mubr.bf16.gmra.mxu0 %v4241
      %v4828 = vpop.f32.mrf.mxu0
      %v4829 = vadd.f32 %v4778, %v4828
      %v4830 = vpop.f32.mrf.mxu0
      %v4831 = vadd.f32 %v4780, %v4830
      %v4832 = vpop.f32.mrf.mxu0
      %v4833 = vadd.f32 %v4782, %v4832
      %v4834 = vpop.f32.mrf.mxu0
      %v4835 = vadd.f32 %v4784, %v4834
      %4836 = vmatprep.mubr.bf16.mxu0 %v4247
      %4837 = vmatmul.mubr.bf16.gmra.mxu0 %v4246
      %v4838 = vpop.f32.mrf.mxu0
      %v4839 = vadd.f32 %v4788, %v4838
      %v4840 = vpop.f32.mrf.mxu0
      %v4841 = vadd.f32 %v4790, %v4840
      %v4842 = vpop.f32.mrf.mxu0
      %v4843 = vpop.f32.mrf.mxu0
      %4844 = vdwg.mxu0
      %4845 = vmatprep.subr.bf16.mxu0 %v4741
      %4846 = vmatpush1.bf16.msra.mxu0 %v4738
      %4847 = vmatprep.subr.bf16.mxu0 %v4646
      %4848 = vmatpush1.bf16.msra.mxu0 %v4645
      %4849 = vmatprep.subr.bf16.mxu0 %v4644
      %4850 = vmatpush1.bf16.msra.mxu0 %v4643
      %4851 = vmatprep.subr.bf16.mxu0 %v4642
      %4852 = vmatpush1.bf16.msra.mxu0 %v4641
      %4853 = vmatprep.subr.bf16.mxu0 %v4640
      %4854 = vmatpush1.bf16.msra.mxu0 %v4639
      %4855 = vmatprep.subr.bf16.mxu0 %v4638
      %4856 = vmatpush1.bf16.msra.mxu0 %v4637
      %4857 = vmatprep.subr.bf16.mxu0 %v4636
      %4858 = vmatpush1.bf16.msra.mxu0 %v4635
      %4859 = vmatprep.subr.bf16.mxu0 %v4634
      %4860 = vmatpush1.bf16.msra.mxu0 %v4633
      %4861 = vmatprep.subr.bf16.mxu0 0
      %4862 = vmatpush2.bf16.msra.mxu0 0
      %4863 = vmatprep.subr.bf16.mxu0 0
      %4864 = vmatpush2.bf16.msra.mxu0 0
      %4865 = vmatprep.subr.bf16.mxu0 0
      %4866 = vmatpush2.bf16.msra.mxu0 0
      %4867 = vmatprep.subr.bf16.mxu0 0
      %4868 = vmatpush2.bf16.msra.mxu0 0
      %4869 = vmatprep.subr.bf16.mxu0 0
      %4870 = vmatpush2.bf16.msra.mxu0 0
      %4871 = vmatprep.subr.bf16.mxu0 0
      %4872 = vmatpush2.bf16.msra.mxu0 0
      %4873 = vmatprep.subr.bf16.mxu0 0
      %4874 = vmatpush2.bf16.msra.mxu0 0
      %4875 = vmatprep.subr.bf16.mxu0 0
      %4876 = vmatpush2.bf16.msra.mxu0 0
      %4877 = vmatprep.mubr.bf16.mxu0 0
      %4878 = vmatmul.mubr.bf16.gmra.mxu0 %v4728
      %v4879 = vpop.f32.mrf.mxu0
      %v4880 = vadd.f32 %v4829, %v4879
      %v4881 = vpop.f32.mrf.mxu0
      %v4882 = vadd.f32 %v4831, %v4881
      %v4883 = vpop.f32.mrf.mxu0
      %v4884 = vadd.f32 %v4833, %v4883
      %v4885 = vpop.f32.mrf.mxu0
      %v4886 = vadd.f32 %v4835, %v4885
      %4887 = vmatprep.mubr.bf16.mxu0 0
      %4888 = vmatmul.mubr.bf16.gmra.mxu0 %v4731
      %v4889 = vpop.f32.mrf.mxu0
      %v4890 = vadd.f32 %v4839, %v4889
      %v4891 = vpop.f32.mrf.mxu0
      %v4892 = vadd.f32 %v4841, %v4891
      %v4893 = vpop.f32.mrf.mxu0
      %v4894 = vpop.f32.mrf.mxu0
      %4895 = vdwg.mxu0
      %v4896 = vpack.c.bf16 %v4884, %v4880
      %v4897 = vpack.c.bf16 %v4886, %v4882
      %v4898 = vpack.c.bf16 %v4890, %v4890
      %v4899 = vpack.c.bf16 %v4892, %v4892
      %v4900 = vld [vmem:[%s4] sm:$0xf]
      %v4901 = vld [vmem:[%s4 + $0x4] sm:$0xf]
      %v4902 = vld [vmem:[%s4 + $0x8] sm:$0xf]
      %v4903 = vld [vmem:[%s4 + $0xc] sm:$0xf]
      %v4904 = vld [vmem:[%s4 + $0x10] sm:$0xf]
      %v4905 = vld [vmem:[%s4 + $0x14] sm:$0xf]
      %v4906 = vld [vmem:[%s4 + $0x18] sm:$0x1]
      %s4907 = scalar_lea.vmem %s4, 28
      %v4908 = vld [vmem:[%s4907] sm:$0xf]
      %v4909 = vld [vmem:[%s4907 + $0x4] sm:$0xf]
      %v4910 = vld [vmem:[%s4907 + $0x8] sm:$0xf]
      %v4911 = vld [vmem:[%s4907 + $0xc] sm:$0xf]
      %v4912 = vld [vmem:[%s4907 + $0x10] sm:$0xf]
      %v4913 = vld [vmem:[%s4907 + $0x14] sm:$0xf]
      %v4914 = vld [vmem:[%s4907 + $0x18] sm:$0x1]
      %v4922 = vunpack.c.l.b16 %v4908
      %v4923 = vunpack.c.l.b16 %v4909
      %v4924 = vunpack.c.l.b16 %v4910
      %v4925 = vunpack.c.l.b16 %v4911
      %v4926 = vunpack.c.l.b16 %v4912
      %v4927 = vunpack.c.l.b16 %v4913
      %v4928 = vunpack.c.l.b16 %v4914
      %v4929 = vpack.c.b16 %v4923, %v4922
      %v4930 = vpack.c.b16 %v4925, %v4924
      %v4931 = vpack.c.b16 %v4927, %v4926
      %v4932 = vpack.c.b16 %v4928, %v4928
      %4935 = vrot.lane.b32.xlu0 %v4896, 127
      %v4936 = vpop.permute.xlu0 %4935
      %4937 = vrot.lane.b32.xlu0 %v4898, 127
      %v4938 = vpop.permute.xlu0 %4937
      %vm4940 = vcmask 162816
      %v4942 = vsel %vm4940, %v4929, 0
      %v4945 = vsel %vm4940, %v4930, 0
      %v4948 = vsel %vm4940, %v4931, 0
      %v4951 = vsel %vm4940, %v4932, 0
      %vm4953 = vcmask 1041408
      %v4955 = vsel %vm4953, %v4938, 0
      %4957 = vmatprep.subr.bf16.mxu0 0
      %4958 = vmatpush1.bf16.msra.mxu0 0
      %4959 = vmatprep.subr.bf16.mxu0 0
      %4960 = vmatpush1.bf16.msra.mxu0 0
      %4961 = vmatprep.subr.bf16.mxu0 0
      %4962 = vmatpush1.bf16.msra.mxu0 0
      %4963 = vmatprep.subr.bf16.mxu0 0
      %4964 = vmatpush1.bf16.msra.mxu0 0
      %4965 = vmatprep.subr.bf16.mxu0 0
      %4966 = vmatpush1.bf16.msra.mxu0 0
      %4967 = vmatprep.subr.bf16.mxu0 0
      %4968 = vmatpush1.bf16.msra.mxu0 0
      %4969 = vmatprep.subr.bf16.mxu0 0
      %4970 = vmatpush1.bf16.msra.mxu0 %v4955
      %4971 = vmatprep.subr.bf16.mxu0 0
      %4972 = vmatpush1.bf16.msra.mxu0 %v4936
      %4973 = vmatprep.subr.bf16.mxu0 0
      %4974 = vmatpush2.bf16.msra.mxu0 0
      %4975 = vmatprep.subr.bf16.mxu0 0
      %4976 = vmatpush2.bf16.msra.mxu0 0
      %4977 = vmatprep.subr.bf16.mxu0 0
      %4978 = vmatpush2.bf16.msra.mxu0 0
      %4979 = vmatprep.subr.bf16.mxu0 0
      %4980 = vmatpush2.bf16.msra.mxu0 0
      %4981 = vmatprep.subr.bf16.mxu0 0
      %4982 = vmatpush2.bf16.msra.mxu0 0
      %4983 = vmatprep.subr.bf16.mxu0 0
      %4984 = vmatpush2.bf16.msra.mxu0 0
      %4985 = vmatprep.subr.bf16.mxu0 0
      %4986 = vmatpush2.bf16.msra.mxu0 0
      %4987 = vmatprep.subr.bf16.mxu0 0
      %4988 = vmatpush2.bf16.msra.mxu0 0
      %4989 = vmatprep.mubr.bf16.mxu0 0
      %4990 = vmatmul.mubr.bf16.gmra.mxu0 %v4942
      %v4991 = vpop.f32.mrf.mxu0
      %v4992 = vadd.f32 0.0, %v4991
      %v4993 = vpop.f32.mrf.mxu0
      %v4994 = vpop.f32.mrf.mxu0
      %v4995 = vadd.f32 0.0, %v4994
      %v4996 = vpop.f32.mrf.mxu0
      %4997 = vmatprep.mubr.bf16.mxu0 0
      %4998 = vmatmul.mubr.bf16.gmra.mxu0 %v4945
      %v4999 = vpop.f32.mrf.mxu0
      %v5000 = vadd.f32 0.0, %v4999
      %v5001 = vpop.f32.mrf.mxu0
      %v5002 = vpop.f32.mrf.mxu0
      %v5003 = vadd.f32 0.0, %v5002
      %v5004 = vpop.f32.mrf.mxu0
      %5005 = vmatprep.mubr.bf16.mxu0 0
      %5006 = vmatmul.mubr.bf16.gmra.mxu0 %v4948
      %v5007 = vpop.f32.mrf.mxu0
      %v5008 = vadd.f32 0.0, %v5007
      %v5009 = vpop.f32.mrf.mxu0
      %v5010 = vpop.f32.mrf.mxu0
      %v5011 = vadd.f32 0.0, %v5010
      %v5012 = vpop.f32.mrf.mxu0
      %5013 = vmatprep.mubr.bf16.mxu0 0
      %5014 = vmatmul.mubr.bf16.gmra.mxu0 %v4951
      %v5015 = vpop.f32.mrf.mxu0
      %v5016 = vadd.f32 0.0, %v5015
      %v5017 = vpop.f32.mrf.mxu0
      %v5018 = vpop.f32.mrf.mxu0
      %v5019 = vpop.f32.mrf.mxu0
      %5020 = vdwg.mxu0
      %v5028 = vunpack.c.l.b16 %v4900
      %v5029 = vunpack.c.l.b16 %v4901
      %v5030 = vunpack.c.l.b16 %v4902
      %v5031 = vunpack.c.l.b16 %v4903
      %v5032 = vunpack.c.l.b16 %v4904
      %v5033 = vunpack.c.l.b16 %v4905
      %v5034 = vunpack.c.l.b16 %v4906
      %v5035 = vpack.c.b16 %v5029, %v5028
      %v5036 = vpack.c.b16 %v5031, %v5030
      %v5037 = vpack.c.b16 %v5033, %v5032
      %v5038 = vpack.c.b16 %v5034, %v5034
      %v5040 = vsel %vm4940, %v5035, 0
      %v5043 = vsel %vm4940, %v5036, 0
      %v5046 = vsel %vm4940, %v5037, 0
      %v5049 = vsel %vm4940, %v5038, 0
      %v5052 = vsel %vm4953, %v4898, 0
      %5054 = vmatprep.subr.bf16.mxu0 0
      %5055 = vmatpush1.bf16.msra.mxu0 0
      %5056 = vmatprep.subr.bf16.mxu0 0
      %5057 = vmatpush1.bf16.msra.mxu0 0
      %5058 = vmatprep.subr.bf16.mxu0 0
      %5059 = vmatpush1.bf16.msra.mxu0 0
      %5060 = vmatprep.subr.bf16.mxu0 0
      %5061 = vmatpush1.bf16.msra.mxu0 0
      %5062 = vmatprep.subr.bf16.mxu0 0
      %5063 = vmatpush1.bf16.msra.mxu0 0
      %5064 = vmatprep.subr.bf16.mxu0 0
      %5065 = vmatpush1.bf16.msra.mxu0 0
      %5066 = vmatprep.subr.bf16.mxu0 0
      %5067 = vmatpush1.bf16.msra.mxu0 %v5052
      %5068 = vmatprep.subr.bf16.mxu0 0
      %5069 = vmatpush1.bf16.msra.mxu0 %v4896
      %5070 = vmatprep.subr.bf16.mxu0 0
      %5071 = vmatpush2.bf16.msra.mxu0 0
      %5072 = vmatprep.subr.bf16.mxu0 0
      %5073 = vmatpush2.bf16.msra.mxu0 0
      %5074 = vmatprep.subr.bf16.mxu0 0
      %5075 = vmatpush2.bf16.msra.mxu0 0
      %5076 = vmatprep.subr.bf16.mxu0 0
      %5077 = vmatpush2.bf16.msra.mxu0 0
      %5078 = vmatprep.subr.bf16.mxu0 0
      %5079 = vmatpush2.bf16.msra.mxu0 0
      %5080 = vmatprep.subr.bf16.mxu0 0
      %5081 = vmatpush2.bf16.msra.mxu0 0
      %5082 = vmatprep.subr.bf16.mxu0 0
      %5083 = vmatpush2.bf16.msra.mxu0 0
      %5084 = vmatprep.subr.bf16.mxu0 0
      %5085 = vmatpush2.bf16.msra.mxu0 0
      %5086 = vmatprep.mubr.bf16.mxu0 0
      %5087 = vmatmul.mubr.bf16.gmra.mxu0 %v5040
      %v5088 = vpop.f32.mrf.mxu0
      %v5089 = vadd.f32 %v4992, %v5088
      %v5090 = vpop.f32.mrf.mxu0
      %v5091 = vpop.f32.mrf.mxu0
      %v5092 = vadd.f32 %v4995, %v5091
      %v5093 = vpop.f32.mrf.mxu0
      %5094 = vmatprep.mubr.bf16.mxu0 0
      %5095 = vmatmul.mubr.bf16.gmra.mxu0 %v5043
      %v5096 = vpop.f32.mrf.mxu0
      %v5097 = vadd.f32 %v5000, %v5096
      %v5098 = vpop.f32.mrf.mxu0
      %v5099 = vpop.f32.mrf.mxu0
      %v5100 = vadd.f32 %v5003, %v5099
      %v5101 = vpop.f32.mrf.mxu0
      %5102 = vmatprep.mubr.bf16.mxu0 0
      %5103 = vmatmul.mubr.bf16.gmra.mxu0 %v5046
      %v5104 = vpop.f32.mrf.mxu0
      %v5105 = vadd.f32 %v5008, %v5104
      %v5106 = vpop.f32.mrf.mxu0
      %v5107 = vpop.f32.mrf.mxu0
      %v5108 = vadd.f32 %v5011, %v5107
      %v5109 = vpop.f32.mrf.mxu0
      %5110 = vmatprep.mubr.bf16.mxu0 0
      %5111 = vmatmul.mubr.bf16.gmra.mxu0 %v5049
      %v5112 = vpop.f32.mrf.mxu0
      %v5113 = vadd.f32 %v5016, %v5112
      %v5114 = vpop.f32.mrf.mxu0
      %v5115 = vpop.f32.mrf.mxu0
      %v5116 = vpop.f32.mrf.mxu0
      %5117 = vdwg.mxu0
      %s5118 = scalar_lea.vmem %s4, 56
      %v5119 = vld [vmem:[%s5118] sm:$0xf]
      %v5120 = vld [vmem:[%s5118 + $0x4] sm:$0xf]
      %v5121 = vld [vmem:[%s5118 + $0x8] sm:$0xf]
      %v5122 = vld [vmem:[%s5118 + $0xc] sm:$0xf]
      %v5123 = vld [vmem:[%s5118 + $0x10] sm:$0xf]
      %v5124 = vld [vmem:[%s5118 + $0x14] sm:$0xf]
      %v5125 = vld [vmem:[%s5118 + $0x18] sm:$0x1]
      %v5133 = vunpack.c.l.b16 %v5119
      %v5134 = vunpack.c.l.b16 %v5120
      %v5135 = vunpack.c.l.b16 %v5121
      %v5136 = vunpack.c.l.b16 %v5122
      %v5137 = vunpack.c.l.b16 %v5123
      %v5138 = vunpack.c.l.b16 %v5124
      %v5139 = vunpack.c.l.b16 %v5125
      %v5140 = vpack.c.b16 %v5134, %v5133
      %v5141 = vpack.c.b16 %v5136, %v5135
      %v5142 = vpack.c.b16 %v5138, %v5137
      %v5143 = vpack.c.b16 %v5139, %v5139
      %5144 = vrot.lane.b32.xlu0 %v4896, 126
      %v5145 = vpop.permute.xlu0 %5144
      %5146 = vrot.lane.b32.xlu0 %v4898, 126
      %v5147 = vpop.permute.xlu0 %5146
      %v5150 = vsel %vm4940, %v5140, 0
      %v5153 = vsel %vm4940, %v5141, 0
      %v5156 = vsel %vm4940, %v5142, 0
      %v5159 = vsel %vm4940, %v5143, 0
      %v5162 = vsel %vm4953, %v5147, 0
      %5164 = vmatprep.subr.bf16.mxu0 0
      %5165 = vmatpush1.bf16.msra.mxu0 0
      %5166 = vmatprep.subr.bf16.mxu0 0
      %5167 = vmatpush1.bf16.msra.mxu0 0
      %5168 = vmatprep.subr.bf16.mxu0 0
      %5169 = vmatpush1.bf16.msra.mxu0 0
      %5170 = vmatprep.subr.bf16.mxu0 0
      %5171 = vmatpush1.bf16.msra.mxu0 0
      %5172 = vmatprep.subr.bf16.mxu0 0
      %5173 = vmatpush1.bf16.msra.mxu0 0
      %5174 = vmatprep.subr.bf16.mxu0 0
      %5175 = vmatpush1.bf16.msra.mxu0 0
      %5176 = vmatprep.subr.bf16.mxu0 0
      %5177 = vmatpush1.bf16.msra.mxu0 %v5162
      %5178 = vmatprep.subr.bf16.mxu0 0
      %5179 = vmatpush1.bf16.msra.mxu0 %v5145
      %5180 = vmatprep.subr.bf16.mxu0 0
      %5181 = vmatpush2.bf16.msra.mxu0 0
      %5182 = vmatprep.subr.bf16.mxu0 0
      %5183 = vmatpush2.bf16.msra.mxu0 0
      %5184 = vmatprep.subr.bf16.mxu0 0
      %5185 = vmatpush2.bf16.msra.mxu0 0
      %5186 = vmatprep.subr.bf16.mxu0 0
      %5187 = vmatpush2.bf16.msra.mxu0 0
      %5188 = vmatprep.subr.bf16.mxu0 0
      %5189 = vmatpush2.bf16.msra.mxu0 0
      %5190 = vmatprep.subr.bf16.mxu0 0
      %5191 = vmatpush2.bf16.msra.mxu0 0
      %5192 = vmatprep.subr.bf16.mxu0 0
      %5193 = vmatpush2.bf16.msra.mxu0 0
      %5194 = vmatprep.subr.bf16.mxu0 0
      %5195 = vmatpush2.bf16.msra.mxu0 0
      %5196 = vmatprep.mubr.bf16.mxu0 0
      %5197 = vmatmul.mubr.bf16.gmra.mxu0 %v5150
      %v5198 = vpop.f32.mrf.mxu0
      %v5199 = vadd.f32 0.0, %v5198
      %v5200 = vpop.f32.mrf.mxu0
      %v5201 = vpop.f32.mrf.mxu0
      %v5202 = vadd.f32 0.0, %v5201
      %v5203 = vpop.f32.mrf.mxu0
      %5204 = vmatprep.mubr.bf16.mxu0 0
      %5205 = vmatmul.mubr.bf16.gmra.mxu0 %v5153
      %v5206 = vpop.f32.mrf.mxu0
      %v5207 = vadd.f32 0.0, %v5206
      %v5208 = vpop.f32.mrf.mxu0
      %v5209 = vpop.f32.mrf.mxu0
      %v5210 = vadd.f32 0.0, %v5209
      %v5211 = vpop.f32.mrf.mxu0
      %5212 = vmatprep.mubr.bf16.mxu0 0
      %5213 = vmatmul.mubr.bf16.gmra.mxu0 %v5156
      %v5214 = vpop.f32.mrf.mxu0
      %v5215 = vadd.f32 0.0, %v5214
      %v5216 = vpop.f32.mrf.mxu0
      %v5217 = vpop.f32.mrf.mxu0
      %v5218 = vadd.f32 0.0, %v5217
      %v5219 = vpop.f32.mrf.mxu0
      %5220 = vmatprep.mubr.bf16.mxu0 0
      %5221 = vmatmul.mubr.bf16.gmra.mxu0 %v5159
      %v5222 = vpop.f32.mrf.mxu0
      %v5223 = vadd.f32 0.0, %v5222
      %v5224 = vpop.f32.mrf.mxu0
      %v5225 = vpop.f32.mrf.mxu0
      %v5226 = vpop.f32.mrf.mxu0
      %5227 = vdwg.mxu0
      %v5228 = vadd.f32 %v5089, %v5199
      %v5229 = vadd.f32 %v5092, %v5202
      %v5230 = vadd.f32 %v5097, %v5207
      %v5231 = vadd.f32 %v5100, %v5210
      %v5232 = vadd.f32 %v5105, %v5215
      %v5233 = vadd.f32 %v5108, %v5218
      %v5234 = vadd.f32 %v5113, %v5223
      %s5235 = scalar_lea.vmem %s4, 84
      %v5236 = vld [vmem:[%s5235] sm:$0xf]
      %v5237 = vld [vmem:[%s5235 + $0x4] sm:$0xf]
      %v5238 = vld [vmem:[%s5235 + $0x8] sm:$0xf]
      %v5239 = vld [vmem:[%s5235 + $0xc] sm:$0xf]
      %v5240 = vld [vmem:[%s5235 + $0x10] sm:$0xf]
      %v5241 = vld [vmem:[%s5235 + $0x14] sm:$0xf]
      %v5242 = vld [vmem:[%s5235 + $0x18] sm:$0x1]
      %v5250 = vunpack.c.l.b16 %v5236
      %v5251 = vunpack.c.l.b16 %v5237
      %v5252 = vunpack.c.l.b16 %v5238
      %v5253 = vunpack.c.l.b16 %v5239
      %v5254 = vunpack.c.l.b16 %v5240
      %v5255 = vunpack.c.l.b16 %v5241
      %v5256 = vunpack.c.l.b16 %v5242
      %v5257 = vpack.c.b16 %v5251, %v5250
      %v5258 = vpack.c.b16 %v5253, %v5252
      %v5259 = vpack.c.b16 %v5255, %v5254
      %v5260 = vpack.c.b16 %v5256, %v5256
      %5261 = vrot.lane.b32.xlu0 %v4896, 125
      %v5262 = vpop.permute.xlu0 %5261
      %5263 = vrot.lane.b32.xlu0 %v4898, 125
      %v5264 = vpop.permute.xlu0 %5263
      %v5267 = vsel %vm4940, %v5257, 0
      %v5270 = vsel %vm4940, %v5258, 0
      %v5273 = vsel %vm4940, %v5259, 0
      %v5276 = vsel %vm4940, %v5260, 0
      %v5279 = vsel %vm4953, %v5264, 0
      %5281 = vmatprep.subr.bf16.mxu0 0
      %5282 = vmatpush1.bf16.msra.mxu0 0
      %5283 = vmatprep.subr.bf16.mxu0 0
      %5284 = vmatpush1.bf16.msra.mxu0 0
      %5285 = vmatprep.subr.bf16.mxu0 0
      %5286 = vmatpush1.bf16.msra.mxu0 0
      %5287 = vmatprep.subr.bf16.mxu0 0
      %5288 = vmatpush1.bf16.msra.mxu0 0
      %5289 = vmatprep.subr.bf16.mxu0 0
      %5290 = vmatpush1.bf16.msra.mxu0 0
      %5291 = vmatprep.subr.bf16.mxu0 0
      %5292 = vmatpush1.bf16.msra.mxu0 0
      %5293 = vmatprep.subr.bf16.mxu0 0
      %5294 = vmatpush1.bf16.msra.mxu0 %v5279
      %5295 = vmatprep.subr.bf16.mxu0 0
      %5296 = vmatpush1.bf16.msra.mxu0 %v5262
      %5297 = vmatprep.subr.bf16.mxu0 0
      %5298 = vmatpush2.bf16.msra.mxu0 0
      %5299 = vmatprep.subr.bf16.mxu0 0
      %5300 = vmatpush2.bf16.msra.mxu0 0
      %5301 = vmatprep.subr.bf16.mxu0 0
      %5302 = vmatpush2.bf16.msra.mxu0 0
      %5303 = vmatprep.subr.bf16.mxu0 0
      %5304 = vmatpush2.bf16.msra.mxu0 0
      %5305 = vmatprep.subr.bf16.mxu0 0
      %5306 = vmatpush2.bf16.msra.mxu0 0
      %5307 = vmatprep.subr.bf16.mxu0 0
      %5308 = vmatpush2.bf16.msra.mxu0 0
      %5309 = vmatprep.subr.bf16.mxu0 0
      %5310 = vmatpush2.bf16.msra.mxu0 0
      %5311 = vmatprep.subr.bf16.mxu0 0
      %5312 = vmatpush2.bf16.msra.mxu0 0
      %5313 = vmatprep.mubr.bf16.mxu0 0
      %5314 = vmatmul.mubr.bf16.gmra.mxu0 %v5267
      %v5315 = vpop.f32.mrf.mxu0
      %v5316 = vadd.f32 0.0, %v5315
      %v5317 = vpop.f32.mrf.mxu0
      %v5318 = vpop.f32.mrf.mxu0
      %v5319 = vadd.f32 0.0, %v5318
      %v5320 = vpop.f32.mrf.mxu0
      %5321 = vmatprep.mubr.bf16.mxu0 0
      %5322 = vmatmul.mubr.bf16.gmra.mxu0 %v5270
      %v5323 = vpop.f32.mrf.mxu0
      %v5324 = vadd.f32 0.0, %v5323
      %v5325 = vpop.f32.mrf.mxu0
      %v5326 = vpop.f32.mrf.mxu0
      %v5327 = vadd.f32 0.0, %v5326
      %v5328 = vpop.f32.mrf.mxu0
      %5329 = vmatprep.mubr.bf16.mxu0 0
      %5330 = vmatmul.mubr.bf16.gmra.mxu0 %v5273
      %v5331 = vpop.f32.mrf.mxu0
      %v5332 = vadd.f32 0.0, %v5331
      %v5333 = vpop.f32.mrf.mxu0
      %v5334 = vpop.f32.mrf.mxu0
      %v5335 = vadd.f32 0.0, %v5334
      %v5336 = vpop.f32.mrf.mxu0
      %5337 = vmatprep.mubr.bf16.mxu0 0
      %5338 = vmatmul.mubr.bf16.gmra.mxu0 %v5276
      %v5339 = vpop.f32.mrf.mxu0
      %v5340 = vadd.f32 0.0, %v5339
      %v5341 = vpop.f32.mrf.mxu0
      %v5342 = vpop.f32.mrf.mxu0
      %v5343 = vpop.f32.mrf.mxu0
      %5344 = vdwg.mxu0
      %v5345 = vadd.f32 %v5228, %v5316
      %v5346 = vadd.f32 %v5229, %v5319
      %v5347 = vadd.f32 %v5230, %v5324
      %v5348 = vadd.f32 %v5231, %v5327
      %v5349 = vadd.f32 %v5232, %v5332
      %v5350 = vadd.f32 %v5233, %v5335
      %v5351 = vadd.f32 %v5234, %v5340
      %s5352 = scalar_lea.vmem %s4, 112
      %v5353 = vld [vmem:[%s5352] sm:$0xf]
      %v5354 = vld [vmem:[%s5352 + $0x4] sm:$0xf]
      %v5355 = vld [vmem:[%s5352 + $0x8] sm:$0xf]
      %v5356 = vld [vmem:[%s5352 + $0xc] sm:$0xf]
      %v5357 = vld [vmem:[%s5352 + $0x10] sm:$0xf]
      %v5358 = vld [vmem:[%s5352 + $0x14] sm:$0xf]
      %v5359 = vld [vmem:[%s5352 + $0x18] sm:$0x1]
      %v5367 = vunpack.c.l.b16 %v5353
      %v5368 = vunpack.c.l.b16 %v5354
      %v5369 = vunpack.c.l.b16 %v5355
      %v5370 = vunpack.c.l.b16 %v5356
      %v5371 = vunpack.c.l.b16 %v5357
      %v5372 = vunpack.c.l.b16 %v5358
      %v5373 = vunpack.c.l.b16 %v5359
      %v5374 = vpack.c.b16 %v5368, %v5367
      %v5375 = vpack.c.b16 %v5370, %v5369
      %v5376 = vpack.c.b16 %v5372, %v5371
      %v5377 = vpack.c.b16 %v5373, %v5373
      %5378 = vrot.lane.b32.xlu0 %v4896, 124
      %v5379 = vpop.permute.xlu0 %5378
      %5380 = vrot.lane.b32.xlu0 %v4898, 124
      %v5381 = vpop.permute.xlu0 %5380
      %v5384 = vsel %vm4940, %v5374, 0
      %v5387 = vsel %vm4940, %v5375, 0
      %v5390 = vsel %vm4940, %v5376, 0
      %v5393 = vsel %vm4940, %v5377, 0
      %v5396 = vsel %vm4953, %v5381, 0
      %5398 = vmatprep.subr.bf16.mxu0 0
      %5399 = vmatpush1.bf16.msra.mxu0 0
      %5400 = vmatprep.subr.bf16.mxu0 0
      %5401 = vmatpush1.bf16.msra.mxu0 0
      %5402 = vmatprep.subr.bf16.mxu0 0
      %5403 = vmatpush1.bf16.msra.mxu0 0
      %5404 = vmatprep.subr.bf16.mxu0 0
      %5405 = vmatpush1.bf16.msra.mxu0 0
      %5406 = vmatprep.subr.bf16.mxu0 0
      %5407 = vmatpush1.bf16.msra.mxu0 0
      %5408 = vmatprep.subr.bf16.mxu0 0
      %5409 = vmatpush1.bf16.msra.mxu0 0
      %5410 = vmatprep.subr.bf16.mxu0 0
      %5411 = vmatpush1.bf16.msra.mxu0 %v5396
      %5412 = vmatprep.subr.bf16.mxu0 0
      %5413 = vmatpush1.bf16.msra.mxu0 %v5379
      %5414 = vmatprep.subr.bf16.mxu0 0
      %5415 = vmatpush2.bf16.msra.mxu0 0
      %5416 = vmatprep.subr.bf16.mxu0 0
      %5417 = vmatpush2.bf16.msra.mxu0 0
      %5418 = vmatprep.subr.bf16.mxu0 0
      %5419 = vmatpush2.bf16.msra.mxu0 0
      %5420 = vmatprep.subr.bf16.mxu0 0
      %5421 = vmatpush2.bf16.msra.mxu0 0
      %5422 = vmatprep.subr.bf16.mxu0 0
      %5423 = vmatpush2.bf16.msra.mxu0 0
      %5424 = vmatprep.subr.bf16.mxu0 0
      %5425 = vmatpush2.bf16.msra.mxu0 0
      %5426 = vmatprep.subr.bf16.mxu0 0
      %5427 = vmatpush2.bf16.msra.mxu0 0
      %5428 = vmatprep.subr.bf16.mxu0 0
      %5429 = vmatpush2.bf16.msra.mxu0 0
      %5430 = vmatprep.mubr.bf16.mxu0 0
      %5431 = vmatmul.mubr.bf16.gmra.mxu0 %v5384
      %v5432 = vpop.f32.mrf.mxu0
      %v5433 = vadd.f32 0.0, %v5432
      %v5434 = vpop.f32.mrf.mxu0
      %v5435 = vpop.f32.mrf.mxu0
      %v5436 = vadd.f32 0.0, %v5435
      %v5437 = vpop.f32.mrf.mxu0
      %5438 = vmatprep.mubr.bf16.mxu0 0
      %5439 = vmatmul.mubr.bf16.gmra.mxu0 %v5387
      %v5440 = vpop.f32.mrf.mxu0
      %v5441 = vadd.f32 0.0, %v5440
      %v5442 = vpop.f32.mrf.mxu0
      %v5443 = vpop.f32.mrf.mxu0
      %v5444 = vadd.f32 0.0, %v5443
      %v5445 = vpop.f32.mrf.mxu0
      %5446 = vmatprep.mubr.bf16.mxu0 0
      %5447 = vmatmul.mubr.bf16.gmra.mxu0 %v5390
      %v5448 = vpop.f32.mrf.mxu0
      %v5449 = vadd.f32 0.0, %v5448
      %v5450 = vpop.f32.mrf.mxu0
      %v5451 = vpop.f32.mrf.mxu0
      %v5452 = vadd.f32 0.0, %v5451
      %v5453 = vpop.f32.mrf.mxu0
      %5454 = vmatprep.mubr.bf16.mxu0 0
      %5455 = vmatmul.mubr.bf16.gmra.mxu0 %v5393
      %v5456 = vpop.f32.mrf.mxu0
      %v5457 = vadd.f32 0.0, %v5456
      %v5458 = vpop.f32.mrf.mxu0
      %v5459 = vpop.f32.mrf.mxu0
      %v5460 = vpop.f32.mrf.mxu0
      %5461 = vdwg.mxu0
      %v5462 = vadd.f32 %v5345, %v5433
      %v5463 = vadd.f32 %v5346, %v5436
      %v5464 = vadd.f32 %v5347, %v5441
      %v5465 = vadd.f32 %v5348, %v5444
      %v5466 = vadd.f32 %v5349, %v5449
      %v5467 = vadd.f32 %v5350, %v5452
      %v5468 = vadd.f32 %v5351, %v5457
      %s5469 = scalar_lea.vmem %s4, 140
      %v5470 = vld [vmem:[%s5469] sm:$0xf]
      %v5471 = vld [vmem:[%s5469 + $0x4] sm:$0xf]
      %v5472 = vld [vmem:[%s5469 + $0x8] sm:$0xf]
      %v5473 = vld [vmem:[%s5469 + $0xc] sm:$0xf]
      %v5474 = vld [vmem:[%s5469 + $0x10] sm:$0xf]
      %v5475 = vld [vmem:[%s5469 + $0x14] sm:$0xf]
      %v5476 = vld [vmem:[%s5469 + $0x18] sm:$0x1]
      %v5484 = vunpack.c.l.b16 %v5470
      %v5485 = vunpack.c.l.b16 %v5471
      %v5486 = vunpack.c.l.b16 %v5472
      %v5487 = vunpack.c.l.b16 %v5473
      %v5488 = vunpack.c.l.b16 %v5474
      %v5489 = vunpack.c.l.b16 %v5475
      %v5490 = vunpack.c.l.b16 %v5476
      %v5491 = vpack.c.b16 %v5485, %v5484
      %v5492 = vpack.c.b16 %v5487, %v5486
      %v5493 = vpack.c.b16 %v5489, %v5488
      %v5494 = vpack.c.b16 %v5490, %v5490
      %5495 = vrot.lane.b32.xlu0 %v4896, 116
      %v5496 = vpop.permute.xlu0 %5495
      %5497 = vrot.lane.b32.xlu0 %v4898, 116
      %v5498 = vpop.permute.xlu0 %5497
      %v5501 = vsel %vm4940, %v5491, 0
      %v5504 = vsel %vm4940, %v5492, 0
      %v5507 = vsel %vm4940, %v5493, 0
      %v5510 = vsel %vm4940, %v5494, 0
      %v5513 = vsel %vm4953, %v5498, 0
      %5515 = vmatprep.subr.bf16.mxu0 0
      %5516 = vmatpush1.bf16.msra.mxu0 0
      %5517 = vmatprep.subr.bf16.mxu0 0
      %5518 = vmatpush1.bf16.msra.mxu0 0
      %5519 = vmatprep.subr.bf16.mxu0 0
      %5520 = vmatpush1.bf16.msra.mxu0 0
      %5521 = vmatprep.subr.bf16.mxu0 0
      %5522 = vmatpush1.bf16.msra.mxu0 0
      %5523 = vmatprep.subr.bf16.mxu0 0
      %5524 = vmatpush1.bf16.msra.mxu0 0
      %5525 = vmatprep.subr.bf16.mxu0 0
      %5526 = vmatpush1.bf16.msra.mxu0 0
      %5527 = vmatprep.subr.bf16.mxu0 0
      %5528 = vmatpush1.bf16.msra.mxu0 %v5513
      %5529 = vmatprep.subr.bf16.mxu0 0
      %5530 = vmatpush1.bf16.msra.mxu0 %v5496
      %5531 = vmatprep.subr.bf16.mxu0 0
      %5532 = vmatpush2.bf16.msra.mxu0 0
      %5533 = vmatprep.subr.bf16.mxu0 0
      %5534 = vmatpush2.bf16.msra.mxu0 0
      %5535 = vmatprep.subr.bf16.mxu0 0
      %5536 = vmatpush2.bf16.msra.mxu0 0
      %5537 = vmatprep.subr.bf16.mxu0 0
      %5538 = vmatpush2.bf16.msra.mxu0 0
      %5539 = vmatprep.subr.bf16.mxu0 0
      %5540 = vmatpush2.bf16.msra.mxu0 0
      %5541 = vmatprep.subr.bf16.mxu0 0
      %5542 = vmatpush2.bf16.msra.mxu0 0
      %5543 = vmatprep.subr.bf16.mxu0 0
      %5544 = vmatpush2.bf16.msra.mxu0 0
      %5545 = vmatprep.subr.bf16.mxu0 0
      %5546 = vmatpush2.bf16.msra.mxu0 0
      %5547 = vmatprep.mubr.bf16.mxu0 0
      %5548 = vmatmul.mubr.bf16.gmra.mxu0 %v5501
      %v5549 = vpop.f32.mrf.mxu0
      %v5550 = vadd.f32 0.0, %v5549
      %v5551 = vpop.f32.mrf.mxu0
      %v5552 = vpop.f32.mrf.mxu0
      %v5553 = vadd.f32 0.0, %v5552
      %v5554 = vpop.f32.mrf.mxu0
      %5555 = vmatprep.mubr.bf16.mxu0 0
      %5556 = vmatmul.mubr.bf16.gmra.mxu0 %v5504
      %v5557 = vpop.f32.mrf.mxu0
      %v5558 = vadd.f32 0.0, %v5557
      %v5559 = vpop.f32.mrf.mxu0
      %v5560 = vpop.f32.mrf.mxu0
      %v5561 = vadd.f32 0.0, %v5560
      %v5562 = vpop.f32.mrf.mxu0
      %5563 = vmatprep.mubr.bf16.mxu0 0
      %5564 = vmatmul.mubr.bf16.gmra.mxu0 %v5507
      %v5565 = vpop.f32.mrf.mxu0
      %v5566 = vadd.f32 0.0, %v5565
      %v5567 = vpop.f32.mrf.mxu0
      %v5568 = vpop.f32.mrf.mxu0
      %v5569 = vadd.f32 0.0, %v5568
      %v5570 = vpop.f32.mrf.mxu0
      %5571 = vmatprep.mubr.bf16.mxu0 0
      %5572 = vmatmul.mubr.bf16.gmra.mxu0 %v5510
      %v5573 = vpop.f32.mrf.mxu0
      %v5574 = vadd.f32 0.0, %v5573
      %v5575 = vpop.f32.mrf.mxu0
      %v5576 = vpop.f32.mrf.mxu0
      %v5577 = vpop.f32.mrf.mxu0
      %5578 = vdwg.mxu0
      %v5579 = vadd.f32 %v5462, %v5550
      %v5580 = vadd.f32 %v5463, %v5553
      %v5581 = vadd.f32 %v5464, %v5558
      %v5582 = vadd.f32 %v5465, %v5561
      %v5583 = vadd.f32 %v5466, %v5566
      %v5584 = vadd.f32 %v5467, %v5569
      %v5585 = vadd.f32 %v5468, %v5574
      %s5586 = scalar_lea.vmem %s4, 168
      %v5587 = vld [vmem:[%s5586] sm:$0xf]
      %v5588 = vld [vmem:[%s5586 + $0x4] sm:$0xf]
      %v5589 = vld [vmem:[%s5586 + $0x8] sm:$0xf]
      %v5590 = vld [vmem:[%s5586 + $0xc] sm:$0xf]
      %v5591 = vld [vmem:[%s5586 + $0x10] sm:$0xf]
      %v5592 = vld [vmem:[%s5586 + $0x14] sm:$0xf]
      %v5593 = vld [vmem:[%s5586 + $0x18] sm:$0x1]
      %v5601 = vunpack.c.l.b16 %v5587
      %v5602 = vunpack.c.l.b16 %v5588
      %v5603 = vunpack.c.l.b16 %v5589
      %v5604 = vunpack.c.l.b16 %v5590
      %v5605 = vunpack.c.l.b16 %v5591
      %v5606 = vunpack.c.l.b16 %v5592
      %v5607 = vunpack.c.l.b16 %v5593
      %v5608 = vpack.c.b16 %v5602, %v5601
      %v5609 = vpack.c.b16 %v5604, %v5603
      %v5610 = vpack.c.b16 %v5606, %v5605
      %v5611 = vpack.c.b16 %v5607, %v5607
      %5612 = vrot.lane.b32.xlu0 %v4896, 115
      %v5613 = vpop.permute.xlu0 %5612
      %5614 = vrot.lane.b32.xlu0 %v4898, 115
      %v5615 = vpop.permute.xlu0 %5614
      %v5618 = vsel %vm4940, %v5608, 0
      %v5621 = vsel %vm4940, %v5609, 0
      %v5624 = vsel %vm4940, %v5610, 0
      %v5627 = vsel %vm4940, %v5611, 0
      %v5630 = vsel %vm4953, %v5615, 0
      %5632 = vmatprep.subr.bf16.mxu0 0
      %5633 = vmatpush1.bf16.msra.mxu0 0
      %5634 = vmatprep.subr.bf16.mxu0 0
      %5635 = vmatpush1.bf16.msra.mxu0 0
      %5636 = vmatprep.subr.bf16.mxu0 0
      %5637 = vmatpush1.bf16.msra.mxu0 0
      %5638 = vmatprep.subr.bf16.mxu0 0
      %5639 = vmatpush1.bf16.msra.mxu0 0
      %5640 = vmatprep.subr.bf16.mxu0 0
      %5641 = vmatpush1.bf16.msra.mxu0 0
      %5642 = vmatprep.subr.bf16.mxu0 0
      %5643 = vmatpush1.bf16.msra.mxu0 0
      %5644 = vmatprep.subr.bf16.mxu0 0
      %5645 = vmatpush1.bf16.msra.mxu0 %v5630
      %5646 = vmatprep.subr.bf16.mxu0 0
      %5647 = vmatpush1.bf16.msra.mxu0 %v5613
      %5648 = vmatprep.subr.bf16.mxu0 0
      %5649 = vmatpush2.bf16.msra.mxu0 0
      %5650 = vmatprep.subr.bf16.mxu0 0
      %5651 = vmatpush2.bf16.msra.mxu0 0
      %5652 = vmatprep.subr.bf16.mxu0 0
      %5653 = vmatpush2.bf16.msra.mxu0 0
      %5654 = vmatprep.subr.bf16.mxu0 0
      %5655 = vmatpush2.bf16.msra.mxu0 0
      %5656 = vmatprep.subr.bf16.mxu0 0
      %5657 = vmatpush2.bf16.msra.mxu0 0
      %5658 = vmatprep.subr.bf16.mxu0 0
      %5659 = vmatpush2.bf16.msra.mxu0 0
      %5660 = vmatprep.subr.bf16.mxu0 0
      %5661 = vmatpush2.bf16.msra.mxu0 0
      %5662 = vmatprep.subr.bf16.mxu0 0
      %5663 = vmatpush2.bf16.msra.mxu0 0
      %5664 = vmatprep.mubr.bf16.mxu0 0
      %5665 = vmatmul.mubr.bf16.gmra.mxu0 %v5618
      %v5666 = vpop.f32.mrf.mxu0
      %v5667 = vadd.f32 0.0, %v5666
      %v5668 = vpop.f32.mrf.mxu0
      %v5669 = vpop.f32.mrf.mxu0
      %v5670 = vadd.f32 0.0, %v5669
      %v5671 = vpop.f32.mrf.mxu0
      %5672 = vmatprep.mubr.bf16.mxu0 0
      %5673 = vmatmul.mubr.bf16.gmra.mxu0 %v5621
      %v5674 = vpop.f32.mrf.mxu0
      %v5675 = vadd.f32 0.0, %v5674
      %v5676 = vpop.f32.mrf.mxu0
      %v5677 = vpop.f32.mrf.mxu0
      %v5678 = vadd.f32 0.0, %v5677
      %v5679 = vpop.f32.mrf.mxu0
      %5680 = vmatprep.mubr.bf16.mxu0 0
      %5681 = vmatmul.mubr.bf16.gmra.mxu0 %v5624
      %v5682 = vpop.f32.mrf.mxu0
      %v5683 = vadd.f32 0.0, %v5682
      %v5684 = vpop.f32.mrf.mxu0
      %v5685 = vpop.f32.mrf.mxu0
      %v5686 = vadd.f32 0.0, %v5685
      %v5687 = vpop.f32.mrf.mxu0
      %5688 = vmatprep.mubr.bf16.mxu0 0
      %5689 = vmatmul.mubr.bf16.gmra.mxu0 %v5627
      %v5690 = vpop.f32.mrf.mxu0
      %v5691 = vadd.f32 0.0, %v5690
      %v5692 = vpop.f32.mrf.mxu0
      %v5693 = vpop.f32.mrf.mxu0
      %v5694 = vpop.f32.mrf.mxu0
      %5695 = vdwg.mxu0
      %v5696 = vadd.f32 %v5579, %v5667
      %v5697 = vadd.f32 %v5580, %v5670
      %v5698 = vadd.f32 %v5581, %v5675
      %v5699 = vadd.f32 %v5582, %v5678
      %v5700 = vadd.f32 %v5583, %v5683
      %v5701 = vadd.f32 %v5584, %v5686
      %v5702 = vadd.f32 %v5585, %v5691
      %s5703 = scalar_lea.vmem %s4, 196
      %v5704 = vld [vmem:[%s5703] sm:$0xf]
      %v5705 = vld [vmem:[%s5703 + $0x4] sm:$0xf]
      %v5706 = vld [vmem:[%s5703 + $0x8] sm:$0xf]
      %v5707 = vld [vmem:[%s5703 + $0xc] sm:$0xf]
      %v5708 = vld [vmem:[%s5703 + $0x10] sm:$0xf]
      %v5709 = vld [vmem:[%s5703 + $0x14] sm:$0xf]
      %v5710 = vld [vmem:[%s5703 + $0x18] sm:$0x1]
      %v5718 = vunpack.c.l.b16 %v5704
      %v5719 = vunpack.c.l.b16 %v5705
      %v5720 = vunpack.c.l.b16 %v5706
      %v5721 = vunpack.c.l.b16 %v5707
      %v5722 = vunpack.c.l.b16 %v5708
      %v5723 = vunpack.c.l.b16 %v5709
      %v5724 = vunpack.c.l.b16 %v5710
      %v5725 = vpack.c.b16 %v5719, %v5718
      %v5726 = vpack.c.b16 %v5721, %v5720
      %v5727 = vpack.c.b16 %v5723, %v5722
      %v5728 = vpack.c.b16 %v5724, %v5724
      %5729 = vrot.lane.b32.xlu0 %v4896, 114
      %v5730 = vpop.permute.xlu0 %5729
      %5731 = vrot.lane.b32.xlu0 %v4898, 114
      %v5732 = vpop.permute.xlu0 %5731
      %v5735 = vsel %vm4940, %v5725, 0
      %v5738 = vsel %vm4940, %v5726, 0
      %v5741 = vsel %vm4940, %v5727, 0
      %v5744 = vsel %vm4940, %v5728, 0
      %v5747 = vsel %vm4953, %v5732, 0
      %5749 = vmatprep.subr.bf16.mxu0 0
      %5750 = vmatpush1.bf16.msra.mxu0 0
      %5751 = vmatprep.subr.bf16.mxu0 0
      %5752 = vmatpush1.bf16.msra.mxu0 0
      %5753 = vmatprep.subr.bf16.mxu0 0
      %5754 = vmatpush1.bf16.msra.mxu0 0
      %5755 = vmatprep.subr.bf16.mxu0 0
      %5756 = vmatpush1.bf16.msra.mxu0 0
      %5757 = vmatprep.subr.bf16.mxu0 0
      %5758 = vmatpush1.bf16.msra.mxu0 0
      %5759 = vmatprep.subr.bf16.mxu0 0
      %5760 = vmatpush1.bf16.msra.mxu0 0
      %5761 = vmatprep.subr.bf16.mxu0 0
      %5762 = vmatpush1.bf16.msra.mxu0 %v5747
      %5763 = vmatprep.subr.bf16.mxu0 0
      %5764 = vmatpush1.bf16.msra.mxu0 %v5730
      %5765 = vmatprep.subr.bf16.mxu0 0
      %5766 = vmatpush2.bf16.msra.mxu0 0
      %5767 = vmatprep.subr.bf16.mxu0 0
      %5768 = vmatpush2.bf16.msra.mxu0 0
      %5769 = vmatprep.subr.bf16.mxu0 0
      %5770 = vmatpush2.bf16.msra.mxu0 0
      %5771 = vmatprep.subr.bf16.mxu0 0
      %5772 = vmatpush2.bf16.msra.mxu0 0
      %5773 = vmatprep.subr.bf16.mxu0 0
      %5774 = vmatpush2.bf16.msra.mxu0 0
      %5775 = vmatprep.subr.bf16.mxu0 0
      %5776 = vmatpush2.bf16.msra.mxu0 0
      %5777 = vmatprep.subr.bf16.mxu0 0
      %5778 = vmatpush2.bf16.msra.mxu0 0
      %5779 = vmatprep.subr.bf16.mxu0 0
      %5780 = vmatpush2.bf16.msra.mxu0 0
      %5781 = vmatprep.mubr.bf16.mxu0 0
      %5782 = vmatmul.mubr.bf16.gmra.mxu0 %v5735
      %v5783 = vpop.f32.mrf.mxu0
      %v5784 = vadd.f32 0.0, %v5783
      %v5785 = vpop.f32.mrf.mxu0
      %v5786 = vpop.f32.mrf.mxu0
      %v5787 = vadd.f32 0.0, %v5786
      %v5788 = vpop.f32.mrf.mxu0
      %5789 = vmatprep.mubr.bf16.mxu0 0
      %5790 = vmatmul.mubr.bf16.gmra.mxu0 %v5738
      %v5791 = vpop.f32.mrf.mxu0
      %v5792 = vadd.f32 0.0, %v5791
      %v5793 = vpop.f32.mrf.mxu0
      %v5794 = vpop.f32.mrf.mxu0
      %v5795 = vadd.f32 0.0, %v5794
      %v5796 = vpop.f32.mrf.mxu0
      %5797 = vmatprep.mubr.bf16.mxu0 0
      %5798 = vmatmul.mubr.bf16.gmra.mxu0 %v5741
      %v5799 = vpop.f32.mrf.mxu0
      %v5800 = vadd.f32 0.0, %v5799
      %v5801 = vpop.f32.mrf.mxu0
      %v5802 = vpop.f32.mrf.mxu0
      %v5803 = vadd.f32 0.0, %v5802
      %v5804 = vpop.f32.mrf.mxu0
      %5805 = vmatprep.mubr.bf16.mxu0 0
      %5806 = vmatmul.mubr.bf16.gmra.mxu0 %v5744
      %v5807 = vpop.f32.mrf.mxu0
      %v5808 = vadd.f32 0.0, %v5807
      %v5809 = vpop.f32.mrf.mxu0
      %v5810 = vpop.f32.mrf.mxu0
      %v5811 = vpop.f32.mrf.mxu0
      %5812 = vdwg.mxu0
      %v5813 = vadd.f32 %v5696, %v5784
      %v5814 = vadd.f32 %v5697, %v5787
      %v5815 = vadd.f32 %v5698, %v5792
      %v5816 = vadd.f32 %v5699, %v5795
      %v5817 = vadd.f32 %v5700, %v5800
      %v5818 = vadd.f32 %v5701, %v5803
      %v5819 = vadd.f32 %v5702, %v5808
      %s5820 = scalar_lea.vmem %s4, 224
      %v5821 = vld [vmem:[%s5820] sm:$0xf]
      %v5822 = vld [vmem:[%s5820 + $0x4] sm:$0xf]
      %v5823 = vld [vmem:[%s5820 + $0x8] sm:$0xf]
      %v5824 = vld [vmem:[%s5820 + $0xc] sm:$0xf]
      %v5825 = vld [vmem:[%s5820 + $0x10] sm:$0xf]
      %v5826 = vld [vmem:[%s5820 + $0x14] sm:$0xf]
      %v5827 = vld [vmem:[%s5820 + $0x18] sm:$0x1]
      %v5835 = vunpack.c.l.b16 %v5821
      %v5836 = vunpack.c.l.b16 %v5822
      %v5837 = vunpack.c.l.b16 %v5823
      %v5838 = vunpack.c.l.b16 %v5824
      %v5839 = vunpack.c.l.b16 %v5825
      %v5840 = vunpack.c.l.b16 %v5826
      %v5841 = vunpack.c.l.b16 %v5827
      %v5842 = vpack.c.b16 %v5836, %v5835
      %v5843 = vpack.c.b16 %v5838, %v5837
      %v5844 = vpack.c.b16 %v5840, %v5839
      %v5845 = vpack.c.b16 %v5841, %v5841
      %5846 = vrot.lane.b32.xlu0 %v4896, 113
      %v5847 = vpop.permute.xlu0 %5846
      %5848 = vrot.lane.b32.xlu0 %v4898, 113
      %v5849 = vpop.permute.xlu0 %5848
      %v5852 = vsel %vm4940, %v5842, 0
      %v5855 = vsel %vm4940, %v5843, 0
      %v5858 = vsel %vm4940, %v5844, 0
      %v5861 = vsel %vm4940, %v5845, 0
      %v5864 = vsel %vm4953, %v5849, 0
      %5866 = vmatprep.subr.bf16.mxu0 0
      %5867 = vmatpush1.bf16.msra.mxu0 0
      %5868 = vmatprep.subr.bf16.mxu0 0
      %5869 = vmatpush1.bf16.msra.mxu0 0
      %5870 = vmatprep.subr.bf16.mxu0 0
      %5871 = vmatpush1.bf16.msra.mxu0 0
      %5872 = vmatprep.subr.bf16.mxu0 0
      %5873 = vmatpush1.bf16.msra.mxu0 0
      %5874 = vmatprep.subr.bf16.mxu0 0
      %5875 = vmatpush1.bf16.msra.mxu0 0
      %5876 = vmatprep.subr.bf16.mxu0 0
      %5877 = vmatpush1.bf16.msra.mxu0 0
      %5878 = vmatprep.subr.bf16.mxu0 0
      %5879 = vmatpush1.bf16.msra.mxu0 %v5864
      %5880 = vmatprep.subr.bf16.mxu0 0
      %5881 = vmatpush1.bf16.msra.mxu0 %v5847
      %5882 = vmatprep.subr.bf16.mxu0 0
      %5883 = vmatpush2.bf16.msra.mxu0 0
      %5884 = vmatprep.subr.bf16.mxu0 0
      %5885 = vmatpush2.bf16.msra.mxu0 0
      %5886 = vmatprep.subr.bf16.mxu0 0
      %5887 = vmatpush2.bf16.msra.mxu0 0
      %5888 = vmatprep.subr.bf16.mxu0 0
      %5889 = vmatpush2.bf16.msra.mxu0 0
      %5890 = vmatprep.subr.bf16.mxu0 0
      %5891 = vmatpush2.bf16.msra.mxu0 0
      %5892 = vmatprep.subr.bf16.mxu0 0
      %5893 = vmatpush2.bf16.msra.mxu0 0
      %5894 = vmatprep.subr.bf16.mxu0 0
      %5895 = vmatpush2.bf16.msra.mxu0 0
      %5896 = vmatprep.subr.bf16.mxu0 0
      %5897 = vmatpush2.bf16.msra.mxu0 0
      %5898 = vmatprep.mubr.bf16.mxu0 0
      %5899 = vmatmul.mubr.bf16.gmra.mxu0 %v5852
      %v5900 = vpop.f32.mrf.mxu0
      %v5901 = vadd.f32 0.0, %v5900
      %v5902 = vpop.f32.mrf.mxu0
      %v5903 = vpop.f32.mrf.mxu0
      %v5904 = vadd.f32 0.0, %v5903
      %v5905 = vpop.f32.mrf.mxu0
      %5906 = vmatprep.mubr.bf16.mxu0 0
      %5907 = vmatmul.mubr.bf16.gmra.mxu0 %v5855
      %v5908 = vpop.f32.mrf.mxu0
      %v5909 = vadd.f32 0.0, %v5908
      %v5910 = vpop.f32.mrf.mxu0
      %v5911 = vpop.f32.mrf.mxu0
      %v5912 = vadd.f32 0.0, %v5911
      %v5913 = vpop.f32.mrf.mxu0
      %5914 = vmatprep.mubr.bf16.mxu0 0
      %5915 = vmatmul.mubr.bf16.gmra.mxu0 %v5858
      %v5916 = vpop.f32.mrf.mxu0
      %v5917 = vadd.f32 0.0, %v5916
      %v5918 = vpop.f32.mrf.mxu0
      %v5919 = vpop.f32.mrf.mxu0
      %v5920 = vadd.f32 0.0, %v5919
      %v5921 = vpop.f32.mrf.mxu0
      %5922 = vmatprep.mubr.bf16.mxu0 0
      %5923 = vmatmul.mubr.bf16.gmra.mxu0 %v5861
      %v5924 = vpop.f32.mrf.mxu0
      %v5925 = vadd.f32 0.0, %v5924
      %v5926 = vpop.f32.mrf.mxu0
      %v5927 = vpop.f32.mrf.mxu0
      %v5928 = vpop.f32.mrf.mxu0
      %5929 = vdwg.mxu0
      %v5930 = vadd.f32 %v5813, %v5901
      %v5931 = vadd.f32 %v5814, %v5904
      %v5932 = vadd.f32 %v5815, %v5909
      %v5933 = vadd.f32 %v5816, %v5912
      %v5934 = vadd.f32 %v5817, %v5917
      %v5935 = vadd.f32 %v5818, %v5920
      %v5936 = vadd.f32 %v5819, %v5925
      %s5937 = scalar_lea.vmem %s4, 252
      %v5938 = vld [vmem:[%s5937] sm:$0xf]
      %v5939 = vld [vmem:[%s5937 + $0x4] sm:$0xf]
      %v5940 = vld [vmem:[%s5937 + $0x8] sm:$0xf]
      %v5941 = vld [vmem:[%s5937 + $0xc] sm:$0xf]
      %v5942 = vld [vmem:[%s5937 + $0x10] sm:$0xf]
      %v5943 = vld [vmem:[%s5937 + $0x14] sm:$0xf]
      %v5944 = vld [vmem:[%s5937 + $0x18] sm:$0x1]
      %v5952 = vunpack.c.l.b16 %v5938
      %v5953 = vunpack.c.l.b16 %v5939
      %v5954 = vunpack.c.l.b16 %v5940
      %v5955 = vunpack.c.l.b16 %v5941
      %v5956 = vunpack.c.l.b16 %v5942
      %v5957 = vunpack.c.l.b16 %v5943
      %v5958 = vunpack.c.l.b16 %v5944
      %v5959 = vpack.c.b16 %v5953, %v5952
      %v5960 = vpack.c.b16 %v5955, %v5954
      %v5961 = vpack.c.b16 %v5957, %v5956
      %v5962 = vpack.c.b16 %v5958, %v5958
      %5963 = vrot.lane.b32.xlu0 %v4896, 112
      %v5964 = vpop.permute.xlu0 %5963
      %5965 = vrot.lane.b32.xlu0 %v4898, 112
      %v5966 = vpop.permute.xlu0 %5965
      %v5969 = vsel %vm4940, %v5959, 0
      %v5972 = vsel %vm4940, %v5960, 0
      %v5975 = vsel %vm4940, %v5961, 0
      %v5978 = vsel %vm4940, %v5962, 0
      %v5981 = vsel %vm4953, %v5966, 0
      %5983 = vmatprep.subr.bf16.mxu0 0
      %5984 = vmatpush1.bf16.msra.mxu0 0
      %5985 = vmatprep.subr.bf16.mxu0 0
      %5986 = vmatpush1.bf16.msra.mxu0 0
      %5987 = vmatprep.subr.bf16.mxu0 0
      %5988 = vmatpush1.bf16.msra.mxu0 0
      %5989 = vmatprep.subr.bf16.mxu0 0
      %5990 = vmatpush1.bf16.msra.mxu0 0
      %5991 = vmatprep.subr.bf16.mxu0 0
      %5992 = vmatpush1.bf16.msra.mxu0 0
      %5993 = vmatprep.subr.bf16.mxu0 0
      %5994 = vmatpush1.bf16.msra.mxu0 0
      %5995 = vmatprep.subr.bf16.mxu0 0
      %5996 = vmatpush1.bf16.msra.mxu0 %v5981
      %5997 = vmatprep.subr.bf16.mxu0 0
      %5998 = vmatpush1.bf16.msra.mxu0 %v5964
      %5999 = vmatprep.subr.bf16.mxu0 0
      %6000 = vmatpush2.bf16.msra.mxu0 0
      %6001 = vmatprep.subr.bf16.mxu0 0
      %6002 = vmatpush2.bf16.msra.mxu0 0
      %6003 = vmatprep.subr.bf16.mxu0 0
      %6004 = vmatpush2.bf16.msra.mxu0 0
      %6005 = vmatprep.subr.bf16.mxu0 0
      %6006 = vmatpush2.bf16.msra.mxu0 0
      %6007 = vmatprep.subr.bf16.mxu0 0
      %6008 = vmatpush2.bf16.msra.mxu0 0
      %6009 = vmatprep.subr.bf16.mxu0 0
      %6010 = vmatpush2.bf16.msra.mxu0 0
      %6011 = vmatprep.subr.bf16.mxu0 0
      %6012 = vmatpush2.bf16.msra.mxu0 0
      %6013 = vmatprep.subr.bf16.mxu0 0
      %6014 = vmatpush2.bf16.msra.mxu0 0
      %6015 = vmatprep.mubr.bf16.mxu0 0
      %6016 = vmatmul.mubr.bf16.gmra.mxu0 %v5969
      %v6017 = vpop.f32.mrf.mxu0
      %v6018 = vadd.f32 0.0, %v6017
      %v6019 = vpop.f32.mrf.mxu0
      %v6020 = vpop.f32.mrf.mxu0
      %v6021 = vadd.f32 0.0, %v6020
      %v6022 = vpop.f32.mrf.mxu0
      %6023 = vmatprep.mubr.bf16.mxu0 0
      %6024 = vmatmul.mubr.bf16.gmra.mxu0 %v5972
      %v6025 = vpop.f32.mrf.mxu0
      %v6026 = vadd.f32 0.0, %v6025
      %v6027 = vpop.f32.mrf.mxu0
      %v6028 = vpop.f32.mrf.mxu0
      %v6029 = vadd.f32 0.0, %v6028
      %v6030 = vpop.f32.mrf.mxu0
      %6031 = vmatprep.mubr.bf16.mxu0 0
      %6032 = vmatmul.mubr.bf16.gmra.mxu0 %v5975
      %v6033 = vpop.f32.mrf.mxu0
      %v6034 = vadd.f32 0.0, %v6033
      %v6035 = vpop.f32.mrf.mxu0
      %v6036 = vpop.f32.mrf.mxu0
      %v6037 = vadd.f32 0.0, %v6036
      %v6038 = vpop.f32.mrf.mxu0
      %6039 = vmatprep.mubr.bf16.mxu0 0
      %6040 = vmatmul.mubr.bf16.gmra.mxu0 %v5978
      %v6041 = vpop.f32.mrf.mxu0
      %v6042 = vadd.f32 0.0, %v6041
      %v6043 = vpop.f32.mrf.mxu0
      %v6044 = vpop.f32.mrf.mxu0
      %v6045 = vpop.f32.mrf.mxu0
      %6046 = vdwg.mxu0
      %v6047 = vadd.f32 %v5930, %v6018
      %v6048 = vadd.f32 %v5931, %v6021
      %v6049 = vadd.f32 %v5932, %v6026
      %v6050 = vadd.f32 %v5933, %v6029
      %v6051 = vadd.f32 %v5934, %v6034
      %v6052 = vadd.f32 %v5935, %v6037
      %v6053 = vadd.f32 %v5936, %v6042
      %s6054 = scalar_lea.vmem %s4, 280
      %v6055 = vld [vmem:[%s6054] sm:$0xf]
      %v6056 = vld [vmem:[%s6054 + $0x4] sm:$0xf]
      %v6057 = vld [vmem:[%s6054 + $0x8] sm:$0xf]
      %v6058 = vld [vmem:[%s6054 + $0xc] sm:$0xf]
      %v6059 = vld [vmem:[%s6054 + $0x10] sm:$0xf]
      %v6060 = vld [vmem:[%s6054 + $0x14] sm:$0xf]
      %v6061 = vld [vmem:[%s6054 + $0x18] sm:$0x1]
      %v6069 = vunpack.c.l.b16 %v6055
      %v6070 = vunpack.c.l.b16 %v6056
      %v6071 = vunpack.c.l.b16 %v6057
      %v6072 = vunpack.c.l.b16 %v6058
      %v6073 = vunpack.c.l.b16 %v6059
      %v6074 = vunpack.c.l.b16 %v6060
      %v6075 = vunpack.c.l.b16 %v6061
      %v6076 = vpack.c.b16 %v6070, %v6069
      %v6077 = vpack.c.b16 %v6072, %v6071
      %v6078 = vpack.c.b16 %v6074, %v6073
      %v6079 = vpack.c.b16 %v6075, %v6075
      %6080 = vrot.lane.b32.xlu0 %v4896, 104
      %v6081 = vpop.permute.xlu0 %6080
      %6082 = vrot.lane.b32.xlu0 %v4898, 104
      %v6083 = vpop.permute.xlu0 %6082
      %v6086 = vsel %vm4940, %v6076, 0
      %v6089 = vsel %vm4940, %v6077, 0
      %v6092 = vsel %vm4940, %v6078, 0
      %v6095 = vsel %vm4940, %v6079, 0
      %v6098 = vsel %vm4953, %v6083, 0
      %6100 = vmatprep.subr.bf16.mxu0 0
      %6101 = vmatpush1.bf16.msra.mxu0 0
      %6102 = vmatprep.subr.bf16.mxu0 0
      %6103 = vmatpush1.bf16.msra.mxu0 0
      %6104 = vmatprep.subr.bf16.mxu0 0
      %6105 = vmatpush1.bf16.msra.mxu0 0
      %6106 = vmatprep.subr.bf16.mxu0 0
      %6107 = vmatpush1.bf16.msra.mxu0 0
      %6108 = vmatprep.subr.bf16.mxu0 0
      %6109 = vmatpush1.bf16.msra.mxu0 0
      %6110 = vmatprep.subr.bf16.mxu0 0
      %6111 = vmatpush1.bf16.msra.mxu0 0
      %6112 = vmatprep.subr.bf16.mxu0 0
      %6113 = vmatpush1.bf16.msra.mxu0 %v6098
      %6114 = vmatprep.subr.bf16.mxu0 0
      %6115 = vmatpush1.bf16.msra.mxu0 %v6081
      %6116 = vmatprep.subr.bf16.mxu0 0
      %6117 = vmatpush2.bf16.msra.mxu0 0
      %6118 = vmatprep.subr.bf16.mxu0 0
      %6119 = vmatpush2.bf16.msra.mxu0 0
      %6120 = vmatprep.subr.bf16.mxu0 0
      %6121 = vmatpush2.bf16.msra.mxu0 0
      %6122 = vmatprep.subr.bf16.mxu0 0
      %6123 = vmatpush2.bf16.msra.mxu0 0
      %6124 = vmatprep.subr.bf16.mxu0 0
      %6125 = vmatpush2.bf16.msra.mxu0 0
      %6126 = vmatprep.subr.bf16.mxu0 0
      %6127 = vmatpush2.bf16.msra.mxu0 0
      %6128 = vmatprep.subr.bf16.mxu0 0
      %6129 = vmatpush2.bf16.msra.mxu0 0
      %6130 = vmatprep.subr.bf16.mxu0 0
      %6131 = vmatpush2.bf16.msra.mxu0 0
      %6132 = vmatprep.mubr.bf16.mxu0 0
      %6133 = vmatmul.mubr.bf16.gmra.mxu0 %v6086
      %v6134 = vpop.f32.mrf.mxu0
      %v6135 = vadd.f32 0.0, %v6134
      %v6136 = vpop.f32.mrf.mxu0
      %v6137 = vpop.f32.mrf.mxu0
      %v6138 = vadd.f32 0.0, %v6137
      %v6139 = vpop.f32.mrf.mxu0
      %6140 = vmatprep.mubr.bf16.mxu0 0
      %6141 = vmatmul.mubr.bf16.gmra.mxu0 %v6089
      %v6142 = vpop.f32.mrf.mxu0
      %v6143 = vadd.f32 0.0, %v6142
      %v6144 = vpop.f32.mrf.mxu0
      %v6145 = vpop.f32.mrf.mxu0
      %v6146 = vadd.f32 0.0, %v6145
      %v6147 = vpop.f32.mrf.mxu0
      %6148 = vmatprep.mubr.bf16.mxu0 0
      %6149 = vmatmul.mubr.bf16.gmra.mxu0 %v6092
      %v6150 = vpop.f32.mrf.mxu0
      %v6151 = vadd.f32 0.0, %v6150
      %v6152 = vpop.f32.mrf.mxu0
      %v6153 = vpop.f32.mrf.mxu0
      %v6154 = vadd.f32 0.0, %v6153
      %v6155 = vpop.f32.mrf.mxu0
      %6156 = vmatprep.mubr.bf16.mxu0 0
      %6157 = vmatmul.mubr.bf16.gmra.mxu0 %v6095
      %v6158 = vpop.f32.mrf.mxu0
      %v6159 = vadd.f32 0.0, %v6158
      %v6160 = vpop.f32.mrf.mxu0
      %v6161 = vpop.f32.mrf.mxu0
      %v6162 = vpop.f32.mrf.mxu0
      %6163 = vdwg.mxu0
      %v6164 = vadd.f32 %v6047, %v6135
      %v6165 = vadd.f32 %v6048, %v6138
      %v6166 = vadd.f32 %v6049, %v6143
      %v6167 = vadd.f32 %v6050, %v6146
      %v6168 = vadd.f32 %v6051, %v6151
      %v6169 = vadd.f32 %v6052, %v6154
      %v6170 = vadd.f32 %v6053, %v6159
      %s6171 = scalar_lea.vmem %s4, 308
      %v6172 = vld [vmem:[%s6171] sm:$0xf]
      %v6173 = vld [vmem:[%s6171 + $0x4] sm:$0xf]
      %v6174 = vld [vmem:[%s6171 + $0x8] sm:$0xf]
      %v6175 = vld [vmem:[%s6171 + $0xc] sm:$0xf]
      %v6176 = vld [vmem:[%s6171 + $0x10] sm:$0xf]
      %v6177 = vld [vmem:[%s6171 + $0x14] sm:$0xf]
      %v6178 = vld [vmem:[%s6171 + $0x18] sm:$0x1]
      %v6186 = vunpack.c.l.b16 %v6172
      %v6187 = vunpack.c.l.b16 %v6173
      %v6188 = vunpack.c.l.b16 %v6174
      %v6189 = vunpack.c.l.b16 %v6175
      %v6190 = vunpack.c.l.b16 %v6176
      %v6191 = vunpack.c.l.b16 %v6177
      %v6192 = vunpack.c.l.b16 %v6178
      %v6193 = vpack.c.b16 %v6187, %v6186
      %v6194 = vpack.c.b16 %v6189, %v6188
      %v6195 = vpack.c.b16 %v6191, %v6190
      %v6196 = vpack.c.b16 %v6192, %v6192
      %6197 = vrot.lane.b32.xlu0 %v4896, 103
      %v6198 = vpop.permute.xlu0 %6197
      %6199 = vrot.lane.b32.xlu0 %v4898, 103
      %v6200 = vpop.permute.xlu0 %6199
      %v6203 = vsel %vm4940, %v6193, 0
      %v6206 = vsel %vm4940, %v6194, 0
      %v6209 = vsel %vm4940, %v6195, 0
      %v6212 = vsel %vm4940, %v6196, 0
      %v6215 = vsel %vm4953, %v6200, 0
      %6217 = vmatprep.subr.bf16.mxu0 0
      %6218 = vmatpush1.bf16.msra.mxu0 0
      %6219 = vmatprep.subr.bf16.mxu0 0
      %6220 = vmatpush1.bf16.msra.mxu0 0
      %6221 = vmatprep.subr.bf16.mxu0 0
      %6222 = vmatpush1.bf16.msra.mxu0 0
      %6223 = vmatprep.subr.bf16.mxu0 0
      %6224 = vmatpush1.bf16.msra.mxu0 0
      %6225 = vmatprep.subr.bf16.mxu0 0
      %6226 = vmatpush1.bf16.msra.mxu0 0
      %6227 = vmatprep.subr.bf16.mxu0 0
      %6228 = vmatpush1.bf16.msra.mxu0 0
      %6229 = vmatprep.subr.bf16.mxu0 0
      %6230 = vmatpush1.bf16.msra.mxu0 %v6215
      %6231 = vmatprep.subr.bf16.mxu0 0
      %6232 = vmatpush1.bf16.msra.mxu0 %v6198
      %6233 = vmatprep.subr.bf16.mxu0 0
      %6234 = vmatpush2.bf16.msra.mxu0 0
      %6235 = vmatprep.subr.bf16.mxu0 0
      %6236 = vmatpush2.bf16.msra.mxu0 0
      %6237 = vmatprep.subr.bf16.mxu0 0
      %6238 = vmatpush2.bf16.msra.mxu0 0
      %6239 = vmatprep.subr.bf16.mxu0 0
      %6240 = vmatpush2.bf16.msra.mxu0 0
      %6241 = vmatprep.subr.bf16.mxu0 0
      %6242 = vmatpush2.bf16.msra.mxu0 0
      %6243 = vmatprep.subr.bf16.mxu0 0
      %6244 = vmatpush2.bf16.msra.mxu0 0
      %6245 = vmatprep.subr.bf16.mxu0 0
      %6246 = vmatpush2.bf16.msra.mxu0 0
      %6247 = vmatprep.subr.bf16.mxu0 0
      %6248 = vmatpush2.bf16.msra.mxu0 0
      %6249 = vmatprep.mubr.bf16.mxu0 0
      %6250 = vmatmul.mubr.bf16.gmra.mxu0 %v6203
      %v6251 = vpop.f32.mrf.mxu0
      %v6252 = vadd.f32 0.0, %v6251
      %v6253 = vpop.f32.mrf.mxu0
      %v6254 = vpop.f32.mrf.mxu0
      %v6255 = vadd.f32 0.0, %v6254
      %v6256 = vpop.f32.mrf.mxu0
      %6257 = vmatprep.mubr.bf16.mxu0 0
      %6258 = vmatmul.mubr.bf16.gmra.mxu0 %v6206
      %v6259 = vpop.f32.mrf.mxu0
      %v6260 = vadd.f32 0.0, %v6259
      %v6261 = vpop.f32.mrf.mxu0
      %v6262 = vpop.f32.mrf.mxu0
      %v6263 = vadd.f32 0.0, %v6262
      %v6264 = vpop.f32.mrf.mxu0
      %6265 = vmatprep.mubr.bf16.mxu0 0
      %6266 = vmatmul.mubr.bf16.gmra.mxu0 %v6209
      %v6267 = vpop.f32.mrf.mxu0
      %v6268 = vadd.f32 0.0, %v6267
      %v6269 = vpop.f32.mrf.mxu0
      %v6270 = vpop.f32.mrf.mxu0
      %v6271 = vadd.f32 0.0, %v6270
      %v6272 = vpop.f32.mrf.mxu0
      %6273 = vmatprep.mubr.bf16.mxu0 0
      %6274 = vmatmul.mubr.bf16.gmra.mxu0 %v6212
      %v6275 = vpop.f32.mrf.mxu0
      %v6276 = vadd.f32 0.0, %v6275
      %v6277 = vpop.f32.mrf.mxu0
      %v6278 = vpop.f32.mrf.mxu0
      %v6279 = vpop.f32.mrf.mxu0
      %6280 = vdwg.mxu0
      %v6281 = vadd.f32 %v6164, %v6252
      %v6282 = vadd.f32 %v6165, %v6255
      %v6283 = vadd.f32 %v6166, %v6260
      %v6284 = vadd.f32 %v6167, %v6263
      %v6285 = vadd.f32 %v6168, %v6268
      %v6286 = vadd.f32 %v6169, %v6271
      %v6287 = vadd.f32 %v6170, %v6276
      %s6288 = scalar_lea.vmem %s4, 336
      %v6289 = vld [vmem:[%s6288] sm:$0xf]
      %v6290 = vld [vmem:[%s6288 + $0x4] sm:$0xf]
      %v6291 = vld [vmem:[%s6288 + $0x8] sm:$0xf]
      %v6292 = vld [vmem:[%s6288 + $0xc] sm:$0xf]
      %v6293 = vld [vmem:[%s6288 + $0x10] sm:$0xf]
      %v6294 = vld [vmem:[%s6288 + $0x14] sm:$0xf]
      %v6295 = vld [vmem:[%s6288 + $0x18] sm:$0x1]
      %v6303 = vunpack.c.l.b16 %v6289
      %v6304 = vunpack.c.l.b16 %v6290
      %v6305 = vunpack.c.l.b16 %v6291
      %v6306 = vunpack.c.l.b16 %v6292
      %v6307 = vunpack.c.l.b16 %v6293
      %v6308 = vunpack.c.l.b16 %v6294
      %v6309 = vunpack.c.l.b16 %v6295
      %v6310 = vpack.c.b16 %v6304, %v6303
      %v6311 = vpack.c.b16 %v6306, %v6305
      %v6312 = vpack.c.b16 %v6308, %v6307
      %v6313 = vpack.c.b16 %v6309, %v6309
      %6314 = vrot.lane.b32.xlu0 %v4896, 102
      %v6315 = vpop.permute.xlu0 %6314
      %6316 = vrot.lane.b32.xlu0 %v4898, 102
      %v6317 = vpop.permute.xlu0 %6316
      %v6320 = vsel %vm4940, %v6310, 0
      %v6323 = vsel %vm4940, %v6311, 0
      %v6326 = vsel %vm4940, %v6312, 0
      %v6329 = vsel %vm4940, %v6313, 0
      %v6332 = vsel %vm4953, %v6317, 0
      %6334 = vmatprep.subr.bf16.mxu0 0
      %6335 = vmatpush1.bf16.msra.mxu0 0
      %6336 = vmatprep.subr.bf16.mxu0 0
      %6337 = vmatpush1.bf16.msra.mxu0 0
      %6338 = vmatprep.subr.bf16.mxu0 0
      %6339 = vmatpush1.bf16.msra.mxu0 0
      %6340 = vmatprep.subr.bf16.mxu0 0
      %6341 = vmatpush1.bf16.msra.mxu0 0
      %6342 = vmatprep.subr.bf16.mxu0 0
      %6343 = vmatpush1.bf16.msra.mxu0 0
      %6344 = vmatprep.subr.bf16.mxu0 0
      %6345 = vmatpush1.bf16.msra.mxu0 0
      %6346 = vmatprep.subr.bf16.mxu0 0
      %6347 = vmatpush1.bf16.msra.mxu0 %v6332
      %6348 = vmatprep.subr.bf16.mxu0 0
      %6349 = vmatpush1.bf16.msra.mxu0 %v6315
      %6350 = vmatprep.subr.bf16.mxu0 0
      %6351 = vmatpush2.bf16.msra.mxu0 0
      %6352 = vmatprep.subr.bf16.mxu0 0
      %6353 = vmatpush2.bf16.msra.mxu0 0
      %6354 = vmatprep.subr.bf16.mxu0 0
      %6355 = vmatpush2.bf16.msra.mxu0 0
      %6356 = vmatprep.subr.bf16.mxu0 0
      %6357 = vmatpush2.bf16.msra.mxu0 0
      %6358 = vmatprep.subr.bf16.mxu0 0
      %6359 = vmatpush2.bf16.msra.mxu0 0
      %6360 = vmatprep.subr.bf16.mxu0 0
      %6361 = vmatpush2.bf16.msra.mxu0 0
      %6362 = vmatprep.subr.bf16.mxu0 0
      %6363 = vmatpush2.bf16.msra.mxu0 0
      %6364 = vmatprep.subr.bf16.mxu0 0
      %6365 = vmatpush2.bf16.msra.mxu0 0
      %6366 = vmatprep.mubr.bf16.mxu0 0
      %6367 = vmatmul.mubr.bf16.gmra.mxu0 %v6320
      %v6368 = vpop.f32.mrf.mxu0
      %v6369 = vadd.f32 0.0, %v6368
      %v6370 = vpop.f32.mrf.mxu0
      %v6371 = vpop.f32.mrf.mxu0
      %v6372 = vadd.f32 0.0, %v6371
      %v6373 = vpop.f32.mrf.mxu0
      %6374 = vmatprep.mubr.bf16.mxu0 0
      %6375 = vmatmul.mubr.bf16.gmra.mxu0 %v6323
      %v6376 = vpop.f32.mrf.mxu0
      %v6377 = vadd.f32 0.0, %v6376
      %v6378 = vpop.f32.mrf.mxu0
      %v6379 = vpop.f32.mrf.mxu0
      %v6380 = vadd.f32 0.0, %v6379
      %v6381 = vpop.f32.mrf.mxu0
      %6382 = vmatprep.mubr.bf16.mxu0 0
      %6383 = vmatmul.mubr.bf16.gmra.mxu0 %v6326
      %v6384 = vpop.f32.mrf.mxu0
      %v6385 = vadd.f32 0.0, %v6384
      %v6386 = vpop.f32.mrf.mxu0
      %v6387 = vpop.f32.mrf.mxu0
      %v6388 = vadd.f32 0.0, %v6387
      %v6389 = vpop.f32.mrf.mxu0
      %6390 = vmatprep.mubr.bf16.mxu0 0
      %6391 = vmatmul.mubr.bf16.gmra.mxu0 %v6329
      %v6392 = vpop.f32.mrf.mxu0
      %v6393 = vadd.f32 0.0, %v6392
      %v6394 = vpop.f32.mrf.mxu0
      %v6395 = vpop.f32.mrf.mxu0
      %v6396 = vpop.f32.mrf.mxu0
      %6397 = vdwg.mxu0
      %v6398 = vadd.f32 %v6281, %v6369
      %v6399 = vadd.f32 %v6282, %v6372
      %v6400 = vadd.f32 %v6283, %v6377
      %v6401 = vadd.f32 %v6284, %v6380
      %v6402 = vadd.f32 %v6285, %v6385
      %v6403 = vadd.f32 %v6286, %v6388
      %v6404 = vadd.f32 %v6287, %v6393
      %s6405 = scalar_lea.vmem %s4, 364
      %v6406 = vld [vmem:[%s6405] sm:$0xf]
      %v6407 = vld [vmem:[%s6405 + $0x4] sm:$0xf]
      %v6408 = vld [vmem:[%s6405 + $0x8] sm:$0xf]
      %v6409 = vld [vmem:[%s6405 + $0xc] sm:$0xf]
      %v6410 = vld [vmem:[%s6405 + $0x10] sm:$0xf]
      %v6411 = vld [vmem:[%s6405 + $0x14] sm:$0xf]
      %v6412 = vld [vmem:[%s6405 + $0x18] sm:$0x1]
      %v6420 = vunpack.c.l.b16 %v6406
      %v6421 = vunpack.c.l.b16 %v6407
      %v6422 = vunpack.c.l.b16 %v6408
      %v6423 = vunpack.c.l.b16 %v6409
      %v6424 = vunpack.c.l.b16 %v6410
      %v6425 = vunpack.c.l.b16 %v6411
      %v6426 = vunpack.c.l.b16 %v6412
      %v6427 = vpack.c.b16 %v6421, %v6420
      %v6428 = vpack.c.b16 %v6423, %v6422
      %v6429 = vpack.c.b16 %v6425, %v6424
      %v6430 = vpack.c.b16 %v6426, %v6426
      %6431 = vrot.lane.b32.xlu0 %v4896, 101
      %v6432 = vpop.permute.xlu0 %6431
      %6433 = vrot.lane.b32.xlu0 %v4898, 101
      %v6434 = vpop.permute.xlu0 %6433
      %v6437 = vsel %vm4940, %v6427, 0
      %v6440 = vsel %vm4940, %v6428, 0
      %v6443 = vsel %vm4940, %v6429, 0
      %v6446 = vsel %vm4940, %v6430, 0
      %v6449 = vsel %vm4953, %v6434, 0
      %6451 = vmatprep.subr.bf16.mxu0 0
      %6452 = vmatpush1.bf16.msra.mxu0 0
      %6453 = vmatprep.subr.bf16.mxu0 0
      %6454 = vmatpush1.bf16.msra.mxu0 0
      %6455 = vmatprep.subr.bf16.mxu0 0
      %6456 = vmatpush1.bf16.msra.mxu0 0
      %6457 = vmatprep.subr.bf16.mxu0 0
      %6458 = vmatpush1.bf16.msra.mxu0 0
      %6459 = vmatprep.subr.bf16.mxu0 0
      %6460 = vmatpush1.bf16.msra.mxu0 0
      %6461 = vmatprep.subr.bf16.mxu0 0
      %6462 = vmatpush1.bf16.msra.mxu0 0
      %6463 = vmatprep.subr.bf16.mxu0 0
      %6464 = vmatpush1.bf16.msra.mxu0 %v6449
      %6465 = vmatprep.subr.bf16.mxu0 0
      %6466 = vmatpush1.bf16.msra.mxu0 %v6432
      %6467 = vmatprep.subr.bf16.mxu0 0
      %6468 = vmatpush2.bf16.msra.mxu0 0
      %6469 = vmatprep.subr.bf16.mxu0 0
      %6470 = vmatpush2.bf16.msra.mxu0 0
      %6471 = vmatprep.subr.bf16.mxu0 0
      %6472 = vmatpush2.bf16.msra.mxu0 0
      %6473 = vmatprep.subr.bf16.mxu0 0
      %6474 = vmatpush2.bf16.msra.mxu0 0
      %6475 = vmatprep.subr.bf16.mxu0 0
      %6476 = vmatpush2.bf16.msra.mxu0 0
      %6477 = vmatprep.subr.bf16.mxu0 0
      %6478 = vmatpush2.bf16.msra.mxu0 0
      %6479 = vmatprep.subr.bf16.mxu0 0
      %6480 = vmatpush2.bf16.msra.mxu0 0
      %6481 = vmatprep.subr.bf16.mxu0 0
      %6482 = vmatpush2.bf16.msra.mxu0 0
      %6483 = vmatprep.mubr.bf16.mxu0 0
      %6484 = vmatmul.mubr.bf16.gmra.mxu0 %v6437
      %v6485 = vpop.f32.mrf.mxu0
      %v6486 = vadd.f32 0.0, %v6485
      %v6487 = vpop.f32.mrf.mxu0
      %v6488 = vpop.f32.mrf.mxu0
      %v6489 = vadd.f32 0.0, %v6488
      %v6490 = vpop.f32.mrf.mxu0
      %6491 = vmatprep.mubr.bf16.mxu0 0
      %6492 = vmatmul.mubr.bf16.gmra.mxu0 %v6440
      %v6493 = vpop.f32.mrf.mxu0
      %v6494 = vadd.f32 0.0, %v6493
      %v6495 = vpop.f32.mrf.mxu0
      %v6496 = vpop.f32.mrf.mxu0
      %v6497 = vadd.f32 0.0, %v6496
      %v6498 = vpop.f32.mrf.mxu0
      %6499 = vmatprep.mubr.bf16.mxu0 0
      %6500 = vmatmul.mubr.bf16.gmra.mxu0 %v6443
      %v6501 = vpop.f32.mrf.mxu0
      %v6502 = vadd.f32 0.0, %v6501
      %v6503 = vpop.f32.mrf.mxu0
      %v6504 = vpop.f32.mrf.mxu0
      %v6505 = vadd.f32 0.0, %v6504
      %v6506 = vpop.f32.mrf.mxu0
      %6507 = vmatprep.mubr.bf16.mxu0 0
      %6508 = vmatmul.mubr.bf16.gmra.mxu0 %v6446
      %v6509 = vpop.f32.mrf.mxu0
      %v6510 = vadd.f32 0.0, %v6509
      %v6511 = vpop.f32.mrf.mxu0
      %v6512 = vpop.f32.mrf.mxu0
      %v6513 = vpop.f32.mrf.mxu0
      %6514 = vdwg.mxu0
      %v6515 = vadd.f32 %v6398, %v6486
      %v6516 = vadd.f32 %v6399, %v6489
      %v6517 = vadd.f32 %v6400, %v6494
      %v6518 = vadd.f32 %v6401, %v6497
      %v6519 = vadd.f32 %v6402, %v6502
      %v6520 = vadd.f32 %v6403, %v6505
      %v6521 = vadd.f32 %v6404, %v6510
      %s6522 = scalar_lea.vmem %s4, 392
      %v6523 = vld [vmem:[%s6522] sm:$0xf]
      %v6524 = vld [vmem:[%s6522 + $0x4] sm:$0xf]
      %v6525 = vld [vmem:[%s6522 + $0x8] sm:$0xf]
      %v6526 = vld [vmem:[%s6522 + $0xc] sm:$0xf]
      %v6527 = vld [vmem:[%s6522 + $0x10] sm:$0xf]
      %v6528 = vld [vmem:[%s6522 + $0x14] sm:$0xf]
      %v6529 = vld [vmem:[%s6522 + $0x18] sm:$0x1]
      %v6537 = vunpack.c.l.b16 %v6523
      %v6538 = vunpack.c.l.b16 %v6524
      %v6539 = vunpack.c.l.b16 %v6525
      %v6540 = vunpack.c.l.b16 %v6526
      %v6541 = vunpack.c.l.b16 %v6527
      %v6542 = vunpack.c.l.b16 %v6528
      %v6543 = vunpack.c.l.b16 %v6529
      %v6544 = vpack.c.b16 %v6538, %v6537
      %v6545 = vpack.c.b16 %v6540, %v6539
      %v6546 = vpack.c.b16 %v6542, %v6541
      %v6547 = vpack.c.b16 %v6543, %v6543
      %6548 = vrot.lane.b32.xlu0 %v4896, 100
      %v6549 = vpop.permute.xlu0 %6548
      %6550 = vrot.lane.b32.xlu0 %v4898, 100
      %v6551 = vpop.permute.xlu0 %6550
      %v6554 = vsel %vm4940, %v6544, 0
      %v6557 = vsel %vm4940, %v6545, 0
      %v6560 = vsel %vm4940, %v6546, 0
      %v6563 = vsel %vm4940, %v6547, 0
      %v6566 = vsel %vm4953, %v6551, 0
      %6568 = vmatprep.subr.bf16.mxu0 0
      %6569 = vmatpush1.bf16.msra.mxu0 0
      %6570 = vmatprep.subr.bf16.mxu0 0
      %6571 = vmatpush1.bf16.msra.mxu0 0
      %6572 = vmatprep.subr.bf16.mxu0 0
      %6573 = vmatpush1.bf16.msra.mxu0 0
      %6574 = vmatprep.subr.bf16.mxu0 0
      %6575 = vmatpush1.bf16.msra.mxu0 0
      %6576 = vmatprep.subr.bf16.mxu0 0
      %6577 = vmatpush1.bf16.msra.mxu0 0
      %6578 = vmatprep.subr.bf16.mxu0 0
      %6579 = vmatpush1.bf16.msra.mxu0 0
      %6580 = vmatprep.subr.bf16.mxu0 0
      %6581 = vmatpush1.bf16.msra.mxu0 %v6566
      %6582 = vmatprep.subr.bf16.mxu0 0
      %6583 = vmatpush1.bf16.msra.mxu0 %v6549
      %6584 = vmatprep.subr.bf16.mxu0 0
      %6585 = vmatpush2.bf16.msra.mxu0 0
      %6586 = vmatprep.subr.bf16.mxu0 0
      %6587 = vmatpush2.bf16.msra.mxu0 0
      %6588 = vmatprep.subr.bf16.mxu0 0
      %6589 = vmatpush2.bf16.msra.mxu0 0
      %6590 = vmatprep.subr.bf16.mxu0 0
      %6591 = vmatpush2.bf16.msra.mxu0 0
      %6592 = vmatprep.subr.bf16.mxu0 0
      %6593 = vmatpush2.bf16.msra.mxu0 0
      %6594 = vmatprep.subr.bf16.mxu0 0
      %6595 = vmatpush2.bf16.msra.mxu0 0
      %6596 = vmatprep.subr.bf16.mxu0 0
      %6597 = vmatpush2.bf16.msra.mxu0 0
      %6598 = vmatprep.subr.bf16.mxu0 0
      %6599 = vmatpush2.bf16.msra.mxu0 0
      %6600 = vmatprep.mubr.bf16.mxu0 0
      %6601 = vmatmul.mubr.bf16.gmra.mxu0 %v6554
      %v6602 = vpop.f32.mrf.mxu0
      %v6603 = vadd.f32 0.0, %v6602
      %v6604 = vpop.f32.mrf.mxu0
      %v6605 = vpop.f32.mrf.mxu0
      %v6606 = vadd.f32 0.0, %v6605
      %v6607 = vpop.f32.mrf.mxu0
      %6608 = vmatprep.mubr.bf16.mxu0 0
      %6609 = vmatmul.mubr.bf16.gmra.mxu0 %v6557
      %v6610 = vpop.f32.mrf.mxu0
      %v6611 = vadd.f32 0.0, %v6610
      %v6612 = vpop.f32.mrf.mxu0
      %v6613 = vpop.f32.mrf.mxu0
      %v6614 = vadd.f32 0.0, %v6613
      %v6615 = vpop.f32.mrf.mxu0
      %6616 = vmatprep.mubr.bf16.mxu0 0
      %6617 = vmatmul.mubr.bf16.gmra.mxu0 %v6560
      %v6618 = vpop.f32.mrf.mxu0
      %v6619 = vadd.f32 0.0, %v6618
      %v6620 = vpop.f32.mrf.mxu0
      %v6621 = vpop.f32.mrf.mxu0
      %v6622 = vadd.f32 0.0, %v6621
      %v6623 = vpop.f32.mrf.mxu0
      %6624 = vmatprep.mubr.bf16.mxu0 0
      %6625 = vmatmul.mubr.bf16.gmra.mxu0 %v6563
      %v6626 = vpop.f32.mrf.mxu0
      %v6627 = vadd.f32 0.0, %v6626
      %v6628 = vpop.f32.mrf.mxu0
      %v6629 = vpop.f32.mrf.mxu0
      %v6630 = vpop.f32.mrf.mxu0
      %6631 = vdwg.mxu0
      %v6632 = vadd.f32 %v6515, %v6603
      %v6633 = vadd.f32 %v6516, %v6606
      %v6634 = vadd.f32 %v6517, %v6611
      %v6635 = vadd.f32 %v6518, %v6614
      %v6636 = vadd.f32 %v6519, %v6619
      %v6637 = vadd.f32 %v6520, %v6622
      %v6638 = vadd.f32 %v6521, %v6627
      %s6639 = scalar_lea.vmem %s4, 420
      %v6640 = vld [vmem:[%s6639] sm:$0xf]
      %v6641 = vld [vmem:[%s6639 + $0x4] sm:$0xf]
      %v6642 = vld [vmem:[%s6639 + $0x8] sm:$0xf]
      %v6643 = vld [vmem:[%s6639 + $0xc] sm:$0xf]
      %v6644 = vld [vmem:[%s6639 + $0x10] sm:$0xf]
      %v6645 = vld [vmem:[%s6639 + $0x14] sm:$0xf]
      %v6646 = vld [vmem:[%s6639 + $0x18] sm:$0x1]
      %v6654 = vunpack.c.l.b16 %v6640
      %v6655 = vunpack.c.l.b16 %v6641
      %v6656 = vunpack.c.l.b16 %v6642
      %v6657 = vunpack.c.l.b16 %v6643
      %v6658 = vunpack.c.l.b16 %v6644
      %v6659 = vunpack.c.l.b16 %v6645
      %v6660 = vunpack.c.l.b16 %v6646
      %v6661 = vpack.c.b16 %v6655, %v6654
      %v6662 = vpack.c.b16 %v6657, %v6656
      %v6663 = vpack.c.b16 %v6659, %v6658
      %v6664 = vpack.c.b16 %v6660, %v6660
      %6665 = vrot.lane.b32.xlu0 %v4896, 92
      %v6666 = vpop.permute.xlu0 %6665
      %6667 = vrot.lane.b32.xlu0 %v4898, 92
      %v6668 = vpop.permute.xlu0 %6667
      %v6671 = vsel %vm4940, %v6661, 0
      %v6674 = vsel %vm4940, %v6662, 0
      %v6677 = vsel %vm4940, %v6663, 0
      %v6680 = vsel %vm4940, %v6664, 0
      %v6683 = vsel %vm4953, %v6668, 0
      %6685 = vmatprep.subr.bf16.mxu0 0
      %6686 = vmatpush1.bf16.msra.mxu0 0
      %6687 = vmatprep.subr.bf16.mxu0 0
      %6688 = vmatpush1.bf16.msra.mxu0 0
      %6689 = vmatprep.subr.bf16.mxu0 0
      %6690 = vmatpush1.bf16.msra.mxu0 0
      %6691 = vmatprep.subr.bf16.mxu0 0
      %6692 = vmatpush1.bf16.msra.mxu0 0
      %6693 = vmatprep.subr.bf16.mxu0 0
      %6694 = vmatpush1.bf16.msra.mxu0 0
      %6695 = vmatprep.subr.bf16.mxu0 0
      %6696 = vmatpush1.bf16.msra.mxu0 0
      %6697 = vmatprep.subr.bf16.mxu0 0
      %6698 = vmatpush1.bf16.msra.mxu0 %v6683
      %6699 = vmatprep.subr.bf16.mxu0 0
      %6700 = vmatpush1.bf16.msra.mxu0 %v6666
      %6701 = vmatprep.subr.bf16.mxu0 0
      %6702 = vmatpush2.bf16.msra.mxu0 0
      %6703 = vmatprep.subr.bf16.mxu0 0
      %6704 = vmatpush2.bf16.msra.mxu0 0
      %6705 = vmatprep.subr.bf16.mxu0 0
      %6706 = vmatpush2.bf16.msra.mxu0 0
      %6707 = vmatprep.subr.bf16.mxu0 0
      %6708 = vmatpush2.bf16.msra.mxu0 0
      %6709 = vmatprep.subr.bf16.mxu0 0
      %6710 = vmatpush2.bf16.msra.mxu0 0
      %6711 = vmatprep.subr.bf16.mxu0 0
      %6712 = vmatpush2.bf16.msra.mxu0 0
      %6713 = vmatprep.subr.bf16.mxu0 0
      %6714 = vmatpush2.bf16.msra.mxu0 0
      %6715 = vmatprep.subr.bf16.mxu0 0
      %6716 = vmatpush2.bf16.msra.mxu0 0
      %6717 = vmatprep.mubr.bf16.mxu0 0
      %6718 = vmatmul.mubr.bf16.gmra.mxu0 %v6671
      %v6719 = vpop.f32.mrf.mxu0
      %v6720 = vadd.f32 0.0, %v6719
      %v6721 = vpop.f32.mrf.mxu0
      %v6722 = vpop.f32.mrf.mxu0
      %v6723 = vadd.f32 0.0, %v6722
      %v6724 = vpop.f32.mrf.mxu0
      %6725 = vmatprep.mubr.bf16.mxu0 0
      %6726 = vmatmul.mubr.bf16.gmra.mxu0 %v6674
      %v6727 = vpop.f32.mrf.mxu0
      %v6728 = vadd.f32 0.0, %v6727
      %v6729 = vpop.f32.mrf.mxu0
      %v6730 = vpop.f32.mrf.mxu0
      %v6731 = vadd.f32 0.0, %v6730
      %v6732 = vpop.f32.mrf.mxu0
      %6733 = vmatprep.mubr.bf16.mxu0 0
      %6734 = vmatmul.mubr.bf16.gmra.mxu0 %v6677
      %v6735 = vpop.f32.mrf.mxu0
      %v6736 = vadd.f32 0.0, %v6735
      %v6737 = vpop.f32.mrf.mxu0
      %v6738 = vpop.f32.mrf.mxu0
      %v6739 = vadd.f32 0.0, %v6738
      %v6740 = vpop.f32.mrf.mxu0
      %6741 = vmatprep.mubr.bf16.mxu0 0
      %6742 = vmatmul.mubr.bf16.gmra.mxu0 %v6680
      %v6743 = vpop.f32.mrf.mxu0
      %v6744 = vadd.f32 0.0, %v6743
      %v6745 = vpop.f32.mrf.mxu0
      %v6746 = vpop.f32.mrf.mxu0
      %v6747 = vpop.f32.mrf.mxu0
      %6748 = vdwg.mxu0
      %v6749 = vadd.f32 %v6632, %v6720
      %v6750 = vadd.f32 %v6633, %v6723
      %v6751 = vadd.f32 %v6634, %v6728
      %v6752 = vadd.f32 %v6635, %v6731
      %v6753 = vadd.f32 %v6636, %v6736
      %v6754 = vadd.f32 %v6637, %v6739
      %v6755 = vadd.f32 %v6638, %v6744
      %s6756 = scalar_lea.vmem %s4, 448
      %v6757 = vld [vmem:[%s6756] sm:$0xf]
      %v6758 = vld [vmem:[%s6756 + $0x4] sm:$0xf]
      %v6759 = vld [vmem:[%s6756 + $0x8] sm:$0xf]
      %v6760 = vld [vmem:[%s6756 + $0xc] sm:$0xf]
      %v6761 = vld [vmem:[%s6756 + $0x10] sm:$0xf]
      %v6762 = vld [vmem:[%s6756 + $0x14] sm:$0xf]
      %v6763 = vld [vmem:[%s6756 + $0x18] sm:$0x1]
      %v6771 = vunpack.c.l.b16 %v6757
      %v6772 = vunpack.c.l.b16 %v6758
      %v6773 = vunpack.c.l.b16 %v6759
      %v6774 = vunpack.c.l.b16 %v6760
      %v6775 = vunpack.c.l.b16 %v6761
      %v6776 = vunpack.c.l.b16 %v6762
      %v6777 = vunpack.c.l.b16 %v6763
      %v6778 = vpack.c.b16 %v6772, %v6771
      %v6779 = vpack.c.b16 %v6774, %v6773
      %v6780 = vpack.c.b16 %v6776, %v6775
      %v6781 = vpack.c.b16 %v6777, %v6777
      %6784 = vrot.lane.b32.xlu0 %v4896, 91
      %v6785 = vpop.permute.xlu0 %6784
      %6786 = vrot.lane.b32.xlu0 %v4897, 91
      %v6787 = vpop.permute.xlu0 %6786
      %6788 = vrot.lane.b32.xlu0 %v4898, 91
      %v6789 = vpop.permute.xlu0 %6788
      %6790 = vrot.lane.b32.xlu0 %v4899, 91
      %v6791 = vpop.permute.xlu0 %6790
      %vm6792 = vcmask 744448
      %v6793 = vsel %vm6792, %v6785, %v6787
      %v6794 = vsel %vm6792, %v6789, %v6791
      %v6797 = vsel %vm4940, %v6778, 0
      %v6800 = vsel %vm4940, %v6779, 0
      %v6803 = vsel %vm4940, %v6780, 0
      %v6806 = vsel %vm4940, %v6781, 0
      %v6809 = vsel %vm4953, %v6794, 0
      %6811 = vmatprep.subr.bf16.mxu0 0
      %6812 = vmatpush1.bf16.msra.mxu0 0
      %6813 = vmatprep.subr.bf16.mxu0 0
      %6814 = vmatpush1.bf16.msra.mxu0 0
      %6815 = vmatprep.subr.bf16.mxu0 0
      %6816 = vmatpush1.bf16.msra.mxu0 0
      %6817 = vmatprep.subr.bf16.mxu0 0
      %6818 = vmatpush1.bf16.msra.mxu0 0
      %6819 = vmatprep.subr.bf16.mxu0 0
      %6820 = vmatpush1.bf16.msra.mxu0 0
      %6821 = vmatprep.subr.bf16.mxu0 0
      %6822 = vmatpush1.bf16.msra.mxu0 0
      %6823 = vmatprep.subr.bf16.mxu0 0
      %6824 = vmatpush1.bf16.msra.mxu0 %v6809
      %6825 = vmatprep.subr.bf16.mxu0 0
      %6826 = vmatpush1.bf16.msra.mxu0 %v6793
      %6827 = vmatprep.subr.bf16.mxu0 0
      %6828 = vmatpush2.bf16.msra.mxu0 0
      %6829 = vmatprep.subr.bf16.mxu0 0
      %6830 = vmatpush2.bf16.msra.mxu0 0
      %6831 = vmatprep.subr.bf16.mxu0 0
      %6832 = vmatpush2.bf16.msra.mxu0 0
      %6833 = vmatprep.subr.bf16.mxu0 0
      %6834 = vmatpush2.bf16.msra.mxu0 0
      %6835 = vmatprep.subr.bf16.mxu0 0
      %6836 = vmatpush2.bf16.msra.mxu0 0
      %6837 = vmatprep.subr.bf16.mxu0 0
      %6838 = vmatpush2.bf16.msra.mxu0 0
      %6839 = vmatprep.subr.bf16.mxu0 0
      %6840 = vmatpush2.bf16.msra.mxu0 0
      %6841 = vmatprep.subr.bf16.mxu0 0
      %6842 = vmatpush2.bf16.msra.mxu0 0
      %6843 = vmatprep.mubr.bf16.mxu0 0
      %6844 = vmatmul.mubr.bf16.gmra.mxu0 %v6797
      %v6845 = vpop.f32.mrf.mxu0
      %v6846 = vadd.f32 0.0, %v6845
      %v6847 = vpop.f32.mrf.mxu0
      %v6848 = vpop.f32.mrf.mxu0
      %v6849 = vadd.f32 0.0, %v6848
      %v6850 = vpop.f32.mrf.mxu0
      %6851 = vmatprep.mubr.bf16.mxu0 0
      %6852 = vmatmul.mubr.bf16.gmra.mxu0 %v6800
      %v6853 = vpop.f32.mrf.mxu0
      %v6854 = vadd.f32 0.0, %v6853
      %v6855 = vpop.f32.mrf.mxu0
      %v6856 = vpop.f32.mrf.mxu0
      %v6857 = vadd.f32 0.0, %v6856
      %v6858 = vpop.f32.mrf.mxu0
      %6859 = vmatprep.mubr.bf16.mxu0 0
      %6860 = vmatmul.mubr.bf16.gmra.mxu0 %v6803
      %v6861 = vpop.f32.mrf.mxu0
      %v6862 = vadd.f32 0.0, %v6861
      %v6863 = vpop.f32.mrf.mxu0
      %v6864 = vpop.f32.mrf.mxu0
      %v6865 = vadd.f32 0.0, %v6864
      %v6866 = vpop.f32.mrf.mxu0
      %6867 = vmatprep.mubr.bf16.mxu0 0
      %6868 = vmatmul.mubr.bf16.gmra.mxu0 %v6806
      %v6869 = vpop.f32.mrf.mxu0
      %v6870 = vadd.f32 0.0, %v6869
      %v6871 = vpop.f32.mrf.mxu0
      %v6872 = vpop.f32.mrf.mxu0
      %v6873 = vpop.f32.mrf.mxu0
      %6874 = vdwg.mxu0
      %v6875 = vadd.f32 %v6749, %v6846
      %v6876 = vadd.f32 %v6750, %v6849
      %v6877 = vadd.f32 %v6751, %v6854
      %v6878 = vadd.f32 %v6752, %v6857
      %v6879 = vadd.f32 %v6753, %v6862
      %v6880 = vadd.f32 %v6754, %v6865
      %v6881 = vadd.f32 %v6755, %v6870
      %s6882 = scalar_lea.vmem %s4, 476
      %v6883 = vld [vmem:[%s6882] sm:$0xf]
      %v6884 = vld [vmem:[%s6882 + $0x4] sm:$0xf]
      %v6885 = vld [vmem:[%s6882 + $0x8] sm:$0xf]
      %v6886 = vld [vmem:[%s6882 + $0xc] sm:$0xf]
      %v6887 = vld [vmem:[%s6882 + $0x10] sm:$0xf]
      %v6888 = vld [vmem:[%s6882 + $0x14] sm:$0xf]
      %v6889 = vld [vmem:[%s6882 + $0x18] sm:$0x1]
      %v6897 = vunpack.c.l.b16 %v6883
      %v6898 = vunpack.c.l.b16 %v6884
      %v6899 = vunpack.c.l.b16 %v6885
      %v6900 = vunpack.c.l.b16 %v6886
      %v6901 = vunpack.c.l.b16 %v6887
      %v6902 = vunpack.c.l.b16 %v6888
      %v6903 = vunpack.c.l.b16 %v6889
      %v6904 = vpack.c.b16 %v6898, %v6897
      %v6905 = vpack.c.b16 %v6900, %v6899
      %v6906 = vpack.c.b16 %v6902, %v6901
      %v6907 = vpack.c.b16 %v6903, %v6903
      %6908 = vrot.lane.b32.xlu0 %v4896, 90
      %v6909 = vpop.permute.xlu0 %6908
      %6910 = vrot.lane.b32.xlu0 %v4897, 90
      %v6911 = vpop.permute.xlu0 %6910
      %6912 = vrot.lane.b32.xlu0 %v4898, 90
      %v6913 = vpop.permute.xlu0 %6912
      %6914 = vrot.lane.b32.xlu0 %v4899, 90
      %v6915 = vpop.permute.xlu0 %6914
      %vm6916 = vcmask 736256
      %v6917 = vsel %vm6916, %v6909, %v6911
      %v6918 = vsel %vm6916, %v6913, %v6915
      %v6921 = vsel %vm4940, %v6904, 0
      %v6924 = vsel %vm4940, %v6905, 0
      %v6927 = vsel %vm4940, %v6906, 0
      %v6930 = vsel %vm4940, %v6907, 0
      %v6933 = vsel %vm4953, %v6918, 0
      %6935 = vmatprep.subr.bf16.mxu0 0
      %6936 = vmatpush1.bf16.msra.mxu0 0
      %6937 = vmatprep.subr.bf16.mxu0 0
      %6938 = vmatpush1.bf16.msra.mxu0 0
      %6939 = vmatprep.subr.bf16.mxu0 0
      %6940 = vmatpush1.bf16.msra.mxu0 0
      %6941 = vmatprep.subr.bf16.mxu0 0
      %6942 = vmatpush1.bf16.msra.mxu0 0
      %6943 = vmatprep.subr.bf16.mxu0 0
      %6944 = vmatpush1.bf16.msra.mxu0 0
      %6945 = vmatprep.subr.bf16.mxu0 0
      %6946 = vmatpush1.bf16.msra.mxu0 0
      %6947 = vmatprep.subr.bf16.mxu0 0
      %6948 = vmatpush1.bf16.msra.mxu0 %v6933
      %6949 = vmatprep.subr.bf16.mxu0 0
      %6950 = vmatpush1.bf16.msra.mxu0 %v6917
      %6951 = vmatprep.subr.bf16.mxu0 0
      %6952 = vmatpush2.bf16.msra.mxu0 0
      %6953 = vmatprep.subr.bf16.mxu0 0
      %6954 = vmatpush2.bf16.msra.mxu0 0
      %6955 = vmatprep.subr.bf16.mxu0 0
      %6956 = vmatpush2.bf16.msra.mxu0 0
      %6957 = vmatprep.subr.bf16.mxu0 0
      %6958 = vmatpush2.bf16.msra.mxu0 0
      %6959 = vmatprep.subr.bf16.mxu0 0
      %6960 = vmatpush2.bf16.msra.mxu0 0
      %6961 = vmatprep.subr.bf16.mxu0 0
      %6962 = vmatpush2.bf16.msra.mxu0 0
      %6963 = vmatprep.subr.bf16.mxu0 0
      %6964 = vmatpush2.bf16.msra.mxu0 0
      %6965 = vmatprep.subr.bf16.mxu0 0
      %6966 = vmatpush2.bf16.msra.mxu0 0
      %6967 = vmatprep.mubr.bf16.mxu0 0
      %6968 = vmatmul.mubr.bf16.gmra.mxu0 %v6921
      %v6969 = vpop.f32.mrf.mxu0
      %v6970 = vadd.f32 0.0, %v6969
      %v6971 = vpop.f32.mrf.mxu0
      %v6972 = vpop.f32.mrf.mxu0
      %v6973 = vadd.f32 0.0, %v6972
      %v6974 = vpop.f32.mrf.mxu0
      %6975 = vmatprep.mubr.bf16.mxu0 0
      %6976 = vmatmul.mubr.bf16.gmra.mxu0 %v6924
      %v6977 = vpop.f32.mrf.mxu0
      %v6978 = vadd.f32 0.0, %v6977
      %v6979 = vpop.f32.mrf.mxu0
      %v6980 = vpop.f32.mrf.mxu0
      %v6981 = vadd.f32 0.0, %v6980
      %v6982 = vpop.f32.mrf.mxu0
      %6983 = vmatprep.mubr.bf16.mxu0 0
      %6984 = vmatmul.mubr.bf16.gmra.mxu0 %v6927
      %v6985 = vpop.f32.mrf.mxu0
      %v6986 = vadd.f32 0.0, %v6985
      %v6987 = vpop.f32.mrf.mxu0
      %v6988 = vpop.f32.mrf.mxu0
      %v6989 = vadd.f32 0.0, %v6988
      %v6990 = vpop.f32.mrf.mxu0
      %6991 = vmatprep.mubr.bf16.mxu0 0
      %6992 = vmatmul.mubr.bf16.gmra.mxu0 %v6930
      %v6993 = vpop.f32.mrf.mxu0
      %v6994 = vadd.f32 0.0, %v6993
      %v6995 = vpop.f32.mrf.mxu0
      %v6996 = vpop.f32.mrf.mxu0
      %v6997 = vpop.f32.mrf.mxu0
      %6998 = vdwg.mxu0
      %v6999 = vadd.f32 %v6875, %v6970
      %v7000 = vadd.f32 %v6876, %v6973
      %v7001 = vadd.f32 %v6877, %v6978
      %v7002 = vadd.f32 %v6878, %v6981
      %v7003 = vadd.f32 %v6879, %v6986
      %v7004 = vadd.f32 %v6880, %v6989
      %v7005 = vadd.f32 %v6881, %v6994
      %s7006 = scalar_lea.vmem %s4, 504
      %v7007 = vld [vmem:[%s7006] sm:$0xf]
      %v7008 = vld [vmem:[%s7006 + $0x4] sm:$0xf]
      %v7009 = vld [vmem:[%s7006 + $0x8] sm:$0xf]
      %v7010 = vld [vmem:[%s7006 + $0xc] sm:$0xf]
      %v7011 = vld [vmem:[%s7006 + $0x10] sm:$0xf]
      %v7012 = vld [vmem:[%s7006 + $0x14] sm:$0xf]
      %v7013 = vld [vmem:[%s7006 + $0x18] sm:$0x1]
      %v7021 = vunpack.c.l.b16 %v7007
      %v7022 = vunpack.c.l.b16 %v7008
      %v7023 = vunpack.c.l.b16 %v7009
      %v7024 = vunpack.c.l.b16 %v7010
      %v7025 = vunpack.c.l.b16 %v7011
      %v7026 = vunpack.c.l.b16 %v7012
      %v7027 = vunpack.c.l.b16 %v7013
      %v7028 = vpack.c.b16 %v7022, %v7021
      %v7029 = vpack.c.b16 %v7024, %v7023
      %v7030 = vpack.c.b16 %v7026, %v7025
      %v7031 = vpack.c.b16 %v7027, %v7027
      %7032 = vrot.lane.b32.xlu0 %v4896, 89
      %v7033 = vpop.permute.xlu0 %7032
      %7034 = vrot.lane.b32.xlu0 %v4897, 89
      %v7035 = vpop.permute.xlu0 %7034
      %7036 = vrot.lane.b32.xlu0 %v4898, 89
      %v7037 = vpop.permute.xlu0 %7036
      %7038 = vrot.lane.b32.xlu0 %v4899, 89
      %v7039 = vpop.permute.xlu0 %7038
      %vm7040 = vcmask 728064
      %v7041 = vsel %vm7040, %v7033, %v7035
      %v7042 = vsel %vm7040, %v7037, %v7039
      %v7045 = vsel %vm4940, %v7028, 0
      %v7048 = vsel %vm4940, %v7029, 0
      %v7051 = vsel %vm4940, %v7030, 0
      %v7054 = vsel %vm4940, %v7031, 0
      %v7057 = vsel %vm4953, %v7042, 0
      %7059 = vmatprep.subr.bf16.mxu0 0
      %7060 = vmatpush1.bf16.msra.mxu0 0
      %7061 = vmatprep.subr.bf16.mxu0 0
      %7062 = vmatpush1.bf16.msra.mxu0 0
      %7063 = vmatprep.subr.bf16.mxu0 0
      %7064 = vmatpush1.bf16.msra.mxu0 0
      %7065 = vmatprep.subr.bf16.mxu0 0
      %7066 = vmatpush1.bf16.msra.mxu0 0
      %7067 = vmatprep.subr.bf16.mxu0 0
      %7068 = vmatpush1.bf16.msra.mxu0 0
      %7069 = vmatprep.subr.bf16.mxu0 0
      %7070 = vmatpush1.bf16.msra.mxu0 0
      %7071 = vmatprep.subr.bf16.mxu0 0
      %7072 = vmatpush1.bf16.msra.mxu0 %v7057
      %7073 = vmatprep.subr.bf16.mxu0 0
      %7074 = vmatpush1.bf16.msra.mxu0 %v7041
      %7075 = vmatprep.subr.bf16.mxu0 0
      %7076 = vmatpush2.bf16.msra.mxu0 0
      %7077 = vmatprep.subr.bf16.mxu0 0
      %7078 = vmatpush2.bf16.msra.mxu0 0
      %7079 = vmatprep.subr.bf16.mxu0 0
      %7080 = vmatpush2.bf16.msra.mxu0 0
      %7081 = vmatprep.subr.bf16.mxu0 0
      %7082 = vmatpush2.bf16.msra.mxu0 0
      %7083 = vmatprep.subr.bf16.mxu0 0
      %7084 = vmatpush2.bf16.msra.mxu0 0
      %7085 = vmatprep.subr.bf16.mxu0 0
      %7086 = vmatpush2.bf16.msra.mxu0 0
      %7087 = vmatprep.subr.bf16.mxu0 0
      %7088 = vmatpush2.bf16.msra.mxu0 0
      %7089 = vmatprep.subr.bf16.mxu0 0
      %7090 = vmatpush2.bf16.msra.mxu0 0
      %7091 = vmatprep.mubr.bf16.mxu0 0
      %7092 = vmatmul.mubr.bf16.gmra.mxu0 %v7045
      %v7093 = vpop.f32.mrf.mxu0
      %v7094 = vadd.f32 0.0, %v7093
      %v7095 = vpop.f32.mrf.mxu0
      %v7096 = vpop.f32.mrf.mxu0
      %v7097 = vadd.f32 0.0, %v7096
      %v7098 = vpop.f32.mrf.mxu0
      %7099 = vmatprep.mubr.bf16.mxu0 0
      %7100 = vmatmul.mubr.bf16.gmra.mxu0 %v7048
      %v7101 = vpop.f32.mrf.mxu0
      %v7102 = vadd.f32 0.0, %v7101
      %v7103 = vpop.f32.mrf.mxu0
      %v7104 = vpop.f32.mrf.mxu0
      %v7105 = vadd.f32 0.0, %v7104
      %v7106 = vpop.f32.mrf.mxu0
      %7107 = vmatprep.mubr.bf16.mxu0 0
      %7108 = vmatmul.mubr.bf16.gmra.mxu0 %v7051
      %v7109 = vpop.f32.mrf.mxu0
      %v7110 = vadd.f32 0.0, %v7109
      %v7111 = vpop.f32.mrf.mxu0
      %v7112 = vpop.f32.mrf.mxu0
      %v7113 = vadd.f32 0.0, %v7112
      %v7114 = vpop.f32.mrf.mxu0
      %7115 = vmatprep.mubr.bf16.mxu0 0
      %7116 = vmatmul.mubr.bf16.gmra.mxu0 %v7054
      %v7117 = vpop.f32.mrf.mxu0
      %v7118 = vadd.f32 0.0, %v7117
      %v7119 = vpop.f32.mrf.mxu0
      %v7120 = vpop.f32.mrf.mxu0
      %v7121 = vpop.f32.mrf.mxu0
      %7122 = vdwg.mxu0
      %v7123 = vadd.f32 %v6999, %v7094
      %v7124 = vadd.f32 %v7000, %v7097
      %v7125 = vadd.f32 %v7001, %v7102
      %v7126 = vadd.f32 %v7002, %v7105
      %v7127 = vadd.f32 %v7003, %v7110
      %v7128 = vadd.f32 %v7004, %v7113
      %v7129 = vadd.f32 %v7005, %v7118
      %s7130 = scalar_lea.vmem %s4, 532
      %v7131 = vld [vmem:[%s7130] sm:$0xf]
      %v7132 = vld [vmem:[%s7130 + $0x4] sm:$0xf]
      %v7133 = vld [vmem:[%s7130 + $0x8] sm:$0xf]
      %v7134 = vld [vmem:[%s7130 + $0xc] sm:$0xf]
      %v7135 = vld [vmem:[%s7130 + $0x10] sm:$0xf]
      %v7136 = vld [vmem:[%s7130 + $0x14] sm:$0xf]
      %v7137 = vld [vmem:[%s7130 + $0x18] sm:$0x1]
      %v7145 = vunpack.c.l.b16 %v7131
      %v7146 = vunpack.c.l.b16 %v7132
      %v7147 = vunpack.c.l.b16 %v7133
      %v7148 = vunpack.c.l.b16 %v7134
      %v7149 = vunpack.c.l.b16 %v7135
      %v7150 = vunpack.c.l.b16 %v7136
      %v7151 = vunpack.c.l.b16 %v7137
      %v7152 = vpack.c.b16 %v7146, %v7145
      %v7153 = vpack.c.b16 %v7148, %v7147
      %v7154 = vpack.c.b16 %v7150, %v7149
      %v7155 = vpack.c.b16 %v7151, %v7151
      %7156 = vrot.lane.b32.xlu0 %v4896, 88
      %v7157 = vpop.permute.xlu0 %7156
      %7158 = vrot.lane.b32.xlu0 %v4897, 88
      %v7159 = vpop.permute.xlu0 %7158
      %7160 = vrot.lane.b32.xlu0 %v4898, 88
      %v7161 = vpop.permute.xlu0 %7160
      %7162 = vrot.lane.b32.xlu0 %v4899, 88
      %v7163 = vpop.permute.xlu0 %7162
      %vm7164 = vcmask 719872
      %v7165 = vsel %vm7164, %v7157, %v7159
      %v7166 = vsel %vm7164, %v7161, %v7163
      %v7169 = vsel %vm4940, %v7152, 0
      %v7172 = vsel %vm4940, %v7153, 0
      %v7175 = vsel %vm4940, %v7154, 0
      %v7178 = vsel %vm4940, %v7155, 0
      %v7181 = vsel %vm4953, %v7166, 0
      %7183 = vmatprep.subr.bf16.mxu0 0
      %7184 = vmatpush1.bf16.msra.mxu0 0
      %7185 = vmatprep.subr.bf16.mxu0 0
      %7186 = vmatpush1.bf16.msra.mxu0 0
      %7187 = vmatprep.subr.bf16.mxu0 0
      %7188 = vmatpush1.bf16.msra.mxu0 0
      %7189 = vmatprep.subr.bf16.mxu0 0
      %7190 = vmatpush1.bf16.msra.mxu0 0
      %7191 = vmatprep.subr.bf16.mxu0 0
      %7192 = vmatpush1.bf16.msra.mxu0 0
      %7193 = vmatprep.subr.bf16.mxu0 0
      %7194 = vmatpush1.bf16.msra.mxu0 0
      %7195 = vmatprep.subr.bf16.mxu0 0
      %7196 = vmatpush1.bf16.msra.mxu0 %v7181
      %7197 = vmatprep.subr.bf16.mxu0 0
      %7198 = vmatpush1.bf16.msra.mxu0 %v7165
      %7199 = vmatprep.subr.bf16.mxu0 0
      %7200 = vmatpush2.bf16.msra.mxu0 0
      %7201 = vmatprep.subr.bf16.mxu0 0
      %7202 = vmatpush2.bf16.msra.mxu0 0
      %7203 = vmatprep.subr.bf16.mxu0 0
      %7204 = vmatpush2.bf16.msra.mxu0 0
      %7205 = vmatprep.subr.bf16.mxu0 0
      %7206 = vmatpush2.bf16.msra.mxu0 0
      %7207 = vmatprep.subr.bf16.mxu0 0
      %7208 = vmatpush2.bf16.msra.mxu0 0
      %7209 = vmatprep.subr.bf16.mxu0 0
      %7210 = vmatpush2.bf16.msra.mxu0 0
      %7211 = vmatprep.subr.bf16.mxu0 0
      %7212 = vmatpush2.bf16.msra.mxu0 0
      %7213 = vmatprep.subr.bf16.mxu0 0
      %7214 = vmatpush2.bf16.msra.mxu0 0
      %7215 = vmatprep.mubr.bf16.mxu0 0
      %7216 = vmatmul.mubr.bf16.gmra.mxu0 %v7169
      %v7217 = vpop.f32.mrf.mxu0
      %v7218 = vadd.f32 0.0, %v7217
      %v7219 = vpop.f32.mrf.mxu0
      %v7220 = vpop.f32.mrf.mxu0
      %v7221 = vadd.f32 0.0, %v7220
      %v7222 = vpop.f32.mrf.mxu0
      %7223 = vmatprep.mubr.bf16.mxu0 0
      %7224 = vmatmul.mubr.bf16.gmra.mxu0 %v7172
      %v7225 = vpop.f32.mrf.mxu0
      %v7226 = vadd.f32 0.0, %v7225
      %v7227 = vpop.f32.mrf.mxu0
      %v7228 = vpop.f32.mrf.mxu0
      %v7229 = vadd.f32 0.0, %v7228
      %v7230 = vpop.f32.mrf.mxu0
      %7231 = vmatprep.mubr.bf16.mxu0 0
      %7232 = vmatmul.mubr.bf16.gmra.mxu0 %v7175
      %v7233 = vpop.f32.mrf.mxu0
      %v7234 = vadd.f32 0.0, %v7233
      %v7235 = vpop.f32.mrf.mxu0
      %v7236 = vpop.f32.mrf.mxu0
      %v7237 = vadd.f32 0.0, %v7236
      %v7238 = vpop.f32.mrf.mxu0
      %7239 = vmatprep.mubr.bf16.mxu0 0
      %7240 = vmatmul.mubr.bf16.gmra.mxu0 %v7178
      %v7241 = vpop.f32.mrf.mxu0
      %v7242 = vadd.f32 0.0, %v7241
      %v7243 = vpop.f32.mrf.mxu0
      %v7244 = vpop.f32.mrf.mxu0
      %v7245 = vpop.f32.mrf.mxu0
      %7246 = vdwg.mxu0
      %v7247 = vadd.f32 %v7123, %v7218
      %v7248 = vadd.f32 %v7124, %v7221
      %v7249 = vadd.f32 %v7125, %v7226
      %v7250 = vadd.f32 %v7126, %v7229
      %v7251 = vadd.f32 %v7127, %v7234
      %v7252 = vadd.f32 %v7128, %v7237
      %v7253 = vadd.f32 %v7129, %v7242
      %s7254 = scalar_lea.vmem %s4, 560
      %v7255 = vld [vmem:[%s7254] sm:$0xf]
      %v7256 = vld [vmem:[%s7254 + $0x4] sm:$0xf]
      %v7257 = vld [vmem:[%s7254 + $0x8] sm:$0xf]
      %v7258 = vld [vmem:[%s7254 + $0xc] sm:$0xf]
      %v7259 = vld [vmem:[%s7254 + $0x10] sm:$0xf]
      %v7260 = vld [vmem:[%s7254 + $0x14] sm:$0xf]
      %v7261 = vld [vmem:[%s7254 + $0x18] sm:$0x1]
      %v7269 = vunpack.c.l.b16 %v7255
      %v7270 = vunpack.c.l.b16 %v7256
      %v7271 = vunpack.c.l.b16 %v7257
      %v7272 = vunpack.c.l.b16 %v7258
      %v7273 = vunpack.c.l.b16 %v7259
      %v7274 = vunpack.c.l.b16 %v7260
      %v7275 = vunpack.c.l.b16 %v7261
      %v7276 = vpack.c.b16 %v7270, %v7269
      %v7277 = vpack.c.b16 %v7272, %v7271
      %v7278 = vpack.c.b16 %v7274, %v7273
      %v7279 = vpack.c.b16 %v7275, %v7275
      %7280 = vrot.lane.b32.xlu0 %v4896, 80
      %v7281 = vpop.permute.xlu0 %7280
      %7282 = vrot.lane.b32.xlu0 %v4897, 80
      %v7283 = vpop.permute.xlu0 %7282
      %7284 = vrot.lane.b32.xlu0 %v4898, 80
      %v7285 = vpop.permute.xlu0 %7284
      %7286 = vrot.lane.b32.xlu0 %v4899, 80
      %v7287 = vpop.permute.xlu0 %7286
      %vm7288 = vcmask 654336
      %v7289 = vsel %vm7288, %v7281, %v7283
      %v7290 = vsel %vm7288, %v7285, %v7287
      %v7293 = vsel %vm4940, %v7276, 0
      %v7296 = vsel %vm4940, %v7277, 0
      %v7299 = vsel %vm4940, %v7278, 0
      %v7302 = vsel %vm4940, %v7279, 0
      %v7305 = vsel %vm4953, %v7290, 0
      %7307 = vmatprep.subr.bf16.mxu0 0
      %7308 = vmatpush1.bf16.msra.mxu0 0
      %7309 = vmatprep.subr.bf16.mxu0 0
      %7310 = vmatpush1.bf16.msra.mxu0 0
      %7311 = vmatprep.subr.bf16.mxu0 0
      %7312 = vmatpush1.bf16.msra.mxu0 0
      %7313 = vmatprep.subr.bf16.mxu0 0
      %7314 = vmatpush1.bf16.msra.mxu0 0
      %7315 = vmatprep.subr.bf16.mxu0 0
      %7316 = vmatpush1.bf16.msra.mxu0 0
      %7317 = vmatprep.subr.bf16.mxu0 0
      %7318 = vmatpush1.bf16.msra.mxu0 0
      %7319 = vmatprep.subr.bf16.mxu0 0
      %7320 = vmatpush1.bf16.msra.mxu0 %v7305
      %7321 = vmatprep.subr.bf16.mxu0 0
      %7322 = vmatpush1.bf16.msra.mxu0 %v7289
      %7323 = vmatprep.subr.bf16.mxu0 0
      %7324 = vmatpush2.bf16.msra.mxu0 0
      %7325 = vmatprep.subr.bf16.mxu0 0
      %7326 = vmatpush2.bf16.msra.mxu0 0
      %7327 = vmatprep.subr.bf16.mxu0 0
      %7328 = vmatpush2.bf16.msra.mxu0 0
      %7329 = vmatprep.subr.bf16.mxu0 0
      %7330 = vmatpush2.bf16.msra.mxu0 0
      %7331 = vmatprep.subr.bf16.mxu0 0
      %7332 = vmatpush2.bf16.msra.mxu0 0
      %7333 = vmatprep.subr.bf16.mxu0 0
      %7334 = vmatpush2.bf16.msra.mxu0 0
      %7335 = vmatprep.subr.bf16.mxu0 0
      %7336 = vmatpush2.bf16.msra.mxu0 0
      %7337 = vmatprep.subr.bf16.mxu0 0
      %7338 = vmatpush2.bf16.msra.mxu0 0
      %7339 = vmatprep.mubr.bf16.mxu0 0
      %7340 = vmatmul.mubr.bf16.gmra.mxu0 %v7293
      %v7341 = vpop.f32.mrf.mxu0
      %v7342 = vadd.f32 0.0, %v7341
      %v7343 = vpop.f32.mrf.mxu0
      %v7344 = vpop.f32.mrf.mxu0
      %v7345 = vadd.f32 0.0, %v7344
      %v7346 = vpop.f32.mrf.mxu0
      %7347 = vmatprep.mubr.bf16.mxu0 0
      %7348 = vmatmul.mubr.bf16.gmra.mxu0 %v7296
      %v7349 = vpop.f32.mrf.mxu0
      %v7350 = vadd.f32 0.0, %v7349
      %v7351 = vpop.f32.mrf.mxu0
      %v7352 = vpop.f32.mrf.mxu0
      %v7353 = vadd.f32 0.0, %v7352
      %v7354 = vpop.f32.mrf.mxu0
      %7355 = vmatprep.mubr.bf16.mxu0 0
      %7356 = vmatmul.mubr.bf16.gmra.mxu0 %v7299
      %v7357 = vpop.f32.mrf.mxu0
      %v7358 = vadd.f32 0.0, %v7357
      %v7359 = vpop.f32.mrf.mxu0
      %v7360 = vpop.f32.mrf.mxu0
      %v7361 = vadd.f32 0.0, %v7360
      %v7362 = vpop.f32.mrf.mxu0
      %7363 = vmatprep.mubr.bf16.mxu0 0
      %7364 = vmatmul.mubr.bf16.gmra.mxu0 %v7302
      %v7365 = vpop.f32.mrf.mxu0
      %v7366 = vadd.f32 0.0, %v7365
      %v7367 = vpop.f32.mrf.mxu0
      %v7368 = vpop.f32.mrf.mxu0
      %v7369 = vpop.f32.mrf.mxu0
      %7370 = vdwg.mxu0
      %v7371 = vadd.f32 %v7247, %v7342
      %v7372 = vadd.f32 %v7248, %v7345
      %v7373 = vadd.f32 %v7249, %v7350
      %v7374 = vadd.f32 %v7250, %v7353
      %v7375 = vadd.f32 %v7251, %v7358
      %v7376 = vadd.f32 %v7252, %v7361
      %v7377 = vadd.f32 %v7253, %v7366
      %s7378 = scalar_lea.vmem %s4, 588
      %v7379 = vld [vmem:[%s7378] sm:$0xf]
      %v7380 = vld [vmem:[%s7378 + $0x4] sm:$0xf]
      %v7381 = vld [vmem:[%s7378 + $0x8] sm:$0xf]
      %v7382 = vld [vmem:[%s7378 + $0xc] sm:$0xf]
      %v7383 = vld [vmem:[%s7378 + $0x10] sm:$0xf]
      %v7384 = vld [vmem:[%s7378 + $0x14] sm:$0xf]
      %v7385 = vld [vmem:[%s7378 + $0x18] sm:$0x1]
      %v7393 = vunpack.c.l.b16 %v7379
      %v7394 = vunpack.c.l.b16 %v7380
      %v7395 = vunpack.c.l.b16 %v7381
      %v7396 = vunpack.c.l.b16 %v7382
      %v7397 = vunpack.c.l.b16 %v7383
      %v7398 = vunpack.c.l.b16 %v7384
      %v7399 = vunpack.c.l.b16 %v7385
      %v7400 = vpack.c.b16 %v7394, %v7393
      %v7401 = vpack.c.b16 %v7396, %v7395
      %v7402 = vpack.c.b16 %v7398, %v7397
      %v7403 = vpack.c.b16 %v7399, %v7399
      %7404 = vrot.lane.b32.xlu0 %v4896, 79
      %v7405 = vpop.permute.xlu0 %7404
      %7406 = vrot.lane.b32.xlu0 %v4897, 79
      %v7407 = vpop.permute.xlu0 %7406
      %7408 = vrot.lane.b32.xlu0 %v4898, 79
      %v7409 = vpop.permute.xlu0 %7408
      %7410 = vrot.lane.b32.xlu0 %v4899, 79
      %v7411 = vpop.permute.xlu0 %7410
      %vm7412 = vcmask 646144
      %v7413 = vsel %vm7412, %v7405, %v7407
      %v7414 = vsel %vm7412, %v7409, %v7411
      %v7417 = vsel %vm4940, %v7400, 0
      %v7420 = vsel %vm4940, %v7401, 0
      %v7423 = vsel %vm4940, %v7402, 0
      %v7426 = vsel %vm4940, %v7403, 0
      %v7429 = vsel %vm4953, %v7414, 0
      %7431 = vmatprep.subr.bf16.mxu0 0
      %7432 = vmatpush1.bf16.msra.mxu0 0
      %7433 = vmatprep.subr.bf16.mxu0 0
      %7434 = vmatpush1.bf16.msra.mxu0 0
      %7435 = vmatprep.subr.bf16.mxu0 0
      %7436 = vmatpush1.bf16.msra.mxu0 0
      %7437 = vmatprep.subr.bf16.mxu0 0
      %7438 = vmatpush1.bf16.msra.mxu0 0
      %7439 = vmatprep.subr.bf16.mxu0 0
      %7440 = vmatpush1.bf16.msra.mxu0 0
      %7441 = vmatprep.subr.bf16.mxu0 0
      %7442 = vmatpush1.bf16.msra.mxu0 0
      %7443 = vmatprep.subr.bf16.mxu0 0
      %7444 = vmatpush1.bf16.msra.mxu0 %v7429
      %7445 = vmatprep.subr.bf16.mxu0 0
      %7446 = vmatpush1.bf16.msra.mxu0 %v7413
      %7447 = vmatprep.subr.bf16.mxu0 0
      %7448 = vmatpush2.bf16.msra.mxu0 0
      %7449 = vmatprep.subr.bf16.mxu0 0
      %7450 = vmatpush2.bf16.msra.mxu0 0
      %7451 = vmatprep.subr.bf16.mxu0 0
      %7452 = vmatpush2.bf16.msra.mxu0 0
      %7453 = vmatprep.subr.bf16.mxu0 0
      %7454 = vmatpush2.bf16.msra.mxu0 0
      %7455 = vmatprep.subr.bf16.mxu0 0
      %7456 = vmatpush2.bf16.msra.mxu0 0
      %7457 = vmatprep.subr.bf16.mxu0 0
      %7458 = vmatpush2.bf16.msra.mxu0 0
      %7459 = vmatprep.subr.bf16.mxu0 0
      %7460 = vmatpush2.bf16.msra.mxu0 0
      %7461 = vmatprep.subr.bf16.mxu0 0
      %7462 = vmatpush2.bf16.msra.mxu0 0
      %7463 = vmatprep.mubr.bf16.mxu0 0
      %7464 = vmatmul.mubr.bf16.gmra.mxu0 %v7417
      %v7465 = vpop.f32.mrf.mxu0
      %v7466 = vadd.f32 0.0, %v7465
      %v7467 = vpop.f32.mrf.mxu0
      %v7468 = vpop.f32.mrf.mxu0
      %v7469 = vadd.f32 0.0, %v7468
      %v7470 = vpop.f32.mrf.mxu0
      %7471 = vmatprep.mubr.bf16.mxu0 0
      %7472 = vmatmul.mubr.bf16.gmra.mxu0 %v7420
      %v7473 = vpop.f32.mrf.mxu0
      %v7474 = vadd.f32 0.0, %v7473
      %v7475 = vpop.f32.mrf.mxu0
      %v7476 = vpop.f32.mrf.mxu0
      %v7477 = vadd.f32 0.0, %v7476
      %v7478 = vpop.f32.mrf.mxu0
      %7479 = vmatprep.mubr.bf16.mxu0 0
      %7480 = vmatmul.mubr.bf16.gmra.mxu0 %v7423
      %v7481 = vpop.f32.mrf.mxu0
      %v7482 = vadd.f32 0.0, %v7481
      %v7483 = vpop.f32.mrf.mxu0
      %v7484 = vpop.f32.mrf.mxu0
      %v7485 = vadd.f32 0.0, %v7484
      %v7486 = vpop.f32.mrf.mxu0
      %7487 = vmatprep.mubr.bf16.mxu0 0
      %7488 = vmatmul.mubr.bf16.gmra.mxu0 %v7426
      %v7489 = vpop.f32.mrf.mxu0
      %v7490 = vadd.f32 0.0, %v7489
      %v7491 = vpop.f32.mrf.mxu0
      %v7492 = vpop.f32.mrf.mxu0
      %v7493 = vpop.f32.mrf.mxu0
      %7494 = vdwg.mxu0
      %v7495 = vadd.f32 %v7371, %v7466
      %v7496 = vadd.f32 %v7372, %v7469
      %v7497 = vadd.f32 %v7373, %v7474
      %v7498 = vadd.f32 %v7374, %v7477
      %v7499 = vadd.f32 %v7375, %v7482
      %v7500 = vadd.f32 %v7376, %v7485
      %v7501 = vadd.f32 %v7377, %v7490
      %s7502 = scalar_lea.vmem %s4, 616
      %v7503 = vld [vmem:[%s7502] sm:$0xf]
      %v7504 = vld [vmem:[%s7502 + $0x4] sm:$0xf]
      %v7505 = vld [vmem:[%s7502 + $0x8] sm:$0xf]
      %v7506 = vld [vmem:[%s7502 + $0xc] sm:$0xf]
      %v7507 = vld [vmem:[%s7502 + $0x10] sm:$0xf]
      %v7508 = vld [vmem:[%s7502 + $0x14] sm:$0xf]
      %v7509 = vld [vmem:[%s7502 + $0x18] sm:$0x1]
      %v7517 = vunpack.c.l.b16 %v7503
      %v7518 = vunpack.c.l.b16 %v7504
      %v7519 = vunpack.c.l.b16 %v7505
      %v7520 = vunpack.c.l.b16 %v7506
      %v7521 = vunpack.c.l.b16 %v7507
      %v7522 = vunpack.c.l.b16 %v7508
      %v7523 = vunpack.c.l.b16 %v7509
      %v7524 = vpack.c.b16 %v7518, %v7517
      %v7525 = vpack.c.b16 %v7520, %v7519
      %v7526 = vpack.c.b16 %v7522, %v7521
      %v7527 = vpack.c.b16 %v7523, %v7523
      %7528 = vrot.lane.b32.xlu0 %v4896, 78
      %v7529 = vpop.permute.xlu0 %7528
      %7530 = vrot.lane.b32.xlu0 %v4897, 78
      %v7531 = vpop.permute.xlu0 %7530
      %7532 = vrot.lane.b32.xlu0 %v4898, 78
      %v7533 = vpop.permute.xlu0 %7532
      %7534 = vrot.lane.b32.xlu0 %v4899, 78
      %v7535 = vpop.permute.xlu0 %7534
      %vm7536 = vcmask 637952
      %v7537 = vsel %vm7536, %v7529, %v7531
      %v7538 = vsel %vm7536, %v7533, %v7535
      %v7541 = vsel %vm4940, %v7524, 0
      %v7544 = vsel %vm4940, %v7525, 0
      %v7547 = vsel %vm4940, %v7526, 0
      %v7550 = vsel %vm4940, %v7527, 0
      %v7553 = vsel %vm4953, %v7538, 0
      %7555 = vmatprep.subr.bf16.mxu0 0
      %7556 = vmatpush1.bf16.msra.mxu0 0
      %7557 = vmatprep.subr.bf16.mxu0 0
      %7558 = vmatpush1.bf16.msra.mxu0 0
      %7559 = vmatprep.subr.bf16.mxu0 0
      %7560 = vmatpush1.bf16.msra.mxu0 0
      %7561 = vmatprep.subr.bf16.mxu0 0
      %7562 = vmatpush1.bf16.msra.mxu0 0
      %7563 = vmatprep.subr.bf16.mxu0 0
      %7564 = vmatpush1.bf16.msra.mxu0 0
      %7565 = vmatprep.subr.bf16.mxu0 0
      %7566 = vmatpush1.bf16.msra.mxu0 0
      %7567 = vmatprep.subr.bf16.mxu0 0
      %7568 = vmatpush1.bf16.msra.mxu0 %v7553
      %7569 = vmatprep.subr.bf16.mxu0 0
      %7570 = vmatpush1.bf16.msra.mxu0 %v7537
      %7571 = vmatprep.subr.bf16.mxu0 0
      %7572 = vmatpush2.bf16.msra.mxu0 0
      %7573 = vmatprep.subr.bf16.mxu0 0
      %7574 = vmatpush2.bf16.msra.mxu0 0
      %7575 = vmatprep.subr.bf16.mxu0 0
      %7576 = vmatpush2.bf16.msra.mxu0 0
      %7577 = vmatprep.subr.bf16.mxu0 0
      %7578 = vmatpush2.bf16.msra.mxu0 0
      %7579 = vmatprep.subr.bf16.mxu0 0
      %7580 = vmatpush2.bf16.msra.mxu0 0
      %7581 = vmatprep.subr.bf16.mxu0 0
      %7582 = vmatpush2.bf16.msra.mxu0 0
      %7583 = vmatprep.subr.bf16.mxu0 0
      %7584 = vmatpush2.bf16.msra.mxu0 0
      %7585 = vmatprep.subr.bf16.mxu0 0
      %7586 = vmatpush2.bf16.msra.mxu0 0
      %7587 = vmatprep.mubr.bf16.mxu0 0
      %7588 = vmatmul.mubr.bf16.gmra.mxu0 %v7541
      %v7589 = vpop.f32.mrf.mxu0
      %v7590 = vadd.f32 0.0, %v7589
      %v7591 = vpop.f32.mrf.mxu0
      %v7592 = vpop.f32.mrf.mxu0
      %v7593 = vadd.f32 0.0, %v7592
      %v7594 = vpop.f32.mrf.mxu0
      %7595 = vmatprep.mubr.bf16.mxu0 0
      %7596 = vmatmul.mubr.bf16.gmra.mxu0 %v7544
      %v7597 = vpop.f32.mrf.mxu0
      %v7598 = vadd.f32 0.0, %v7597
      %v7599 = vpop.f32.mrf.mxu0
      %v7600 = vpop.f32.mrf.mxu0
      %v7601 = vadd.f32 0.0, %v7600
      %v7602 = vpop.f32.mrf.mxu0
      %7603 = vmatprep.mubr.bf16.mxu0 0
      %7604 = vmatmul.mubr.bf16.gmra.mxu0 %v7547
      %v7605 = vpop.f32.mrf.mxu0
      %v7606 = vadd.f32 0.0, %v7605
      %v7607 = vpop.f32.mrf.mxu0
      %v7608 = vpop.f32.mrf.mxu0
      %v7609 = vadd.f32 0.0, %v7608
      %v7610 = vpop.f32.mrf.mxu0
      %7611 = vmatprep.mubr.bf16.mxu0 0
      %7612 = vmatmul.mubr.bf16.gmra.mxu0 %v7550
      %v7613 = vpop.f32.mrf.mxu0
      %v7614 = vadd.f32 0.0, %v7613
      %v7615 = vpop.f32.mrf.mxu0
      %v7616 = vpop.f32.mrf.mxu0
      %v7617 = vpop.f32.mrf.mxu0
      %7618 = vdwg.mxu0
      %v7619 = vadd.f32 %v7495, %v7590
      %v7620 = vadd.f32 %v7496, %v7593
      %v7621 = vadd.f32 %v7497, %v7598
      %v7622 = vadd.f32 %v7498, %v7601
      %v7623 = vadd.f32 %v7499, %v7606
      %v7624 = vadd.f32 %v7500, %v7609
      %v7625 = vadd.f32 %v7501, %v7614
      %s7626 = scalar_lea.vmem %s4, 644
      %v7627 = vld [vmem:[%s7626] sm:$0xf]
      %v7628 = vld [vmem:[%s7626 + $0x4] sm:$0xf]
      %v7629 = vld [vmem:[%s7626 + $0x8] sm:$0xf]
      %v7630 = vld [vmem:[%s7626 + $0xc] sm:$0xf]
      %v7631 = vld [vmem:[%s7626 + $0x10] sm:$0xf]
      %v7632 = vld [vmem:[%s7626 + $0x14] sm:$0xf]
      %v7633 = vld [vmem:[%s7626 + $0x18] sm:$0x1]
      %v7641 = vunpack.c.l.b16 %v7627
      %v7642 = vunpack.c.l.b16 %v7628
      %v7643 = vunpack.c.l.b16 %v7629
      %v7644 = vunpack.c.l.b16 %v7630
      %v7645 = vunpack.c.l.b16 %v7631
      %v7646 = vunpack.c.l.b16 %v7632
      %v7647 = vunpack.c.l.b16 %v7633
      %v7648 = vpack.c.b16 %v7642, %v7641
      %v7649 = vpack.c.b16 %v7644, %v7643
      %v7650 = vpack.c.b16 %v7646, %v7645
      %v7651 = vpack.c.b16 %v7647, %v7647
      %7652 = vrot.lane.b32.xlu0 %v4896, 77
      %v7653 = vpop.permute.xlu0 %7652
      %7654 = vrot.lane.b32.xlu0 %v4897, 77
      %v7655 = vpop.permute.xlu0 %7654
      %7656 = vrot.lane.b32.xlu0 %v4898, 77
      %v7657 = vpop.permute.xlu0 %7656
      %7658 = vrot.lane.b32.xlu0 %v4899, 77
      %v7659 = vpop.permute.xlu0 %7658
      %vm7660 = vcmask 629760
      %v7661 = vsel %vm7660, %v7653, %v7655
      %v7662 = vsel %vm7660, %v7657, %v7659
      %v7665 = vsel %vm4940, %v7648, 0
      %v7668 = vsel %vm4940, %v7649, 0
      %v7671 = vsel %vm4940, %v7650, 0
      %v7674 = vsel %vm4940, %v7651, 0
      %v7677 = vsel %vm4953, %v7662, 0
      %7679 = vmatprep.subr.bf16.mxu0 0
      %7680 = vmatpush1.bf16.msra.mxu0 0
      %7681 = vmatprep.subr.bf16.mxu0 0
      %7682 = vmatpush1.bf16.msra.mxu0 0
      %7683 = vmatprep.subr.bf16.mxu0 0
      %7684 = vmatpush1.bf16.msra.mxu0 0
      %7685 = vmatprep.subr.bf16.mxu0 0
      %7686 = vmatpush1.bf16.msra.mxu0 0
      %7687 = vmatprep.subr.bf16.mxu0 0
      %7688 = vmatpush1.bf16.msra.mxu0 0
      %7689 = vmatprep.subr.bf16.mxu0 0
      %7690 = vmatpush1.bf16.msra.mxu0 0
      %7691 = vmatprep.subr.bf16.mxu0 0
      %7692 = vmatpush1.bf16.msra.mxu0 %v7677
      %7693 = vmatprep.subr.bf16.mxu0 0
      %7694 = vmatpush1.bf16.msra.mxu0 %v7661
      %7695 = vmatprep.subr.bf16.mxu0 0
      %7696 = vmatpush2.bf16.msra.mxu0 0
      %7697 = vmatprep.subr.bf16.mxu0 0
      %7698 = vmatpush2.bf16.msra.mxu0 0
      %7699 = vmatprep.subr.bf16.mxu0 0
      %7700 = vmatpush2.bf16.msra.mxu0 0
      %7701 = vmatprep.subr.bf16.mxu0 0
      %7702 = vmatpush2.bf16.msra.mxu0 0
      %7703 = vmatprep.subr.bf16.mxu0 0
      %7704 = vmatpush2.bf16.msra.mxu0 0
      %7705 = vmatprep.subr.bf16.mxu0 0
      %7706 = vmatpush2.bf16.msra.mxu0 0
      %7707 = vmatprep.subr.bf16.mxu0 0
      %7708 = vmatpush2.bf16.msra.mxu0 0
      %7709 = vmatprep.subr.bf16.mxu0 0
      %7710 = vmatpush2.bf16.msra.mxu0 0
      %7711 = vmatprep.mubr.bf16.mxu0 0
      %7712 = vmatmul.mubr.bf16.gmra.mxu0 %v7665
      %v7713 = vpop.f32.mrf.mxu0
      %v7714 = vadd.f32 0.0, %v7713
      %v7715 = vpop.f32.mrf.mxu0
      %v7716 = vpop.f32.mrf.mxu0
      %v7717 = vadd.f32 0.0, %v7716
      %v7718 = vpop.f32.mrf.mxu0
      %7719 = vmatprep.mubr.bf16.mxu0 0
      %7720 = vmatmul.mubr.bf16.gmra.mxu0 %v7668
      %v7721 = vpop.f32.mrf.mxu0
      %v7722 = vadd.f32 0.0, %v7721
      %v7723 = vpop.f32.mrf.mxu0
      %v7724 = vpop.f32.mrf.mxu0
      %v7725 = vadd.f32 0.0, %v7724
      %v7726 = vpop.f32.mrf.mxu0
      %7727 = vmatprep.mubr.bf16.mxu0 0
      %7728 = vmatmul.mubr.bf16.gmra.mxu0 %v7671
      %v7729 = vpop.f32.mrf.mxu0
      %v7730 = vadd.f32 0.0, %v7729
      %v7731 = vpop.f32.mrf.mxu0
      %v7732 = vpop.f32.mrf.mxu0
      %v7733 = vadd.f32 0.0, %v7732
      %v7734 = vpop.f32.mrf.mxu0
      %7735 = vmatprep.mubr.bf16.mxu0 0
      %7736 = vmatmul.mubr.bf16.gmra.mxu0 %v7674
      %v7737 = vpop.f32.mrf.mxu0
      %v7738 = vadd.f32 0.0, %v7737
      %v7739 = vpop.f32.mrf.mxu0
      %v7740 = vpop.f32.mrf.mxu0
      %v7741 = vpop.f32.mrf.mxu0
      %7742 = vdwg.mxu0
      %v7743 = vadd.f32 %v7619, %v7714
      %v7744 = vadd.f32 %v7620, %v7717
      %v7745 = vadd.f32 %v7621, %v7722
      %v7746 = vadd.f32 %v7622, %v7725
      %v7747 = vadd.f32 %v7623, %v7730
      %v7748 = vadd.f32 %v7624, %v7733
      %v7749 = vadd.f32 %v7625, %v7738
      %s7750 = scalar_lea.vmem %s4, 672
      %v7751 = vld [vmem:[%s7750] sm:$0xf]
      %v7752 = vld [vmem:[%s7750 + $0x4] sm:$0xf]
      %v7753 = vld [vmem:[%s7750 + $0x8] sm:$0xf]
      %v7754 = vld [vmem:[%s7750 + $0xc] sm:$0xf]
      %v7755 = vld [vmem:[%s7750 + $0x10] sm:$0xf]
      %v7756 = vld [vmem:[%s7750 + $0x14] sm:$0xf]
      %v7757 = vld [vmem:[%s7750 + $0x18] sm:$0x1]
      %v7765 = vunpack.c.l.b16 %v7751
      %v7766 = vunpack.c.l.b16 %v7752
      %v7767 = vunpack.c.l.b16 %v7753
      %v7768 = vunpack.c.l.b16 %v7754
      %v7769 = vunpack.c.l.b16 %v7755
      %v7770 = vunpack.c.l.b16 %v7756
      %v7771 = vunpack.c.l.b16 %v7757
      %v7772 = vpack.c.b16 %v7766, %v7765
      %v7773 = vpack.c.b16 %v7768, %v7767
      %v7774 = vpack.c.b16 %v7770, %v7769
      %v7775 = vpack.c.b16 %v7771, %v7771
      %7776 = vrot.lane.b32.xlu0 %v4896, 76
      %v7777 = vpop.permute.xlu0 %7776
      %7778 = vrot.lane.b32.xlu0 %v4897, 76
      %v7779 = vpop.permute.xlu0 %7778
      %7780 = vrot.lane.b32.xlu0 %v4898, 76
      %v7781 = vpop.permute.xlu0 %7780
      %7782 = vrot.lane.b32.xlu0 %v4899, 76
      %v7783 = vpop.permute.xlu0 %7782
      %vm7784 = vcmask 621568
      %v7785 = vsel %vm7784, %v7777, %v7779
      %v7786 = vsel %vm7784, %v7781, %v7783
      %v7789 = vsel %vm4940, %v7772, 0
      %v7792 = vsel %vm4940, %v7773, 0
      %v7795 = vsel %vm4940, %v7774, 0
      %v7798 = vsel %vm4940, %v7775, 0
      %v7801 = vsel %vm4953, %v7786, 0
      %7803 = vmatprep.subr.bf16.mxu0 0
      %7804 = vmatpush1.bf16.msra.mxu0 0
      %7805 = vmatprep.subr.bf16.mxu0 0
      %7806 = vmatpush1.bf16.msra.mxu0 0
      %7807 = vmatprep.subr.bf16.mxu0 0
      %7808 = vmatpush1.bf16.msra.mxu0 0
      %7809 = vmatprep.subr.bf16.mxu0 0
      %7810 = vmatpush1.bf16.msra.mxu0 0
      %7811 = vmatprep.subr.bf16.mxu0 0
      %7812 = vmatpush1.bf16.msra.mxu0 0
      %7813 = vmatprep.subr.bf16.mxu0 0
      %7814 = vmatpush1.bf16.msra.mxu0 0
      %7815 = vmatprep.subr.bf16.mxu0 0
      %7816 = vmatpush1.bf16.msra.mxu0 %v7801
      %7817 = vmatprep.subr.bf16.mxu0 0
      %7818 = vmatpush1.bf16.msra.mxu0 %v7785
      %7819 = vmatprep.subr.bf16.mxu0 0
      %7820 = vmatpush2.bf16.msra.mxu0 0
      %7821 = vmatprep.subr.bf16.mxu0 0
      %7822 = vmatpush2.bf16.msra.mxu0 0
      %7823 = vmatprep.subr.bf16.mxu0 0
      %7824 = vmatpush2.bf16.msra.mxu0 0
      %7825 = vmatprep.subr.bf16.mxu0 0
      %7826 = vmatpush2.bf16.msra.mxu0 0
      %7827 = vmatprep.subr.bf16.mxu0 0
      %7828 = vmatpush2.bf16.msra.mxu0 0
      %7829 = vmatprep.subr.bf16.mxu0 0
      %7830 = vmatpush2.bf16.msra.mxu0 0
      %7831 = vmatprep.subr.bf16.mxu0 0
      %7832 = vmatpush2.bf16.msra.mxu0 0
      %7833 = vmatprep.subr.bf16.mxu0 0
      %7834 = vmatpush2.bf16.msra.mxu0 0
      %7835 = vmatprep.mubr.bf16.mxu0 0
      %7836 = vmatmul.mubr.bf16.gmra.mxu0 %v7789
      %v7837 = vpop.f32.mrf.mxu0
      %v7838 = vadd.f32 0.0, %v7837
      %v7839 = vpop.f32.mrf.mxu0
      %v7840 = vpop.f32.mrf.mxu0
      %v7841 = vadd.f32 0.0, %v7840
      %v7842 = vpop.f32.mrf.mxu0
      %7843 = vmatprep.mubr.bf16.mxu0 0
      %7844 = vmatmul.mubr.bf16.gmra.mxu0 %v7792
      %v7845 = vpop.f32.mrf.mxu0
      %v7846 = vadd.f32 0.0, %v7845
      %v7847 = vpop.f32.mrf.mxu0
      %v7848 = vpop.f32.mrf.mxu0
      %v7849 = vadd.f32 0.0, %v7848
      %v7850 = vpop.f32.mrf.mxu0
      %7851 = vmatprep.mubr.bf16.mxu0 0
      %7852 = vmatmul.mubr.bf16.gmra.mxu0 %v7795
      %v7853 = vpop.f32.mrf.mxu0
      %v7854 = vadd.f32 0.0, %v7853
      %v7855 = vpop.f32.mrf.mxu0
      %v7856 = vpop.f32.mrf.mxu0
      %v7857 = vadd.f32 0.0, %v7856
      %v7858 = vpop.f32.mrf.mxu0
      %7859 = vmatprep.mubr.bf16.mxu0 0
      %7860 = vmatmul.mubr.bf16.gmra.mxu0 %v7798
      %v7861 = vpop.f32.mrf.mxu0
      %v7862 = vadd.f32 0.0, %v7861
      %v7863 = vpop.f32.mrf.mxu0
      %v7864 = vpop.f32.mrf.mxu0
      %v7865 = vpop.f32.mrf.mxu0
      %7866 = vdwg.mxu0
      %v7867 = vadd.f32 %v7743, %v7838
      %v7868 = vadd.f32 %v7744, %v7841
      %v7869 = vadd.f32 %v7745, %v7846
      %v7870 = vadd.f32 %v7746, %v7849
      %v7871 = vadd.f32 %v7747, %v7854
      %v7872 = vadd.f32 %v7748, %v7857
      %v7873 = vadd.f32 %v7749, %v7862
      %v7874 = vld [vmem:[%s5] sm:$0xff]
      %v7875 = vld [vmem:[%s5 + $0x8] sm:$0xff]
      %v7876 = vld [vmem:[%s5 + $0x10] sm:$0xff]
      %v7877 = vld [vmem:[%s5 + $0x18] sm:$0xff]
      %v7878 = vld [vmem:[%s5 + $0x20] sm:$0xff]
      %v7879 = vld [vmem:[%s5 + $0x28] sm:$0xff]
      %v7880 = vld [vmem:[%s5 + $0x30] sm:$0x3]
      %7882 = vset.pattern.permute.xlu0 0
      %7883 = vperm.xlu0 %7882, %v7874
      %v7884 = vpop.permute.xlu0 %7883
      %7887 = vset.pattern.permute.xlu0 0
      %7888 = vperm.xlu0 %7887, %v7875
      %v7889 = vpop.permute.xlu0 %7888
      %7892 = vset.pattern.permute.xlu0 0
      %7893 = vperm.xlu0 %7892, %v7876
      %v7894 = vpop.permute.xlu0 %7893
      %7897 = vset.pattern.permute.xlu0 0
      %7898 = vperm.xlu0 %7897, %v7877
      %v7899 = vpop.permute.xlu0 %7898
      %7902 = vset.pattern.permute.xlu0 0
      %7903 = vperm.xlu0 %7902, %v7878
      %v7904 = vpop.permute.xlu0 %7903
      %7907 = vset.pattern.permute.xlu0 0
      %7908 = vperm.xlu0 %7907, %v7879
      %v7909 = vpop.permute.xlu0 %7908
      %7912 = vset.pattern.permute.xlu0 0
      %7913 = vperm.xlu0 %7912, %v7880
      %v7914 = vpop.permute.xlu0 %7913
      %v7916 = vadd.f32 %v7867, %v7884
      %v7917 = vadd.f32 %v7868, %v7889
      %v7918 = vadd.f32 %v7869, %v7894
      %v7919 = vadd.f32 %v7870, %v7899
      %v7920 = vadd.f32 %v7871, %v7904
      %v7921 = vadd.f32 %v7872, %v7909
      %v7922 = vadd.f32 %v7873, %v7914
      %v7923 = vmax.f32 %v7916, 0.0
      %v7924 = vmax.f32 %v7917, 0.0
      %v7925 = vmax.f32 %v7918, 0.0
      %v7926 = vmax.f32 %v7919, 0.0
      %v7927 = vmax.f32 %v7920, 0.0
      %v7928 = vmax.f32 %v7921, 0.0
      %v7929 = vmax.f32 %v7922, 0.0
      %7937 = vrot.lane.b32.xlu0 %v7923, 127
      %v7938 = vpop.permute.xlu0 %7937
      %7939 = vrot.lane.b32.xlu0 %v7924, 127
      %v7940 = vpop.permute.xlu0 %7939
      %7941 = vrot.lane.b32.xlu0 %v7925, 127
      %v7942 = vpop.permute.xlu0 %7941
      %7943 = vrot.lane.b32.xlu0 %v7926, 127
      %v7944 = vpop.permute.xlu0 %7943
      %7945 = vrot.lane.b32.xlu0 %v7927, 127
      %v7946 = vpop.permute.xlu0 %7945
      %7947 = vrot.lane.b32.xlu0 %v7928, 127
      %v7948 = vpop.permute.xlu0 %7947
      %7949 = vrot.lane.b32.xlu0 %v7929, 127
      %v7950 = vpop.permute.xlu0 %7949
      %v7958 = vmax.f32 %v7923, %v7938
      %v7959 = vmax.f32 %v7924, %v7940
      %v7960 = vmax.f32 %v7925, %v7942
      %v7961 = vmax.f32 %v7926, %v7944
      %v7962 = vmax.f32 %v7927, %v7946
      %v7963 = vmax.f32 %v7928, %v7948
      %v7964 = vmax.f32 %v7929, %v7950
      %7972 = vrot.lane.b32.xlu0 %v7958, 116
      %v7973 = vpop.permute.xlu0 %7972
      %7974 = vrot.lane.b32.xlu0 %v7959, 116
      %v7975 = vpop.permute.xlu0 %7974
      %7976 = vrot.lane.b32.xlu0 %v7960, 116
      %v7977 = vpop.permute.xlu0 %7976
      %7978 = vrot.lane.b32.xlu0 %v7961, 116
      %v7979 = vpop.permute.xlu0 %7978
      %7980 = vrot.lane.b32.xlu0 %v7962, 116
      %v7981 = vpop.permute.xlu0 %7980
      %7982 = vrot.lane.b32.xlu0 %v7963, 116
      %v7983 = vpop.permute.xlu0 %7982
      %7984 = vrot.lane.b32.xlu0 %v7964, 116
      %v7985 = vpop.permute.xlu0 %7984
      %v7993 = vmax.f32 %v7958, %v7973
      %v7994 = vmax.f32 %v7959, %v7975
      %v7995 = vmax.f32 %v7960, %v7977
      %v7996 = vmax.f32 %v7961, %v7979
      %v7997 = vmax.f32 %v7962, %v7981
      %v7998 = vmax.f32 %v7963, %v7983
      %v7999 = vmax.f32 %v7964, %v7985
      %v8000 = vpack.c.bf16 %v7994, %v7993
      %v8001 = vpack.c.bf16 %v7996, %v7995
      %v8002 = vpack.c.bf16 %v7998, %v7997
      %v8003 = vpack.c.bf16 %v7999, %v7999
      %v8004 = vld [vmem:[%s6] sm:$0xf]
      %v8005 = vld [vmem:[%s6 + $0x4] sm:$0xf]
      %v8006 = vld [vmem:[%s6 + $0x8] sm:$0xf]
      %v8007 = vld [vmem:[%s6 + $0xc] sm:$0xf]
      %v8008 = vld [vmem:[%s6 + $0x10] sm:$0xf]
      %v8009 = vld [vmem:[%s6 + $0x14] sm:$0xf]
      %v8010 = vld [vmem:[%s6 + $0x18] sm:$0xf]
      %v8011 = vld [vmem:[%s6 + $0x1c] sm:$0xf]
      %v8012 = vld [vmem:[%s6 + $0x20] sm:$0xf]
      %v8013 = vld [vmem:[%s6 + $0x24] sm:$0xf]
      %v8024 = vunpack.c.l.b16 %v8004
      %v8025 = vunpack.c.l.b16 %v8005
      %v8026 = vunpack.c.l.b16 %v8006
      %v8027 = vunpack.c.l.b16 %v8007
      %v8028 = vunpack.c.l.b16 %v8008
      %v8029 = vunpack.c.l.b16 %v8009
      %v8030 = vunpack.c.l.b16 %v8010
      %v8031 = vunpack.c.l.b16 %v8011
      %v8032 = vunpack.c.l.b16 %v8012
      %v8033 = vunpack.c.l.b16 %v8013
      %v8034 = vpack.c.b16 %v8025, %v8024
      %v8035 = vpack.c.b16 %v8027, %v8026
      %v8036 = vpack.c.b16 %v8029, %v8028
      %v8037 = vpack.c.b16 %v8031, %v8030
      %v8038 = vpack.c.b16 %v8033, %v8032
      %vm8043 = vcmask 646144
      %v8045 = vsel %vm8043, %v8000, 0
      %v8048 = vsel %vm8043, %v8001, 0
      %v8051 = vsel %vm8043, %v8002, 0
      %v8054 = vsel %vm8043, %v8003, 0
      %v8057 = vand.u32 %v8038, %v4736
      %8059 = vmatprep.subr.bf16.mxu0 0
      %8060 = vmatpush1.bf16.msra.mxu0 0
      %8061 = vmatprep.subr.bf16.mxu0 0
      %8062 = vmatpush1.bf16.msra.mxu0 0
      %8063 = vmatprep.subr.bf16.mxu0 0
      %8064 = vmatpush1.bf16.msra.mxu0 0
      %8065 = vmatprep.subr.bf16.mxu0 0
      %8066 = vmatpush1.bf16.msra.mxu0 %v8057
      %8067 = vmatprep.subr.bf16.mxu0 0
      %8068 = vmatpush1.bf16.msra.mxu0 %v8037
      %8069 = vmatprep.subr.bf16.mxu0 0
      %8070 = vmatpush1.bf16.msra.mxu0 %v8036
      %8071 = vmatprep.subr.bf16.mxu0 0
      %8072 = vmatpush1.bf16.msra.mxu0 %v8035
      %8073 = vmatprep.subr.bf16.mxu0 0
      %8074 = vmatpush1.bf16.msra.mxu0 %v8034
      %8075 = vmatprep.subr.bf16.mxu0 0
      %8076 = vmatpush2.bf16.msra.mxu0 0
      %8077 = vmatprep.subr.bf16.mxu0 0
      %8078 = vmatpush2.bf16.msra.mxu0 0
      %8079 = vmatprep.subr.bf16.mxu0 0
      %8080 = vmatpush2.bf16.msra.mxu0 0
      %8081 = vmatprep.subr.bf16.mxu0 0
      %8082 = vmatpush2.bf16.msra.mxu0 0
      %8083 = vmatprep.subr.bf16.mxu0 0
      %8084 = vmatpush2.bf16.msra.mxu0 0
      %8085 = vmatprep.subr.bf16.mxu0 0
      %8086 = vmatpush2.bf16.msra.mxu0 0
      %8087 = vmatprep.subr.bf16.mxu0 0
      %8088 = vmatpush2.bf16.msra.mxu0 0
      %8089 = vmatprep.subr.bf16.mxu0 0
      %8090 = vmatpush2.bf16.msra.mxu0 0
      %8091 = vmatprep.mubr.bf16.mxu0 0
      %8092 = vmatmul.mubr.bf16.gmra.mxu0 %v8045
      %v8093 = vpop.f32.mrf.mxu0
      %v8094 = vadd.f32 0.0, %v8093
      %v8095 = vpop.f32.mrf.mxu0
      %v8096 = vpop.f32.mrf.mxu0
      %v8097 = vadd.f32 0.0, %v8096
      %v8098 = vpop.f32.mrf.mxu0
      %8099 = vmatprep.mubr.bf16.mxu0 0
      %8100 = vmatmul.mubr.bf16.gmra.mxu0 %v8048
      %v8101 = vpop.f32.mrf.mxu0
      %v8102 = vadd.f32 0.0, %v8101
      %v8103 = vpop.f32.mrf.mxu0
      %v8104 = vpop.f32.mrf.mxu0
      %v8105 = vadd.f32 0.0, %v8104
      %v8106 = vpop.f32.mrf.mxu0
      %8107 = vmatprep.mubr.bf16.mxu0 0
      %8108 = vmatmul.mubr.bf16.gmra.mxu0 %v8051
      %v8109 = vpop.f32.mrf.mxu0
      %v8110 = vadd.f32 0.0, %v8109
      %v8111 = vpop.f32.mrf.mxu0
      %v8112 = vpop.f32.mrf.mxu0
      %v8113 = vadd.f32 0.0, %v8112
      %v8114 = vpop.f32.mrf.mxu0
      %8115 = vmatprep.mubr.bf16.mxu0 0
      %8116 = vmatmul.mubr.bf16.gmra.mxu0 %v8054
      %v8117 = vpop.f32.mrf.mxu0
      %v8118 = vadd.f32 0.0, %v8117
      %v8119 = vpop.f32.mrf.mxu0
      %v8120 = vpop.f32.mrf.mxu0
      %v8121 = vpop.f32.mrf.mxu0
      %8122 = vdwg.mxu0
      %v8123 = vpack.c.bf16 %v8097, %v8094
      %v8124 = vpack.c.bf16 %v8105, %v8102
      %v8125 = vpack.c.bf16 %v8113, %v8110
      %v8126 = vpack.c.bf16 %v8118, %v8118
      %v8131 = vunpack.c.l.b16 %v8123
      %v8132 = vunpack.c.h.b16 %v8123
      %v8133 = vunpack.c.l.b16 %v8124
      %v8134 = vunpack.c.h.b16 %v8124
      %v8135 = vunpack.c.l.b16 %v8125
      %v8136 = vunpack.c.h.b16 %v8125
      %v8137 = vunpack.c.l.b16 %v8126
      %v8138 = vpack.c.b16 %v8131, %v8131
      %v8139 = vpack.c.b16 %v8132, %v8132
      %v8140 = vpack.c.b16 %v8133, %v8133
      %v8141 = vpack.c.b16 %v8134, %v8134
      %v8142 = vpack.c.b16 %v8135, %v8135
      %v8143 = vpack.c.b16 %v8136, %v8136
      %v8144 = vpack.c.b16 %v8137, %v8137
      %vm8152 = vcmask 125952
      %8153 = vst.msk [vmem:[%s275] sm:$0xf] %vm8152, %v8138
      %8154 = vst.msk [vmem:[%s275 + $0x4] sm:$0xf] %vm8152, %v8139
      %8155 = vst.msk [vmem:[%s275 + $0x8] sm:$0xf] %vm8152, %v8140
      %8156 = vst.msk [vmem:[%s275 + $0xc] sm:$0xf] %vm8152, %v8141
      %8157 = vst.msk [vmem:[%s275 + $0x10] sm:$0xf] %vm8152, %v8142
      %8158 = vst.msk [vmem:[%s275 + $0x14] sm:$0xf] %vm8152, %v8143
      %vm8159 = vcmask 122880
      %8160 = vst.msk [vmem:[%s275 + $0x18] sm:$0x1] %vm8159, %v8144
      %p8161 = scmp.lt.s32.totalorder %s18, 1
      %s8162 = scalar_select %p8161, %s18, 1
      %s8163 = smul.addr %s8162, 7
      %s8164 = smul.addr %s8163, 4
      %s8165 = scalar_lea.vmem %s7, %s8164
      // Predicated region
      $region49: #{cnn_forward.2} parent=47 // pred_check
        %p8166 = pneg %p188
      $region50: #{cnn_forward.2} parent=47 // pred_check_branch
        %8168 = sbr.rel (%p8166) target = $region52
      $region51: #{cnn_forward.2} parent=47 // pred_region
        _
      $region52: #{cnn_forward.2} parent=47 // pred_fallthru
        _
    $region48: #{cnn_forward.2} parent=5 // pred_fallthru
      _
    %p8169 = scmp.le.s32.totalorder 2, %s13
    // Predicated region
    $region53: #{cnn_forward.2} parent=5 // pred_check
      %p8170 = pneg %p8169
    $region54: #{cnn_forward.2} parent=5 // pred_check_branch
      %8172 = sbr.rel (%p8170) target = $region56
    $region55: #{cnn_forward.2} parent=5 // pred_region
      %s8173 = ssub.s32 %s13, 2
      // Predicated region
      $region57: #{cnn_forward.2} parent=55 // pred_check
        %p8174 = pneg %p194
      $region58: #{cnn_forward.2} parent=55 // pred_check_branch
        %8176 = sbr.rel (%p8174) target = $region60
      $region59: #{cnn_forward.2} parent=55 // pred_region
        %p8177 = scmp.lt.s32.totalorder %s19, 1
        %s8178 = scalar_select %p8177, %s19, 1
        %s8179 = smul.addr %s8178, 7
        %s8180 = smul.addr %s8179, 4
        %s8181 = scalar_lea.vmem %s7, %s8180
      $region60: #{cnn_forward.2} parent=55 // pred_fallthru
        _
    $region56: #{cnn_forward.2} parent=5 // pred_fallthru
      _
  $region6: #{cnn_forward.2} parent=0 // loop_footer
    %s17 = sadd.s32 1, %s13
  $region7: #{cnn_forward.2} parent=0 // loop_footer_branch
    %12 = sbr.rel target = $region3
  $region8: #{cnn_forward.2} parent=0 // loop_exit
    _

</llo_original>
